<compile_context>
chip_gen: v5e
topology: v5e:2x2
jax: 0.10.0
libtpu: 0.0.40
codegen_flags: <defaults>
</compile_context>

<pallas_src>
import jax
import jax.numpy as jnp
from jax.experimental import pallas as pl
from jax.experimental.pallas import tpu as pltpu

# ----------------------------- fixed Net geometry ---------------------------
K = 3            # conv kernel size
H0 = W0 = 28     # input spatial (forced by fc1 = 9216)
H1 = W1 = 26     # conv1 output spatial
W1P = 32         # conv1 width padded to a sublane-aligned 32
C1 = 32          # conv1 channels
H2 = W2 = 24     # conv2 output spatial
C2 = 64          # conv2 channels
HP = WP = 12     # pooled spatial
FEAT = HP * WP * C2   # 9216
HID = 128
NCLS = 10


# ----------------------------- Pallas kernels -------------------------------

def conv_block_kernel(p1_ref, w1_ref, b1_ref, w2_ref, b2_ref, feat_ref,
                      y1_scr, y2_scr, jm_scr):
    """Fused conv1 + ReLU + conv2 + ReLU + 2x2 max-pool for one image.

    p1_ref:  (1, H1*W1P, 9)  bf16   conv1 im2col rows (row = i*32 + j)
    w1_ref:  (9, 32)         bf16
    b1_ref:  (1, 32)         f32
    w2_ref:  (3, 3, 32, 64)  bf16   HWIO taps
    b2_ref:  (1, 64)         f32
    feat_ref:(1, 12, 12, 64) bf16   pooled NHWC features (flatten order is
                                    absorbed into the pre-permuted fc1 weight)
    """
    # conv1 as a single (832,9)x(9,32) matmul + bias + ReLU; stays in VMEM.
    y1 = jnp.dot(p1_ref[0], w1_ref[...], preferred_element_type=jnp.float32)
    y1 = jnp.maximum(y1 + b1_ref[...], 0.0)                 # (832, 32) f32
    y1_scr[...] = y1.reshape(H1, W1P, C1)                   # (26, 32, 32)

    # conv2 as 9 shift-and-matmul taps over the VMEM-resident y1.
    acc = jnp.zeros((H2 * W2, C2), jnp.float32)
    for kh in range(K):
        for kw in range(K):
            tap = y1_scr[kh:kh + H2, kw:kw + W2, :]         # (24, 24, 32) f32
            lhs = tap.reshape(H2 * W2, C1).astype(jnp.bfloat16)
            acc = acc + jnp.dot(lhs, w2_ref[kh, kw],
                                preferred_element_type=jnp.float32)
    y2 = jnp.maximum(acc + b2_ref[...], 0.0)                # (576, 64) f32
    y2_scr[...] = y2.reshape(H2, W2, C2)                    # (24, 24, 64)

    # 2x2 max-pool entirely in VMEM: first over W pairs, then over H pairs.
    for w in range(WP):
        jm_scr[:, w, :] = jnp.maximum(y2_scr[:, 2 * w, :],
                                      y2_scr[:, 2 * w + 1, :])
    for h in range(HP):
        feat_ref[0, h] = jnp.maximum(jm_scr[2 * h],
                                     jm_scr[2 * h + 1]).astype(jnp.bfloat16)


def conv_block(p1, w1, b1, w2, b2):
    N = p1.shape[0]
    return pl.pallas_call(
        conv_block_kernel,
        out_shape=jax.ShapeDtypeStruct((N, HP, WP, C2), jnp.bfloat16),
        grid=(N,),
        in_specs=[
            pl.BlockSpec((1, H1 * W1P, K * K), lambda n: (n, 0, 0)),
            pl.BlockSpec((K * K, C1), lambda n: (0, 0)),
            pl.BlockSpec((1, C1), lambda n: (0, 0)),
            pl.BlockSpec((K, K, C1, C2), lambda n: (0, 0, 0, 0)),
            pl.BlockSpec((1, C2), lambda n: (0, 0)),
        ],
        out_specs=pl.BlockSpec((1, HP, WP, C2), lambda n: (n, 0, 0, 0)),
        scratch_shapes=[
            pltpu.VMEM((H1, W1P, C1), jnp.float32),   # y1
            pltpu.VMEM((H2, W2, C2), jnp.float32),    # y2
            pltpu.VMEM((H2, WP, C2), jnp.float32),    # W-pooled intermediate
        ],
        compiler_params=pltpu.CompilerParams(dimension_semantics=("parallel",)),
    )(p1, w1, b1, w2, b2)


def head_kernel(x_ref, w1_ref, b1_ref, w2_ref, b2_ref, o_ref, h_acc):
    """fc1 (K-split, streamed weight) + ReLU + fc2 + log_softmax."""
    k = pl.program_id(0)

    @pl.when(k == 0)
    def _():
        h_acc[...] = jnp.zeros_like(h_acc)

    h_acc[...] += jnp.dot(x_ref[...], w1_ref[...],
                          preferred_element_type=jnp.float32)

    @pl.when(k == pl.num_programs(0) - 1)
    def _():
        # TODO(synk): dropout1/dropout2 are identity at inference (eval mode);
        # training-mode stochastic dropout is not implemented here.
        h = jnp.maximum(h_acc[...] + b1_ref[...], 0.0)
        logits = jnp.dot(h.astype(jnp.bfloat16), w2_ref[...],
                         preferred_element_type=jnp.float32) + b2_ref[...]
        m = jnp.max(logits, axis=-1, keepdims=True)
        z = logits - m
        lse = jnp.log(jnp.sum(jnp.exp(z), axis=-1, keepdims=True))
        o_ref[...] = z - lse


def fc_head(x_flat, w1p, b1, w2t, b2, *, tk=2304):
    N, Kdim = x_flat.shape
    assert Kdim % tk == 0
    return pl.pallas_call(
        head_kernel,
        out_shape=jax.ShapeDtypeStruct((N, NCLS), jnp.float32),
        grid=(Kdim // tk,),
        in_specs=[
            pl.BlockSpec((N, tk), lambda k: (0, k)),
            pl.BlockSpec((tk, HID), lambda k: (k, 0)),
            pl.BlockSpec((1, HID), lambda k: (0, 0)),
            pl.BlockSpec((HID, NCLS), lambda k: (0, 0)),
            pl.BlockSpec((1, NCLS), lambda k: (0, 0)),
        ],
        out_specs=pl.BlockSpec((N, NCLS), lambda k: (0, 0)),
        scratch_shapes=[pltpu.VMEM((N, HID), jnp.float32)],
        compiler_params=pltpu.CompilerParams(
            dimension_semantics=("arbitrary",)),
    )(x_flat, w1p, b1, w2t, b2)


# --------------------------------- glue -------------------------------------

def prepare_params(params):
    """One-time weight layout prep (hoisted out of the per-call forward).

    * conv weights -> HWIO tap layout, bf16.
    * fc1 weight   -> transposed AND row-permuted so it directly consumes the
                      kernel's NHWC-flattened pooled features (matching
                      torch.flatten of the NCHW tensor), bf16.
    * fc2 weight   -> transposed, bf16; biases -> (1, C) f32 rows.
    """
    cw1, cb1, cw2, cb2, fw1, fb1, fw2, fb2 = params
    w1 = jnp.transpose(cw1, (1, 2, 3, 0)).reshape(K * K, C1).astype(jnp.bfloat16)
    b1 = cb1.reshape(1, C1)
    w2 = jnp.transpose(cw2, (2, 3, 1, 0)).astype(jnp.bfloat16)   # (3,3,32,64)
    b2 = cb2.reshape(1, C2)
    fw1p = jnp.transpose(fw1.reshape(HID, C2, HP, WP),
                         (2, 3, 1, 0)).reshape(FEAT, HID).astype(jnp.bfloat16)
    fb1r = fb1.reshape(1, HID)
    fw2t = jnp.transpose(fw2).astype(jnp.bfloat16)               # (128, 10)
    fb2r = fb2.reshape(1, NCLS)
    return (w1, b1, w2, b2, fw1p, fb1r, fw2t, fb2r)


def net_forward(x_nchw, prepared):
    """Pallas implementation of Net.forward (inference semantics)."""
    w1, b1, w2, b2, fw1p, fb1, fw2t, fb2 = prepared
    N = x_nchw.shape[0]

    # conv1 im2col (only Cin*K*K = 9 tiny slices of the raw 28x28 input); the
    # large conv2 im2col now happens *inside* the fused kernel in VMEM.
    x2d = x_nchw[:, 0]                                          # (N, 28, 28)
    cols = [x2d[:, kh:kh + H1, kw:kw + W1]
            for kh in range(K) for kw in range(K)]
    p1 = jnp.stack(cols, axis=-1)                               # (N, 26, 26, 9)
    p1 = jnp.pad(p1, ((0, 0), (0, 0), (0, W1P - W1), (0, 0)))   # W 26 -> 32
    p1 = p1.reshape(N, H1 * W1P, K * K).astype(jnp.bfloat16)

    feats = conv_block(p1, w1, b1, w2, b2)                      # (N,12,12,64)
    x_flat = feats.reshape(N, FEAT)                             # free reshape

    return fc_head(x_flat, fw1p, fb1, fw2t, fb2)                # (N, 10)


def reference_forward(x, params):
    """Pure-JAX f32 reference replicating the PyTorch forward (eval mode)."""
    (cw1, cb1, cw2, cb2, fw1, fb1, fw2, fb2) = params
    dn = ("NCHW", "OIHW", "NCHW")
    y = jax.lax.conv_general_dilated(x, cw1, (1, 1), "VALID",
                                     dimension_numbers=dn)
    y = jnp.maximum(y + cb1[None, :, None, None], 0.0)
    y = jax.lax.conv_general_dilated(y, cw2, (1, 1), "VALID",
                                     dimension_numbers=dn)
    y = jnp.maximum(y + cb2[None, :, None, None], 0.0)
    N, C, H, W = y.shape
    y = y.reshape(N, C, H // 2, 2, W // 2, 2).max(axis=(3, 5))
    y = y.reshape(N, -1)
    h = jnp.maximum(y @ fw1.T + fb1, 0.0)
    logits = h @ fw2.T + fb2
    return jax.nn.log_softmax(logits, axis=1)


def init_params(key):
    ks = jax.random.split(key, 8)
    s = 0.05
    cw1 = s * jax.random.normal(ks[0], (32, 1, 3, 3), jnp.float32)
    cb1 = s * jax.random.normal(ks[1], (32,), jnp.float32)
    cw2 = s * jax.random.normal(ks[2], (64, 32, 3, 3), jnp.float32)
    cb2 = s * jax.random.normal(ks[3], (64,), jnp.float32)
    fw1 = s * jax.random.normal(ks[4], (128, 9216), jnp.float32)
    fb1 = s * jax.random.normal(ks[5], (128,), jnp.float32)
    fw2 = s * jax.random.normal(ks[6], (10, 128), jnp.float32)
    fb2 = s * jax.random.normal(ks[7], (10,), jnp.float32)
    return (cw1, cb1, cw2, cb2, fw1, fb1, fw2, fb2)


if __name__ == "__main__":
    key = jax.random.PRNGKey(0)
    k_x, k_p = jax.random.split(key)
    params = init_params(k_p)
    prepared = prepare_params(params)   # one-time layout prep, not per-call
    # fc1 expects 9216 = 64*12*12 features, which fixes the 28x28x1 input.
    x = jax.random.normal(k_x, (2, 1, 28, 28), jnp.float32)

    fwd = jax.jit(net_forward)
    out = jax.block_until_ready(fwd(x, prepared))
    ref = jax.block_until_ready(reference_forward(x, params))

    assert out.shape == (2, 10) and out.dtype == jnp.float32
    # bf16 MXU operands (f32 accumulation) vs. pure-f32 reference -> looser tol.
    assert jnp.allclose(out, ref, atol=5e-2, rtol=2e-2), "mismatch vs reference"
    print("KERNEL_OK")
</pallas_src>

<mosaic_0001>
module attributes {stable_mosaic.version = 11 : i64} {
  func.func @conv_block_kernel(%arg0: i32, %arg1: memref<1x832x9xbf16, #tpu.memory_space<vmem>>, %arg2: memref<9x32xbf16, #tpu.memory_space<vmem>>, %arg3: memref<1x32xf32, #tpu.memory_space<vmem>>, %arg4: memref<3x3x32x64xbf16, #tpu.memory_space<vmem>>, %arg5: memref<1x64xf32, #tpu.memory_space<vmem>>, %arg6: memref<1x12x12x64xbf16, #tpu.memory_space<vmem>>, %arg7: memref<26x32x32xf32, #tpu.memory_space<vmem>>, %arg8: memref<24x24x64xf32, #tpu.memory_space<vmem>>, %arg9: memref<24x12x64xf32, #tpu.memory_space<vmem>>) attributes {dimension_semantics = [#tpu.dimension_semantics<parallel>], iteration_bounds = array<i64: 2>, scalar_prefetch = 0 : i64, scratch_operands = 3 : i64, tpu.core_type = #tpu.core_type<tc>, window_params = [{transform_indices = @transform_0, window_bounds = array<i64: 1, 832, 9>}, {pipeline_mode = #tpu.pipeline_mode<synchronous>, transform_indices = @transform_1, window_bounds = array<i64: 9, 32>}, {pipeline_mode = #tpu.pipeline_mode<synchronous>, transform_indices = @transform_2, window_bounds = array<i64: 1, 32>}, {pipeline_mode = #tpu.pipeline_mode<synchronous>, transform_indices = @transform_3, window_bounds = array<i64: 3, 3, 32, 64>}, {pipeline_mode = #tpu.pipeline_mode<synchronous>, transform_indices = @transform_4, window_bounds = array<i64: 1, 64>}, {transform_indices = @transform_5, window_bounds = array<i64: 1, 12, 12, 64>}]} {
    %c0 = arith.constant 0 : index
    %c0_0 = arith.constant 0 : index
    %c0_1 = arith.constant 0 : index
    %0 = vector.load %arg1[%c0, %c0_0, %c0_1] : memref<1x832x9xbf16, #tpu.memory_space<vmem>>, vector<1x832x9xbf16>
    %1 = vector.shape_cast %0 : vector<1x832x9xbf16> to vector<832x9xbf16>
    %c0_2 = arith.constant 0 : index
    %c0_3 = arith.constant 0 : index
    %2 = vector.load %arg2[%c0_2, %c0_3] : memref<9x32xbf16, #tpu.memory_space<vmem>>, vector<9x32xbf16>
    %cst = arith.constant dense<0.000000e+00> : vector<832x32xf32>
    %3 = tpu.matmul %1, %2, %cst {dimension_numbers = #tpu.dot_dimension_numbers<[1], [0], [0], [1], [0, 0, 1, 1], [], []>} : vector<832x9xbf16>, vector<9x32xbf16>, vector<832x32xf32> -> vector<832x32xf32>
    %c0_4 = arith.constant 0 : index
    %c0_5 = arith.constant 0 : index
    %4 = vector.load %arg3[%c0_4, %c0_5] : memref<1x32xf32, #tpu.memory_space<vmem>>, vector<1x32xf32>
    %5 = vector.broadcast %4 : vector<1x32xf32> to vector<832x32xf32>
    %6 = arith.addf %3, %5 : vector<832x32xf32>
    %cst_6 = arith.constant 0.000000e+00 : f32
    %7 = vector.broadcast %cst_6 : f32 to vector<832x32xf32>
    %8 = arith.maximumf %6, %7 : vector<832x32xf32>
    %9 = vector.shape_cast %8 : vector<832x32xf32> to vector<26x32x32xf32>
    %c0_7 = arith.constant 0 : index
    %c0_8 = arith.constant 0 : index
    %c0_9 = arith.constant 0 : index
    %10 = vector.load %arg7[%c0_7, %c0_8, %c0_9] : memref<26x32x32xf32, #tpu.memory_space<vmem>>, vector<26x32x32xf32>
    tpu.vector_store %arg7[%c0_7, %c0_8, %c0_9], %9 {strides = array<i32>} : memref<26x32x32xf32, #tpu.memory_space<vmem>>, vector<26x32x32xf32>,
    %cst_10 = arith.constant 0.000000e+00 : f32
    %11 = vector.broadcast %cst_10 : f32 to vector<576x64xf32>
    %c0_11 = arith.constant 0 : index
    %c0_12 = arith.constant 0 : index
    %c0_13 = arith.constant 0 : index
    %12 = vector.load %arg7[%c0_11, %c0_12, %c0_13] : memref<26x32x32xf32, #tpu.memory_space<vmem>>, vector<24x24x32xf32>
    %13 = vector.shape_cast %12 : vector<24x24x32xf32> to vector<576x32xf32>
    %14 = arith.truncf %13 : vector<576x32xf32> to vector<576x32xbf16>
    %c0_14 = arith.constant 0 : index
    %c0_15 = arith.constant 0 : index
    %c0_16 = arith.constant 0 : index
    %c0_17 = arith.constant 0 : index
    %15 = vector.load %arg4[%c0_14, %c0_15, %c0_16, %c0_17] : memref<3x3x32x64xbf16, #tpu.memory_space<vmem>>, vector<1x1x32x64xbf16>
    %16 = vector.shape_cast %15 : vector<1x1x32x64xbf16> to vector<32x64xbf16>
    %cst_18 = arith.constant dense<0.000000e+00> : vector<576x64xf32>
    %17 = tpu.matmul %14, %16, %cst_18 {dimension_numbers = #tpu.dot_dimension_numbers<[1], [0], [0], [1], [0, 0, 1, 1], [], []>} : vector<576x32xbf16>, vector<32x64xbf16>, vector<576x64xf32> -> vector<576x64xf32>
    %18 = arith.addf %11, %17 : vector<576x64xf32>
    %c0_19 = arith.constant 0 : index
    %c1 = arith.constant 1 : index
    %c0_20 = arith.constant 0 : index
    %19 = vector.load %arg7[%c0_19, %c1, %c0_20] : memref<26x32x32xf32, #tpu.memory_space<vmem>>, vector<24x24x32xf32>
    %20 = vector.shape_cast %19 : vector<24x24x32xf32> to vector<576x32xf32>
    %21 = arith.truncf %20 : vector<576x32xf32> to vector<576x32xbf16>
    %c0_21 = arith.constant 0 : index
    %c1_22 = arith.constant 1 : index
    %c0_23 = arith.constant 0 : index
    %c0_24 = arith.constant 0 : index
    %22 = vector.load %arg4[%c0_21, %c1_22, %c0_23, %c0_24] : memref<3x3x32x64xbf16, #tpu.memory_space<vmem>>, vector<1x1x32x64xbf16>
    %23 = vector.shape_cast %22 : vector<1x1x32x64xbf16> to vector<32x64xbf16>
    %cst_25 = arith.constant dense<0.000000e+00> : vector<576x64xf32>
    %24 = tpu.matmul %21, %23, %cst_25 {dimension_numbers = #tpu.dot_dimension_numbers<[1], [0], [0], [1], [0, 0, 1, 1], [], []>} : vector<576x32xbf16>, vector<32x64xbf16>, vector<576x64xf32> -> vector<576x64xf32>
    %25 = arith.addf %18, %24 : vector<576x64xf32>
    %c0_26 = arith.constant 0 : index
    %c2 = arith.constant 2 : index
    %c0_27 = arith.constant 0 : index
    %26 = vector.load %arg7[%c0_26, %c2, %c0_27] : memref<26x32x32xf32, #tpu.memory_space<vmem>>, vector<24x24x32xf32>
    %27 = vector.shape_cast %26 : vector<24x24x32xf32> to vector<576x32xf32>
    %28 = arith.truncf %27 : vector<576x32xf32> to vector<576x32xbf16>
    %c0_28 = arith.constant 0 : index
    %c2_29 = arith.constant 2 : index
    %c0_30 = arith.constant 0 : index
    %c0_31 = arith.constant 0 : index
    %29 = vector.load %arg4[%c0_28, %c2_29, %c0_30, %c0_31] : memref<3x3x32x64xbf16, #tpu.memory_space<vmem>>, vector<1x1x32x64xbf16>
    %30 = vector.shape_cast %29 : vector<1x1x32x64xbf16> to vector<32x64xbf16>
    %cst_32 = arith.constant dense<0.000000e+00> : vector<576x64xf32>
    %31 = tpu.matmul %28, %30, %cst_32 {dimension_numbers = #tpu.dot_dimension_numbers<[1], [0], [0], [1], [0, 0, 1, 1], [], []>} : vector<576x32xbf16>, vector<32x64xbf16>, vector<576x64xf32> -> vector<576x64xf32>
    %32 = arith.addf %25, %31 : vector<576x64xf32>
    %c1_33 = arith.constant 1 : index
    %c0_34 = arith.constant 0 : index
    %c0_35 = arith.constant 0 : index
    %33 = vector.load %arg7[%c1_33, %c0_34, %c0_35] : memref<26x32x32xf32, #tpu.memory_space<vmem>>, vector<24x24x32xf32>
    %34 = vector.shape_cast %33 : vector<24x24x32xf32> to vector<576x32xf32>
    %35 = arith.truncf %34 : vector<576x32xf32> to vector<576x32xbf16>
    %c1_36 = arith.constant 1 : index
    %c0_37 = arith.constant 0 : index
    %c0_38 = arith.constant 0 : index
    %c0_39 = arith.constant 0 : index
    %36 = vector.load %arg4[%c1_36, %c0_37, %c0_38, %c0_39] : memref<3x3x32x64xbf16, #tpu.memory_space<vmem>>, vector<1x1x32x64xbf16>
    %37 = vector.shape_cast %36 : vector<1x1x32x64xbf16> to vector<32x64xbf16>
    %cst_40 = arith.constant dense<0.000000e+00> : vector<576x64xf32>
    %38 = tpu.matmul %35, %37, %cst_40 {dimension_numbers = #tpu.dot_dimension_numbers<[1], [0], [0], [1], [0, 0, 1, 1], [], []>} : vector<576x32xbf16>, vector<32x64xbf16>, vector<576x64xf32> -> vector<576x64xf32>
    %39 = arith.addf %32, %38 : vector<576x64xf32>
    %c1_41 = arith.constant 1 : index
    %c1_42 = arith.constant 1 : index
    %c0_43 = arith.constant 0 : index
    %40 = vector.load %arg7[%c1_41, %c1_42, %c0_43] : memref<26x32x32xf32, #tpu.memory_space<vmem>>, vector<24x24x32xf32>
    %41 = vector.shape_cast %40 : vector<24x24x32xf32> to vector<576x32xf32>
    %42 = arith.truncf %41 : vector<576x32xf32> to vector<576x32xbf16>
    %c1_44 = arith.constant 1 : index
    %c1_45 = arith.constant 1 : index
    %c0_46 = arith.constant 0 : index
    %c0_47 = arith.constant 0 : index
    %43 = vector.load %arg4[%c1_44, %c1_45, %c0_46, %c0_47] : memref<3x3x32x64xbf16, #tpu.memory_space<vmem>>, vector<1x1x32x64xbf16>
    %44 = vector.shape_cast %43 : vector<1x1x32x64xbf16> to vector<32x64xbf16>
    %cst_48 = arith.constant dense<0.000000e+00> : vector<576x64xf32>
    %45 = tpu.matmul %42, %44, %cst_48 {dimension_numbers = #tpu.dot_dimension_numbers<[1], [0], [0], [1], [0, 0, 1, 1], [], []>} : vector<576x32xbf16>, vector<32x64xbf16>, vector<576x64xf32> -> vector<576x64xf32>
    %46 = arith.addf %39, %45 : vector<576x64xf32>
    %c1_49 = arith.constant 1 : index
    %c2_50 = arith.constant 2 : index
    %c0_51 = arith.constant 0 : index
    %47 = vector.load %arg7[%c1_49, %c2_50, %c0_51] : memref<26x32x32xf32, #tpu.memory_space<vmem>>, vector<24x24x32xf32>
    %48 = vector.shape_cast %47 : vector<24x24x32xf32> to vector<576x32xf32>
    %49 = arith.truncf %48 : vector<576x32xf32> to vector<576x32xbf16>
    %c1_52 = arith.constant 1 : index
    %c2_53 = arith.constant 2 : index
    %c0_54 = arith.constant 0 : index
    %c0_55 = arith.constant 0 : index
    %50 = vector.load %arg4[%c1_52, %c2_53, %c0_54, %c0_55] : memref<3x3x32x64xbf16, #tpu.memory_space<vmem>>, vector<1x1x32x64xbf16>
    %51 = vector.shape_cast %50 : vector<1x1x32x64xbf16> to vector<32x64xbf16>
    %cst_56 = arith.constant dense<0.000000e+00> : vector<576x64xf32>
    %52 = tpu.matmul %49, %51, %cst_56 {dimension_numbers = #tpu.dot_dimension_numbers<[1], [0], [0], [1], [0, 0, 1, 1], [], []>} : vector<576x32xbf16>, vector<32x64xbf16>, vector<576x64xf32> -> vector<576x64xf32>
    %53 = arith.addf %46, %52 : vector<576x64xf32>
    %c2_57 = arith.constant 2 : index
    %c0_58 = arith.constant 0 : index
    %c0_59 = arith.constant 0 : index
    %54 = vector.load %arg7[%c2_57, %c0_58, %c0_59] : memref<26x32x32xf32, #tpu.memory_space<vmem>>, vector<24x24x32xf32>
    %55 = vector.shape_cast %54 : vector<24x24x32xf32> to vector<576x32xf32>
    %56 = arith.truncf %55 : vector<576x32xf32> to vector<576x32xbf16>
    %c2_60 = arith.constant 2 : index
    %c0_61 = arith.constant 0 : index
    %c0_62 = arith.constant 0 : index
    %c0_63 = arith.constant 0 : index
    %57 = vector.load %arg4[%c2_60, %c0_61, %c0_62, %c0_63] : memref<3x3x32x64xbf16, #tpu.memory_space<vmem>>, vector<1x1x32x64xbf16>
    %58 = vector.shape_cast %57 : vector<1x1x32x64xbf16> to vector<32x64xbf16>
    %cst_64 = arith.constant dense<0.000000e+00> : vector<576x64xf32>
    %59 = tpu.matmul %56, %58, %cst_64 {dimension_numbers = #tpu.dot_dimension_numbers<[1], [0], [0], [1], [0, 0, 1, 1], [], []>} : vector<576x32xbf16>, vector<32x64xbf16>, vector<576x64xf32> -> vector<576x64xf32>
    %60 = arith.addf %53, %59 : vector<576x64xf32>
    %c2_65 = arith.constant 2 : index
    %c1_66 = arith.constant 1 : index
    %c0_67 = arith.constant 0 : index
    %61 = vector.load %arg7[%c2_65, %c1_66, %c0_67] : memref<26x32x32xf32, #tpu.memory_space<vmem>>, vector<24x24x32xf32>
    %62 = vector.shape_cast %61 : vector<24x24x32xf32> to vector<576x32xf32>
    %63 = arith.truncf %62 : vector<576x32xf32> to vector<576x32xbf16>
    %c2_68 = arith.constant 2 : index
    %c1_69 = arith.constant 1 : index
    %c0_70 = arith.constant 0 : index
    %c0_71 = arith.constant 0 : index
    %64 = vector.load %arg4[%c2_68, %c1_69, %c0_70, %c0_71] : memref<3x3x32x64xbf16, #tpu.memory_space<vmem>>, vector<1x1x32x64xbf16>
    %65 = vector.shape_cast %64 : vector<1x1x32x64xbf16> to vector<32x64xbf16>
    %cst_72 = arith.constant dense<0.000000e+00> : vector<576x64xf32>
    %66 = tpu.matmul %63, %65, %cst_72 {dimension_numbers = #tpu.dot_dimension_numbers<[1], [0], [0], [1], [0, 0, 1, 1], [], []>} : vector<576x32xbf16>, vector<32x64xbf16>, vector<576x64xf32> -> vector<576x64xf32>
    %67 = arith.addf %60, %66 : vector<576x64xf32>
    %c2_73 = arith.constant 2 : index
    %c2_74 = arith.constant 2 : index
    %c0_75 = arith.constant 0 : index
    %68 = vector.load %arg7[%c2_73, %c2_74, %c0_75] : memref<26x32x32xf32, #tpu.memory_space<vmem>>, vector<24x24x32xf32>
    %69 = vector.shape_cast %68 : vector<24x24x32xf32> to vector<576x32xf32>
    %70 = arith.truncf %69 : vector<576x32xf32> to vector<576x32xbf16>
    %c2_76 = arith.constant 2 : index
    %c2_77 = arith.constant 2 : index
    %c0_78 = arith.constant 0 : index
    %c0_79 = arith.constant 0 : index
    %71 = vector.load %arg4[%c2_76, %c2_77, %c0_78, %c0_79] : memref<3x3x32x64xbf16, #tpu.memory_space<vmem>>, vector<1x1x32x64xbf16>
    %72 = vector.shape_cast %71 : vector<1x1x32x64xbf16> to vector<32x64xbf16>
    %cst_80 = arith.constant dense<0.000000e+00> : vector<576x64xf32>
    %73 = tpu.matmul %70, %72, %cst_80 {dimension_numbers = #tpu.dot_dimension_numbers<[1], [0], [0], [1], [0, 0, 1, 1], [], []>} : vector<576x32xbf16>, vector<32x64xbf16>, vector<576x64xf32> -> vector<576x64xf32>
    %74 = arith.addf %67, %73 : vector<576x64xf32>
    %c0_81 = arith.constant 0 : index
    %c0_82 = arith.constant 0 : index
    %75 = vector.load %arg5[%c0_81, %c0_82] : memref<1x64xf32, #tpu.memory_space<vmem>>, vector<1x64xf32>
    %76 = vector.broadcast %75 : vector<1x64xf32> to vector<576x64xf32>
    %77 = arith.addf %74, %76 : vector<576x64xf32>
    %cst_83 = arith.constant 0.000000e+00 : f32
    %78 = vector.broadcast %cst_83 : f32 to vector<576x64xf32>
    %79 = arith.maximumf %77, %78 : vector<576x64xf32>
    %80 = vector.shape_cast %79 : vector<576x64xf32> to vector<24x24x64xf32>
    %c0_84 = arith.constant 0 : index
    %c0_85 = arith.constant 0 : index
    %c0_86 = arith.constant 0 : index
    %81 = vector.load %arg8[%c0_84, %c0_85, %c0_86] : memref<24x24x64xf32, #tpu.memory_space<vmem>>, vector<24x24x64xf32>
    tpu.vector_store %arg8[%c0_84, %c0_85, %c0_86], %80 {strides = array<i32>} : memref<24x24x64xf32, #tpu.memory_space<vmem>>, vector<24x24x64xf32>,
    %c0_87 = arith.constant 0 : index
    %c0_88 = arith.constant 0 : index
    %c0_89 = arith.constant 0 : index
    %82 = vector.load %arg8[%c0_87, %c0_88, %c0_89] : memref<24x24x64xf32, #tpu.memory_space<vmem>>, vector<24x1x64xf32>
    %83 = vector.shape_cast %82 : vector<24x1x64xf32> to vector<24x64xf32>
    %c0_90 = arith.constant 0 : index
    %c1_91 = arith.constant 1 : index
    %c0_92 = arith.constant 0 : index
    %84 = vector.load %arg8[%c0_90, %c1_91, %c0_92] : memref<24x24x64xf32, #tpu.memory_space<vmem>>, vector<24x1x64xf32>
    %85 = vector.shape_cast %84 : vector<24x1x64xf32> to vector<24x64xf32>
    %86 = arith.maximumf %83, %85 : vector<24x64xf32>
    %c0_93 = arith.constant 0 : index
    %c0_94 = arith.constant 0 : index
    %c0_95 = arith.constant 0 : index
    %87 = vector.load %arg9[%c0_93, %c0_94, %c0_95] : memref<24x12x64xf32, #tpu.memory_space<vmem>>, vector<24x1x64xf32>
    %88 = vector.shape_cast %87 : vector<24x1x64xf32> to vector<24x64xf32>
    %89 = vector.shape_cast %86 : vector<24x64xf32> to vector<24x1x64xf32>
    tpu.vector_store %arg9[%c0_93, %c0_94, %c0_95], %89 {strides = array<i32>} : memref<24x12x64xf32, #tpu.memory_space<vmem>>, vector<24x1x64xf32>,
    %c0_96 = arith.constant 0 : index
    %c2_97 = arith.constant 2 : index
    %c0_98 = arith.constant 0 : index
    %90 = vector.load %arg8[%c0_96, %c2_97, %c0_98] : memref<24x24x64xf32, #tpu.memory_space<vmem>>, vector<24x1x64xf32>
    %91 = vector.shape_cast %90 : vector<24x1x64xf32> to vector<24x64xf32>
    %c0_99 = arith.constant 0 : index
    %c3 = arith.constant 3 : index
    %c0_100 = arith.constant 0 : index
    %92 = vector.load %arg8[%c0_99, %c3, %c0_100] : memref<24x24x64xf32, #tpu.memory_space<vmem>>, vector<24x1x64xf32>
    %93 = vector.shape_cast %92 : vector<24x1x64xf32> to vector<24x64xf32>
    %94 = arith.maximumf %91, %93 : vector<24x64xf32>
    %c0_101 = arith.constant 0 : index
    %c1_102 = arith.constant 1 : index
    %c0_103 = arith.constant 0 : index
    %95 = vector.load %arg9[%c0_101, %c1_102, %c0_103] : memref<24x12x64xf32, #tpu.memory_space<vmem>>, vector<24x1x64xf32>
    %96 = vector.shape_cast %95 : vector<24x1x64xf32> to vector<24x64xf32>
    %97 = vector.shape_cast %94 : vector<24x64xf32> to vector<24x1x64xf32>
    tpu.vector_store %arg9[%c0_101, %c1_102, %c0_103], %97 {strides = array<i32>} : memref<24x12x64xf32, #tpu.memory_space<vmem>>, vector<24x1x64xf32>,
    %c0_104 = arith.constant 0 : index
    %c4 = arith.constant 4 : index
    %c0_105 = arith.constant 0 : index
    %98 = vector.load %arg8[%c0_104, %c4, %c0_105] : memref<24x24x64xf32, #tpu.memory_space<vmem>>, vector<24x1x64xf32>
    %99 = vector.shape_cast %98 : vector<24x1x64xf32> to vector<24x64xf32>
    %c0_106 = arith.constant 0 : index
    %c5 = arith.constant 5 : index
    %c0_107 = arith.constant 0 : index
    %100 = vector.load %arg8[%c0_106, %c5, %c0_107] : memref<24x24x64xf32, #tpu.memory_space<vmem>>, vector<24x1x64xf32>
    %101 = vector.shape_cast %100 : vector<24x1x64xf32> to vector<24x64xf32>
    %102 = arith.maximumf %99, %101 : vector<24x64xf32>
    %c0_108 = arith.constant 0 : index
    %c2_109 = arith.constant 2 : index
    %c0_110 = arith.constant 0 : index
    %103 = vector.load %arg9[%c0_108, %c2_109, %c0_110] : memref<24x12x64xf32, #tpu.memory_space<vmem>>, vector<24x1x64xf32>
    %104 = vector.shape_cast %103 : vector<24x1x64xf32> to vector<24x64xf32>
    %105 = vector.shape_cast %102 : vector<24x64xf32> to vector<24x1x64xf32>
    tpu.vector_store %arg9[%c0_108, %c2_109, %c0_110], %105 {strides = array<i32>} : memref<24x12x64xf32, #tpu.memory_space<vmem>>, vector<24x1x64xf32>,
    %c0_111 = arith.constant 0 : index
    %c6 = arith.constant 6 : index
    %c0_112 = arith.constant 0 : index
    %106 = vector.load %arg8[%c0_111, %c6, %c0_112] : memref<24x24x64xf32, #tpu.memory_space<vmem>>, vector<24x1x64xf32>
    %107 = vector.shape_cast %106 : vector<24x1x64xf32> to vector<24x64xf32>
    %c0_113 = arith.constant 0 : index
    %c7 = arith.constant 7 : index
    %c0_114 = arith.constant 0 : index
    %108 = vector.load %arg8[%c0_113, %c7, %c0_114] : memref<24x24x64xf32, #tpu.memory_space<vmem>>, vector<24x1x64xf32>
    %109 = vector.shape_cast %108 : vector<24x1x64xf32> to vector<24x64xf32>
    %110 = arith.maximumf %107, %109 : vector<24x64xf32>
    %c0_115 = arith.constant 0 : index
    %c3_116 = arith.constant 3 : index
    %c0_117 = arith.constant 0 : index
    %111 = vector.load %arg9[%c0_115, %c3_116, %c0_117] : memref<24x12x64xf32, #tpu.memory_space<vmem>>, vector<24x1x64xf32>
    %112 = vector.shape_cast %111 : vector<24x1x64xf32> to vector<24x64xf32>
    %113 = vector.shape_cast %110 : vector<24x64xf32> to vector<24x1x64xf32>
    tpu.vector_store %arg9[%c0_115, %c3_116, %c0_117], %113 {strides = array<i32>} : memref<24x12x64xf32, #tpu.memory_space<vmem>>, vector<24x1x64xf32>,
    %c0_118 = arith.constant 0 : index
    %c8 = arith.constant 8 : index
    %c0_119 = arith.constant 0 : index
    %114 = vector.load %arg8[%c0_118, %c8, %c0_119] : memref<24x24x64xf32, #tpu.memory_space<vmem>>, vector<24x1x64xf32>
    %115 = vector.shape_cast %114 : vector<24x1x64xf32> to vector<24x64xf32>
    %c0_120 = arith.constant 0 : index
    %c9 = arith.constant 9 : index
    %c0_121 = arith.constant 0 : index
    %116 = vector.load %arg8[%c0_120, %c9, %c0_121] : memref<24x24x64xf32, #tpu.memory_space<vmem>>, vector<24x1x64xf32>
    %117 = vector.shape_cast %116 : vector<24x1x64xf32> to vector<24x64xf32>
    %118 = arith.maximumf %115, %117 : vector<24x64xf32>
    %c0_122 = arith.constant 0 : index
    %c4_123 = arith.constant 4 : index
    %c0_124 = arith.constant 0 : index
    %119 = vector.load %arg9[%c0_122, %c4_123, %c0_124] : memref<24x12x64xf32, #tpu.memory_space<vmem>>, vector<24x1x64xf32>
    %120 = vector.shape_cast %119 : vector<24x1x64xf32> to vector<24x64xf32>
    %121 = vector.shape_cast %118 : vector<24x64xf32> to vector<24x1x64xf32>
    tpu.vector_store %arg9[%c0_122, %c4_123, %c0_124], %121 {strides = array<i32>} : memref<24x12x64xf32, #tpu.memory_space<vmem>>, vector<24x1x64xf32>,
    %c0_125 = arith.constant 0 : index
    %c10 = arith.constant 10 : index
    %c0_126 = arith.constant 0 : index
    %122 = vector.load %arg8[%c0_125, %c10, %c0_126] : memref<24x24x64xf32, #tpu.memory_space<vmem>>, vector<24x1x64xf32>
    %123 = vector.shape_cast %122 : vector<24x1x64xf32> to vector<24x64xf32>
    %c0_127 = arith.constant 0 : index
    %c11 = arith.constant 11 : index
    %c0_128 = arith.constant 0 : index
    %124 = vector.load %arg8[%c0_127, %c11, %c0_128] : memref<24x24x64xf32, #tpu.memory_space<vmem>>, vector<24x1x64xf32>
    %125 = vector.shape_cast %124 : vector<24x1x64xf32> to vector<24x64xf32>
    %126 = arith.maximumf %123, %125 : vector<24x64xf32>
    %c0_129 = arith.constant 0 : index
    %c5_130 = arith.constant 5 : index
    %c0_131 = arith.constant 0 : index
    %127 = vector.load %arg9[%c0_129, %c5_130, %c0_131] : memref<24x12x64xf32, #tpu.memory_space<vmem>>, vector<24x1x64xf32>
    %128 = vector.shape_cast %127 : vector<24x1x64xf32> to vector<24x64xf32>
    %129 = vector.shape_cast %126 : vector<24x64xf32> to vector<24x1x64xf32>
    tpu.vector_store %arg9[%c0_129, %c5_130, %c0_131], %129 {strides = array<i32>} : memref<24x12x64xf32, #tpu.memory_space<vmem>>, vector<24x1x64xf32>,
    %c0_132 = arith.constant 0 : index
    %c12 = arith.constant 12 : index
    %c0_133 = arith.constant 0 : index
    %130 = vector.load %arg8[%c0_132, %c12, %c0_133] : memref<24x24x64xf32, #tpu.memory_space<vmem>>, vector<24x1x64xf32>
    %131 = vector.shape_cast %130 : vector<24x1x64xf32> to vector<24x64xf32>
    %c0_134 = arith.constant 0 : index
    %c13 = arith.constant 13 : index
    %c0_135 = arith.constant 0 : index
    %132 = vector.load %arg8[%c0_134, %c13, %c0_135] : memref<24x24x64xf32, #tpu.memory_space<vmem>>, vector<24x1x64xf32>
    %133 = vector.shape_cast %132 : vector<24x1x64xf32> to vector<24x64xf32>
    %134 = arith.maximumf %131, %133 : vector<24x64xf32>
    %c0_136 = arith.constant 0 : index
    %c6_137 = arith.constant 6 : index
    %c0_138 = arith.constant 0 : index
    %135 = vector.load %arg9[%c0_136, %c6_137, %c0_138] : memref<24x12x64xf32, #tpu.memory_space<vmem>>, vector<24x1x64xf32>
    %136 = vector.shape_cast %135 : vector<24x1x64xf32> to vector<24x64xf32>
    %137 = vector.shape_cast %134 : vector<24x64xf32> to vector<24x1x64xf32>
    tpu.vector_store %arg9[%c0_136, %c6_137, %c0_138], %137 {strides = array<i32>} : memref<24x12x64xf32, #tpu.memory_space<vmem>>, vector<24x1x64xf32>,
    %c0_139 = arith.constant 0 : index
    %c14 = arith.constant 14 : index
    %c0_140 = arith.constant 0 : index
    %138 = vector.load %arg8[%c0_139, %c14, %c0_140] : memref<24x24x64xf32, #tpu.memory_space<vmem>>, vector<24x1x64xf32>
    %139 = vector.shape_cast %138 : vector<24x1x64xf32> to vector<24x64xf32>
    %c0_141 = arith.constant 0 : index
    %c15 = arith.constant 15 : index
    %c0_142 = arith.constant 0 : index
    %140 = vector.load %arg8[%c0_141, %c15, %c0_142] : memref<24x24x64xf32, #tpu.memory_space<vmem>>, vector<24x1x64xf32>
    %141 = vector.shape_cast %140 : vector<24x1x64xf32> to vector<24x64xf32>
    %142 = arith.maximumf %139, %141 : vector<24x64xf32>
    %c0_143 = arith.constant 0 : index
    %c7_144 = arith.constant 7 : index
    %c0_145 = arith.constant 0 : index
    %143 = vector.load %arg9[%c0_143, %c7_144, %c0_145] : memref<24x12x64xf32, #tpu.memory_space<vmem>>, vector<24x1x64xf32>
    %144 = vector.shape_cast %143 : vector<24x1x64xf32> to vector<24x64xf32>
    %145 = vector.shape_cast %142 : vector<24x64xf32> to vector<24x1x64xf32>
    tpu.vector_store %arg9[%c0_143, %c7_144, %c0_145], %145 {strides = array<i32>} : memref<24x12x64xf32, #tpu.memory_space<vmem>>, vector<24x1x64xf32>,
    %c0_146 = arith.constant 0 : index
    %c16 = arith.constant 16 : index
    %c0_147 = arith.constant 0 : index
    %146 = vector.load %arg8[%c0_146, %c16, %c0_147] : memref<24x24x64xf32, #tpu.memory_space<vmem>>, vector<24x1x64xf32>
    %147 = vector.shape_cast %146 : vector<24x1x64xf32> to vector<24x64xf32>
    %c0_148 = arith.constant 0 : index
    %c17 = arith.constant 17 : index
    %c0_149 = arith.constant 0 : index
    %148 = vector.load %arg8[%c0_148, %c17, %c0_149] : memref<24x24x64xf32, #tpu.memory_space<vmem>>, vector<24x1x64xf32>
    %149 = vector.shape_cast %148 : vector<24x1x64xf32> to vector<24x64xf32>
    %150 = arith.maximumf %147, %149 : vector<24x64xf32>
    %c0_150 = arith.constant 0 : index
    %c8_151 = arith.constant 8 : index
    %c0_152 = arith.constant 0 : index
    %151 = vector.load %arg9[%c0_150, %c8_151, %c0_152] : memref<24x12x64xf32, #tpu.memory_space<vmem>>, vector<24x1x64xf32>
    %152 = vector.shape_cast %151 : vector<24x1x64xf32> to vector<24x64xf32>
    %153 = vector.shape_cast %150 : vector<24x64xf32> to vector<24x1x64xf32>
    tpu.vector_store %arg9[%c0_150, %c8_151, %c0_152], %153 {strides = array<i32>} : memref<24x12x64xf32, #tpu.memory_space<vmem>>, vector<24x1x64xf32>,
    %c0_153 = arith.constant 0 : index
    %c18 = arith.constant 18 : index
    %c0_154 = arith.constant 0 : index
    %154 = vector.load %arg8[%c0_153, %c18, %c0_154] : memref<24x24x64xf32, #tpu.memory_space<vmem>>, vector<24x1x64xf32>
    %155 = vector.shape_cast %154 : vector<24x1x64xf32> to vector<24x64xf32>
    %c0_155 = arith.constant 0 : index
    %c19 = arith.constant 19 : index
    %c0_156 = arith.constant 0 : index
    %156 = vector.load %arg8[%c0_155, %c19, %c0_156] : memref<24x24x64xf32, #tpu.memory_space<vmem>>, vector<24x1x64xf32>
    %157 = vector.shape_cast %156 : vector<24x1x64xf32> to vector<24x64xf32>
    %158 = arith.maximumf %155, %157 : vector<24x64xf32>
    %c0_157 = arith.constant 0 : index
    %c9_158 = arith.constant 9 : index
    %c0_159 = arith.constant 0 : index
    %159 = vector.load %arg9[%c0_157, %c9_158, %c0_159] : memref<24x12x64xf32, #tpu.memory_space<vmem>>, vector<24x1x64xf32>
    %160 = vector.shape_cast %159 : vector<24x1x64xf32> to vector<24x64xf32>
    %161 = vector.shape_cast %158 : vector<24x64xf32> to vector<24x1x64xf32>
    tpu.vector_store %arg9[%c0_157, %c9_158, %c0_159], %161 {strides = array<i32>} : memref<24x12x64xf32, #tpu.memory_space<vmem>>, vector<24x1x64xf32>,
    %c0_160 = arith.constant 0 : index
    %c20 = arith.constant 20 : index
    %c0_161 = arith.constant 0 : index
    %162 = vector.load %arg8[%c0_160, %c20, %c0_161] : memref<24x24x64xf32, #tpu.memory_space<vmem>>, vector<24x1x64xf32>
    %163 = vector.shape_cast %162 : vector<24x1x64xf32> to vector<24x64xf32>
    %c0_162 = arith.constant 0 : index
    %c21 = arith.constant 21 : index
    %c0_163 = arith.constant 0 : index
    %164 = vector.load %arg8[%c0_162, %c21, %c0_163] : memref<24x24x64xf32, #tpu.memory_space<vmem>>, vector<24x1x64xf32>
    %165 = vector.shape_cast %164 : vector<24x1x64xf32> to vector<24x64xf32>
    %166 = arith.maximumf %163, %165 : vector<24x64xf32>
    %c0_164 = arith.constant 0 : index
    %c10_165 = arith.constant 10 : index
    %c0_166 = arith.constant 0 : index
    %167 = vector.load %arg9[%c0_164, %c10_165, %c0_166] : memref<24x12x64xf32, #tpu.memory_space<vmem>>, vector<24x1x64xf32>
    %168 = vector.shape_cast %167 : vector<24x1x64xf32> to vector<24x64xf32>
    %169 = vector.shape_cast %166 : vector<24x64xf32> to vector<24x1x64xf32>
    tpu.vector_store %arg9[%c0_164, %c10_165, %c0_166], %169 {strides = array<i32>} : memref<24x12x64xf32, #tpu.memory_space<vmem>>, vector<24x1x64xf32>,
    %c0_167 = arith.constant 0 : index
    %c22 = arith.constant 22 : index
    %c0_168 = arith.constant 0 : index
    %170 = vector.load %arg8[%c0_167, %c22, %c0_168] : memref<24x24x64xf32, #tpu.memory_space<vmem>>, vector<24x1x64xf32>
    %171 = vector.shape_cast %170 : vector<24x1x64xf32> to vector<24x64xf32>
    %c0_169 = arith.constant 0 : index
    %c23 = arith.constant 23 : index
    %c0_170 = arith.constant 0 : index
    %172 = vector.load %arg8[%c0_169, %c23, %c0_170] : memref<24x24x64xf32, #tpu.memory_space<vmem>>, vector<24x1x64xf32>
    %173 = vector.shape_cast %172 : vector<24x1x64xf32> to vector<24x64xf32>
    %174 = arith.maximumf %171, %173 : vector<24x64xf32>
    %c0_171 = arith.constant 0 : index
    %c11_172 = arith.constant 11 : index
    %c0_173 = arith.constant 0 : index
    %175 = vector.load %arg9[%c0_171, %c11_172, %c0_173] : memref<24x12x64xf32, #tpu.memory_space<vmem>>, vector<24x1x64xf32>
    %176 = vector.shape_cast %175 : vector<24x1x64xf32> to vector<24x64xf32>
    %177 = vector.shape_cast %174 : vector<24x64xf32> to vector<24x1x64xf32>
    tpu.vector_store %arg9[%c0_171, %c11_172, %c0_173], %177 {strides = array<i32>} : memref<24x12x64xf32, #tpu.memory_space<vmem>>, vector<24x1x64xf32>,
    %c0_174 = arith.constant 0 : index
    %c0_175 = arith.constant 0 : index
    %c0_176 = arith.constant 0 : index
    %178 = vector.load %arg9[%c0_174, %c0_175, %c0_176] : memref<24x12x64xf32, #tpu.memory_space<vmem>>, vector<1x12x64xf32>
    %179 = vector.shape_cast %178 : vector<1x12x64xf32> to vector<12x64xf32>
    %c1_177 = arith.constant 1 : index
    %c0_178 = arith.constant 0 : index
    %c0_179 = arith.constant 0 : index
    %180 = vector.load %arg9[%c1_177, %c0_178, %c0_179] : memref<24x12x64xf32, #tpu.memory_space<vmem>>, vector<1x12x64xf32>
    %181 = vector.shape_cast %180 : vector<1x12x64xf32> to vector<12x64xf32>
    %182 = arith.maximumf %179, %181 : vector<12x64xf32>
    %183 = arith.truncf %182 : vector<12x64xf32> to vector<12x64xbf16>
    %c0_180 = arith.constant 0 : index
    %c0_181 = arith.constant 0 : index
    %c0_182 = arith.constant 0 : index
    %c0_183 = arith.constant 0 : index
    %184 = vector.load %arg6[%c0_180, %c0_181, %c0_182, %c0_183] : memref<1x12x12x64xbf16, #tpu.memory_space<vmem>>, vector<1x1x12x64xbf16>
    %185 = vector.shape_cast %184 : vector<1x1x12x64xbf16> to vector<12x64xbf16>
    %186 = vector.shape_cast %183 : vector<12x64xbf16> to vector<1x1x12x64xbf16>
    tpu.vector_store %arg6[%c0_180, %c0_181, %c0_182, %c0_183], %186 {strides = array<i32>} : memref<1x12x12x64xbf16, #tpu.memory_space<vmem>>, vector<1x1x12x64xbf16>,
    %c2_184 = arith.constant 2 : index
    %c0_185 = arith.constant 0 : index
    %c0_186 = arith.constant 0 : index
    %187 = vector.load %arg9[%c2_184, %c0_185, %c0_186] : memref<24x12x64xf32, #tpu.memory_space<vmem>>, vector<1x12x64xf32>
    %188 = vector.shape_cast %187 : vector<1x12x64xf32> to vector<12x64xf32>
    %c3_187 = arith.constant 3 : index
    %c0_188 = arith.constant 0 : index
    %c0_189 = arith.constant 0 : index
    %189 = vector.load %arg9[%c3_187, %c0_188, %c0_189] : memref<24x12x64xf32, #tpu.memory_space<vmem>>, vector<1x12x64xf32>
    %190 = vector.shape_cast %189 : vector<1x12x64xf32> to vector<12x64xf32>
    %191 = arith.maximumf %188, %190 : vector<12x64xf32>
    %192 = arith.truncf %191 : vector<12x64xf32> to vector<12x64xbf16>
    %c0_190 = arith.constant 0 : index
    %c1_191 = arith.constant 1 : index
    %c0_192 = arith.constant 0 : index
    %c0_193 = arith.constant 0 : index
    %193 = vector.load %arg6[%c0_190, %c1_191, %c0_192, %c0_193] : memref<1x12x12x64xbf16, #tpu.memory_space<vmem>>, vector<1x1x12x64xbf16>
    %194 = vector.shape_cast %193 : vector<1x1x12x64xbf16> to vector<12x64xbf16>
    %195 = vector.shape_cast %192 : vector<12x64xbf16> to vector<1x1x12x64xbf16>
    tpu.vector_store %arg6[%c0_190, %c1_191, %c0_192, %c0_193], %195 {strides = array<i32>} : memref<1x12x12x64xbf16, #tpu.memory_space<vmem>>, vector<1x1x12x64xbf16>,
    %c4_194 = arith.constant 4 : index
    %c0_195 = arith.constant 0 : index
    %c0_196 = arith.constant 0 : index
    %196 = vector.load %arg9[%c4_194, %c0_195, %c0_196] : memref<24x12x64xf32, #tpu.memory_space<vmem>>, vector<1x12x64xf32>
    %197 = vector.shape_cast %196 : vector<1x12x64xf32> to vector<12x64xf32>
    %c5_197 = arith.constant 5 : index
    %c0_198 = arith.constant 0 : index
    %c0_199 = arith.constant 0 : index
    %198 = vector.load %arg9[%c5_197, %c0_198, %c0_199] : memref<24x12x64xf32, #tpu.memory_space<vmem>>, vector<1x12x64xf32>
    %199 = vector.shape_cast %198 : vector<1x12x64xf32> to vector<12x64xf32>
    %200 = arith.maximumf %197, %199 : vector<12x64xf32>
    %201 = arith.truncf %200 : vector<12x64xf32> to vector<12x64xbf16>
    %c0_200 = arith.constant 0 : index
    %c2_201 = arith.constant 2 : index
    %c0_202 = arith.constant 0 : index
    %c0_203 = arith.constant 0 : index
    %202 = vector.load %arg6[%c0_200, %c2_201, %c0_202, %c0_203] : memref<1x12x12x64xbf16, #tpu.memory_space<vmem>>, vector<1x1x12x64xbf16>
    %203 = vector.shape_cast %202 : vector<1x1x12x64xbf16> to vector<12x64xbf16>
    %204 = vector.shape_cast %201 : vector<12x64xbf16> to vector<1x1x12x64xbf16>
    tpu.vector_store %arg6[%c0_200, %c2_201, %c0_202, %c0_203], %204 {strides = array<i32>} : memref<1x12x12x64xbf16, #tpu.memory_space<vmem>>, vector<1x1x12x64xbf16>,
    %c6_204 = arith.constant 6 : index
    %c0_205 = arith.constant 0 : index
    %c0_206 = arith.constant 0 : index
    %205 = vector.load %arg9[%c6_204, %c0_205, %c0_206] : memref<24x12x64xf32, #tpu.memory_space<vmem>>, vector<1x12x64xf32>
    %206 = vector.shape_cast %205 : vector<1x12x64xf32> to vector<12x64xf32>
    %c7_207 = arith.constant 7 : index
    %c0_208 = arith.constant 0 : index
    %c0_209 = arith.constant 0 : index
    %207 = vector.load %arg9[%c7_207, %c0_208, %c0_209] : memref<24x12x64xf32, #tpu.memory_space<vmem>>, vector<1x12x64xf32>
    %208 = vector.shape_cast %207 : vector<1x12x64xf32> to vector<12x64xf32>
    %209 = arith.maximumf %206, %208 : vector<12x64xf32>
    %210 = arith.truncf %209 : vector<12x64xf32> to vector<12x64xbf16>
    %c0_210 = arith.constant 0 : index
    %c3_211 = arith.constant 3 : index
    %c0_212 = arith.constant 0 : index
    %c0_213 = arith.constant 0 : index
    %211 = vector.load %arg6[%c0_210, %c3_211, %c0_212, %c0_213] : memref<1x12x12x64xbf16, #tpu.memory_space<vmem>>, vector<1x1x12x64xbf16>
    %212 = vector.shape_cast %211 : vector<1x1x12x64xbf16> to vector<12x64xbf16>
    %213 = vector.shape_cast %210 : vector<12x64xbf16> to vector<1x1x12x64xbf16>
    tpu.vector_store %arg6[%c0_210, %c3_211, %c0_212, %c0_213], %213 {strides = array<i32>} : memref<1x12x12x64xbf16, #tpu.memory_space<vmem>>, vector<1x1x12x64xbf16>,
    %c8_214 = arith.constant 8 : index
    %c0_215 = arith.constant 0 : index
    %c0_216 = arith.constant 0 : index
    %214 = vector.load %arg9[%c8_214, %c0_215, %c0_216] : memref<24x12x64xf32, #tpu.memory_space<vmem>>, vector<1x12x64xf32>
    %215 = vector.shape_cast %214 : vector<1x12x64xf32> to vector<12x64xf32>
    %c9_217 = arith.constant 9 : index
    %c0_218 = arith.constant 0 : index
    %c0_219 = arith.constant 0 : index
    %216 = vector.load %arg9[%c9_217, %c0_218, %c0_219] : memref<24x12x64xf32, #tpu.memory_space<vmem>>, vector<1x12x64xf32>
    %217 = vector.shape_cast %216 : vector<1x12x64xf32> to vector<12x64xf32>
    %218 = arith.maximumf %215, %217 : vector<12x64xf32>
    %219 = arith.truncf %218 : vector<12x64xf32> to vector<12x64xbf16>
    %c0_220 = arith.constant 0 : index
    %c4_221 = arith.constant 4 : index
    %c0_222 = arith.constant 0 : index
    %c0_223 = arith.constant 0 : index
    %220 = vector.load %arg6[%c0_220, %c4_221, %c0_222, %c0_223] : memref<1x12x12x64xbf16, #tpu.memory_space<vmem>>, vector<1x1x12x64xbf16>
    %221 = vector.shape_cast %220 : vector<1x1x12x64xbf16> to vector<12x64xbf16>
    %222 = vector.shape_cast %219 : vector<12x64xbf16> to vector<1x1x12x64xbf16>
    tpu.vector_store %arg6[%c0_220, %c4_221, %c0_222, %c0_223], %222 {strides = array<i32>} : memref<1x12x12x64xbf16, #tpu.memory_space<vmem>>, vector<1x1x12x64xbf16>,
    %c10_224 = arith.constant 10 : index
    %c0_225 = arith.constant 0 : index
    %c0_226 = arith.constant 0 : index
    %223 = vector.load %arg9[%c10_224, %c0_225, %c0_226] : memref<24x12x64xf32, #tpu.memory_space<vmem>>, vector<1x12x64xf32>
    %224 = vector.shape_cast %223 : vector<1x12x64xf32> to vector<12x64xf32>
    %c11_227 = arith.constant 11 : index
    %c0_228 = arith.constant 0 : index
    %c0_229 = arith.constant 0 : index
    %225 = vector.load %arg9[%c11_227, %c0_228, %c0_229] : memref<24x12x64xf32, #tpu.memory_space<vmem>>, vector<1x12x64xf32>
    %226 = vector.shape_cast %225 : vector<1x12x64xf32> to vector<12x64xf32>
    %227 = arith.maximumf %224, %226 : vector<12x64xf32>
    %228 = arith.truncf %227 : vector<12x64xf32> to vector<12x64xbf16>
    %c0_230 = arith.constant 0 : index
    %c5_231 = arith.constant 5 : index
    %c0_232 = arith.constant 0 : index
    %c0_233 = arith.constant 0 : index
    %229 = vector.load %arg6[%c0_230, %c5_231, %c0_232, %c0_233] : memref<1x12x12x64xbf16, #tpu.memory_space<vmem>>, vector<1x1x12x64xbf16>
    %230 = vector.shape_cast %229 : vector<1x1x12x64xbf16> to vector<12x64xbf16>
    %231 = vector.shape_cast %228 : vector<12x64xbf16> to vector<1x1x12x64xbf16>
    tpu.vector_store %arg6[%c0_230, %c5_231, %c0_232, %c0_233], %231 {strides = array<i32>} : memref<1x12x12x64xbf16, #tpu.memory_space<vmem>>, vector<1x1x12x64xbf16>,
    %c12_234 = arith.constant 12 : index
    %c0_235 = arith.constant 0 : index
    %c0_236 = arith.constant 0 : index
    %232 = vector.load %arg9[%c12_234, %c0_235, %c0_236] : memref<24x12x64xf32, #tpu.memory_space<vmem>>, vector<1x12x64xf32>
    %233 = vector.shape_cast %232 : vector<1x12x64xf32> to vector<12x64xf32>
    %c13_237 = arith.constant 13 : index
    %c0_238 = arith.constant 0 : index
    %c0_239 = arith.constant 0 : index
    %234 = vector.load %arg9[%c13_237, %c0_238, %c0_239] : memref<24x12x64xf32, #tpu.memory_space<vmem>>, vector<1x12x64xf32>
    %235 = vector.shape_cast %234 : vector<1x12x64xf32> to vector<12x64xf32>
    %236 = arith.maximumf %233, %235 : vector<12x64xf32>
    %237 = arith.truncf %236 : vector<12x64xf32> to vector<12x64xbf16>
    %c0_240 = arith.constant 0 : index
    %c6_241 = arith.constant 6 : index
    %c0_242 = arith.constant 0 : index
    %c0_243 = arith.constant 0 : index
    %238 = vector.load %arg6[%c0_240, %c6_241, %c0_242, %c0_243] : memref<1x12x12x64xbf16, #tpu.memory_space<vmem>>, vector<1x1x12x64xbf16>
    %239 = vector.shape_cast %238 : vector<1x1x12x64xbf16> to vector<12x64xbf16>
    %240 = vector.shape_cast %237 : vector<12x64xbf16> to vector<1x1x12x64xbf16>
    tpu.vector_store %arg6[%c0_240, %c6_241, %c0_242, %c0_243], %240 {strides = array<i32>} : memref<1x12x12x64xbf16, #tpu.memory_space<vmem>>, vector<1x1x12x64xbf16>,
    %c14_244 = arith.constant 14 : index
    %c0_245 = arith.constant 0 : index
    %c0_246 = arith.constant 0 : index
    %241 = vector.load %arg9[%c14_244, %c0_245, %c0_246] : memref<24x12x64xf32, #tpu.memory_space<vmem>>, vector<1x12x64xf32>
    %242 = vector.shape_cast %241 : vector<1x12x64xf32> to vector<12x64xf32>
    %c15_247 = arith.constant 15 : index
    %c0_248 = arith.constant 0 : index
    %c0_249 = arith.constant 0 : index
    %243 = vector.load %arg9[%c15_247, %c0_248, %c0_249] : memref<24x12x64xf32, #tpu.memory_space<vmem>>, vector<1x12x64xf32>
    %244 = vector.shape_cast %243 : vector<1x12x64xf32> to vector<12x64xf32>
    %245 = arith.maximumf %242, %244 : vector<12x64xf32>
    %246 = arith.truncf %245 : vector<12x64xf32> to vector<12x64xbf16>
    %c0_250 = arith.constant 0 : index
    %c7_251 = arith.constant 7 : index
    %c0_252 = arith.constant 0 : index
    %c0_253 = arith.constant 0 : index
    %247 = vector.load %arg6[%c0_250, %c7_251, %c0_252, %c0_253] : memref<1x12x12x64xbf16, #tpu.memory_space<vmem>>, vector<1x1x12x64xbf16>
    %248 = vector.shape_cast %247 : vector<1x1x12x64xbf16> to vector<12x64xbf16>
    %249 = vector.shape_cast %246 : vector<12x64xbf16> to vector<1x1x12x64xbf16>
    tpu.vector_store %arg6[%c0_250, %c7_251, %c0_252, %c0_253], %249 {strides = array<i32>} : memref<1x12x12x64xbf16, #tpu.memory_space<vmem>>, vector<1x1x12x64xbf16>,
    %c16_254 = arith.constant 16 : index
    %c0_255 = arith.constant 0 : index
    %c0_256 = arith.constant 0 : index
    %250 = vector.load %arg9[%c16_254, %c0_255, %c0_256] : memref<24x12x64xf32, #tpu.memory_space<vmem>>, vector<1x12x64xf32>
    %251 = vector.shape_cast %250 : vector<1x12x64xf32> to vector<12x64xf32>
    %c17_257 = arith.constant 17 : index
    %c0_258 = arith.constant 0 : index
    %c0_259 = arith.constant 0 : index
    %252 = vector.load %arg9[%c17_257, %c0_258, %c0_259] : memref<24x12x64xf32, #tpu.memory_space<vmem>>, vector<1x12x64xf32>
    %253 = vector.shape_cast %252 : vector<1x12x64xf32> to vector<12x64xf32>
    %254 = arith.maximumf %251, %253 : vector<12x64xf32>
    %255 = arith.truncf %254 : vector<12x64xf32> to vector<12x64xbf16>
    %c0_260 = arith.constant 0 : index
    %c8_261 = arith.constant 8 : index
    %c0_262 = arith.constant 0 : index
    %c0_263 = arith.constant 0 : index
    %256 = vector.load %arg6[%c0_260, %c8_261, %c0_262, %c0_263] : memref<1x12x12x64xbf16, #tpu.memory_space<vmem>>, vector<1x1x12x64xbf16>
    %257 = vector.shape_cast %256 : vector<1x1x12x64xbf16> to vector<12x64xbf16>
    %258 = vector.shape_cast %255 : vector<12x64xbf16> to vector<1x1x12x64xbf16>
    tpu.vector_store %arg6[%c0_260, %c8_261, %c0_262, %c0_263], %258 {strides = array<i32>} : memref<1x12x12x64xbf16, #tpu.memory_space<vmem>>, vector<1x1x12x64xbf16>,
    %c18_264 = arith.constant 18 : index
    %c0_265 = arith.constant 0 : index
    %c0_266 = arith.constant 0 : index
    %259 = vector.load %arg9[%c18_264, %c0_265, %c0_266] : memref<24x12x64xf32, #tpu.memory_space<vmem>>, vector<1x12x64xf32>
    %260 = vector.shape_cast %259 : vector<1x12x64xf32> to vector<12x64xf32>
    %c19_267 = arith.constant 19 : index
    %c0_268 = arith.constant 0 : index
    %c0_269 = arith.constant 0 : index
    %261 = vector.load %arg9[%c19_267, %c0_268, %c0_269] : memref<24x12x64xf32, #tpu.memory_space<vmem>>, vector<1x12x64xf32>
    %262 = vector.shape_cast %261 : vector<1x12x64xf32> to vector<12x64xf32>
    %263 = arith.maximumf %260, %262 : vector<12x64xf32>
    %264 = arith.truncf %263 : vector<12x64xf32> to vector<12x64xbf16>
    %c0_270 = arith.constant 0 : index
    %c9_271 = arith.constant 9 : index
    %c0_272 = arith.constant 0 : index
    %c0_273 = arith.constant 0 : index
    %265 = vector.load %arg6[%c0_270, %c9_271, %c0_272, %c0_273] : memref<1x12x12x64xbf16, #tpu.memory_space<vmem>>, vector<1x1x12x64xbf16>
    %266 = vector.shape_cast %265 : vector<1x1x12x64xbf16> to vector<12x64xbf16>
    %267 = vector.shape_cast %264 : vector<12x64xbf16> to vector<1x1x12x64xbf16>
    tpu.vector_store %arg6[%c0_270, %c9_271, %c0_272, %c0_273], %267 {strides = array<i32>} : memref<1x12x12x64xbf16, #tpu.memory_space<vmem>>, vector<1x1x12x64xbf16>,
    %c20_274 = arith.constant 20 : index
    %c0_275 = arith.constant 0 : index
    %c0_276 = arith.constant 0 : index
    %268 = vector.load %arg9[%c20_274, %c0_275, %c0_276] : memref<24x12x64xf32, #tpu.memory_space<vmem>>, vector<1x12x64xf32>
    %269 = vector.shape_cast %268 : vector<1x12x64xf32> to vector<12x64xf32>
    %c21_277 = arith.constant 21 : index
    %c0_278 = arith.constant 0 : index
    %c0_279 = arith.constant 0 : index
    %270 = vector.load %arg9[%c21_277, %c0_278, %c0_279] : memref<24x12x64xf32, #tpu.memory_space<vmem>>, vector<1x12x64xf32>
    %271 = vector.shape_cast %270 : vector<1x12x64xf32> to vector<12x64xf32>
    %272 = arith.maximumf %269, %271 : vector<12x64xf32>
    %273 = arith.truncf %272 : vector<12x64xf32> to vector<12x64xbf16>
    %c0_280 = arith.constant 0 : index
    %c10_281 = arith.constant 10 : index
    %c0_282 = arith.constant 0 : index
    %c0_283 = arith.constant 0 : index
    %274 = vector.load %arg6[%c0_280, %c10_281, %c0_282, %c0_283] : memref<1x12x12x64xbf16, #tpu.memory_space<vmem>>, vector<1x1x12x64xbf16>
    %275 = vector.shape_cast %274 : vector<1x1x12x64xbf16> to vector<12x64xbf16>
    %276 = vector.shape_cast %273 : vector<12x64xbf16> to vector<1x1x12x64xbf16>
    tpu.vector_store %arg6[%c0_280, %c10_281, %c0_282, %c0_283], %276 {strides = array<i32>} : memref<1x12x12x64xbf16, #tpu.memory_space<vmem>>, vector<1x1x12x64xbf16>,
    %c22_284 = arith.constant 22 : index
    %c0_285 = arith.constant 0 : index
    %c0_286 = arith.constant 0 : index
    %277 = vector.load %arg9[%c22_284, %c0_285, %c0_286] : memref<24x12x64xf32, #tpu.memory_space<vmem>>, vector<1x12x64xf32>
    %278 = vector.shape_cast %277 : vector<1x12x64xf32> to vector<12x64xf32>
    %c23_287 = arith.constant 23 : index
    %c0_288 = arith.constant 0 : index
    %c0_289 = arith.constant 0 : index
    %279 = vector.load %arg9[%c23_287, %c0_288, %c0_289] : memref<24x12x64xf32, #tpu.memory_space<vmem>>, vector<1x12x64xf32>
    %280 = vector.shape_cast %279 : vector<1x12x64xf32> to vector<12x64xf32>
    %281 = arith.maximumf %278, %280 : vector<12x64xf32>
    %282 = arith.truncf %281 : vector<12x64xf32> to vector<12x64xbf16>
    %c0_290 = arith.constant 0 : index
    %c11_291 = arith.constant 11 : index
    %c0_292 = arith.constant 0 : index
    %c0_293 = arith.constant 0 : index
    %283 = vector.load %arg6[%c0_290, %c11_291, %c0_292, %c0_293] : memref<1x12x12x64xbf16, #tpu.memory_space<vmem>>, vector<1x1x12x64xbf16>
    %284 = vector.shape_cast %283 : vector<1x1x12x64xbf16> to vector<12x64xbf16>
    %285 = vector.shape_cast %282 : vector<12x64xbf16> to vector<1x1x12x64xbf16>
    tpu.vector_store %arg6[%c0_290, %c11_291, %c0_292, %c0_293], %285 {strides = array<i32>} : memref<1x12x12x64xbf16, #tpu.memory_space<vmem>>, vector<1x1x12x64xbf16>,
    return
  }
  func.func @transform_0(%arg0: i32) -> (i32, i32, i32) {
    %c0_i32 = arith.constant 0 : i32
    %c0_i32_0 = arith.constant 0 : i32
    %c0_i32_1 = arith.constant 0 : i32
    return %arg0, %c0_i32, %c0_i32_0 : i32, i32, i32
  }
  func.func @transform_1(%arg0: i32) -> (i32, i32) {
    %c0_i32 = arith.constant 0 : i32
    %c0_i32_0 = arith.constant 0 : i32
    %c0_i32_1 = arith.constant 0 : i32
    return %c0_i32, %c0_i32_0 : i32, i32
  }
  func.func @transform_2(%arg0: i32) -> (i32, i32) {
    %c0_i32 = arith.constant 0 : i32
    %c0_i32_0 = arith.constant 0 : i32
    %c0_i32_1 = arith.constant 0 : i32
    return %c0_i32, %c0_i32_0 : i32, i32
  }
  func.func @transform_3(%arg0: i32) -> (i32, i32, i32, i32) {
    %c0_i32 = arith.constant 0 : i32
    %c0_i32_0 = arith.constant 0 : i32
    %c0_i32_1 = arith.constant 0 : i32
    %c0_i32_2 = arith.constant 0 : i32
    %c0_i32_3 = arith.constant 0 : i32
    return %c0_i32, %c0_i32_0, %c0_i32_1, %c0_i32_2 : i32, i32, i32, i32
  }
  func.func @transform_4(%arg0: i32) -> (i32, i32) {
    %c0_i32 = arith.constant 0 : i32
    %c0_i32_0 = arith.constant 0 : i32
    %c0_i32_1 = arith.constant 0 : i32
    return %c0_i32, %c0_i32_0 : i32, i32
  }
  func.func @transform_5(%arg0: i32) -> (i32, i32, i32, i32) {
    %c0_i32 = arith.constant 0 : i32
    %c0_i32_0 = arith.constant 0 : i32
    %c0_i32_1 = arith.constant 0 : i32
    %c0_i32_2 = arith.constant 0 : i32
    return %arg0, %c0_i32, %c0_i32_0, %c0_i32_1 : i32, i32, i32, i32
  }
}

module attributes {stable_mosaic.version = 11 : i64} {
  func.func @head_kernel(%arg0: i32, %arg1: memref<2x2304xbf16, #tpu.memory_space<vmem>>, %arg2: memref<2304x128xbf16, #tpu.memory_space<vmem>>, %arg3: memref<1x128xf32, #tpu.memory_space<vmem>>, %arg4: memref<128x10xbf16, #tpu.memory_space<vmem>>, %arg5: memref<1x10xf32, #tpu.memory_space<vmem>>, %arg6: memref<2x10xf32, #tpu.memory_space<vmem>>, %arg7: memref<2x128xf32, #tpu.memory_space<vmem>>) attributes {dimension_semantics = [#tpu.dimension_semantics<arbitrary>], iteration_bounds = array<i64: 4>, scalar_prefetch = 0 : i64, scratch_operands = 1 : i64, tpu.core_type = #tpu.core_type<tc>, window_params = [{transform_indices = @transform_0, window_bounds = array<i64: 2, 2304>}, {transform_indices = @transform_1, window_bounds = array<i64: 2304, 128>}, {pipeline_mode = #tpu.pipeline_mode<synchronous>, transform_indices = @transform_2, window_bounds = array<i64: 1, 128>}, {pipeline_mode = #tpu.pipeline_mode<synchronous>, transform_indices = @transform_3, window_bounds = array<i64: 128, 10>}, {pipeline_mode = #tpu.pipeline_mode<synchronous>, transform_indices = @transform_4, window_bounds = array<i64: 1, 10>}, {pipeline_mode = #tpu.pipeline_mode<synchronous>, transform_indices = @transform_5, window_bounds = array<i64: 2, 10>}]} {
    %c0_i32 = arith.constant 0 : i32
    %0 = arith.cmpi eq, %arg0, %c0_i32 : i32
    %1 = arith.extui %0 : i1 to i32
    %c0_i32_0 = arith.constant 0 : i32
    %2 = arith.cmpi ne, %1, %c0_i32_0 : i32
    scf.if %2 {
      %cst_9 = arith.constant 0.000000e+00 : f32
      %12 = vector.broadcast %cst_9 : f32 to vector<2x128xf32>
      %c0_10 = arith.constant 0 : index
      %c0_11 = arith.constant 0 : index
      %13 = vector.load %arg7[%c0_10, %c0_11] : memref<2x128xf32, #tpu.memory_space<vmem>>, vector<2x128xf32>
      tpu.vector_store %arg7[%c0_10, %c0_11], %12 {strides = array<i32>} : memref<2x128xf32, #tpu.memory_space<vmem>>, vector<2x128xf32>,
    } else {
    }
    %c0 = arith.constant 0 : index
    %c0_1 = arith.constant 0 : index
    %3 = vector.load %arg7[%c0, %c0_1] : memref<2x128xf32, #tpu.memory_space<vmem>>, vector<2x128xf32>
    %c0_2 = arith.constant 0 : index
    %c0_3 = arith.constant 0 : index
    %4 = vector.load %arg1[%c0_2, %c0_3] : memref<2x2304xbf16, #tpu.memory_space<vmem>>, vector<2x2304xbf16>
    %c0_4 = arith.constant 0 : index
    %c0_5 = arith.constant 0 : index
    %5 = vector.load %arg2[%c0_4, %c0_5] : memref<2304x128xbf16, #tpu.memory_space<vmem>>, vector<2304x128xbf16>
    %cst = arith.constant dense<0.000000e+00> : vector<2x128xf32>
    %6 = tpu.matmul %4, %5, %cst {dimension_numbers = #tpu.dot_dimension_numbers<[1], [0], [0], [1], [0, 0, 1, 1], [], []>} : vector<2x2304xbf16>, vector<2304x128xbf16>, vector<2x128xf32> -> vector<2x128xf32>
    %7 = arith.addf %3, %6 : vector<2x128xf32>
    %c0_6 = arith.constant 0 : index
    %c0_7 = arith.constant 0 : index
    %8 = vector.load %arg7[%c0_6, %c0_7] : memref<2x128xf32, #tpu.memory_space<vmem>>, vector<2x128xf32>
    tpu.vector_store %arg7[%c0_6, %c0_7], %7 {strides = array<i32>} : memref<2x128xf32, #tpu.memory_space<vmem>>, vector<2x128xf32>,
    %c3_i32 = arith.constant 3 : i32
    %9 = arith.cmpi eq, %arg0, %c3_i32 : i32
    %10 = arith.extui %9 : i1 to i32
    %c0_i32_8 = arith.constant 0 : i32
    %11 = arith.cmpi ne, %10, %c0_i32_8 : i32
    scf.if %11 {
      %c0_9 = arith.constant 0 : index
      %c0_10 = arith.constant 0 : index
      %12 = vector.load %arg7[%c0_9, %c0_10] : memref<2x128xf32, #tpu.memory_space<vmem>>, vector<2x128xf32>
      %c0_11 = arith.constant 0 : index
      %c0_12 = arith.constant 0 : index
      %13 = vector.load %arg3[%c0_11, %c0_12] : memref<1x128xf32, #tpu.memory_space<vmem>>, vector<1x128xf32>
      %14 = vector.broadcast %13 : vector<1x128xf32> to vector<2x128xf32>
      %15 = arith.addf %12, %14 : vector<2x128xf32>
      %cst_13 = arith.constant 0.000000e+00 : f32
      %16 = vector.broadcast %cst_13 : f32 to vector<2x128xf32>
      %17 = arith.maximumf %15, %16 : vector<2x128xf32>
      %18 = arith.truncf %17 : vector<2x128xf32> to vector<2x128xbf16>
      %c0_14 = arith.constant 0 : index
      %c0_15 = arith.constant 0 : index
      %19 = vector.load %arg4[%c0_14, %c0_15] : memref<128x10xbf16, #tpu.memory_space<vmem>>, vector<128x10xbf16>
      %cst_16 = arith.constant dense<0.000000e+00> : vector<2x10xf32>
      %20 = tpu.matmul %18, %19, %cst_16 {dimension_numbers = #tpu.dot_dimension_numbers<[1], [0], [0], [1], [0, 0, 1, 1], [], []>} : vector<2x128xbf16>, vector<128x10xbf16>, vector<2x10xf32> -> vector<2x10xf32>
      %c0_17 = arith.constant 0 : index
      %c0_18 = arith.constant 0 : index
      %21 = vector.load %arg5[%c0_17, %c0_18] : memref<1x10xf32, #tpu.memory_space<vmem>>, vector<1x10xf32>
      %22 = vector.broadcast %21 : vector<1x10xf32> to vector<2x10xf32>
      %23 = arith.addf %20, %22 : vector<2x10xf32>
      %cst_19 = arith.constant dense<0xFF800000> : vector<2xf32>
      %24 = vector.multi_reduction <maximumf>, %23, %cst_19 [1] : vector<2x10xf32> to vector<2xf32>
      %25 = vector.shape_cast %24 : vector<2xf32> to vector<2x1xf32>
      %26 = vector.broadcast %25 : vector<2x1xf32> to vector<2x10xf32>
      %27 = arith.subf %23, %26 : vector<2x10xf32>
      %28 = math.exp %27 : vector<2x10xf32>
      %cst_20 = arith.constant dense<0.000000e+00> : vector<2xf32>
      %29 = vector.multi_reduction <add>, %28, %cst_20 [1] : vector<2x10xf32> to vector<2xf32>
      %30 = vector.shape_cast %29 : vector<2xf32> to vector<2x1xf32>
      %31 = math.log %30 : vector<2x1xf32>
      %32 = vector.broadcast %31 : vector<2x1xf32> to vector<2x10xf32>
      %33 = arith.subf %27, %32 : vector<2x10xf32>
      %c0_21 = arith.constant 0 : index
      %c0_22 = arith.constant 0 : index
      %34 = vector.load %arg6[%c0_21, %c0_22] : memref<2x10xf32, #tpu.memory_space<vmem>>, vector<2x10xf32>
      tpu.vector_store %arg6[%c0_21, %c0_22], %33 {strides = array<i32>} : memref<2x10xf32, #tpu.memory_space<vmem>>, vector<2x10xf32>,
    } else {
    }
    return
  }
  func.func @transform_0(%arg0: i32) -> (i32, i32) {
    %c0_i32 = arith.constant 0 : i32
    %c0_i32_0 = arith.constant 0 : i32
    return %c0_i32, %arg0 : i32, i32
  }
  func.func @transform_1(%arg0: i32) -> (i32, i32) {
    %c0_i32 = arith.constant 0 : i32
    %c0_i32_0 = arith.constant 0 : i32
    return %arg0, %c0_i32 : i32, i32
  }
  func.func @transform_2(%arg0: i32) -> (i32, i32) {
    %c0_i32 = arith.constant 0 : i32
    %c0_i32_0 = arith.constant 0 : i32
    %c0_i32_1 = arith.constant 0 : i32
    return %c0_i32, %c0_i32_0 : i32, i32
  }
  func.func @transform_3(%arg0: i32) -> (i32, i32) {
    %c0_i32 = arith.constant 0 : i32
    %c0_i32_0 = arith.constant 0 : i32
    %c0_i32_1 = arith.constant 0 : i32
    return %c0_i32, %c0_i32_0 : i32, i32
  }
  func.func @transform_4(%arg0: i32) -> (i32, i32) {
    %c0_i32 = arith.constant 0 : i32
    %c0_i32_0 = arith.constant 0 : i32
    %c0_i32_1 = arith.constant 0 : i32
    return %c0_i32, %c0_i32_0 : i32, i32
  }
  func.func @transform_5(%arg0: i32) -> (i32, i32) {
    %c0_i32 = arith.constant 0 : i32
    %c0_i32_0 = arith.constant 0 : i32
    %c0_i32_1 = arith.constant 0 : i32
    return %c0_i32, %c0_i32_0 : i32, i32
  }
}

</mosaic_0001>

<llo_original>
// kernel: net_forward.3
$region0: #{net_forward.3}
  #allocation0 [shape = 'u32[]', space=smem, size = 0x4, offset = 0x4, fixed_abs, tag = 'smem constant byte address 0x4 - core index']
  #allocation1 [shape = 'u32[72,128]{1,0:T(1,128)}', space=vmem, size = 0x9000, scoped, tag = 'internal scratch']
  #allocation2 [shape = 'f32[2,128]{1,0:T(2,128)}', space=vmem, size = 0x400, scoped, tag = 'scratch operand']
  %s0 = inlined_call_operand.vmem [shape: bf16[2,9216], index: 0, kind: input, shape index: {}]
  %s1 = inlined_call_operand.hbm [shape: bf16[9216,128], index: 1, kind: input, shape index: {}]
  %s2 = inlined_call_operand.hbm [shape: f32[1,128], index: 2, kind: input, shape index: {}]
  %s3 = inlined_call_operand.vmem [shape: bf16[128,10], index: 3, kind: input, shape index: {}]
  %s4 = inlined_call_operand.hbm [shape: f32[1,10], index: 4, kind: input, shape index: {}]
  %s5 = inlined_call_operand.hbm [shape: f32[2,10], index: 5, kind: output, shape index: {}]
  %s6 = sld [smem:[#allocation0]]
  $region73: #{net_forward.3} parent=0
    _
  %s8 = ssub.s32 1, %s6
  %s9 = scalar_select 0, %s8, %s6
  $region1: #{net_forward.3} parent=0
    #allocation3 [shape = 'u8[1179648]{0}', space=vmem, size = 0x120000, scoped, tag = 'input window, operand 1']
    #allocation4 [shape = 's32[2]{0}', space=sflag, size = 0x8, scoped, tag = 'scoped memory for net_forward.3']
    #allocation5 [shape = 's32[2]{0}', space=sflag, size = 0x8, scoped, tag = 'scoped memory for net_forward.3']
    #allocation6 [shape = 'u8[512]{0}', space=vmem, size = 0x400, scoped, tag = 'input window, operand 2, single buffered']
    #allocation7 [shape = 's32[1]{0}', space=sflag, size = 0x4, scoped, tag = 'scoped memory for net_forward.3']
    #allocation8 [shape = 'u8[512]{0}', space=vmem, size = 0x400, scoped, tag = 'input window, operand 4, single buffered']
    #allocation9 [shape = 'u8[1024]{0}', space=vmem, size = 0x400, scoped, tag = 'output window, operand 0, single buffered']
    %10 = vsyncpa [#allocation4], 0
    %s11 = scalar_lea.sflag [#allocation4], 1
    %12 = vsyncpa %s11, 0
    %13 = vsyncpa [#allocation7], 0
    %14 = vsyncpa [#allocation5], 0
    loop: start=0, step=1, limit=6
    $region2: #{net_forward.3} parent=1 // loop_pre_header
      _
    $region3: #{net_forward.3} parent=1 // loop_header
      %s16 = sphi 0, %s20
      %p17 = scmp.ge.s32.totalorder %s16, 6
      %s26 = sphi 0, %s28
      %s29 = sphi 0, %s26
      %s30 = sphi 0, %s29
      %s46 = sphi 0, %s30
      %s52 = sphi 0, %s54
      %s55 = sphi 0, %s52
      %s56 = sphi 0, %s55
      %s72 = sphi 0, %s56
      %s76 = sphi 0, %s76
      %s78 = sphi 0, %s76
      %s79 = sphi 0, %s78
      %s93 = sphi 0, %s79
      %s97 = sphi 0, %s97
      %s99 = sphi 0, %s97
      %s100 = sphi 0, %s99
      %s114 = sphi 0, %s100
      %s118 = sphi 0, %s118
      %s120 = sphi 0, %s118
      %s121 = sphi 0, %s120
      %s135 = sphi 0, %s121
      %s139 = sphi 0, %s139
      %s141 = sphi 0, %s139
      %s142 = sphi 0, %s141
      %s156 = sphi 0, %s142
    $region4: #{net_forward.3} parent=1 // loop_header_branch
      %19 = sbr.rel (%p17) target = $region8
    $region5: #{net_forward.3} parent=1 // loop_body
      %s21 = ssub.s32 %s16, 1
      %s22 = ssub.s32 %s16, 2
      %s23 = sadd.s32 %s16, 1
      %s24 = ssub.s32 %s16, %s23
      %p25 = scmp.eq.s32.totalorder %s24, 0
      %s27 = sadd.s32 %s26, 1
      %s28 = scalar_select %p25, %s26, %s27
      %p31 = pneg %p25
      %p32 = scmp.eq.s32.totalorder %s16, 3
      %p33 = por %p31, %p32
      %p34 = scmp.ne.s32.totalorder %s26, %s29
      %p35 = scmp.eq.s32.totalorder %s16, 0
      %p36 = por %p34, %p35
      %p37 = scmp.ne.s32.totalorder %s26, %s29
      %p38 = scmp.eq.s32.totalorder %s21, 3
      %p39 = por %p37, %p38
      %p40 = scmp.ne.s32.totalorder %s29, %s30
      %p41 = scmp.eq.s32.totalorder %s21, 0
      %p42 = por %p40, %p41
      %p43 = scmp.ne.s32.totalorder %s29, %s30
      %p44 = scmp.eq.s32.totalorder %s22, 3
      %p45 = por %p43, %p44
      %p47 = scmp.ne.s32.totalorder %s30, %s46
      %p48 = scmp.eq.s32.totalorder %s22, 0
      %p49 = por %p47, %p48
      %s50 = ssub.s32 %s16, %s23
      %p51 = scmp.eq.s32.totalorder %s50, 0
      %s53 = sadd.s32 %s52, 1
      %s54 = scalar_select %p51, %s52, %s53
      %p57 = pneg %p51
      %p58 = scmp.eq.s32.totalorder %s16, 3
      %p59 = por %p57, %p58
      %p60 = scmp.ne.s32.totalorder %s52, %s55
      %p61 = scmp.eq.s32.totalorder %s16, 0
      %p62 = por %p60, %p61
      %p63 = scmp.ne.s32.totalorder %s52, %s55
      %p64 = scmp.eq.s32.totalorder %s21, 3
      %p65 = por %p63, %p64
      %p66 = scmp.ne.s32.totalorder %s55, %s56
      %p67 = scmp.eq.s32.totalorder %s21, 0
      %p68 = por %p66, %p67
      %p69 = scmp.ne.s32.totalorder %s55, %s56
      %p70 = scmp.eq.s32.totalorder %s22, 3
      %p71 = por %p69, %p70
      %p73 = scmp.ne.s32.totalorder %s56, %s72
      %p74 = scmp.eq.s32.totalorder %s22, 0
      %p75 = por %p73, %p74
      %s77 = sadd.s32 %s76, 1
      %p80 = scmp.eq.s32.totalorder %s16, 3
      %p81 = scmp.ne.s32.totalorder %s76, %s78
      %p82 = scmp.eq.s32.totalorder %s16, 0
      %p83 = por %p81, %p82
      %p84 = scmp.ne.s32.totalorder %s76, %s78
      %p85 = scmp.eq.s32.totalorder %s21, 3
      %p86 = por %p84, %p85
      %p87 = scmp.ne.s32.totalorder %s78, %s79
      %p88 = scmp.eq.s32.totalorder %s21, 0
      %p89 = por %p87, %p88
      %p90 = scmp.ne.s32.totalorder %s78, %s79
      %p91 = scmp.eq.s32.totalorder %s22, 3
      %p92 = por %p90, %p91
      %p94 = scmp.ne.s32.totalorder %s79, %s93
      %p95 = scmp.eq.s32.totalorder %s22, 0
      %p96 = por %p94, %p95
      %s98 = sadd.s32 %s97, 1
      %p101 = scmp.eq.s32.totalorder %s16, 3
      %p102 = scmp.ne.s32.totalorder %s97, %s99
      %p103 = scmp.eq.s32.totalorder %s16, 0
      %p104 = por %p102, %p103
      %p105 = scmp.ne.s32.totalorder %s97, %s99
      %p106 = scmp.eq.s32.totalorder %s21, 3
      %p107 = por %p105, %p106
      %p108 = scmp.ne.s32.totalorder %s99, %s100
      %p109 = scmp.eq.s32.totalorder %s21, 0
      %p110 = por %p108, %p109
      %p111 = scmp.ne.s32.totalorder %s99, %s100
      %p112 = scmp.eq.s32.totalorder %s22, 3
      %p113 = por %p111, %p112
      %p115 = scmp.ne.s32.totalorder %s100, %s114
      %p116 = scmp.eq.s32.totalorder %s22, 0
      %p117 = por %p115, %p116
      %s119 = sadd.s32 %s118, 1
      %p122 = scmp.eq.s32.totalorder %s16, 3
      %p123 = scmp.ne.s32.totalorder %s118, %s120
      %p124 = scmp.eq.s32.totalorder %s16, 0
      %p125 = por %p123, %p124
      %p126 = scmp.ne.s32.totalorder %s118, %s120
      %p127 = scmp.eq.s32.totalorder %s21, 3
      %p128 = por %p126, %p127
      %p129 = scmp.ne.s32.totalorder %s120, %s121
      %p130 = scmp.eq.s32.totalorder %s21, 0
      %p131 = por %p129, %p130
      %p132 = scmp.ne.s32.totalorder %s120, %s121
      %p133 = scmp.eq.s32.totalorder %s22, 3
      %p134 = por %p132, %p133
      %p136 = scmp.ne.s32.totalorder %s121, %s135
      %p137 = scmp.eq.s32.totalorder %s22, 0
      %p138 = por %p136, %p137
      %s140 = sadd.s32 %s139, 1
      %p143 = scmp.eq.s32.totalorder %s16, 3
      %p144 = scmp.ne.s32.totalorder %s139, %s141
      %p145 = scmp.eq.s32.totalorder %s16, 0
      %p146 = por %p144, %p145
      %p147 = scmp.ne.s32.totalorder %s139, %s141
      %p148 = scmp.eq.s32.totalorder %s21, 3
      %p149 = por %p147, %p148
      %p150 = scmp.ne.s32.totalorder %s141, %s142
      %p151 = scmp.eq.s32.totalorder %s21, 0
      %p152 = por %p150, %p151
      %p153 = scmp.ne.s32.totalorder %s141, %s142
      %p154 = scmp.eq.s32.totalorder %s22, 3
      %p155 = por %p153, %p154
      %p157 = scmp.ne.s32.totalorder %s142, %s156
      %p158 = scmp.eq.s32.totalorder %s22, 0
      %p159 = por %p157, %p158
      %p160 = scmp.le.s32.totalorder 1, %s16
      %p161 = scmp.lt.s32.totalorder %s16, 5
      %p162 = pnand %p160, %p161
      %p163 = pneg %p162
      // Predicated region
      $region9: #{net_forward.3} parent=5 // pred_check
        _
      $region10: #{net_forward.3} parent=5 // pred_check_branch
        %165 = sbr.rel (%p162) target = $region12
      $region11: #{net_forward.3} parent=5 // pred_region
        %s166 = ssub.s32 %s16, 1
        // Predicated region
        $region13: #{net_forward.3} parent=11 // pred_check
          %p167 = pneg %p89
        $region14: #{net_forward.3} parent=11 // pred_check_branch
          %169 = sbr.rel (%p167) target = $region16
        $region15: #{net_forward.3} parent=11 // pred_region
          %171 = vsyncadd [#allocation7], 0
          %s173 = sshll.u32 %s2, 4
          %s174 = int_to_ptr.hbm [resolvable:$true] %s173
          %s175 = sshll.u32 [#allocation6], 4
          %s176 = int_to_ptr.vmem [resolvable:$true] %s175
          %178 = dma.hbm_to_vmem [thread:$0]  %s174, 16, %s176, [#allocation7]
        $region16: #{net_forward.3} parent=11 // pred_fallthru
          _
        // Predicated region
        $region17: #{net_forward.3} parent=11 // pred_check
          %p179 = pneg %p110
        $region18: #{net_forward.3} parent=11 // pred_check_branch
          %181 = sbr.rel (%p179) target = $region20
        $region19: #{net_forward.3} parent=11 // pred_region
          _
        $region20: #{net_forward.3} parent=11 // pred_fallthru
          _
        // Predicated region
        $region21: #{net_forward.3} parent=11 // pred_check
          %p182 = pneg %p131
        $region22: #{net_forward.3} parent=11 // pred_check_branch
          %184 = sbr.rel (%p182) target = $region24
        $region23: #{net_forward.3} parent=11 // pred_region
          %186 = vsyncadd [#allocation7], 0
          %s188 = sshll.u32 %s4, 4
          %s189 = int_to_ptr.hbm [resolvable:$true] %s188
          %s190 = sshll.u32 [#allocation8], 4
          %s191 = int_to_ptr.vmem [resolvable:$true] %s190
          %193 = dma.hbm_to_vmem [thread:$0]  %s189, 16, %s191, [#allocation7]
        $region24: #{net_forward.3} parent=11 // pred_fallthru
          _
      $region12: #{net_forward.3} parent=5 // pred_fallthru
        _
      %p194 = scmp.lt.s32.totalorder %s16, 4
      // Predicated region
      $region25: #{net_forward.3} parent=5 // pred_check
        %p195 = pneg %p194
      $region26: #{net_forward.3} parent=5 // pred_check_branch
        %197 = sbr.rel (%p195) target = $region28
      $region27: #{net_forward.3} parent=5 // pred_region
        // Predicated region
        $region29: #{net_forward.3} parent=27 // pred_check
          %p198 = pneg %p36
        $region30: #{net_forward.3} parent=27 // pred_check_branch
          %200 = sbr.rel (%p198) target = $region32
        $region31: #{net_forward.3} parent=27 // pred_region
          %s201 = smul.u32 18, %s16
          %p202 = scmp.lt.s32.totalorder %s201, 71
          %s203 = scalar_select %p202, %s201, 71
          %s204 = scalar_lea.vmem %s0, %s203
          %s205 = smul.u32 18, %s16
        $region32: #{net_forward.3} parent=27 // pred_fallthru
          _
        // Predicated region
        $region33: #{net_forward.3} parent=27 // pred_check
          %p206 = pneg %p62
        $region34: #{net_forward.3} parent=27 // pred_check_branch
          %208 = sbr.rel (%p206) target = $region36
        $region35: #{net_forward.3} parent=27 // pred_region
          %s209 = sand.u32 %s52, 1
          %s210 = scalar_lea.sflag [#allocation4], %s209
          %s211 = sand.u32 %s52, 1
          %s212 = smul.addr %s211, 1152
          %s213 = scalar_lea.vmem [#allocation3], %s212
          %s214 = smul.u32 288, %s16
          %216 = vsyncadd %s210, 0
          %s217 = smul.addr %s214, 4
          %s218 = scalar_lea.hbm %s1, %s217
          %s219 = sshll.u32 %s218, 4
          %s220 = int_to_ptr.hbm [resolvable:$true] %s219
          %s221 = sshll.u32 %s213, 4
          %s222 = int_to_ptr.vmem [resolvable:$true] %s221
          %227 = dma.hbm_to_vmem [thread:$0]  %s220, 18432, %s222, %s210, 64, 64, 4
        $region36: #{net_forward.3} parent=27 // pred_fallthru
          _
      $region28: #{net_forward.3} parent=5 // pred_fallthru
        _
      %p228 = scmp.le.s32.totalorder 1, %s16
      %p229 = scmp.lt.s32.totalorder %s16, 5
      %p230 = pnand %p228, %p229
      %p231 = pneg %p230
      // Predicated region
      $region37: #{net_forward.3} parent=5 // pred_check
        _
      $region38: #{net_forward.3} parent=5 // pred_check_branch
        %233 = sbr.rel (%p230) target = $region40
      $region39: #{net_forward.3} parent=5 // pred_region
        %s234 = ssub.s32 %s16, 1
        %s235 = sand.u32 %s55, 1
        %s236 = scalar_lea.sflag [#allocation4], %s235
        %s237 = sand.u32 %s55, 1
        %s238 = smul.addr %s237, 1152
        %s239 = scalar_lea.vmem [#allocation3], %s238
        // Predicated region
        $region41: #{net_forward.3} parent=39 // pred_check
          %p240 = pneg %p68
        $region42: #{net_forward.3} parent=39 // pred_check_branch
          %242 = sbr.rel (%p240) target = $region44
        $region43: #{net_forward.3} parent=39 // pred_region
          %244 = dma.done %s236, 18432
        $region44: #{net_forward.3} parent=39 // pred_fallthru
          _
        // Predicated region
        $region45: #{net_forward.3} parent=39 // pred_check
          %p245 = pneg %p89
        $region46: #{net_forward.3} parent=39 // pred_check_branch
          %247 = sbr.rel (%p245) target = $region48
        $region47: #{net_forward.3} parent=39 // pred_region
          %249 = dma.done [#allocation7], 16
        $region48: #{net_forward.3} parent=39 // pred_fallthru
          _
        // Predicated region
        $region49: #{net_forward.3} parent=39 // pred_check
          %p250 = pneg %p131
        $region50: #{net_forward.3} parent=39 // pred_check_branch
          %252 = sbr.rel (%p250) target = $region52
        $region51: #{net_forward.3} parent=39 // pred_region
          %254 = dma.done [#allocation7], 16
        $region52: #{net_forward.3} parent=39 // pred_fallthru
          _
        %s255 = smul.u32 18, %s21
        %p256 = scmp.lt.s32.totalorder %s255, 71
        %s257 = scalar_select %p256, %s255, 71
        %s258 = scalar_lea.vmem %s0, %s257
        %p259 = pneg %p42
        %p260 = pneg %p39
        %s261 = sand.u32 %s55, 1
        %s262 = scalar_lea.sflag [#allocation4], %s261
        %s263 = sand.u32 %s55, 1
        %s264 = smul.addr %s263, 1152
        %s265 = scalar_lea.vmem [#allocation3], %s264
        %p266 = pneg %p68
        %p267 = pneg %p65
        %p268 = pneg %p89
        %p269 = pneg %p86
        %p270 = pneg %p110
        %p271 = pneg %p107
        %p272 = pneg %p131
        %p273 = pneg %p128
        %p274 = pneg %p152
        %p275 = pneg %p149
        %s276 = smul.u32 18, %s21
        %p277 = scmp.lt.s32.totalorder %s276, 71
        %s278 = scalar_select %p277, %s276, 71
        %s279 = scalar_lea.vmem %s0, %s278
        %s280 = smul.u32 18, %s21
        %s281 = smul.u32 288, %s21
        %p282 = scmp.eq.s32.totalorder %s21, 0
        // Predicated region
        $region53: #{net_forward.3} parent=39 // pred_check
          %p283 = pneg %p282
        $region54: #{net_forward.3} parent=39 // pred_check_branch
          %285 = sbr.rel (%p283) target = $region56
        $region55: #{net_forward.3} parent=39 // pred_region
          %286 = vst [vmem:[#allocation2] sm:$0x3] 0.0
        $region56: #{net_forward.3} parent=39 // pred_fallthru
          _
        %v287 = vld [vmem:[#allocation2] sm:$0x3]
        %v288 = vld [vmem:[%s279] sm:$0xff]
        %v289 = vld [vmem:[%s279 + $0x8] sm:$0xff]
        %v290 = vld [vmem:[%s279 + $0x10] sm:$0x3]
        %v291 = vld [vmem:[%s239] sm:$0xf]
        %v292 = vld [vmem:[%s239 + $0x4] sm:$0xf]
        %v293 = vld [vmem:[%s239 + $0x8] sm:$0xf]
        %v294 = vld [vmem:[%s239 + $0xc] sm:$0xf]
        %v295 = vld [vmem:[%s239 + $0x10] sm:$0xf]
        %v296 = vld [vmem:[%s239 + $0x14] sm:$0xf]
        %v297 = vld [vmem:[%s239 + $0x18] sm:$0xf]
        %v298 = vld [vmem:[%s239 + $0x1c] sm:$0xf]
        %v299 = vld [vmem:[%s239 + $0x20] sm:$0xf]
        %v300 = vld [vmem:[%s239 + $0x24] sm:$0xf]
        %v301 = vld [vmem:[%s239 + $0x28] sm:$0xf]
        %v302 = vld [vmem:[%s239 + $0x2c] sm:$0xf]
        %v303 = vld [vmem:[%s239 + $0x30] sm:$0xf]
        %v304 = vld [vmem:[%s239 + $0x34] sm:$0xf]
        %v305 = vld [vmem:[%s239 + $0x38] sm:$0xf]
        %v306 = vld [vmem:[%s239 + $0x3c] sm:$0xf]
        %v307 = vld [vmem:[%s239 + $0x40] sm:$0xf]
        %v308 = vld [vmem:[%s239 + $0x44] sm:$0xf]
        %v309 = vld [vmem:[%s239 + $0x48] sm:$0xf]
        %v310 = vld [vmem:[%s239 + $0x4c] sm:$0xf]
        %v311 = vld [vmem:[%s239 + $0x50] sm:$0xf]
        %v312 = vld [vmem:[%s239 + $0x54] sm:$0xf]
        %v313 = vld [vmem:[%s239 + $0x58] sm:$0xf]
        %v314 = vld [vmem:[%s239 + $0x5c] sm:$0xf]
        %v315 = vld [vmem:[%s239 + $0x60] sm:$0xf]
        %v316 = vld [vmem:[%s239 + $0x64] sm:$0xf]
        %v317 = vld [vmem:[%s239 + $0x68] sm:$0xf]
        %v318 = vld [vmem:[%s239 + $0x6c] sm:$0xf]
        %v319 = vld [vmem:[%s239 + $0x70] sm:$0xf]
        %v320 = vld [vmem:[%s239 + $0x74] sm:$0xf]
        %v321 = vld [vmem:[%s239 + $0x78] sm:$0xf]
        %v322 = vld [vmem:[%s239 + $0x7c] sm:$0xf]
        %v323 = vld [vmem:[%s239 + $0x80] sm:$0xf]
        %v324 = vld [vmem:[%s239 + $0x84] sm:$0xf]
        %v325 = vld [vmem:[%s239 + $0x88] sm:$0xf]
        %v326 = vld [vmem:[%s239 + $0x8c] sm:$0xf]
        %v327 = vld [vmem:[%s239 + $0x90] sm:$0xf]
        %v328 = vld [vmem:[%s239 + $0x94] sm:$0xf]
        %v329 = vld [vmem:[%s239 + $0x98] sm:$0xf]
        %v330 = vld [vmem:[%s239 + $0x9c] sm:$0xf]
        %v331 = vld [vmem:[%s239 + $0xa0] sm:$0xf]
        %v332 = vld [vmem:[%s239 + $0xa4] sm:$0xf]
        %v333 = vld [vmem:[%s239 + $0xa8] sm:$0xf]
        %v334 = vld [vmem:[%s239 + $0xac] sm:$0xf]
        %v335 = vld [vmem:[%s239 + $0xb0] sm:$0xf]
        %v336 = vld [vmem:[%s239 + $0xb4] sm:$0xf]
        %v337 = vld [vmem:[%s239 + $0xb8] sm:$0xf]
        %v338 = vld [vmem:[%s239 + $0xbc] sm:$0xf]
        %v339 = vld [vmem:[%s239 + $0xc0] sm:$0xf]
        %v340 = vld [vmem:[%s239 + $0xc4] sm:$0xf]
        %v341 = vld [vmem:[%s239 + $0xc8] sm:$0xf]
        %v342 = vld [vmem:[%s239 + $0xcc] sm:$0xf]
        %v343 = vld [vmem:[%s239 + $0xd0] sm:$0xf]
        %v344 = vld [vmem:[%s239 + $0xd4] sm:$0xf]
        %v345 = vld [vmem:[%s239 + $0xd8] sm:$0xf]
        %v346 = vld [vmem:[%s239 + $0xdc] sm:$0xf]
        %v347 = vld [vmem:[%s239 + $0xe0] sm:$0xf]
        %v348 = vld [vmem:[%s239 + $0xe4] sm:$0xf]
        %v349 = vld [vmem:[%s239 + $0xe8] sm:$0xf]
        %v350 = vld [vmem:[%s239 + $0xec] sm:$0xf]
        %v351 = vld [vmem:[%s239 + $0xf0] sm:$0xf]
        %v352 = vld [vmem:[%s239 + $0xf4] sm:$0xf]
        %v353 = vld [vmem:[%s239 + $0xf8] sm:$0xf]
        %v354 = vld [vmem:[%s239 + $0xfc] sm:$0xf]
        %v355 = vld [vmem:[%s239 + $0x100] sm:$0xf]
        %v356 = vld [vmem:[%s239 + $0x104] sm:$0xf]
        %v357 = vld [vmem:[%s239 + $0x108] sm:$0xf]
        %v358 = vld [vmem:[%s239 + $0x10c] sm:$0xf]
        %v359 = vld [vmem:[%s239 + $0x110] sm:$0xf]
        %v360 = vld [vmem:[%s239 + $0x114] sm:$0xf]
        %v361 = vld [vmem:[%s239 + $0x118] sm:$0xf]
        %v362 = vld [vmem:[%s239 + $0x11c] sm:$0xf]
        %v363 = vld [vmem:[%s239 + $0x120] sm:$0xf]
        %v364 = vld [vmem:[%s239 + $0x124] sm:$0xf]
        %v365 = vld [vmem:[%s239 + $0x128] sm:$0xf]
        %v366 = vld [vmem:[%s239 + $0x12c] sm:$0xf]
        %v367 = vld [vmem:[%s239 + $0x130] sm:$0xf]
        %v368 = vld [vmem:[%s239 + $0x134] sm:$0xf]
        %v369 = vld [vmem:[%s239 + $0x138] sm:$0xf]
        %v370 = vld [vmem:[%s239 + $0x13c] sm:$0xf]
        %v371 = vld [vmem:[%s239 + $0x140] sm:$0xf]
        %v372 = vld [vmem:[%s239 + $0x144] sm:$0xf]
        %v373 = vld [vmem:[%s239 + $0x148] sm:$0xf]
        %v374 = vld [vmem:[%s239 + $0x14c] sm:$0xf]
        %v375 = vld [vmem:[%s239 + $0x150] sm:$0xf]
        %v376 = vld [vmem:[%s239 + $0x154] sm:$0xf]
        %v377 = vld [vmem:[%s239 + $0x158] sm:$0xf]
        %v378 = vld [vmem:[%s239 + $0x15c] sm:$0xf]
        %v379 = vld [vmem:[%s239 + $0x160] sm:$0xf]
        %v380 = vld [vmem:[%s239 + $0x164] sm:$0xf]
        %v381 = vld [vmem:[%s239 + $0x168] sm:$0xf]
        %v382 = vld [vmem:[%s239 + $0x16c] sm:$0xf]
        %v383 = vld [vmem:[%s239 + $0x170] sm:$0xf]
        %v384 = vld [vmem:[%s239 + $0x174] sm:$0xf]
        %v385 = vld [vmem:[%s239 + $0x178] sm:$0xf]
        %v386 = vld [vmem:[%s239 + $0x17c] sm:$0xf]
        %v387 = vld [vmem:[%s239 + $0x180] sm:$0xf]
        %v388 = vld [vmem:[%s239 + $0x184] sm:$0xf]
        %v389 = vld [vmem:[%s239 + $0x188] sm:$0xf]
        %v390 = vld [vmem:[%s239 + $0x18c] sm:$0xf]
        %v391 = vld [vmem:[%s239 + $0x190] sm:$0xf]
        %v392 = vld [vmem:[%s239 + $0x194] sm:$0xf]
        %v393 = vld [vmem:[%s239 + $0x198] sm:$0xf]
        %v394 = vld [vmem:[%s239 + $0x19c] sm:$0xf]
        %v395 = vld [vmem:[%s239 + $0x1a0] sm:$0xf]
        %v396 = vld [vmem:[%s239 + $0x1a4] sm:$0xf]
        %v397 = vld [vmem:[%s239 + $0x1a8] sm:$0xf]
        %v398 = vld [vmem:[%s239 + $0x1ac] sm:$0xf]
        %v399 = vld [vmem:[%s239 + $0x1b0] sm:$0xf]
        %v400 = vld [vmem:[%s239 + $0x1b4] sm:$0xf]
        %v401 = vld [vmem:[%s239 + $0x1b8] sm:$0xf]
        %v402 = vld [vmem:[%s239 + $0x1bc] sm:$0xf]
        %v403 = vld [vmem:[%s239 + $0x1c0] sm:$0xf]
        %v404 = vld [vmem:[%s239 + $0x1c4] sm:$0xf]
        %v405 = vld [vmem:[%s239 + $0x1c8] sm:$0xf]
        %v406 = vld [vmem:[%s239 + $0x1cc] sm:$0xf]
        %v407 = vld [vmem:[%s239 + $0x1d0] sm:$0xf]
        %v408 = vld [vmem:[%s239 + $0x1d4] sm:$0xf]
        %v409 = vld [vmem:[%s239 + $0x1d8] sm:$0xf]
        %v410 = vld [vmem:[%s239 + $0x1dc] sm:$0xf]
        %v411 = vld [vmem:[%s239 + $0x1e0] sm:$0xf]
        %v412 = vld [vmem:[%s239 + $0x1e4] sm:$0xf]
        %v413 = vld [vmem:[%s239 + $0x1e8] sm:$0xf]
        %v414 = vld [vmem:[%s239 + $0x1ec] sm:$0xf]
        %v415 = vld [vmem:[%s239 + $0x1f0] sm:$0xf]
        %v416 = vld [vmem:[%s239 + $0x1f4] sm:$0xf]
        %v417 = vld [vmem:[%s239 + $0x1f8] sm:$0xf]
        %v418 = vld [vmem:[%s239 + $0x1fc] sm:$0xf]
        %v419 = vld [vmem:[%s239 + $0x200] sm:$0xf]
        %v420 = vld [vmem:[%s239 + $0x204] sm:$0xf]
        %v421 = vld [vmem:[%s239 + $0x208] sm:$0xf]
        %v422 = vld [vmem:[%s239 + $0x20c] sm:$0xf]
        %v423 = vld [vmem:[%s239 + $0x210] sm:$0xf]
        %v424 = vld [vmem:[%s239 + $0x214] sm:$0xf]
        %v425 = vld [vmem:[%s239 + $0x218] sm:$0xf]
        %v426 = vld [vmem:[%s239 + $0x21c] sm:$0xf]
        %v427 = vld [vmem:[%s239 + $0x220] sm:$0xf]
        %v428 = vld [vmem:[%s239 + $0x224] sm:$0xf]
        %v429 = vld [vmem:[%s239 + $0x228] sm:$0xf]
        %v430 = vld [vmem:[%s239 + $0x22c] sm:$0xf]
        %v431 = vld [vmem:[%s239 + $0x230] sm:$0xf]
        %v432 = vld [vmem:[%s239 + $0x234] sm:$0xf]
        %v433 = vld [vmem:[%s239 + $0x238] sm:$0xf]
        %v434 = vld [vmem:[%s239 + $0x23c] sm:$0xf]
        %v435 = vld [vmem:[%s239 + $0x240] sm:$0xf]
        %v436 = vld [vmem:[%s239 + $0x244] sm:$0xf]
        %v437 = vld [vmem:[%s239 + $0x248] sm:$0xf]
        %v438 = vld [vmem:[%s239 + $0x24c] sm:$0xf]
        %v439 = vld [vmem:[%s239 + $0x250] sm:$0xf]
        %v440 = vld [vmem:[%s239 + $0x254] sm:$0xf]
        %v441 = vld [vmem:[%s239 + $0x258] sm:$0xf]
        %v442 = vld [vmem:[%s239 + $0x25c] sm:$0xf]
        %v443 = vld [vmem:[%s239 + $0x260] sm:$0xf]
        %v444 = vld [vmem:[%s239 + $0x264] sm:$0xf]
        %v445 = vld [vmem:[%s239 + $0x268] sm:$0xf]
        %v446 = vld [vmem:[%s239 + $0x26c] sm:$0xf]
        %v447 = vld [vmem:[%s239 + $0x270] sm:$0xf]
        %v448 = vld [vmem:[%s239 + $0x274] sm:$0xf]
        %v449 = vld [vmem:[%s239 + $0x278] sm:$0xf]
        %v450 = vld [vmem:[%s239 + $0x27c] sm:$0xf]
        %v451 = vld [vmem:[%s239 + $0x280] sm:$0xf]
        %v452 = vld [vmem:[%s239 + $0x284] sm:$0xf]
        %v453 = vld [vmem:[%s239 + $0x288] sm:$0xf]
        %v454 = vld [vmem:[%s239 + $0x28c] sm:$0xf]
        %v455 = vld [vmem:[%s239 + $0x290] sm:$0xf]
        %v456 = vld [vmem:[%s239 + $0x294] sm:$0xf]
        %v457 = vld [vmem:[%s239 + $0x298] sm:$0xf]
        %v458 = vld [vmem:[%s239 + $0x29c] sm:$0xf]
        %v459 = vld [vmem:[%s239 + $0x2a0] sm:$0xf]
        %v460 = vld [vmem:[%s239 + $0x2a4] sm:$0xf]
        %v461 = vld [vmem:[%s239 + $0x2a8] sm:$0xf]
        %v462 = vld [vmem:[%s239 + $0x2ac] sm:$0xf]
        %v463 = vld [vmem:[%s239 + $0x2b0] sm:$0xf]
        %v464 = vld [vmem:[%s239 + $0x2b4] sm:$0xf]
        %v465 = vld [vmem:[%s239 + $0x2b8] sm:$0xf]
        %v466 = vld [vmem:[%s239 + $0x2bc] sm:$0xf]
        %v467 = vld [vmem:[%s239 + $0x2c0] sm:$0xf]
        %v468 = vld [vmem:[%s239 + $0x2c4] sm:$0xf]
        %v469 = vld [vmem:[%s239 + $0x2c8] sm:$0xf]
        %v470 = vld [vmem:[%s239 + $0x2cc] sm:$0xf]
        %v471 = vld [vmem:[%s239 + $0x2d0] sm:$0xf]
        %v472 = vld [vmem:[%s239 + $0x2d4] sm:$0xf]
        %v473 = vld [vmem:[%s239 + $0x2d8] sm:$0xf]
        %v474 = vld [vmem:[%s239 + $0x2dc] sm:$0xf]
        %v475 = vld [vmem:[%s239 + $0x2e0] sm:$0xf]
        %v476 = vld [vmem:[%s239 + $0x2e4] sm:$0xf]
        %v477 = vld [vmem:[%s239 + $0x2e8] sm:$0xf]
        %v478 = vld [vmem:[%s239 + $0x2ec] sm:$0xf]
        %v479 = vld [vmem:[%s239 + $0x2f0] sm:$0xf]
        %v480 = vld [vmem:[%s239 + $0x2f4] sm:$0xf]
        %v481 = vld [vmem:[%s239 + $0x2f8] sm:$0xf]
        %v482 = vld [vmem:[%s239 + $0x2fc] sm:$0xf]
        %v483 = vld [vmem:[%s239 + $0x300] sm:$0xf]
        %v484 = vld [vmem:[%s239 + $0x304] sm:$0xf]
        %v485 = vld [vmem:[%s239 + $0x308] sm:$0xf]
        %v486 = vld [vmem:[%s239 + $0x30c] sm:$0xf]
        %v487 = vld [vmem:[%s239 + $0x310] sm:$0xf]
        %v488 = vld [vmem:[%s239 + $0x314] sm:$0xf]
        %v489 = vld [vmem:[%s239 + $0x318] sm:$0xf]
        %v490 = vld [vmem:[%s239 + $0x31c] sm:$0xf]
        %v491 = vld [vmem:[%s239 + $0x320] sm:$0xf]
        %v492 = vld [vmem:[%s239 + $0x324] sm:$0xf]
        %v493 = vld [vmem:[%s239 + $0x328] sm:$0xf]
        %v494 = vld [vmem:[%s239 + $0x32c] sm:$0xf]
        %v495 = vld [vmem:[%s239 + $0x330] sm:$0xf]
        %v496 = vld [vmem:[%s239 + $0x334] sm:$0xf]
        %v497 = vld [vmem:[%s239 + $0x338] sm:$0xf]
        %v498 = vld [vmem:[%s239 + $0x33c] sm:$0xf]
        %v499 = vld [vmem:[%s239 + $0x340] sm:$0xf]
        %v500 = vld [vmem:[%s239 + $0x344] sm:$0xf]
        %v501 = vld [vmem:[%s239 + $0x348] sm:$0xf]
        %v502 = vld [vmem:[%s239 + $0x34c] sm:$0xf]
        %v503 = vld [vmem:[%s239 + $0x350] sm:$0xf]
        %v504 = vld [vmem:[%s239 + $0x354] sm:$0xf]
        %v505 = vld [vmem:[%s239 + $0x358] sm:$0xf]
        %v506 = vld [vmem:[%s239 + $0x35c] sm:$0xf]
        %v507 = vld [vmem:[%s239 + $0x360] sm:$0xf]
        %v508 = vld [vmem:[%s239 + $0x364] sm:$0xf]
        %v509 = vld [vmem:[%s239 + $0x368] sm:$0xf]
        %v510 = vld [vmem:[%s239 + $0x36c] sm:$0xf]
        %v511 = vld [vmem:[%s239 + $0x370] sm:$0xf]
        %v512 = vld [vmem:[%s239 + $0x374] sm:$0xf]
        %v513 = vld [vmem:[%s239 + $0x378] sm:$0xf]
        %v514 = vld [vmem:[%s239 + $0x37c] sm:$0xf]
        %v515 = vld [vmem:[%s239 + $0x380] sm:$0xf]
        %v516 = vld [vmem:[%s239 + $0x384] sm:$0xf]
        %v517 = vld [vmem:[%s239 + $0x388] sm:$0xf]
        %v518 = vld [vmem:[%s239 + $0x38c] sm:$0xf]
        %v519 = vld [vmem:[%s239 + $0x390] sm:$0xf]
        %v520 = vld [vmem:[%s239 + $0x394] sm:$0xf]
        %v521 = vld [vmem:[%s239 + $0x398] sm:$0xf]
        %v522 = vld [vmem:[%s239 + $0x39c] sm:$0xf]
        %v523 = vld [vmem:[%s239 + $0x3a0] sm:$0xf]
        %v524 = vld [vmem:[%s239 + $0x3a4] sm:$0xf]
        %v525 = vld [vmem:[%s239 + $0x3a8] sm:$0xf]
        %v526 = vld [vmem:[%s239 + $0x3ac] sm:$0xf]
        %v527 = vld [vmem:[%s239 + $0x3b0] sm:$0xf]
        %v528 = vld [vmem:[%s239 + $0x3b4] sm:$0xf]
        %v529 = vld [vmem:[%s239 + $0x3b8] sm:$0xf]
        %v530 = vld [vmem:[%s239 + $0x3bc] sm:$0xf]
        %v531 = vld [vmem:[%s239 + $0x3c0] sm:$0xf]
        %v532 = vld [vmem:[%s239 + $0x3c4] sm:$0xf]
        %v533 = vld [vmem:[%s239 + $0x3c8] sm:$0xf]
        %v534 = vld [vmem:[%s239 + $0x3cc] sm:$0xf]
        %v535 = vld [vmem:[%s239 + $0x3d0] sm:$0xf]
        %v536 = vld [vmem:[%s239 + $0x3d4] sm:$0xf]
        %v537 = vld [vmem:[%s239 + $0x3d8] sm:$0xf]
        %v538 = vld [vmem:[%s239 + $0x3dc] sm:$0xf]
        %v539 = vld [vmem:[%s239 + $0x3e0] sm:$0xf]
        %v540 = vld [vmem:[%s239 + $0x3e4] sm:$0xf]
        %v541 = vld [vmem:[%s239 + $0x3e8] sm:$0xf]
        %v542 = vld [vmem:[%s239 + $0x3ec] sm:$0xf]
        %v543 = vld [vmem:[%s239 + $0x3f0] sm:$0xf]
        %v544 = vld [vmem:[%s239 + $0x3f4] sm:$0xf]
        %v545 = vld [vmem:[%s239 + $0x3f8] sm:$0xf]
        %v546 = vld [vmem:[%s239 + $0x3fc] sm:$0xf]
        %v547 = vld [vmem:[%s239 + $0x400] sm:$0xf]
        %v548 = vld [vmem:[%s239 + $0x404] sm:$0xf]
        %v549 = vld [vmem:[%s239 + $0x408] sm:$0xf]
        %v550 = vld [vmem:[%s239 + $0x40c] sm:$0xf]
        %v551 = vld [vmem:[%s239 + $0x410] sm:$0xf]
        %v552 = vld [vmem:[%s239 + $0x414] sm:$0xf]
        %v553 = vld [vmem:[%s239 + $0x418] sm:$0xf]
        %v554 = vld [vmem:[%s239 + $0x41c] sm:$0xf]
        %v555 = vld [vmem:[%s239 + $0x420] sm:$0xf]
        %v556 = vld [vmem:[%s239 + $0x424] sm:$0xf]
        %v557 = vld [vmem:[%s239 + $0x428] sm:$0xf]
        %v558 = vld [vmem:[%s239 + $0x42c] sm:$0xf]
        %v559 = vld [vmem:[%s239 + $0x430] sm:$0xf]
        %v560 = vld [vmem:[%s239 + $0x434] sm:$0xf]
        %v561 = vld [vmem:[%s239 + $0x438] sm:$0xf]
        %v562 = vld [vmem:[%s239 + $0x43c] sm:$0xf]
        %v563 = vld [vmem:[%s239 + $0x440] sm:$0xf]
        %v564 = vld [vmem:[%s239 + $0x444] sm:$0xf]
        %v565 = vld [vmem:[%s239 + $0x448] sm:$0xf]
        %v566 = vld [vmem:[%s239 + $0x44c] sm:$0xf]
        %v567 = vld [vmem:[%s239 + $0x450] sm:$0xf]
        %v568 = vld [vmem:[%s239 + $0x454] sm:$0xf]
        %v569 = vld [vmem:[%s239 + $0x458] sm:$0xf]
        %v570 = vld [vmem:[%s239 + $0x45c] sm:$0xf]
        %v571 = vld [vmem:[%s239 + $0x460] sm:$0xf]
        %v572 = vld [vmem:[%s239 + $0x464] sm:$0xf]
        %v573 = vld [vmem:[%s239 + $0x468] sm:$0xf]
        %v574 = vld [vmem:[%s239 + $0x46c] sm:$0xf]
        %v575 = vld [vmem:[%s239 + $0x470] sm:$0xf]
        %v576 = vld [vmem:[%s239 + $0x474] sm:$0xf]
        %v577 = vld [vmem:[%s239 + $0x478] sm:$0xf]
        %v578 = vld [vmem:[%s239 + $0x47c] sm:$0xf]
        %580 = vst [vmem:[#allocation1] ss:$9 sm:$0xff] %v288
        %v581 = vld [vmem:[#allocation1] sm:$0xff]
        %v582 = vld [vmem:[#allocation1 + $0x9] sm:$0xff]
        %v583 = vld [vmem:[#allocation1 + $0x12] sm:$0xff]
        %v584 = vld [vmem:[#allocation1 + $0x1b] sm:$0xff]
        %v585 = vld [vmem:[#allocation1 + $0x24] sm:$0xff]
        %v586 = vld [vmem:[#allocation1 + $0x2d] sm:$0xff]
        %v587 = vld [vmem:[#allocation1 + $0x36] sm:$0xff]
        %v588 = vld [vmem:[#allocation1 + $0x3f] sm:$0xff]
        %590 = vst [vmem:[#allocation1] ss:$9 sm:$0xff] %v289
        %v591 = vld [vmem:[#allocation1] sm:$0xff]
        %v592 = vld [vmem:[#allocation1 + $0x9] sm:$0xff]
        %v593 = vld [vmem:[#allocation1 + $0x12] sm:$0xff]
        %v594 = vld [vmem:[#allocation1 + $0x1b] sm:$0xff]
        %v595 = vld [vmem:[#allocation1 + $0x24] sm:$0xff]
        %v596 = vld [vmem:[#allocation1 + $0x2d] sm:$0xff]
        %v597 = vld [vmem:[#allocation1 + $0x36] sm:$0xff]
        %v598 = vld [vmem:[#allocation1 + $0x3f] sm:$0xff]
        %600 = vst [vmem:[#allocation1] ss:$9 sm:$0xff] %v290
        %v601 = vld [vmem:[#allocation1] sm:$0xff]
        %v602 = vld [vmem:[#allocation1 + $0x9] sm:$0xff]
        %v909 = vunpack.c.l.b16 %v291
        %v910 = vunpack.c.l.b16 %v292
        %v911 = vunpack.c.l.b16 %v293
        %v912 = vunpack.c.l.b16 %v294
        %v913 = vunpack.c.l.b16 %v295
        %v914 = vunpack.c.l.b16 %v296
        %v915 = vunpack.c.l.b16 %v297
        %v916 = vunpack.c.l.b16 %v298
        %v917 = vunpack.c.l.b16 %v299
        %v918 = vunpack.c.l.b16 %v300
        %v919 = vunpack.c.l.b16 %v301
        %v920 = vunpack.c.l.b16 %v302
        %v921 = vunpack.c.l.b16 %v303
        %v922 = vunpack.c.l.b16 %v304
        %v923 = vunpack.c.l.b16 %v305
        %v924 = vunpack.c.l.b16 %v306
        %v925 = vunpack.c.l.b16 %v307
        %v926 = vunpack.c.l.b16 %v308
        %v927 = vunpack.c.l.b16 %v309
        %v928 = vunpack.c.l.b16 %v310
        %v929 = vunpack.c.l.b16 %v311
        %v930 = vunpack.c.l.b16 %v312
        %v931 = vunpack.c.l.b16 %v313
        %v932 = vunpack.c.l.b16 %v314
        %v933 = vunpack.c.l.b16 %v315
        %v934 = vunpack.c.l.b16 %v316
        %v935 = vunpack.c.l.b16 %v317
        %v936 = vunpack.c.l.b16 %v318
        %v937 = vunpack.c.l.b16 %v319
        %v938 = vunpack.c.l.b16 %v320
        %v939 = vunpack.c.l.b16 %v321
        %v940 = vunpack.c.l.b16 %v322
        %v941 = vunpack.c.l.b16 %v323
        %v942 = vunpack.c.l.b16 %v324
        %v943 = vunpack.c.l.b16 %v325
        %v944 = vunpack.c.l.b16 %v326
        %v945 = vunpack.c.l.b16 %v327
        %v946 = vunpack.c.l.b16 %v328
        %v947 = vunpack.c.l.b16 %v329
        %v948 = vunpack.c.l.b16 %v330
        %v949 = vunpack.c.l.b16 %v331
        %v950 = vunpack.c.l.b16 %v332
        %v951 = vunpack.c.l.b16 %v333
        %v952 = vunpack.c.l.b16 %v334
        %v953 = vunpack.c.l.b16 %v335
        %v954 = vunpack.c.l.b16 %v336
        %v955 = vunpack.c.l.b16 %v337
        %v956 = vunpack.c.l.b16 %v338
        %v957 = vunpack.c.l.b16 %v339
        %v958 = vunpack.c.l.b16 %v340
        %v959 = vunpack.c.l.b16 %v341
        %v960 = vunpack.c.l.b16 %v342
        %v961 = vunpack.c.l.b16 %v343
        %v962 = vunpack.c.l.b16 %v344
        %v963 = vunpack.c.l.b16 %v345
        %v964 = vunpack.c.l.b16 %v346
        %v965 = vunpack.c.l.b16 %v347
        %v966 = vunpack.c.l.b16 %v348
        %v967 = vunpack.c.l.b16 %v349
        %v968 = vunpack.c.l.b16 %v350
        %v969 = vunpack.c.l.b16 %v351
        %v970 = vunpack.c.l.b16 %v352
        %v971 = vunpack.c.l.b16 %v353
        %v972 = vunpack.c.l.b16 %v354
        %v973 = vunpack.c.l.b16 %v355
        %v974 = vunpack.c.l.b16 %v356
        %v975 = vunpack.c.l.b16 %v357
        %v976 = vunpack.c.l.b16 %v358
        %v977 = vunpack.c.l.b16 %v359
        %v978 = vunpack.c.l.b16 %v360
        %v979 = vunpack.c.l.b16 %v361
        %v980 = vunpack.c.l.b16 %v362
        %v981 = vunpack.c.l.b16 %v363
        %v982 = vunpack.c.l.b16 %v364
        %v983 = vunpack.c.l.b16 %v365
        %v984 = vunpack.c.l.b16 %v366
        %v985 = vunpack.c.l.b16 %v367
        %v986 = vunpack.c.l.b16 %v368
        %v987 = vunpack.c.l.b16 %v369
        %v988 = vunpack.c.l.b16 %v370
        %v989 = vunpack.c.l.b16 %v371
        %v990 = vunpack.c.l.b16 %v372
        %v991 = vunpack.c.l.b16 %v373
        %v992 = vunpack.c.l.b16 %v374
        %v993 = vunpack.c.l.b16 %v375
        %v994 = vunpack.c.l.b16 %v376
        %v995 = vunpack.c.l.b16 %v377
        %v996 = vunpack.c.l.b16 %v378
        %v997 = vunpack.c.l.b16 %v379
        %v998 = vunpack.c.l.b16 %v380
        %v999 = vunpack.c.l.b16 %v381
        %v1000 = vunpack.c.l.b16 %v382
        %v1001 = vunpack.c.l.b16 %v383
        %v1002 = vunpack.c.l.b16 %v384
        %v1003 = vunpack.c.l.b16 %v385
        %v1004 = vunpack.c.l.b16 %v386
        %v1005 = vunpack.c.l.b16 %v387
        %v1006 = vunpack.c.l.b16 %v388
        %v1007 = vunpack.c.l.b16 %v389
        %v1008 = vunpack.c.l.b16 %v390
        %v1009 = vunpack.c.l.b16 %v391
        %v1010 = vunpack.c.l.b16 %v392
        %v1011 = vunpack.c.l.b16 %v393
        %v1012 = vunpack.c.l.b16 %v394
        %v1013 = vunpack.c.l.b16 %v395
        %v1014 = vunpack.c.l.b16 %v396
        %v1015 = vunpack.c.l.b16 %v397
        %v1016 = vunpack.c.l.b16 %v398
        %v1017 = vunpack.c.l.b16 %v399
        %v1018 = vunpack.c.l.b16 %v400
        %v1019 = vunpack.c.l.b16 %v401
        %v1020 = vunpack.c.l.b16 %v402
        %v1021 = vunpack.c.l.b16 %v403
        %v1022 = vunpack.c.l.b16 %v404
        %v1023 = vunpack.c.l.b16 %v405
        %v1024 = vunpack.c.l.b16 %v406
        %v1025 = vunpack.c.l.b16 %v407
        %v1026 = vunpack.c.l.b16 %v408
        %v1027 = vunpack.c.l.b16 %v409
        %v1028 = vunpack.c.l.b16 %v410
        %v1029 = vunpack.c.l.b16 %v411
        %v1030 = vunpack.c.l.b16 %v412
        %v1031 = vunpack.c.l.b16 %v413
        %v1032 = vunpack.c.l.b16 %v414
        %v1033 = vunpack.c.l.b16 %v415
        %v1034 = vunpack.c.l.b16 %v416
        %v1035 = vunpack.c.l.b16 %v417
        %v1036 = vunpack.c.l.b16 %v418
        %v1037 = vunpack.c.l.b16 %v419
        %v1038 = vunpack.c.l.b16 %v420
        %v1039 = vunpack.c.l.b16 %v421
        %v1040 = vunpack.c.l.b16 %v422
        %v1041 = vunpack.c.l.b16 %v423
        %v1042 = vunpack.c.l.b16 %v424
        %v1043 = vunpack.c.l.b16 %v425
        %v1044 = vunpack.c.l.b16 %v426
        %v1045 = vunpack.c.l.b16 %v427
        %v1046 = vunpack.c.l.b16 %v428
        %v1047 = vunpack.c.l.b16 %v429
        %v1048 = vunpack.c.l.b16 %v430
        %v1049 = vunpack.c.l.b16 %v431
        %v1050 = vunpack.c.l.b16 %v432
        %v1051 = vunpack.c.l.b16 %v433
        %v1052 = vunpack.c.l.b16 %v434
        %v1053 = vunpack.c.l.b16 %v435
        %v1054 = vunpack.c.l.b16 %v436
        %v1055 = vunpack.c.l.b16 %v437
        %v1056 = vunpack.c.l.b16 %v438
        %v1057 = vunpack.c.l.b16 %v439
        %v1058 = vunpack.c.l.b16 %v440
        %v1059 = vunpack.c.l.b16 %v441
        %v1060 = vunpack.c.l.b16 %v442
        %v1061 = vunpack.c.l.b16 %v443
        %v1062 = vunpack.c.l.b16 %v444
        %v1063 = vunpack.c.l.b16 %v445
        %v1064 = vunpack.c.l.b16 %v446
        %v1065 = vunpack.c.l.b16 %v447
        %v1066 = vunpack.c.l.b16 %v448
        %v1067 = vunpack.c.l.b16 %v449
        %v1068 = vunpack.c.l.b16 %v450
        %v1069 = vunpack.c.l.b16 %v451
        %v1070 = vunpack.c.l.b16 %v452
        %v1071 = vunpack.c.l.b16 %v453
        %v1072 = vunpack.c.l.b16 %v454
        %v1073 = vunpack.c.l.b16 %v455
        %v1074 = vunpack.c.l.b16 %v456
        %v1075 = vunpack.c.l.b16 %v457
        %v1076 = vunpack.c.l.b16 %v458
        %v1077 = vunpack.c.l.b16 %v459
        %v1078 = vunpack.c.l.b16 %v460
        %v1079 = vunpack.c.l.b16 %v461
        %v1080 = vunpack.c.l.b16 %v462
        %v1081 = vunpack.c.l.b16 %v463
        %v1082 = vunpack.c.l.b16 %v464
        %v1083 = vunpack.c.l.b16 %v465
        %v1084 = vunpack.c.l.b16 %v466
        %v1085 = vunpack.c.l.b16 %v467
        %v1086 = vunpack.c.l.b16 %v468
        %v1087 = vunpack.c.l.b16 %v469
        %v1088 = vunpack.c.l.b16 %v470
        %v1089 = vunpack.c.l.b16 %v471
        %v1090 = vunpack.c.l.b16 %v472
        %v1091 = vunpack.c.l.b16 %v473
        %v1092 = vunpack.c.l.b16 %v474
        %v1093 = vunpack.c.l.b16 %v475
        %v1094 = vunpack.c.l.b16 %v476
        %v1095 = vunpack.c.l.b16 %v477
        %v1096 = vunpack.c.l.b16 %v478
        %v1097 = vunpack.c.l.b16 %v479
        %v1098 = vunpack.c.l.b16 %v480
        %v1099 = vunpack.c.l.b16 %v481
        %v1100 = vunpack.c.l.b16 %v482
        %v1101 = vunpack.c.l.b16 %v483
        %v1102 = vunpack.c.l.b16 %v484
        %v1103 = vunpack.c.l.b16 %v485
        %v1104 = vunpack.c.l.b16 %v486
        %v1105 = vunpack.c.l.b16 %v487
        %v1106 = vunpack.c.l.b16 %v488
        %v1107 = vunpack.c.l.b16 %v489
        %v1108 = vunpack.c.l.b16 %v490
        %v1109 = vunpack.c.l.b16 %v491
        %v1110 = vunpack.c.l.b16 %v492
        %v1111 = vunpack.c.l.b16 %v493
        %v1112 = vunpack.c.l.b16 %v494
        %v1113 = vunpack.c.l.b16 %v495
        %v1114 = vunpack.c.l.b16 %v496
        %v1115 = vunpack.c.l.b16 %v497
        %v1116 = vunpack.c.l.b16 %v498
        %v1117 = vunpack.c.l.b16 %v499
        %v1118 = vunpack.c.l.b16 %v500
        %v1119 = vunpack.c.l.b16 %v501
        %v1120 = vunpack.c.l.b16 %v502
        %v1121 = vunpack.c.l.b16 %v503
        %v1122 = vunpack.c.l.b16 %v504
        %v1123 = vunpack.c.l.b16 %v505
        %v1124 = vunpack.c.l.b16 %v506
        %v1125 = vunpack.c.l.b16 %v507
        %v1126 = vunpack.c.l.b16 %v508
        %v1127 = vunpack.c.l.b16 %v509
        %v1128 = vunpack.c.l.b16 %v510
        %v1129 = vunpack.c.l.b16 %v511
        %v1130 = vunpack.c.l.b16 %v512
        %v1131 = vunpack.c.l.b16 %v513
        %v1132 = vunpack.c.l.b16 %v514
        %v1133 = vunpack.c.l.b16 %v515
        %v1134 = vunpack.c.l.b16 %v516
        %v1135 = vunpack.c.l.b16 %v517
        %v1136 = vunpack.c.l.b16 %v518
        %v1137 = vunpack.c.l.b16 %v519
        %v1138 = vunpack.c.l.b16 %v520
        %v1139 = vunpack.c.l.b16 %v521
        %v1140 = vunpack.c.l.b16 %v522
        %v1141 = vunpack.c.l.b16 %v523
        %v1142 = vunpack.c.l.b16 %v524
        %v1143 = vunpack.c.l.b16 %v525
        %v1144 = vunpack.c.l.b16 %v526
        %v1145 = vunpack.c.l.b16 %v527
        %v1146 = vunpack.c.l.b16 %v528
        %v1147 = vunpack.c.l.b16 %v529
        %v1148 = vunpack.c.l.b16 %v530
        %v1149 = vunpack.c.l.b16 %v531
        %v1150 = vunpack.c.l.b16 %v532
        %v1151 = vunpack.c.l.b16 %v533
        %v1152 = vunpack.c.l.b16 %v534
        %v1153 = vunpack.c.l.b16 %v535
        %v1154 = vunpack.c.l.b16 %v536
        %v1155 = vunpack.c.l.b16 %v537
        %v1156 = vunpack.c.l.b16 %v538
        %v1157 = vunpack.c.l.b16 %v539
        %v1158 = vunpack.c.l.b16 %v540
        %v1159 = vunpack.c.l.b16 %v541
        %v1160 = vunpack.c.l.b16 %v542
        %v1161 = vunpack.c.l.b16 %v543
        %v1162 = vunpack.c.l.b16 %v544
        %v1163 = vunpack.c.l.b16 %v545
        %v1164 = vunpack.c.l.b16 %v546
        %v1165 = vunpack.c.l.b16 %v547
        %v1166 = vunpack.c.l.b16 %v548
        %v1167 = vunpack.c.l.b16 %v549
        %v1168 = vunpack.c.l.b16 %v550
        %v1169 = vunpack.c.l.b16 %v551
        %v1170 = vunpack.c.l.b16 %v552
        %v1171 = vunpack.c.l.b16 %v553
        %v1172 = vunpack.c.l.b16 %v554
        %v1173 = vunpack.c.l.b16 %v555
        %v1174 = vunpack.c.l.b16 %v556
        %v1175 = vunpack.c.l.b16 %v557
        %v1176 = vunpack.c.l.b16 %v558
        %v1177 = vunpack.c.l.b16 %v559
        %v1178 = vunpack.c.l.b16 %v560
        %v1179 = vunpack.c.l.b16 %v561
        %v1180 = vunpack.c.l.b16 %v562
        %v1181 = vunpack.c.l.b16 %v563
        %v1182 = vunpack.c.l.b16 %v564
        %v1183 = vunpack.c.l.b16 %v565
        %v1184 = vunpack.c.l.b16 %v566
        %v1185 = vunpack.c.l.b16 %v567
        %v1186 = vunpack.c.l.b16 %v568
        %v1187 = vunpack.c.l.b16 %v569
        %v1188 = vunpack.c.l.b16 %v570
        %v1189 = vunpack.c.l.b16 %v571
        %v1190 = vunpack.c.l.b16 %v572
        %v1191 = vunpack.c.l.b16 %v573
        %v1192 = vunpack.c.l.b16 %v574
        %v1193 = vunpack.c.l.b16 %v575
        %v1194 = vunpack.c.l.b16 %v576
        %v1195 = vunpack.c.l.b16 %v577
        %v1196 = vunpack.c.l.b16 %v578
        %v1197 = vpack.c.b16 %v910, %v909
        %v1198 = vpack.c.b16 %v912, %v911
        %v1199 = vpack.c.b16 %v914, %v913
        %v1200 = vpack.c.b16 %v916, %v915
        %v1201 = vpack.c.b16 %v918, %v917
        %v1202 = vpack.c.b16 %v920, %v919
        %v1203 = vpack.c.b16 %v922, %v921
        %v1204 = vpack.c.b16 %v924, %v923
        %v1205 = vpack.c.b16 %v926, %v925
        %v1206 = vpack.c.b16 %v928, %v927
        %v1207 = vpack.c.b16 %v930, %v929
        %v1208 = vpack.c.b16 %v932, %v931
        %v1209 = vpack.c.b16 %v934, %v933
        %v1210 = vpack.c.b16 %v936, %v935
        %v1211 = vpack.c.b16 %v938, %v937
        %v1212 = vpack.c.b16 %v940, %v939
        %v1213 = vpack.c.b16 %v942, %v941
        %v1214 = vpack.c.b16 %v944, %v943
        %v1215 = vpack.c.b16 %v946, %v945
        %v1216 = vpack.c.b16 %v948, %v947
        %v1217 = vpack.c.b16 %v950, %v949
        %v1218 = vpack.c.b16 %v952, %v951
        %v1219 = vpack.c.b16 %v954, %v953
        %v1220 = vpack.c.b16 %v956, %v955
        %v1221 = vpack.c.b16 %v958, %v957
        %v1222 = vpack.c.b16 %v960, %v959
        %v1223 = vpack.c.b16 %v962, %v961
        %v1224 = vpack.c.b16 %v964, %v963
        %v1225 = vpack.c.b16 %v966, %v965
        %v1226 = vpack.c.b16 %v968, %v967
        %v1227 = vpack.c.b16 %v970, %v969
        %v1228 = vpack.c.b16 %v972, %v971
        %v1229 = vpack.c.b16 %v974, %v973
        %v1230 = vpack.c.b16 %v976, %v975
        %v1231 = vpack.c.b16 %v978, %v977
        %v1232 = vpack.c.b16 %v980, %v979
        %v1233 = vpack.c.b16 %v982, %v981
        %v1234 = vpack.c.b16 %v984, %v983
        %v1235 = vpack.c.b16 %v986, %v985
        %v1236 = vpack.c.b16 %v988, %v987
        %v1237 = vpack.c.b16 %v990, %v989
        %v1238 = vpack.c.b16 %v992, %v991
        %v1239 = vpack.c.b16 %v994, %v993
        %v1240 = vpack.c.b16 %v996, %v995
        %v1241 = vpack.c.b16 %v998, %v997
        %v1242 = vpack.c.b16 %v1000, %v999
        %v1243 = vpack.c.b16 %v1002, %v1001
        %v1244 = vpack.c.b16 %v1004, %v1003
        %v1245 = vpack.c.b16 %v1006, %v1005
        %v1246 = vpack.c.b16 %v1008, %v1007
        %v1247 = vpack.c.b16 %v1010, %v1009
        %v1248 = vpack.c.b16 %v1012, %v1011
        %v1249 = vpack.c.b16 %v1014, %v1013
        %v1250 = vpack.c.b16 %v1016, %v1015
        %v1251 = vpack.c.b16 %v1018, %v1017
        %v1252 = vpack.c.b16 %v1020, %v1019
        %v1253 = vpack.c.b16 %v1022, %v1021
        %v1254 = vpack.c.b16 %v1024, %v1023
        %v1255 = vpack.c.b16 %v1026, %v1025
        %v1256 = vpack.c.b16 %v1028, %v1027
        %v1257 = vpack.c.b16 %v1030, %v1029
        %v1258 = vpack.c.b16 %v1032, %v1031
        %v1259 = vpack.c.b16 %v1034, %v1033
        %v1260 = vpack.c.b16 %v1036, %v1035
        %v1261 = vpack.c.b16 %v1038, %v1037
        %v1262 = vpack.c.b16 %v1040, %v1039
        %v1263 = vpack.c.b16 %v1042, %v1041
        %v1264 = vpack.c.b16 %v1044, %v1043
        %v1265 = vpack.c.b16 %v1046, %v1045
        %v1266 = vpack.c.b16 %v1048, %v1047
        %v1267 = vpack.c.b16 %v1050, %v1049
        %v1268 = vpack.c.b16 %v1052, %v1051
        %v1269 = vpack.c.b16 %v1054, %v1053
        %v1270 = vpack.c.b16 %v1056, %v1055
        %v1271 = vpack.c.b16 %v1058, %v1057
        %v1272 = vpack.c.b16 %v1060, %v1059
        %v1273 = vpack.c.b16 %v1062, %v1061
        %v1274 = vpack.c.b16 %v1064, %v1063
        %v1275 = vpack.c.b16 %v1066, %v1065
        %v1276 = vpack.c.b16 %v1068, %v1067
        %v1277 = vpack.c.b16 %v1070, %v1069
        %v1278 = vpack.c.b16 %v1072, %v1071
        %v1279 = vpack.c.b16 %v1074, %v1073
        %v1280 = vpack.c.b16 %v1076, %v1075
        %v1281 = vpack.c.b16 %v1078, %v1077
        %v1282 = vpack.c.b16 %v1080, %v1079
        %v1283 = vpack.c.b16 %v1082, %v1081
        %v1284 = vpack.c.b16 %v1084, %v1083
        %v1285 = vpack.c.b16 %v1086, %v1085
        %v1286 = vpack.c.b16 %v1088, %v1087
        %v1287 = vpack.c.b16 %v1090, %v1089
        %v1288 = vpack.c.b16 %v1092, %v1091
        %v1289 = vpack.c.b16 %v1094, %v1093
        %v1290 = vpack.c.b16 %v1096, %v1095
        %v1291 = vpack.c.b16 %v1098, %v1097
        %v1292 = vpack.c.b16 %v1100, %v1099
        %v1293 = vpack.c.b16 %v1102, %v1101
        %v1294 = vpack.c.b16 %v1104, %v1103
        %v1295 = vpack.c.b16 %v1106, %v1105
        %v1296 = vpack.c.b16 %v1108, %v1107
        %v1297 = vpack.c.b16 %v1110, %v1109
        %v1298 = vpack.c.b16 %v1112, %v1111
        %v1299 = vpack.c.b16 %v1114, %v1113
        %v1300 = vpack.c.b16 %v1116, %v1115
        %v1301 = vpack.c.b16 %v1118, %v1117
        %v1302 = vpack.c.b16 %v1120, %v1119
        %v1303 = vpack.c.b16 %v1122, %v1121
        %v1304 = vpack.c.b16 %v1124, %v1123
        %v1305 = vpack.c.b16 %v1126, %v1125
        %v1306 = vpack.c.b16 %v1128, %v1127
        %v1307 = vpack.c.b16 %v1130, %v1129
        %v1308 = vpack.c.b16 %v1132, %v1131
        %v1309 = vpack.c.b16 %v1134, %v1133
        %v1310 = vpack.c.b16 %v1136, %v1135
        %v1311 = vpack.c.b16 %v1138, %v1137
        %v1312 = vpack.c.b16 %v1140, %v1139
        %v1313 = vpack.c.b16 %v1142, %v1141
        %v1314 = vpack.c.b16 %v1144, %v1143
        %v1315 = vpack.c.b16 %v1146, %v1145
        %v1316 = vpack.c.b16 %v1148, %v1147
        %v1317 = vpack.c.b16 %v1150, %v1149
        %v1318 = vpack.c.b16 %v1152, %v1151
        %v1319 = vpack.c.b16 %v1154, %v1153
        %v1320 = vpack.c.b16 %v1156, %v1155
        %v1321 = vpack.c.b16 %v1158, %v1157
        %v1322 = vpack.c.b16 %v1160, %v1159
        %v1323 = vpack.c.b16 %v1162, %v1161
        %v1324 = vpack.c.b16 %v1164, %v1163
        %v1325 = vpack.c.b16 %v1166, %v1165
        %v1326 = vpack.c.b16 %v1168, %v1167
        %v1327 = vpack.c.b16 %v1170, %v1169
        %v1328 = vpack.c.b16 %v1172, %v1171
        %v1329 = vpack.c.b16 %v1174, %v1173
        %v1330 = vpack.c.b16 %v1176, %v1175
        %v1331 = vpack.c.b16 %v1178, %v1177
        %v1332 = vpack.c.b16 %v1180, %v1179
        %v1333 = vpack.c.b16 %v1182, %v1181
        %v1334 = vpack.c.b16 %v1184, %v1183
        %v1335 = vpack.c.b16 %v1186, %v1185
        %v1336 = vpack.c.b16 %v1188, %v1187
        %v1337 = vpack.c.b16 %v1190, %v1189
        %v1338 = vpack.c.b16 %v1192, %v1191
        %v1339 = vpack.c.b16 %v1194, %v1193
        %v1340 = vpack.c.b16 %v1196, %v1195
        %1485 = vmatpush.bf16.msra.mxu0 %v1204
        %1486 = vmatpush.bf16.msra.mxu0 %v1203
        %1487 = vmatpush.bf16.msra.mxu0 %v1202
        %1488 = vmatpush.bf16.msra.mxu0 %v1201
        %1489 = vmatpush.bf16.msra.mxu0 %v1200
        %1490 = vmatpush.bf16.msra.mxu0 %v1199
        %1491 = vmatpush.bf16.msra.mxu0 %v1198
        %1492 = vmatpush.bf16.msra.mxu0 %v1197
        %1493 = vmatmul.bf16.gmra.mxu0 %v581
        %v1494 = vpop.f32.mrf.mxu0
        %v1495 = vadd.f32 0.0, %v1494
        %v1496 = vpop.f32.mrf.mxu0
        %1497 = vdwg.mxu0
        %1498 = vmatpush.bf16.msra.mxu0 %v1212
        %1499 = vmatpush.bf16.msra.mxu0 %v1211
        %1500 = vmatpush.bf16.msra.mxu0 %v1210
        %1501 = vmatpush.bf16.msra.mxu0 %v1209
        %1502 = vmatpush.bf16.msra.mxu0 %v1208
        %1503 = vmatpush.bf16.msra.mxu0 %v1207
        %1504 = vmatpush.bf16.msra.mxu0 %v1206
        %1505 = vmatpush.bf16.msra.mxu0 %v1205
        %1506 = vmatmul.bf16.gmra.mxu0 %v582
        %v1507 = vpop.f32.mrf.mxu0
        %v1508 = vadd.f32 %v1495, %v1507
        %v1509 = vpop.f32.mrf.mxu0
        %1510 = vdwg.mxu0
        %1511 = vmatpush.bf16.msra.mxu0 %v1220
        %1512 = vmatpush.bf16.msra.mxu0 %v1219
        %1513 = vmatpush.bf16.msra.mxu0 %v1218
        %1514 = vmatpush.bf16.msra.mxu0 %v1217
        %1515 = vmatpush.bf16.msra.mxu0 %v1216
        %1516 = vmatpush.bf16.msra.mxu0 %v1215
        %1517 = vmatpush.bf16.msra.mxu0 %v1214
        %1518 = vmatpush.bf16.msra.mxu0 %v1213
        %1519 = vmatmul.bf16.gmra.mxu0 %v583
        %v1520 = vpop.f32.mrf.mxu0
        %v1521 = vadd.f32 %v1508, %v1520
        %v1522 = vpop.f32.mrf.mxu0
        %1523 = vdwg.mxu0
        %1524 = vmatpush.bf16.msra.mxu0 %v1228
        %1525 = vmatpush.bf16.msra.mxu0 %v1227
        %1526 = vmatpush.bf16.msra.mxu0 %v1226
        %1527 = vmatpush.bf16.msra.mxu0 %v1225
        %1528 = vmatpush.bf16.msra.mxu0 %v1224
        %1529 = vmatpush.bf16.msra.mxu0 %v1223
        %1530 = vmatpush.bf16.msra.mxu0 %v1222
        %1531 = vmatpush.bf16.msra.mxu0 %v1221
        %1532 = vmatmul.bf16.gmra.mxu0 %v584
        %v1533 = vpop.f32.mrf.mxu0
        %v1534 = vadd.f32 %v1521, %v1533
        %v1535 = vpop.f32.mrf.mxu0
        %1536 = vdwg.mxu0
        %1537 = vmatpush.bf16.msra.mxu0 %v1236
        %1538 = vmatpush.bf16.msra.mxu0 %v1235
        %1539 = vmatpush.bf16.msra.mxu0 %v1234
        %1540 = vmatpush.bf16.msra.mxu0 %v1233
        %1541 = vmatpush.bf16.msra.mxu0 %v1232
        %1542 = vmatpush.bf16.msra.mxu0 %v1231
        %1543 = vmatpush.bf16.msra.mxu0 %v1230
        %1544 = vmatpush.bf16.msra.mxu0 %v1229
        %1545 = vmatmul.bf16.gmra.mxu0 %v585
        %v1546 = vpop.f32.mrf.mxu0
        %v1547 = vadd.f32 %v1534, %v1546
        %v1548 = vpop.f32.mrf.mxu0
        %1549 = vdwg.mxu0
        %1550 = vmatpush.bf16.msra.mxu0 %v1244
        %1551 = vmatpush.bf16.msra.mxu0 %v1243
        %1552 = vmatpush.bf16.msra.mxu0 %v1242
        %1553 = vmatpush.bf16.msra.mxu0 %v1241
        %1554 = vmatpush.bf16.msra.mxu0 %v1240
        %1555 = vmatpush.bf16.msra.mxu0 %v1239
        %1556 = vmatpush.bf16.msra.mxu0 %v1238
        %1557 = vmatpush.bf16.msra.mxu0 %v1237
        %1558 = vmatmul.bf16.gmra.mxu0 %v586
        %v1559 = vpop.f32.mrf.mxu0
        %v1560 = vadd.f32 %v1547, %v1559
        %v1561 = vpop.f32.mrf.mxu0
        %1562 = vdwg.mxu0
        %1563 = vmatpush.bf16.msra.mxu0 %v1252
        %1564 = vmatpush.bf16.msra.mxu0 %v1251
        %1565 = vmatpush.bf16.msra.mxu0 %v1250
        %1566 = vmatpush.bf16.msra.mxu0 %v1249
        %1567 = vmatpush.bf16.msra.mxu0 %v1248
        %1568 = vmatpush.bf16.msra.mxu0 %v1247
        %1569 = vmatpush.bf16.msra.mxu0 %v1246
        %1570 = vmatpush.bf16.msra.mxu0 %v1245
        %1571 = vmatmul.bf16.gmra.mxu0 %v587
        %v1572 = vpop.f32.mrf.mxu0
        %v1573 = vadd.f32 %v1560, %v1572
        %v1574 = vpop.f32.mrf.mxu0
        %1575 = vdwg.mxu0
        %1576 = vmatpush.bf16.msra.mxu0 %v1260
        %1577 = vmatpush.bf16.msra.mxu0 %v1259
        %1578 = vmatpush.bf16.msra.mxu0 %v1258
        %1579 = vmatpush.bf16.msra.mxu0 %v1257
        %1580 = vmatpush.bf16.msra.mxu0 %v1256
        %1581 = vmatpush.bf16.msra.mxu0 %v1255
        %1582 = vmatpush.bf16.msra.mxu0 %v1254
        %1583 = vmatpush.bf16.msra.mxu0 %v1253
        %1584 = vmatmul.bf16.gmra.mxu0 %v588
        %v1585 = vpop.f32.mrf.mxu0
        %v1586 = vadd.f32 %v1573, %v1585
        %v1587 = vpop.f32.mrf.mxu0
        %1588 = vdwg.mxu0
        %1589 = vmatpush.bf16.msra.mxu0 %v1268
        %1590 = vmatpush.bf16.msra.mxu0 %v1267
        %1591 = vmatpush.bf16.msra.mxu0 %v1266
        %1592 = vmatpush.bf16.msra.mxu0 %v1265
        %1593 = vmatpush.bf16.msra.mxu0 %v1264
        %1594 = vmatpush.bf16.msra.mxu0 %v1263
        %1595 = vmatpush.bf16.msra.mxu0 %v1262
        %1596 = vmatpush.bf16.msra.mxu0 %v1261
        %1597 = vmatmul.bf16.gmra.mxu0 %v591
        %v1598 = vpop.f32.mrf.mxu0
        %v1599 = vadd.f32 %v1586, %v1598
        %v1600 = vpop.f32.mrf.mxu0
        %1601 = vdwg.mxu0
        %1602 = vmatpush.bf16.msra.mxu0 %v1276
        %1603 = vmatpush.bf16.msra.mxu0 %v1275
        %1604 = vmatpush.bf16.msra.mxu0 %v1274
        %1605 = vmatpush.bf16.msra.mxu0 %v1273
        %1606 = vmatpush.bf16.msra.mxu0 %v1272
        %1607 = vmatpush.bf16.msra.mxu0 %v1271
        %1608 = vmatpush.bf16.msra.mxu0 %v1270
        %1609 = vmatpush.bf16.msra.mxu0 %v1269
        %1610 = vmatmul.bf16.gmra.mxu0 %v592
        %v1611 = vpop.f32.mrf.mxu0
        %v1612 = vadd.f32 %v1599, %v1611
        %v1613 = vpop.f32.mrf.mxu0
        %1614 = vdwg.mxu0
        %1615 = vmatpush.bf16.msra.mxu0 %v1284
        %1616 = vmatpush.bf16.msra.mxu0 %v1283
        %1617 = vmatpush.bf16.msra.mxu0 %v1282
        %1618 = vmatpush.bf16.msra.mxu0 %v1281
        %1619 = vmatpush.bf16.msra.mxu0 %v1280
        %1620 = vmatpush.bf16.msra.mxu0 %v1279
        %1621 = vmatpush.bf16.msra.mxu0 %v1278
        %1622 = vmatpush.bf16.msra.mxu0 %v1277
        %1623 = vmatmul.bf16.gmra.mxu0 %v593
        %v1624 = vpop.f32.mrf.mxu0
        %v1625 = vadd.f32 %v1612, %v1624
        %v1626 = vpop.f32.mrf.mxu0
        %1627 = vdwg.mxu0
        %1628 = vmatpush.bf16.msra.mxu0 %v1292
        %1629 = vmatpush.bf16.msra.mxu0 %v1291
        %1630 = vmatpush.bf16.msra.mxu0 %v1290
        %1631 = vmatpush.bf16.msra.mxu0 %v1289
        %1632 = vmatpush.bf16.msra.mxu0 %v1288
        %1633 = vmatpush.bf16.msra.mxu0 %v1287
        %1634 = vmatpush.bf16.msra.mxu0 %v1286
        %1635 = vmatpush.bf16.msra.mxu0 %v1285
        %1636 = vmatmul.bf16.gmra.mxu0 %v594
        %v1637 = vpop.f32.mrf.mxu0
        %v1638 = vadd.f32 %v1625, %v1637
        %v1639 = vpop.f32.mrf.mxu0
        %1640 = vdwg.mxu0
        %1641 = vmatpush.bf16.msra.mxu0 %v1300
        %1642 = vmatpush.bf16.msra.mxu0 %v1299
        %1643 = vmatpush.bf16.msra.mxu0 %v1298
        %1644 = vmatpush.bf16.msra.mxu0 %v1297
        %1645 = vmatpush.bf16.msra.mxu0 %v1296
        %1646 = vmatpush.bf16.msra.mxu0 %v1295
        %1647 = vmatpush.bf16.msra.mxu0 %v1294
        %1648 = vmatpush.bf16.msra.mxu0 %v1293
        %1649 = vmatmul.bf16.gmra.mxu0 %v595
        %v1650 = vpop.f32.mrf.mxu0
        %v1651 = vadd.f32 %v1638, %v1650
        %v1652 = vpop.f32.mrf.mxu0
        %1653 = vdwg.mxu0
        %1654 = vmatpush.bf16.msra.mxu0 %v1308
        %1655 = vmatpush.bf16.msra.mxu0 %v1307
        %1656 = vmatpush.bf16.msra.mxu0 %v1306
        %1657 = vmatpush.bf16.msra.mxu0 %v1305
        %1658 = vmatpush.bf16.msra.mxu0 %v1304
        %1659 = vmatpush.bf16.msra.mxu0 %v1303
        %1660 = vmatpush.bf16.msra.mxu0 %v1302
        %1661 = vmatpush.bf16.msra.mxu0 %v1301
        %1662 = vmatmul.bf16.gmra.mxu0 %v596
        %v1663 = vpop.f32.mrf.mxu0
        %v1664 = vadd.f32 %v1651, %v1663
        %v1665 = vpop.f32.mrf.mxu0
        %1666 = vdwg.mxu0
        %1667 = vmatpush.bf16.msra.mxu0 %v1316
        %1668 = vmatpush.bf16.msra.mxu0 %v1315
        %1669 = vmatpush.bf16.msra.mxu0 %v1314
        %1670 = vmatpush.bf16.msra.mxu0 %v1313
        %1671 = vmatpush.bf16.msra.mxu0 %v1312
        %1672 = vmatpush.bf16.msra.mxu0 %v1311
        %1673 = vmatpush.bf16.msra.mxu0 %v1310
        %1674 = vmatpush.bf16.msra.mxu0 %v1309
        %1675 = vmatmul.bf16.gmra.mxu0 %v597
        %v1676 = vpop.f32.mrf.mxu0
        %v1677 = vadd.f32 %v1664, %v1676
        %v1678 = vpop.f32.mrf.mxu0
        %1679 = vdwg.mxu0
        %1680 = vmatpush.bf16.msra.mxu0 %v1324
        %1681 = vmatpush.bf16.msra.mxu0 %v1323
        %1682 = vmatpush.bf16.msra.mxu0 %v1322
        %1683 = vmatpush.bf16.msra.mxu0 %v1321
        %1684 = vmatpush.bf16.msra.mxu0 %v1320
        %1685 = vmatpush.bf16.msra.mxu0 %v1319
        %1686 = vmatpush.bf16.msra.mxu0 %v1318
        %1687 = vmatpush.bf16.msra.mxu0 %v1317
        %1688 = vmatmul.bf16.gmra.mxu0 %v598
        %v1689 = vpop.f32.mrf.mxu0
        %v1690 = vadd.f32 %v1677, %v1689
        %v1691 = vpop.f32.mrf.mxu0
        %1692 = vdwg.mxu0
        %1693 = vmatpush.bf16.msra.mxu0 %v1332
        %1694 = vmatpush.bf16.msra.mxu0 %v1331
        %1695 = vmatpush.bf16.msra.mxu0 %v1330
        %1696 = vmatpush.bf16.msra.mxu0 %v1329
        %1697 = vmatpush.bf16.msra.mxu0 %v1328
        %1698 = vmatpush.bf16.msra.mxu0 %v1327
        %1699 = vmatpush.bf16.msra.mxu0 %v1326
        %1700 = vmatpush.bf16.msra.mxu0 %v1325
        %1701 = vmatmul.bf16.gmra.mxu0 %v601
        %v1702 = vpop.f32.mrf.mxu0
        %v1703 = vadd.f32 %v1690, %v1702
        %v1704 = vpop.f32.mrf.mxu0
        %1705 = vdwg.mxu0
        %1706 = vmatpush.bf16.msra.mxu0 %v1340
        %1707 = vmatpush.bf16.msra.mxu0 %v1339
        %1708 = vmatpush.bf16.msra.mxu0 %v1338
        %1709 = vmatpush.bf16.msra.mxu0 %v1337
        %1710 = vmatpush.bf16.msra.mxu0 %v1336
        %1711 = vmatpush.bf16.msra.mxu0 %v1335
        %1712 = vmatpush.bf16.msra.mxu0 %v1334
        %1713 = vmatpush.bf16.msra.mxu0 %v1333
        %1714 = vmatmul.bf16.gmra.mxu0 %v602
        %v1715 = vpop.f32.mrf.mxu0
        %v1716 = vadd.f32 %v1703, %v1715
        %v1717 = vpop.f32.mrf.mxu0
        %1718 = vdwg.mxu0
        %v1719 = vadd.f32 %v287, %v1716
        %1720 = vst [vmem:[#allocation2] sm:$0x3] %v1719
        %p1721 = scmp.eq.s32.totalorder %s21, 3
        // Predicated region
        $region57: #{net_forward.3} parent=39 // pred_check
          %p1722 = pneg %p1721
        $region58: #{net_forward.3} parent=39 // pred_check_branch
          %1724 = sbr.rel (%p1722) target = $region60
        $region59: #{net_forward.3} parent=39 // pred_region
          %v1725 = vld [vmem:[#allocation2] sm:$0x3]
          %v1726 = vld [vmem:[#allocation6] sm:$0x1]
          %v1728 = vperm.slane %v1726, 0
          %v1730 = vadd.f32 %v1725, %v1728
          %v1731 = vmax.f32 %v1730, 0.0
          %v1732 = vpack.c.bf16 %v1731, %v1731
          %v1733 = vld [vmem:[%s3] sm:$0xf]
          %v1734 = vld [vmem:[%s3 + $0x4] sm:$0xf]
          %v1735 = vld [vmem:[%s3 + $0x8] sm:$0xf]
          %v1736 = vld [vmem:[%s3 + $0xc] sm:$0xf]
          %v1737 = vld [vmem:[%s3 + $0x10] sm:$0xf]
          %v1738 = vld [vmem:[%s3 + $0x14] sm:$0xf]
          %v1739 = vld [vmem:[%s3 + $0x18] sm:$0xf]
          %v1740 = vld [vmem:[%s3 + $0x1c] sm:$0xf]
          %v1741 = vld [vmem:[%s3 + $0x20] sm:$0xf]
          %v1742 = vld [vmem:[%s3 + $0x24] sm:$0xf]
          %v1743 = vld [vmem:[%s3 + $0x28] sm:$0xf]
          %v1744 = vld [vmem:[%s3 + $0x2c] sm:$0xf]
          %v1745 = vld [vmem:[%s3 + $0x30] sm:$0xf]
          %v1746 = vld [vmem:[%s3 + $0x34] sm:$0xf]
          %v1747 = vld [vmem:[%s3 + $0x38] sm:$0xf]
          %v1748 = vld [vmem:[%s3 + $0x3c] sm:$0xf]
          %v1749 = vld [vmem:[#allocation8] sm:$0x1]
          %v1751 = vperm.slane %v1749, 0
          %v1769 = vunpack.c.l.b16 %v1733
          %v1770 = vunpack.c.l.b16 %v1734
          %v1771 = vunpack.c.l.b16 %v1735
          %v1772 = vunpack.c.l.b16 %v1736
          %v1773 = vunpack.c.l.b16 %v1737
          %v1774 = vunpack.c.l.b16 %v1738
          %v1775 = vunpack.c.l.b16 %v1739
          %v1776 = vunpack.c.l.b16 %v1740
          %v1777 = vunpack.c.l.b16 %v1741
          %v1778 = vunpack.c.l.b16 %v1742
          %v1779 = vunpack.c.l.b16 %v1743
          %v1780 = vunpack.c.l.b16 %v1744
          %v1781 = vunpack.c.l.b16 %v1745
          %v1782 = vunpack.c.l.b16 %v1746
          %v1783 = vunpack.c.l.b16 %v1747
          %v1784 = vunpack.c.l.b16 %v1748
          %v1785 = vpack.c.b16 %v1770, %v1769
          %v1786 = vpack.c.b16 %v1772, %v1771
          %v1787 = vpack.c.b16 %v1774, %v1773
          %v1788 = vpack.c.b16 %v1776, %v1775
          %v1789 = vpack.c.b16 %v1778, %v1777
          %v1790 = vpack.c.b16 %v1780, %v1779
          %v1791 = vpack.c.b16 %v1782, %v1781
          %v1792 = vpack.c.b16 %v1784, %v1783
          %1801 = vmatpush.bf16.msra.mxu0 %v1792
          %1802 = vmatpush.bf16.msra.mxu0 %v1791
          %1803 = vmatpush.bf16.msra.mxu0 %v1790
          %1804 = vmatpush.bf16.msra.mxu0 %v1789
          %1805 = vmatpush.bf16.msra.mxu0 %v1788
          %1806 = vmatpush.bf16.msra.mxu0 %v1787
          %1807 = vmatpush.bf16.msra.mxu0 %v1786
          %1808 = vmatpush.bf16.msra.mxu0 %v1785
          %1809 = vmatmul.bf16.gmra.mxu0 %v1732
          %v1810 = vpop.f32.mrf.mxu0
          %v1811 = vadd.f32 %v1751, %v1810
          %v1812 = vpop.f32.mrf.mxu0
          %1813 = vdwg.mxu0
          %vm1814 = vcmask 74752
          %v1815 = vsel %vm1814, %v1811, -inf
          %1816 = vmax.xlane.f32.xlu0 %v1815
          %v1817 = vpop.xlane.xlu0 %1816
          %v1818 = vsub.f32 %v1811, %v1817
          %v1819 = vmul.f32 %v1818, 1.442695
          %v1820 = vpow.pop %v1819
          %v1821 = vsel %vm1814, %v1820, 0.0
          %1822 = vadd.xlane.f32.xlu0 %v1821
          %v1823 = vpop.xlane.xlu0 %1822
          %v1824 = vlog2.pop %v1823
          %v1825 = vmul.f32 %v1824, 0.6931472
          %v1826 = vsub.f32 %v1818, %v1825
          %1827 = vst.msk [vmem:[#allocation9] sm:$0x3] %vm1814, %v1826
        $region60: #{net_forward.3} parent=39 // pred_fallthru
          _
        // Predicated region
        $region61: #{net_forward.3} parent=39 // pred_check
          %p1828 = pneg %p149
        $region62: #{net_forward.3} parent=39 // pred_check_branch
          %1830 = sbr.rel (%p1828) target = $region64
        $region63: #{net_forward.3} parent=39 // pred_region
          %1832 = vsyncadd [#allocation5], 0
          %s1834 = sshll.u32 [#allocation9], 4
          %s1835 = int_to_ptr.vmem [resolvable:$true] %s1834
          %s1836 = sshll.u32 %s5, 4
          %s1837 = int_to_ptr.hbm [resolvable:$true] %s1836
          %1839 = dma.vmem_to_hbm [thread:$0]  %s1835, 32, %s1837, [#allocation5]
        $region64: #{net_forward.3} parent=39 // pred_fallthru
          _
        // Predicated region
        $region65: #{net_forward.3} parent=39 // pred_check
          %p1840 = pneg %p149
        $region66: #{net_forward.3} parent=39 // pred_check_branch
          %1842 = sbr.rel (%p1840) target = $region68
        $region67: #{net_forward.3} parent=39 // pred_region
          %1844 = dma.done [#allocation5], 32
        $region68: #{net_forward.3} parent=39 // pred_fallthru
          _
      $region40: #{net_forward.3} parent=5 // pred_fallthru
        _
      %p1845 = scmp.le.s32.totalorder 2, %s16
      // Predicated region
      $region69: #{net_forward.3} parent=5 // pred_check
        %p1846 = pneg %p1845
      $region70: #{net_forward.3} parent=5 // pred_check_branch
        %1848 = sbr.rel (%p1846) target = $region72
      $region71: #{net_forward.3} parent=5 // pred_region
        %s1849 = ssub.s32 %s16, 2
      $region72: #{net_forward.3} parent=5 // pred_fallthru
        _
    $region6: #{net_forward.3} parent=1 // loop_footer
      %s20 = sadd.s32 1, %s16
    $region7: #{net_forward.3} parent=1 // loop_footer_branch
      %15 = sbr.rel target = $region3
    $region8: #{net_forward.3} parent=1 // loop_exit
      _
    %1850 = vsyncpa [#allocation4], 1
    %s1851 = scalar_lea.sflag [#allocation4], 1
    %1852 = vsyncpa %s1851, 1
    %1853 = vsyncpa [#allocation7], 1
    %1854 = vsyncpa [#allocation5], 1
    %s1855 = scalar_lea.sflag [#allocation5], 1
    %1856 = vsyncpa %s1855, 1

// kernel: net_forward.2
$region0: #{net_forward.2}
  #allocation0 [shape = 'u32[]', space=smem, size = 0x4, offset = 0x4, fixed_abs, tag = 'smem constant byte address 0x4 - core index']
  #allocation1 [shape = 'u32[72,128]{1,0:T(1,128)}', space=vmem, size = 0x9000, scoped, tag = 'internal scratch']
  #allocation2 [shape = 'f32[26,32,32]{2,1,0:T(8,128)}', space=vmem, size = 0x68000, scoped, tag = 'scratch operand']
  #allocation3 [shape = 'f32[24,24,64]{2,1,0:T(8,128)}', space=vmem, size = 0x48000, scoped, tag = 'scratch operand']
  #allocation4 [shape = 'f32[24,12,64]{2,1,0:T(8,128)}', space=vmem, size = 0x30000, scoped, tag = 'scratch operand']
  %s0 = inlined_call_operand.vmem [shape: bf16[2,832,9], index: 0, kind: input, shape index: {}]
  %s1 = inlined_call_operand.hbm [shape: bf16[9,32], index: 1, kind: input, shape index: {}]
  %s2 = inlined_call_operand.hbm [shape: f32[1,32], index: 2, kind: input, shape index: {}]
  %s3 = inlined_call_operand.hbm [shape: bf16[3,3,32,64], index: 3, kind: input, shape index: {}]
  %s4 = inlined_call_operand.hbm [shape: f32[1,64], index: 4, kind: input, shape index: {}]
  %s5 = inlined_call_operand.vmem [shape: bf16[2,12,12,64], index: 5, kind: output, shape index: {}]
  %s6 = sld [smem:[#allocation0]]
  $region69: #{net_forward.2} parent=0
    _
  %s8 = ssub.s32 1, %s6
  %s9 = scalar_select 0, %s8, %s6
  $region1: #{net_forward.2} parent=0
    #allocation5 [shape = 'u8[4096]{0}', space=vmem, size = 0x1000, scoped, tag = 'input window, operand 1, single buffered']
    #allocation6 [shape = 's32[2]{0}', space=sflag, size = 0x8, scoped, tag = 'scoped memory for net_forward.2']
    #allocation7 [shape = 'u8[512]{0}', space=vmem, size = 0x400, scoped, tag = 'input window, operand 2, single buffered']
    #allocation8 [shape = 's32[1]{0}', space=sflag, size = 0x4, scoped, tag = 'scoped memory for net_forward.2']
    #allocation9 [shape = 'u8[73728]{0}', space=vmem, size = 0x12000, scoped, tag = 'input window, operand 3, single buffered']
    #allocation10 [shape = 'u8[512]{0}', space=vmem, size = 0x400, scoped, tag = 'input window, operand 4, single buffered']
    #allocation11 [shape = 's32[1]{0}', space=sflag, size = 0x4, scoped, tag = 'scoped memory for net_forward.2']
    %10 = vsyncpa [#allocation6], 0
    %11 = vsyncpa [#allocation8], 0
    %12 = vsyncpa [#allocation11], 0
    loop: start=0, step=1, limit=4
    $region2: #{net_forward.2} parent=1 // loop_pre_header
      _
    $region3: #{net_forward.2} parent=1 // loop_header
      %s14 = sphi 0, %s18
      %p15 = scmp.ge.s32.totalorder %s14, 4
      %s24 = sphi 0, %s26
      %s27 = sphi 0, %s24
      %s28 = sphi 0, %s27
      %s44 = sphi 0, %s28
      %s48 = sphi 0, %s48
      %s50 = sphi 0, %s48
      %s51 = sphi 0, %s50
      %s65 = sphi 0, %s51
      %s69 = sphi 0, %s69
      %s71 = sphi 0, %s69
      %s72 = sphi 0, %s71
      %s86 = sphi 0, %s72
      %s90 = sphi 0, %s90
      %s92 = sphi 0, %s90
      %s93 = sphi 0, %s92
      %s107 = sphi 0, %s93
      %s111 = sphi 0, %s111
      %s113 = sphi 0, %s111
      %s114 = sphi 0, %s113
      %s128 = sphi 0, %s114
      %s134 = sphi 0, %s136
      %s137 = sphi 0, %s134
      %s138 = sphi 0, %s137
      %s154 = sphi 0, %s138
    $region4: #{net_forward.2} parent=1 // loop_header_branch
      %17 = sbr.rel (%p15) target = $region8
    $region5: #{net_forward.2} parent=1 // loop_body
      %s19 = ssub.s32 %s14, 1
      %s20 = ssub.s32 %s14, 2
      %s21 = sadd.s32 %s14, 1
      %s22 = ssub.s32 %s14, %s21
      %p23 = scmp.eq.s32.totalorder %s22, 0
      %s25 = sadd.s32 %s24, 1
      %s26 = scalar_select %p23, %s24, %s25
      %p29 = pneg %p23
      %p30 = scmp.eq.s32.totalorder %s14, 1
      %p31 = por %p29, %p30
      %p32 = scmp.ne.s32.totalorder %s24, %s27
      %p33 = scmp.eq.s32.totalorder %s14, 0
      %p34 = por %p32, %p33
      %p35 = scmp.ne.s32.totalorder %s24, %s27
      %p36 = scmp.eq.s32.totalorder %s19, 1
      %p37 = por %p35, %p36
      %p38 = scmp.ne.s32.totalorder %s27, %s28
      %p39 = scmp.eq.s32.totalorder %s19, 0
      %p40 = por %p38, %p39
      %p41 = scmp.ne.s32.totalorder %s27, %s28
      %p42 = scmp.eq.s32.totalorder %s20, 1
      %p43 = por %p41, %p42
      %p45 = scmp.ne.s32.totalorder %s28, %s44
      %p46 = scmp.eq.s32.totalorder %s20, 0
      %p47 = por %p45, %p46
      %s49 = sadd.s32 %s48, 1
      %p52 = scmp.eq.s32.totalorder %s14, 1
      %p53 = scmp.ne.s32.totalorder %s48, %s50
      %p54 = scmp.eq.s32.totalorder %s14, 0
      %p55 = por %p53, %p54
      %p56 = scmp.ne.s32.totalorder %s48, %s50
      %p57 = scmp.eq.s32.totalorder %s19, 1
      %p58 = por %p56, %p57
      %p59 = scmp.ne.s32.totalorder %s50, %s51
      %p60 = scmp.eq.s32.totalorder %s19, 0
      %p61 = por %p59, %p60
      %p62 = scmp.ne.s32.totalorder %s50, %s51
      %p63 = scmp.eq.s32.totalorder %s20, 1
      %p64 = por %p62, %p63
      %p66 = scmp.ne.s32.totalorder %s51, %s65
      %p67 = scmp.eq.s32.totalorder %s20, 0
      %p68 = por %p66, %p67
      %s70 = sadd.s32 %s69, 1
      %p73 = scmp.eq.s32.totalorder %s14, 1
      %p74 = scmp.ne.s32.totalorder %s69, %s71
      %p75 = scmp.eq.s32.totalorder %s14, 0
      %p76 = por %p74, %p75
      %p77 = scmp.ne.s32.totalorder %s69, %s71
      %p78 = scmp.eq.s32.totalorder %s19, 1
      %p79 = por %p77, %p78
      %p80 = scmp.ne.s32.totalorder %s71, %s72
      %p81 = scmp.eq.s32.totalorder %s19, 0
      %p82 = por %p80, %p81
      %p83 = scmp.ne.s32.totalorder %s71, %s72
      %p84 = scmp.eq.s32.totalorder %s20, 1
      %p85 = por %p83, %p84
      %p87 = scmp.ne.s32.totalorder %s72, %s86
      %p88 = scmp.eq.s32.totalorder %s20, 0
      %p89 = por %p87, %p88
      %s91 = sadd.s32 %s90, 1
      %p94 = scmp.eq.s32.totalorder %s14, 1
      %p95 = scmp.ne.s32.totalorder %s90, %s92
      %p96 = scmp.eq.s32.totalorder %s14, 0
      %p97 = por %p95, %p96
      %p98 = scmp.ne.s32.totalorder %s90, %s92
      %p99 = scmp.eq.s32.totalorder %s19, 1
      %p100 = por %p98, %p99
      %p101 = scmp.ne.s32.totalorder %s92, %s93
      %p102 = scmp.eq.s32.totalorder %s19, 0
      %p103 = por %p101, %p102
      %p104 = scmp.ne.s32.totalorder %s92, %s93
      %p105 = scmp.eq.s32.totalorder %s20, 1
      %p106 = por %p104, %p105
      %p108 = scmp.ne.s32.totalorder %s93, %s107
      %p109 = scmp.eq.s32.totalorder %s20, 0
      %p110 = por %p108, %p109
      %s112 = sadd.s32 %s111, 1
      %p115 = scmp.eq.s32.totalorder %s14, 1
      %p116 = scmp.ne.s32.totalorder %s111, %s113
      %p117 = scmp.eq.s32.totalorder %s14, 0
      %p118 = por %p116, %p117
      %p119 = scmp.ne.s32.totalorder %s111, %s113
      %p120 = scmp.eq.s32.totalorder %s19, 1
      %p121 = por %p119, %p120
      %p122 = scmp.ne.s32.totalorder %s113, %s114
      %p123 = scmp.eq.s32.totalorder %s19, 0
      %p124 = por %p122, %p123
      %p125 = scmp.ne.s32.totalorder %s113, %s114
      %p126 = scmp.eq.s32.totalorder %s20, 1
      %p127 = por %p125, %p126
      %p129 = scmp.ne.s32.totalorder %s114, %s128
      %p130 = scmp.eq.s32.totalorder %s20, 0
      %p131 = por %p129, %p130
      %s132 = ssub.s32 %s14, %s21
      %p133 = scmp.eq.s32.totalorder %s132, 0
      %s135 = sadd.s32 %s134, 1
      %s136 = scalar_select %p133, %s134, %s135
      %p139 = pneg %p133
      %p140 = scmp.eq.s32.totalorder %s14, 1
      %p141 = por %p139, %p140
      %p142 = scmp.ne.s32.totalorder %s134, %s137
      %p143 = scmp.eq.s32.totalorder %s14, 0
      %p144 = por %p142, %p143
      %p145 = scmp.ne.s32.totalorder %s134, %s137
      %p146 = scmp.eq.s32.totalorder %s19, 1
      %p147 = por %p145, %p146
      %p148 = scmp.ne.s32.totalorder %s137, %s138
      %p149 = scmp.eq.s32.totalorder %s19, 0
      %p150 = por %p148, %p149
      %p151 = scmp.ne.s32.totalorder %s137, %s138
      %p152 = scmp.eq.s32.totalorder %s20, 1
      %p153 = por %p151, %p152
      %p155 = scmp.ne.s32.totalorder %s138, %s154
      %p156 = scmp.eq.s32.totalorder %s20, 0
      %p157 = por %p155, %p156
      %p158 = scmp.le.s32.totalorder 1, %s14
      %p159 = scmp.lt.s32.totalorder %s14, 3
      %p160 = pnand %p158, %p159
      %p161 = pneg %p160
      // Predicated region
      $region9: #{net_forward.2} parent=5 // pred_check
        _
      $region10: #{net_forward.2} parent=5 // pred_check_branch
        %163 = sbr.rel (%p160) target = $region12
      $region11: #{net_forward.2} parent=5 // pred_region
        %s164 = ssub.s32 %s14, 1
        // Predicated region
        $region13: #{net_forward.2} parent=11 // pred_check
          %p165 = pneg %p61
        $region14: #{net_forward.2} parent=11 // pred_check_branch
          %167 = sbr.rel (%p165) target = $region16
        $region15: #{net_forward.2} parent=11 // pred_region
          %169 = vsyncadd [#allocation6], 0
          %s170 = sshll.u32 %s1, 4
          %s171 = int_to_ptr.hbm [resolvable:$true] %s170
          %s172 = sshll.u32 [#allocation5], 4
          %s173 = int_to_ptr.vmem [resolvable:$true] %s172
          %178 = dma.hbm_to_vmem [thread:$0]  %s171, 128, %s173, [#allocation6], 64, 64, 4
        $region16: #{net_forward.2} parent=11 // pred_fallthru
          _
        // Predicated region
        $region17: #{net_forward.2} parent=11 // pred_check
          %p179 = pneg %p82
        $region18: #{net_forward.2} parent=11 // pred_check_branch
          %181 = sbr.rel (%p179) target = $region20
        $region19: #{net_forward.2} parent=11 // pred_region
          %183 = vsyncadd [#allocation8], 0
          %s185 = sshll.u32 %s2, 4
          %s186 = int_to_ptr.hbm [resolvable:$true] %s185
          %s187 = sshll.u32 [#allocation7], 4
          %s188 = int_to_ptr.vmem [resolvable:$true] %s187
          %190 = dma.hbm_to_vmem [thread:$0]  %s186, 16, %s188, [#allocation8]
        $region20: #{net_forward.2} parent=11 // pred_fallthru
          _
        // Predicated region
        $region21: #{net_forward.2} parent=11 // pred_check
          %p191 = pneg %p103
        $region22: #{net_forward.2} parent=11 // pred_check_branch
          %193 = sbr.rel (%p191) target = $region24
        $region23: #{net_forward.2} parent=11 // pred_region
          %195 = vsyncadd [#allocation8], 0
          %s196 = sshll.u32 %s3, 4
          %s197 = int_to_ptr.hbm [resolvable:$true] %s196
          %s198 = sshll.u32 [#allocation9], 4
          %s199 = int_to_ptr.vmem [resolvable:$true] %s198
          %204 = dma.hbm_to_vmem [thread:$0]  %s197, 2304, %s199, [#allocation8], 64, 64, 4
        $region24: #{net_forward.2} parent=11 // pred_fallthru
          _
        // Predicated region
        $region25: #{net_forward.2} parent=11 // pred_check
          %p205 = pneg %p124
        $region26: #{net_forward.2} parent=11 // pred_check_branch
          %207 = sbr.rel (%p205) target = $region28
        $region27: #{net_forward.2} parent=11 // pred_region
          %209 = vsyncadd [#allocation11], 0
          %s211 = sshll.u32 %s4, 4
          %s212 = int_to_ptr.hbm [resolvable:$true] %s211
          %s213 = sshll.u32 [#allocation10], 4
          %s214 = int_to_ptr.vmem [resolvable:$true] %s213
          %216 = dma.hbm_to_vmem [thread:$0]  %s212, 16, %s214, [#allocation11]
        $region28: #{net_forward.2} parent=11 // pred_fallthru
          _
      $region12: #{net_forward.2} parent=5 // pred_fallthru
        _
      %p217 = scmp.lt.s32.totalorder %s14, 2
      // Predicated region
      $region29: #{net_forward.2} parent=5 // pred_check
        %p218 = pneg %p217
      $region30: #{net_forward.2} parent=5 // pred_check_branch
        %220 = sbr.rel (%p218) target = $region32
      $region31: #{net_forward.2} parent=5 // pred_region
        // Predicated region
        $region33: #{net_forward.2} parent=31 // pred_check
          %p221 = pneg %p34
        $region34: #{net_forward.2} parent=31 // pred_check_branch
          %223 = sbr.rel (%p221) target = $region36
        $region35: #{net_forward.2} parent=31 // pred_region
          %p224 = scmp.lt.s32.totalorder %s14, 1
          %s225 = scalar_select %p224, %s14, 1
          %s226 = smul.addr %s225, 104
          %s227 = smul.addr %s226, 4
          %s228 = scalar_lea.vmem %s0, %s227
        $region36: #{net_forward.2} parent=31 // pred_fallthru
          _
      $region32: #{net_forward.2} parent=5 // pred_fallthru
        _
      %p229 = scmp.le.s32.totalorder 1, %s14
      %p230 = scmp.lt.s32.totalorder %s14, 3
      %p231 = pnand %p229, %p230
      %p232 = pneg %p231
      // Predicated region
      $region37: #{net_forward.2} parent=5 // pred_check
        _
      $region38: #{net_forward.2} parent=5 // pred_check_branch
        %234 = sbr.rel (%p231) target = $region40
      $region39: #{net_forward.2} parent=5 // pred_region
        %s235 = ssub.s32 %s14, 1
        // Predicated region
        $region41: #{net_forward.2} parent=39 // pred_check
          %p236 = pneg %p61
        $region42: #{net_forward.2} parent=39 // pred_check_branch
          %238 = sbr.rel (%p236) target = $region44
        $region43: #{net_forward.2} parent=39 // pred_region
          %240 = dma.done [#allocation6], 128
        $region44: #{net_forward.2} parent=39 // pred_fallthru
          _
        // Predicated region
        $region45: #{net_forward.2} parent=39 // pred_check
          %p241 = pneg %p82
        $region46: #{net_forward.2} parent=39 // pred_check_branch
          %243 = sbr.rel (%p241) target = $region48
        $region47: #{net_forward.2} parent=39 // pred_region
          %245 = dma.done [#allocation8], 16
        $region48: #{net_forward.2} parent=39 // pred_fallthru
          _
        // Predicated region
        $region49: #{net_forward.2} parent=39 // pred_check
          %p246 = pneg %p103
        $region50: #{net_forward.2} parent=39 // pred_check_branch
          %248 = sbr.rel (%p246) target = $region52
        $region51: #{net_forward.2} parent=39 // pred_region
          %250 = dma.done [#allocation8], 2304
        $region52: #{net_forward.2} parent=39 // pred_fallthru
          _
        // Predicated region
        $region53: #{net_forward.2} parent=39 // pred_check
          %p251 = pneg %p124
        $region54: #{net_forward.2} parent=39 // pred_check_branch
          %253 = sbr.rel (%p251) target = $region56
        $region55: #{net_forward.2} parent=39 // pred_region
          %255 = dma.done [#allocation11], 16
        $region56: #{net_forward.2} parent=39 // pred_fallthru
          _
        %p256 = scmp.lt.s32.totalorder %s19, 1
        %s257 = scalar_select %p256, %s19, 1
        %s258 = smul.addr %s257, 104
        %s259 = smul.addr %s258, 4
        %s260 = scalar_lea.vmem %s0, %s259
        %p261 = pneg %p40
        %p262 = pneg %p37
        %p263 = pneg %p61
        %p264 = pneg %p58
        %p265 = pneg %p82
        %p266 = pneg %p79
        %p267 = pneg %p103
        %p268 = pneg %p100
        %p269 = pneg %p124
        %p270 = pneg %p121
        %p271 = pneg %p150
        %p272 = pneg %p147
        %p273 = scmp.lt.s32.totalorder %s19, 1
        %s274 = scalar_select %p273, %s19, 1
        %s275 = smul.addr %s274, 24
        %s276 = smul.addr %s275, 4
        %s277 = scalar_lea.vmem %s5, %s276
        %p278 = scmp.lt.s32.totalorder %s19, 1
        %s279 = scalar_select %p278, %s19, 1
        %s280 = smul.addr %s279, 104
        %s281 = smul.addr %s280, 4
        %s282 = scalar_lea.vmem %s0, %s281
        %p283 = scmp.lt.s32.totalorder %s19, 1
        %s284 = scalar_select %p283, %s19, 1
        %s285 = smul.addr %s284, 24
        %s286 = smul.addr %s285, 4
        %s287 = scalar_lea.vmem %s5, %s286
        %v289 = vld [vmem:[%s282] sm:$0xf]
        %v290 = vld [vmem:[%s282 + $0x4] sm:$0xf]
        %v291 = vld [vmem:[%s282 + $0x8] sm:$0xf]
        %v292 = vld [vmem:[%s282 + $0xc] sm:$0xf]
        %v293 = vld [vmem:[%s282 + $0x10] sm:$0xf]
        %v294 = vld [vmem:[%s282 + $0x14] sm:$0xf]
        %v295 = vld [vmem:[%s282 + $0x18] sm:$0xf]
        %v296 = vld [vmem:[%s282 + $0x1c] sm:$0xf]
        %v297 = vld [vmem:[%s282 + $0x20] sm:$0xf]
        %v298 = vld [vmem:[%s282 + $0x24] sm:$0xf]
        %v299 = vld [vmem:[%s282 + $0x28] sm:$0xf]
        %v300 = vld [vmem:[%s282 + $0x2c] sm:$0xf]
        %v301 = vld [vmem:[%s282 + $0x30] sm:$0xf]
        %v302 = vld [vmem:[%s282 + $0x34] sm:$0xf]
        %v303 = vld [vmem:[%s282 + $0x38] sm:$0xf]
        %v304 = vld [vmem:[%s282 + $0x3c] sm:$0xf]
        %v305 = vld [vmem:[%s282 + $0x40] sm:$0xf]
        %v306 = vld [vmem:[%s282 + $0x44] sm:$0xf]
        %v307 = vld [vmem:[%s282 + $0x48] sm:$0xf]
        %v308 = vld [vmem:[%s282 + $0x4c] sm:$0xf]
        %v309 = vld [vmem:[%s282 + $0x50] sm:$0xf]
        %v310 = vld [vmem:[%s282 + $0x54] sm:$0xf]
        %v311 = vld [vmem:[%s282 + $0x58] sm:$0xf]
        %v312 = vld [vmem:[%s282 + $0x5c] sm:$0xf]
        %v313 = vld [vmem:[%s282 + $0x60] sm:$0xf]
        %v314 = vld [vmem:[%s282 + $0x64] sm:$0xf]
        %v315 = vld [vmem:[%s282 + $0x68] sm:$0xf]
        %v316 = vld [vmem:[%s282 + $0x6c] sm:$0xf]
        %v317 = vld [vmem:[%s282 + $0x70] sm:$0xf]
        %v318 = vld [vmem:[%s282 + $0x74] sm:$0xf]
        %v319 = vld [vmem:[%s282 + $0x78] sm:$0xf]
        %v320 = vld [vmem:[%s282 + $0x7c] sm:$0xf]
        %v321 = vld [vmem:[%s282 + $0x80] sm:$0xf]
        %v322 = vld [vmem:[%s282 + $0x84] sm:$0xf]
        %v323 = vld [vmem:[%s282 + $0x88] sm:$0xf]
        %v324 = vld [vmem:[%s282 + $0x8c] sm:$0xf]
        %v325 = vld [vmem:[%s282 + $0x90] sm:$0xf]
        %v326 = vld [vmem:[%s282 + $0x94] sm:$0xf]
        %v327 = vld [vmem:[%s282 + $0x98] sm:$0xf]
        %v328 = vld [vmem:[%s282 + $0x9c] sm:$0xf]
        %v329 = vld [vmem:[%s282 + $0xa0] sm:$0xf]
        %v330 = vld [vmem:[%s282 + $0xa4] sm:$0xf]
        %v331 = vld [vmem:[%s282 + $0xa8] sm:$0xf]
        %v332 = vld [vmem:[%s282 + $0xac] sm:$0xf]
        %v333 = vld [vmem:[%s282 + $0xb0] sm:$0xf]
        %v334 = vld [vmem:[%s282 + $0xb4] sm:$0xf]
        %v335 = vld [vmem:[%s282 + $0xb8] sm:$0xf]
        %v336 = vld [vmem:[%s282 + $0xbc] sm:$0xf]
        %v337 = vld [vmem:[%s282 + $0xc0] sm:$0xf]
        %v338 = vld [vmem:[%s282 + $0xc4] sm:$0xf]
        %v339 = vld [vmem:[%s282 + $0xc8] sm:$0xf]
        %v340 = vld [vmem:[%s282 + $0xcc] sm:$0xf]
        %v341 = vld [vmem:[%s282 + $0xd0] sm:$0xf]
        %v342 = vld [vmem:[%s282 + $0xd4] sm:$0xf]
        %v343 = vld [vmem:[%s282 + $0xd8] sm:$0xf]
        %v344 = vld [vmem:[%s282 + $0xdc] sm:$0xf]
        %v345 = vld [vmem:[%s282 + $0xe0] sm:$0xf]
        %v346 = vld [vmem:[%s282 + $0xe4] sm:$0xf]
        %v347 = vld [vmem:[%s282 + $0xe8] sm:$0xf]
        %v348 = vld [vmem:[%s282 + $0xec] sm:$0xf]
        %v349 = vld [vmem:[%s282 + $0xf0] sm:$0xf]
        %v350 = vld [vmem:[%s282 + $0xf4] sm:$0xf]
        %v351 = vld [vmem:[%s282 + $0xf8] sm:$0xf]
        %v352 = vld [vmem:[%s282 + $0xfc] sm:$0xf]
        %v353 = vld [vmem:[%s282 + $0x100] sm:$0xf]
        %v354 = vld [vmem:[%s282 + $0x104] sm:$0xf]
        %v355 = vld [vmem:[%s282 + $0x108] sm:$0xf]
        %v356 = vld [vmem:[%s282 + $0x10c] sm:$0xf]
        %v357 = vld [vmem:[%s282 + $0x110] sm:$0xf]
        %v358 = vld [vmem:[%s282 + $0x114] sm:$0xf]
        %v359 = vld [vmem:[%s282 + $0x118] sm:$0xf]
        %v360 = vld [vmem:[%s282 + $0x11c] sm:$0xf]
        %v361 = vld [vmem:[%s282 + $0x120] sm:$0xf]
        %v362 = vld [vmem:[%s282 + $0x124] sm:$0xf]
        %v363 = vld [vmem:[%s282 + $0x128] sm:$0xf]
        %v364 = vld [vmem:[%s282 + $0x12c] sm:$0xf]
        %v365 = vld [vmem:[%s282 + $0x130] sm:$0xf]
        %v366 = vld [vmem:[%s282 + $0x134] sm:$0xf]
        %v367 = vld [vmem:[%s282 + $0x138] sm:$0xf]
        %v368 = vld [vmem:[%s282 + $0x13c] sm:$0xf]
        %v369 = vld [vmem:[%s282 + $0x140] sm:$0xf]
        %v370 = vld [vmem:[%s282 + $0x144] sm:$0xf]
        %v371 = vld [vmem:[%s282 + $0x148] sm:$0xf]
        %v372 = vld [vmem:[%s282 + $0x14c] sm:$0xf]
        %v373 = vld [vmem:[%s282 + $0x150] sm:$0xf]
        %v374 = vld [vmem:[%s282 + $0x154] sm:$0xf]
        %v375 = vld [vmem:[%s282 + $0x158] sm:$0xf]
        %v376 = vld [vmem:[%s282 + $0x15c] sm:$0xf]
        %v377 = vld [vmem:[%s282 + $0x160] sm:$0xf]
        %v378 = vld [vmem:[%s282 + $0x164] sm:$0xf]
        %v379 = vld [vmem:[%s282 + $0x168] sm:$0xf]
        %v380 = vld [vmem:[%s282 + $0x16c] sm:$0xf]
        %v381 = vld [vmem:[%s282 + $0x170] sm:$0xf]
        %v382 = vld [vmem:[%s282 + $0x174] sm:$0xf]
        %v383 = vld [vmem:[%s282 + $0x178] sm:$0xf]
        %v384 = vld [vmem:[%s282 + $0x17c] sm:$0xf]
        %v385 = vld [vmem:[%s282 + $0x180] sm:$0xf]
        %v386 = vld [vmem:[%s282 + $0x184] sm:$0xf]
        %v387 = vld [vmem:[%s282 + $0x188] sm:$0xf]
        %v388 = vld [vmem:[%s282 + $0x18c] sm:$0xf]
        %v389 = vld [vmem:[%s282 + $0x190] sm:$0xf]
        %v390 = vld [vmem:[%s282 + $0x194] sm:$0xf]
        %v391 = vld [vmem:[%s282 + $0x198] sm:$0xf]
        %v392 = vld [vmem:[%s282 + $0x19c] sm:$0xf]
        %v393 = vld [vmem:[#allocation5] sm:$0xf]
        %v394 = vld [vmem:[#allocation5 + $0x4] sm:$0x1]
        %v395 = vld [vmem:[#allocation7] sm:$0x1]
        %v397 = vperm.slane %v395, 0
        %v503 = vunpack.c.l.b16 %v289
        %v504 = vunpack.c.l.b16 %v290
        %v505 = vunpack.c.l.b16 %v291
        %v506 = vunpack.c.l.b16 %v292
        %v507 = vunpack.c.l.b16 %v293
        %v508 = vunpack.c.l.b16 %v294
        %v509 = vunpack.c.l.b16 %v295
        %v510 = vunpack.c.l.b16 %v296
        %v511 = vunpack.c.l.b16 %v297
        %v512 = vunpack.c.l.b16 %v298
        %v513 = vunpack.c.l.b16 %v299
        %v514 = vunpack.c.l.b16 %v300
        %v515 = vunpack.c.l.b16 %v301
        %v516 = vunpack.c.l.b16 %v302
        %v517 = vunpack.c.l.b16 %v303
        %v518 = vunpack.c.l.b16 %v304
        %v519 = vunpack.c.l.b16 %v305
        %v520 = vunpack.c.l.b16 %v306
        %v521 = vunpack.c.l.b16 %v307
        %v522 = vunpack.c.l.b16 %v308
        %v523 = vunpack.c.l.b16 %v309
        %v524 = vunpack.c.l.b16 %v310
        %v525 = vunpack.c.l.b16 %v311
        %v526 = vunpack.c.l.b16 %v312
        %v527 = vunpack.c.l.b16 %v313
        %v528 = vunpack.c.l.b16 %v314
        %v529 = vunpack.c.l.b16 %v315
        %v530 = vunpack.c.l.b16 %v316
        %v531 = vunpack.c.l.b16 %v317
        %v532 = vunpack.c.l.b16 %v318
        %v533 = vunpack.c.l.b16 %v319
        %v534 = vunpack.c.l.b16 %v320
        %v535 = vunpack.c.l.b16 %v321
        %v536 = vunpack.c.l.b16 %v322
        %v537 = vunpack.c.l.b16 %v323
        %v538 = vunpack.c.l.b16 %v324
        %v539 = vunpack.c.l.b16 %v325
        %v540 = vunpack.c.l.b16 %v326
        %v541 = vunpack.c.l.b16 %v327
        %v542 = vunpack.c.l.b16 %v328
        %v543 = vunpack.c.l.b16 %v329
        %v544 = vunpack.c.l.b16 %v330
        %v545 = vunpack.c.l.b16 %v331
        %v546 = vunpack.c.l.b16 %v332
        %v547 = vunpack.c.l.b16 %v333
        %v548 = vunpack.c.l.b16 %v334
        %v549 = vunpack.c.l.b16 %v335
        %v550 = vunpack.c.l.b16 %v336
        %v551 = vunpack.c.l.b16 %v337
        %v552 = vunpack.c.l.b16 %v338
        %v553 = vunpack.c.l.b16 %v339
        %v554 = vunpack.c.l.b16 %v340
        %v555 = vunpack.c.l.b16 %v341
        %v556 = vunpack.c.l.b16 %v342
        %v557 = vunpack.c.l.b16 %v343
        %v558 = vunpack.c.l.b16 %v344
        %v559 = vunpack.c.l.b16 %v345
        %v560 = vunpack.c.l.b16 %v346
        %v561 = vunpack.c.l.b16 %v347
        %v562 = vunpack.c.l.b16 %v348
        %v563 = vunpack.c.l.b16 %v349
        %v564 = vunpack.c.l.b16 %v350
        %v565 = vunpack.c.l.b16 %v351
        %v566 = vunpack.c.l.b16 %v352
        %v567 = vunpack.c.l.b16 %v353
        %v568 = vunpack.c.l.b16 %v354
        %v569 = vunpack.c.l.b16 %v355
        %v570 = vunpack.c.l.b16 %v356
        %v571 = vunpack.c.l.b16 %v357
        %v572 = vunpack.c.l.b16 %v358
        %v573 = vunpack.c.l.b16 %v359
        %v574 = vunpack.c.l.b16 %v360
        %v575 = vunpack.c.l.b16 %v361
        %v576 = vunpack.c.l.b16 %v362
        %v577 = vunpack.c.l.b16 %v363
        %v578 = vunpack.c.l.b16 %v364
        %v579 = vunpack.c.l.b16 %v365
        %v580 = vunpack.c.l.b16 %v366
        %v581 = vunpack.c.l.b16 %v367
        %v582 = vunpack.c.l.b16 %v368
        %v583 = vunpack.c.l.b16 %v369
        %v584 = vunpack.c.l.b16 %v370
        %v585 = vunpack.c.l.b16 %v371
        %v586 = vunpack.c.l.b16 %v372
        %v587 = vunpack.c.l.b16 %v373
        %v588 = vunpack.c.l.b16 %v374
        %v589 = vunpack.c.l.b16 %v375
        %v590 = vunpack.c.l.b16 %v376
        %v591 = vunpack.c.l.b16 %v377
        %v592 = vunpack.c.l.b16 %v378
        %v593 = vunpack.c.l.b16 %v379
        %v594 = vunpack.c.l.b16 %v380
        %v595 = vunpack.c.l.b16 %v381
        %v596 = vunpack.c.l.b16 %v382
        %v597 = vunpack.c.l.b16 %v383
        %v598 = vunpack.c.l.b16 %v384
        %v599 = vunpack.c.l.b16 %v385
        %v600 = vunpack.c.l.b16 %v386
        %v601 = vunpack.c.l.b16 %v387
        %v602 = vunpack.c.l.b16 %v388
        %v603 = vunpack.c.l.b16 %v389
        %v604 = vunpack.c.l.b16 %v390
        %v605 = vunpack.c.l.b16 %v391
        %v606 = vunpack.c.l.b16 %v392
        %v607 = vpack.c.b16 %v504, %v503
        %v608 = vpack.c.b16 %v506, %v505
        %v609 = vpack.c.b16 %v508, %v507
        %v610 = vpack.c.b16 %v510, %v509
        %v611 = vpack.c.b16 %v512, %v511
        %v612 = vpack.c.b16 %v514, %v513
        %v613 = vpack.c.b16 %v516, %v515
        %v614 = vpack.c.b16 %v518, %v517
        %v615 = vpack.c.b16 %v520, %v519
        %v616 = vpack.c.b16 %v522, %v521
        %v617 = vpack.c.b16 %v524, %v523
        %v618 = vpack.c.b16 %v526, %v525
        %v619 = vpack.c.b16 %v528, %v527
        %v620 = vpack.c.b16 %v530, %v529
        %v621 = vpack.c.b16 %v532, %v531
        %v622 = vpack.c.b16 %v534, %v533
        %v623 = vpack.c.b16 %v536, %v535
        %v624 = vpack.c.b16 %v538, %v537
        %v625 = vpack.c.b16 %v540, %v539
        %v626 = vpack.c.b16 %v542, %v541
        %v627 = vpack.c.b16 %v544, %v543
        %v628 = vpack.c.b16 %v546, %v545
        %v629 = vpack.c.b16 %v548, %v547
        %v630 = vpack.c.b16 %v550, %v549
        %v631 = vpack.c.b16 %v552, %v551
        %v632 = vpack.c.b16 %v554, %v553
        %v633 = vpack.c.b16 %v556, %v555
        %v634 = vpack.c.b16 %v558, %v557
        %v635 = vpack.c.b16 %v560, %v559
        %v636 = vpack.c.b16 %v562, %v561
        %v637 = vpack.c.b16 %v564, %v563
        %v638 = vpack.c.b16 %v566, %v565
        %v639 = vpack.c.b16 %v568, %v567
        %v640 = vpack.c.b16 %v570, %v569
        %v641 = vpack.c.b16 %v572, %v571
        %v642 = vpack.c.b16 %v574, %v573
        %v643 = vpack.c.b16 %v576, %v575
        %v644 = vpack.c.b16 %v578, %v577
        %v645 = vpack.c.b16 %v580, %v579
        %v646 = vpack.c.b16 %v582, %v581
        %v647 = vpack.c.b16 %v584, %v583
        %v648 = vpack.c.b16 %v586, %v585
        %v649 = vpack.c.b16 %v588, %v587
        %v650 = vpack.c.b16 %v590, %v589
        %v651 = vpack.c.b16 %v592, %v591
        %v652 = vpack.c.b16 %v594, %v593
        %v653 = vpack.c.b16 %v596, %v595
        %v654 = vpack.c.b16 %v598, %v597
        %v655 = vpack.c.b16 %v600, %v599
        %v656 = vpack.c.b16 %v602, %v601
        %v657 = vpack.c.b16 %v604, %v603
        %v658 = vpack.c.b16 %v606, %v605
        %v661 = vunpack.c.l.b16 %v393
        %v662 = vunpack.c.l.b16 %v394
        %v663 = vpack.c.b16 %v662, %v661
        %vm664 = vcmask 72704
        %v666 = vsel %vm664, %v607, 0
        %v669 = vsel %vm664, %v608, 0
        %v672 = vsel %vm664, %v609, 0
        %v675 = vsel %vm664, %v610, 0
        %v678 = vsel %vm664, %v611, 0
        %v681 = vsel %vm664, %v612, 0
        %v684 = vsel %vm664, %v613, 0
        %v687 = vsel %vm664, %v614, 0
        %v690 = vsel %vm664, %v615, 0
        %v693 = vsel %vm664, %v616, 0
        %v696 = vsel %vm664, %v617, 0
        %v699 = vsel %vm664, %v618, 0
        %v702 = vsel %vm664, %v619, 0
        %v705 = vsel %vm664, %v620, 0
        %v708 = vsel %vm664, %v621, 0
        %v711 = vsel %vm664, %v622, 0
        %v714 = vsel %vm664, %v623, 0
        %v717 = vsel %vm664, %v624, 0
        %v720 = vsel %vm664, %v625, 0
        %v723 = vsel %vm664, %v626, 0
        %v726 = vsel %vm664, %v627, 0
        %v729 = vsel %vm664, %v628, 0
        %v732 = vsel %vm664, %v629, 0
        %v735 = vsel %vm664, %v630, 0
        %v738 = vsel %vm664, %v631, 0
        %v741 = vsel %vm664, %v632, 0
        %v744 = vsel %vm664, %v633, 0
        %v747 = vsel %vm664, %v634, 0
        %v750 = vsel %vm664, %v635, 0
        %v753 = vsel %vm664, %v636, 0
        %v756 = vsel %vm664, %v637, 0
        %v759 = vsel %vm664, %v638, 0
        %v762 = vsel %vm664, %v639, 0
        %v765 = vsel %vm664, %v640, 0
        %v768 = vsel %vm664, %v641, 0
        %v771 = vsel %vm664, %v642, 0
        %v774 = vsel %vm664, %v643, 0
        %v777 = vsel %vm664, %v644, 0
        %v780 = vsel %vm664, %v645, 0
        %v783 = vsel %vm664, %v646, 0
        %v786 = vsel %vm664, %v647, 0
        %v789 = vsel %vm664, %v648, 0
        %v792 = vsel %vm664, %v649, 0
        %v795 = vsel %vm664, %v650, 0
        %v798 = vsel %vm664, %v651, 0
        %v801 = vsel %vm664, %v652, 0
        %v804 = vsel %vm664, %v653, 0
        %v807 = vsel %vm664, %v654, 0
        %v810 = vsel %vm664, %v655, 0
        %v813 = vsel %vm664, %v656, 0
        %v816 = vsel %vm664, %v657, 0
        %v819 = vsel %vm664, %v658, 0
        %vm821 = vcmask 1043456
        %vm822 = vcmask 1044480
        %v823 = vsel %vm821, 4294967295, 65535
        %v824 = vsel %vm822, %v823, 0
        %v826 = vand.u32 %v663, %v824
        %828 = vmatpush.bf16.msra.mxu0 0
        %829 = vmatpush.bf16.msra.mxu0 0
        %830 = vmatpush.bf16.msra.mxu0 0
        %831 = vmatpush.bf16.msra.mxu0 0
        %832 = vmatpush.bf16.msra.mxu0 0
        %833 = vmatpush.bf16.msra.mxu0 0
        %834 = vmatpush.bf16.msra.mxu0 0
        %835 = vmatpush.bf16.msra.mxu0 %v826
        %836 = vmatmul.bf16.gmra.mxu0 %v666
        %v837 = vpop.f32.mrf.mxu0
        %v838 = vadd.f32 %v397, %v837
        %v839 = vpop.f32.mrf.mxu0
        %v840 = vadd.f32 %v397, %v839
        %841 = vmatmul.bf16.gmra.mxu0 %v669
        %v842 = vpop.f32.mrf.mxu0
        %v843 = vadd.f32 %v397, %v842
        %v844 = vpop.f32.mrf.mxu0
        %v845 = vadd.f32 %v397, %v844
        %846 = vmatmul.bf16.gmra.mxu0 %v672
        %v847 = vpop.f32.mrf.mxu0
        %v848 = vadd.f32 %v397, %v847
        %v849 = vpop.f32.mrf.mxu0
        %v850 = vadd.f32 %v397, %v849
        %851 = vmatmul.bf16.gmra.mxu0 %v675
        %v852 = vpop.f32.mrf.mxu0
        %v853 = vadd.f32 %v397, %v852
        %v854 = vpop.f32.mrf.mxu0
        %v855 = vadd.f32 %v397, %v854
        %856 = vmatmul.bf16.gmra.mxu0 %v678
        %v857 = vpop.f32.mrf.mxu0
        %v858 = vadd.f32 %v397, %v857
        %v859 = vpop.f32.mrf.mxu0
        %v860 = vadd.f32 %v397, %v859
        %861 = vmatmul.bf16.gmra.mxu0 %v681
        %v862 = vpop.f32.mrf.mxu0
        %v863 = vadd.f32 %v397, %v862
        %v864 = vpop.f32.mrf.mxu0
        %v865 = vadd.f32 %v397, %v864
        %866 = vmatmul.bf16.gmra.mxu0 %v684
        %v867 = vpop.f32.mrf.mxu0
        %v868 = vadd.f32 %v397, %v867
        %v869 = vpop.f32.mrf.mxu0
        %v870 = vadd.f32 %v397, %v869
        %871 = vmatmul.bf16.gmra.mxu0 %v687
        %v872 = vpop.f32.mrf.mxu0
        %v873 = vadd.f32 %v397, %v872
        %v874 = vpop.f32.mrf.mxu0
        %v875 = vadd.f32 %v397, %v874
        %876 = vmatmul.bf16.gmra.mxu0 %v690
        %v877 = vpop.f32.mrf.mxu0
        %v878 = vadd.f32 %v397, %v877
        %v879 = vpop.f32.mrf.mxu0
        %v880 = vadd.f32 %v397, %v879
        %881 = vmatmul.bf16.gmra.mxu0 %v693
        %v882 = vpop.f32.mrf.mxu0
        %v883 = vadd.f32 %v397, %v882
        %v884 = vpop.f32.mrf.mxu0
        %v885 = vadd.f32 %v397, %v884
        %886 = vmatmul.bf16.gmra.mxu0 %v696
        %v887 = vpop.f32.mrf.mxu0
        %v888 = vadd.f32 %v397, %v887
        %v889 = vpop.f32.mrf.mxu0
        %v890 = vadd.f32 %v397, %v889
        %891 = vmatmul.bf16.gmra.mxu0 %v699
        %v892 = vpop.f32.mrf.mxu0
        %v893 = vadd.f32 %v397, %v892
        %v894 = vpop.f32.mrf.mxu0
        %v895 = vadd.f32 %v397, %v894
        %896 = vmatmul.bf16.gmra.mxu0 %v702
        %v897 = vpop.f32.mrf.mxu0
        %v898 = vadd.f32 %v397, %v897
        %v899 = vpop.f32.mrf.mxu0
        %v900 = vadd.f32 %v397, %v899
        %901 = vmatmul.bf16.gmra.mxu0 %v705
        %v902 = vpop.f32.mrf.mxu0
        %v903 = vadd.f32 %v397, %v902
        %v904 = vpop.f32.mrf.mxu0
        %v905 = vadd.f32 %v397, %v904
        %906 = vmatmul.bf16.gmra.mxu0 %v708
        %v907 = vpop.f32.mrf.mxu0
        %v908 = vadd.f32 %v397, %v907
        %v909 = vpop.f32.mrf.mxu0
        %v910 = vadd.f32 %v397, %v909
        %911 = vmatmul.bf16.gmra.mxu0 %v711
        %v912 = vpop.f32.mrf.mxu0
        %v913 = vadd.f32 %v397, %v912
        %v914 = vpop.f32.mrf.mxu0
        %v915 = vadd.f32 %v397, %v914
        %916 = vmatmul.bf16.gmra.mxu0 %v714
        %v917 = vpop.f32.mrf.mxu0
        %v918 = vadd.f32 %v397, %v917
        %v919 = vpop.f32.mrf.mxu0
        %v920 = vadd.f32 %v397, %v919
        %921 = vmatmul.bf16.gmra.mxu0 %v717
        %v922 = vpop.f32.mrf.mxu0
        %v923 = vadd.f32 %v397, %v922
        %v924 = vpop.f32.mrf.mxu0
        %v925 = vadd.f32 %v397, %v924
        %926 = vmatmul.bf16.gmra.mxu0 %v720
        %v927 = vpop.f32.mrf.mxu0
        %v928 = vadd.f32 %v397, %v927
        %v929 = vpop.f32.mrf.mxu0
        %v930 = vadd.f32 %v397, %v929
        %931 = vmatmul.bf16.gmra.mxu0 %v723
        %v932 = vpop.f32.mrf.mxu0
        %v933 = vadd.f32 %v397, %v932
        %v934 = vpop.f32.mrf.mxu0
        %v935 = vadd.f32 %v397, %v934
        %936 = vmatmul.bf16.gmra.mxu0 %v726
        %v937 = vpop.f32.mrf.mxu0
        %v938 = vadd.f32 %v397, %v937
        %v939 = vpop.f32.mrf.mxu0
        %v940 = vadd.f32 %v397, %v939
        %941 = vmatmul.bf16.gmra.mxu0 %v729
        %v942 = vpop.f32.mrf.mxu0
        %v943 = vadd.f32 %v397, %v942
        %v944 = vpop.f32.mrf.mxu0
        %v945 = vadd.f32 %v397, %v944
        %946 = vmatmul.bf16.gmra.mxu0 %v732
        %v947 = vpop.f32.mrf.mxu0
        %v948 = vadd.f32 %v397, %v947
        %v949 = vpop.f32.mrf.mxu0
        %v950 = vadd.f32 %v397, %v949
        %951 = vmatmul.bf16.gmra.mxu0 %v735
        %v952 = vpop.f32.mrf.mxu0
        %v953 = vadd.f32 %v397, %v952
        %v954 = vpop.f32.mrf.mxu0
        %v955 = vadd.f32 %v397, %v954
        %956 = vmatmul.bf16.gmra.mxu0 %v738
        %v957 = vpop.f32.mrf.mxu0
        %v958 = vadd.f32 %v397, %v957
        %v959 = vpop.f32.mrf.mxu0
        %v960 = vadd.f32 %v397, %v959
        %961 = vmatmul.bf16.gmra.mxu0 %v741
        %v962 = vpop.f32.mrf.mxu0
        %v963 = vadd.f32 %v397, %v962
        %v964 = vpop.f32.mrf.mxu0
        %v965 = vadd.f32 %v397, %v964
        %966 = vmatmul.bf16.gmra.mxu0 %v744
        %v967 = vpop.f32.mrf.mxu0
        %v968 = vadd.f32 %v397, %v967
        %v969 = vpop.f32.mrf.mxu0
        %v970 = vadd.f32 %v397, %v969
        %971 = vmatmul.bf16.gmra.mxu0 %v747
        %v972 = vpop.f32.mrf.mxu0
        %v973 = vadd.f32 %v397, %v972
        %v974 = vpop.f32.mrf.mxu0
        %v975 = vadd.f32 %v397, %v974
        %976 = vmatmul.bf16.gmra.mxu0 %v750
        %v977 = vpop.f32.mrf.mxu0
        %v978 = vadd.f32 %v397, %v977
        %v979 = vpop.f32.mrf.mxu0
        %v980 = vadd.f32 %v397, %v979
        %981 = vmatmul.bf16.gmra.mxu0 %v753
        %v982 = vpop.f32.mrf.mxu0
        %v983 = vadd.f32 %v397, %v982
        %v984 = vpop.f32.mrf.mxu0
        %v985 = vadd.f32 %v397, %v984
        %986 = vmatmul.bf16.gmra.mxu0 %v756
        %v987 = vpop.f32.mrf.mxu0
        %v988 = vadd.f32 %v397, %v987
        %v989 = vpop.f32.mrf.mxu0
        %v990 = vadd.f32 %v397, %v989
        %991 = vmatmul.bf16.gmra.mxu0 %v759
        %v992 = vpop.f32.mrf.mxu0
        %v993 = vadd.f32 %v397, %v992
        %v994 = vpop.f32.mrf.mxu0
        %v995 = vadd.f32 %v397, %v994
        %996 = vmatmul.bf16.gmra.mxu0 %v762
        %v997 = vpop.f32.mrf.mxu0
        %v998 = vadd.f32 %v397, %v997
        %v999 = vpop.f32.mrf.mxu0
        %v1000 = vadd.f32 %v397, %v999
        %1001 = vmatmul.bf16.gmra.mxu0 %v765
        %v1002 = vpop.f32.mrf.mxu0
        %v1003 = vadd.f32 %v397, %v1002
        %v1004 = vpop.f32.mrf.mxu0
        %v1005 = vadd.f32 %v397, %v1004
        %1006 = vmatmul.bf16.gmra.mxu0 %v768
        %v1007 = vpop.f32.mrf.mxu0
        %v1008 = vadd.f32 %v397, %v1007
        %v1009 = vpop.f32.mrf.mxu0
        %v1010 = vadd.f32 %v397, %v1009
        %1011 = vmatmul.bf16.gmra.mxu0 %v771
        %v1012 = vpop.f32.mrf.mxu0
        %v1013 = vadd.f32 %v397, %v1012
        %v1014 = vpop.f32.mrf.mxu0
        %v1015 = vadd.f32 %v397, %v1014
        %1016 = vmatmul.bf16.gmra.mxu0 %v774
        %v1017 = vpop.f32.mrf.mxu0
        %v1018 = vadd.f32 %v397, %v1017
        %v1019 = vpop.f32.mrf.mxu0
        %v1020 = vadd.f32 %v397, %v1019
        %1021 = vmatmul.bf16.gmra.mxu0 %v777
        %v1022 = vpop.f32.mrf.mxu0
        %v1023 = vadd.f32 %v397, %v1022
        %v1024 = vpop.f32.mrf.mxu0
        %v1025 = vadd.f32 %v397, %v1024
        %1026 = vmatmul.bf16.gmra.mxu0 %v780
        %v1027 = vpop.f32.mrf.mxu0
        %v1028 = vadd.f32 %v397, %v1027
        %v1029 = vpop.f32.mrf.mxu0
        %v1030 = vadd.f32 %v397, %v1029
        %1031 = vmatmul.bf16.gmra.mxu0 %v783
        %v1032 = vpop.f32.mrf.mxu0
        %v1033 = vadd.f32 %v397, %v1032
        %v1034 = vpop.f32.mrf.mxu0
        %v1035 = vadd.f32 %v397, %v1034
        %1036 = vmatmul.bf16.gmra.mxu0 %v786
        %v1037 = vpop.f32.mrf.mxu0
        %v1038 = vadd.f32 %v397, %v1037
        %v1039 = vpop.f32.mrf.mxu0
        %v1040 = vadd.f32 %v397, %v1039
        %1041 = vmatmul.bf16.gmra.mxu0 %v789
        %v1042 = vpop.f32.mrf.mxu0
        %v1043 = vadd.f32 %v397, %v1042
        %v1044 = vpop.f32.mrf.mxu0
        %v1045 = vadd.f32 %v397, %v1044
        %1046 = vmatmul.bf16.gmra.mxu0 %v792
        %v1047 = vpop.f32.mrf.mxu0
        %v1048 = vadd.f32 %v397, %v1047
        %v1049 = vpop.f32.mrf.mxu0
        %v1050 = vadd.f32 %v397, %v1049
        %1051 = vmatmul.bf16.gmra.mxu0 %v795
        %v1052 = vpop.f32.mrf.mxu0
        %v1053 = vadd.f32 %v397, %v1052
        %v1054 = vpop.f32.mrf.mxu0
        %v1055 = vadd.f32 %v397, %v1054
        %1056 = vmatmul.bf16.gmra.mxu0 %v798
        %v1057 = vpop.f32.mrf.mxu0
        %v1058 = vadd.f32 %v397, %v1057
        %v1059 = vpop.f32.mrf.mxu0
        %v1060 = vadd.f32 %v397, %v1059
        %1061 = vmatmul.bf16.gmra.mxu0 %v801
        %v1062 = vpop.f32.mrf.mxu0
        %v1063 = vadd.f32 %v397, %v1062
        %v1064 = vpop.f32.mrf.mxu0
        %v1065 = vadd.f32 %v397, %v1064
        %1066 = vmatmul.bf16.gmra.mxu0 %v804
        %v1067 = vpop.f32.mrf.mxu0
        %v1068 = vadd.f32 %v397, %v1067
        %v1069 = vpop.f32.mrf.mxu0
        %v1070 = vadd.f32 %v397, %v1069
        %1071 = vmatmul.bf16.gmra.mxu0 %v807
        %v1072 = vpop.f32.mrf.mxu0
        %v1073 = vadd.f32 %v397, %v1072
        %v1074 = vpop.f32.mrf.mxu0
        %v1075 = vadd.f32 %v397, %v1074
        %1076 = vmatmul.bf16.gmra.mxu0 %v810
        %v1077 = vpop.f32.mrf.mxu0
        %v1078 = vadd.f32 %v397, %v1077
        %v1079 = vpop.f32.mrf.mxu0
        %v1080 = vadd.f32 %v397, %v1079
        %1081 = vmatmul.bf16.gmra.mxu0 %v813
        %v1082 = vpop.f32.mrf.mxu0
        %v1083 = vadd.f32 %v397, %v1082
        %v1084 = vpop.f32.mrf.mxu0
        %v1085 = vadd.f32 %v397, %v1084
        %1086 = vmatmul.bf16.gmra.mxu0 %v816
        %v1087 = vpop.f32.mrf.mxu0
        %v1088 = vadd.f32 %v397, %v1087
        %v1089 = vpop.f32.mrf.mxu0
        %v1090 = vadd.f32 %v397, %v1089
        %1091 = vmatmul.bf16.gmra.mxu0 %v819
        %v1092 = vpop.f32.mrf.mxu0
        %v1093 = vadd.f32 %v397, %v1092
        %v1094 = vpop.f32.mrf.mxu0
        %v1095 = vadd.f32 %v397, %v1094
        %1096 = vdwg.mxu0
        %v1097 = vmax.f32 %v838, 0.0
        %v1098 = vmax.f32 %v840, 0.0
        %v1099 = vmax.f32 %v843, 0.0
        %v1100 = vmax.f32 %v845, 0.0
        %v1101 = vmax.f32 %v848, 0.0
        %v1102 = vmax.f32 %v850, 0.0
        %v1103 = vmax.f32 %v853, 0.0
        %v1104 = vmax.f32 %v855, 0.0
        %v1105 = vmax.f32 %v858, 0.0
        %v1106 = vmax.f32 %v860, 0.0
        %v1107 = vmax.f32 %v863, 0.0
        %v1108 = vmax.f32 %v865, 0.0
        %v1109 = vmax.f32 %v868, 0.0
        %v1110 = vmax.f32 %v870, 0.0
        %v1111 = vmax.f32 %v873, 0.0
        %v1112 = vmax.f32 %v875, 0.0
        %v1113 = vmax.f32 %v878, 0.0
        %v1114 = vmax.f32 %v880, 0.0
        %v1115 = vmax.f32 %v883, 0.0
        %v1116 = vmax.f32 %v885, 0.0
        %v1117 = vmax.f32 %v888, 0.0
        %v1118 = vmax.f32 %v890, 0.0
        %v1119 = vmax.f32 %v893, 0.0
        %v1120 = vmax.f32 %v895, 0.0
        %v1121 = vmax.f32 %v898, 0.0
        %v1122 = vmax.f32 %v900, 0.0
        %v1123 = vmax.f32 %v903, 0.0
        %v1124 = vmax.f32 %v905, 0.0
        %v1125 = vmax.f32 %v908, 0.0
        %v1126 = vmax.f32 %v910, 0.0
        %v1127 = vmax.f32 %v913, 0.0
        %v1128 = vmax.f32 %v915, 0.0
        %v1129 = vmax.f32 %v918, 0.0
        %v1130 = vmax.f32 %v920, 0.0
        %v1131 = vmax.f32 %v923, 0.0
        %v1132 = vmax.f32 %v925, 0.0
        %v1133 = vmax.f32 %v928, 0.0
        %v1134 = vmax.f32 %v930, 0.0
        %v1135 = vmax.f32 %v933, 0.0
        %v1136 = vmax.f32 %v935, 0.0
        %v1137 = vmax.f32 %v938, 0.0
        %v1138 = vmax.f32 %v940, 0.0
        %v1139 = vmax.f32 %v943, 0.0
        %v1140 = vmax.f32 %v945, 0.0
        %v1141 = vmax.f32 %v948, 0.0
        %v1142 = vmax.f32 %v950, 0.0
        %v1143 = vmax.f32 %v953, 0.0
        %v1144 = vmax.f32 %v955, 0.0
        %v1145 = vmax.f32 %v958, 0.0
        %v1146 = vmax.f32 %v960, 0.0
        %v1147 = vmax.f32 %v963, 0.0
        %v1148 = vmax.f32 %v965, 0.0
        %v1149 = vmax.f32 %v968, 0.0
        %v1150 = vmax.f32 %v970, 0.0
        %v1151 = vmax.f32 %v973, 0.0
        %v1152 = vmax.f32 %v975, 0.0
        %v1153 = vmax.f32 %v978, 0.0
        %v1154 = vmax.f32 %v980, 0.0
        %v1155 = vmax.f32 %v983, 0.0
        %v1156 = vmax.f32 %v985, 0.0
        %v1157 = vmax.f32 %v988, 0.0
        %v1158 = vmax.f32 %v990, 0.0
        %v1159 = vmax.f32 %v993, 0.0
        %v1160 = vmax.f32 %v995, 0.0
        %v1161 = vmax.f32 %v998, 0.0
        %v1162 = vmax.f32 %v1000, 0.0
        %v1163 = vmax.f32 %v1003, 0.0
        %v1164 = vmax.f32 %v1005, 0.0
        %v1165 = vmax.f32 %v1008, 0.0
        %v1166 = vmax.f32 %v1010, 0.0
        %v1167 = vmax.f32 %v1013, 0.0
        %v1168 = vmax.f32 %v1015, 0.0
        %v1169 = vmax.f32 %v1018, 0.0
        %v1170 = vmax.f32 %v1020, 0.0
        %v1171 = vmax.f32 %v1023, 0.0
        %v1172 = vmax.f32 %v1025, 0.0
        %v1173 = vmax.f32 %v1028, 0.0
        %v1174 = vmax.f32 %v1030, 0.0
        %v1175 = vmax.f32 %v1033, 0.0
        %v1176 = vmax.f32 %v1035, 0.0
        %v1177 = vmax.f32 %v1038, 0.0
        %v1178 = vmax.f32 %v1040, 0.0
        %v1179 = vmax.f32 %v1043, 0.0
        %v1180 = vmax.f32 %v1045, 0.0
        %v1181 = vmax.f32 %v1048, 0.0
        %v1182 = vmax.f32 %v1050, 0.0
        %v1183 = vmax.f32 %v1053, 0.0
        %v1184 = vmax.f32 %v1055, 0.0
        %v1185 = vmax.f32 %v1058, 0.0
        %v1186 = vmax.f32 %v1060, 0.0
        %v1187 = vmax.f32 %v1063, 0.0
        %v1188 = vmax.f32 %v1065, 0.0
        %v1189 = vmax.f32 %v1068, 0.0
        %v1190 = vmax.f32 %v1070, 0.0
        %v1191 = vmax.f32 %v1073, 0.0
        %v1192 = vmax.f32 %v1075, 0.0
        %v1193 = vmax.f32 %v1078, 0.0
        %v1194 = vmax.f32 %v1080, 0.0
        %v1195 = vmax.f32 %v1083, 0.0
        %v1196 = vmax.f32 %v1085, 0.0
        %v1197 = vmax.f32 %v1088, 0.0
        %v1198 = vmax.f32 %v1090, 0.0
        %v1199 = vmax.f32 %v1093, 0.0
        %v1200 = vmax.f32 %v1095, 0.0
        %vm1201 = vcmask 261120
        %1202 = vst.msk [vmem:[#allocation2] sm:$0xff] %vm1201, %v1097
        %1203 = vst.msk [vmem:[#allocation2 + $0x8] sm:$0xff] %vm1201, %v1098
        %1204 = vst.msk [vmem:[#allocation2 + $0x10] sm:$0xff] %vm1201, %v1099
        %1205 = vst.msk [vmem:[#allocation2 + $0x18] sm:$0xff] %vm1201, %v1100
        %1206 = vst.msk [vmem:[#allocation2 + $0x20] sm:$0xff] %vm1201, %v1101
        %1207 = vst.msk [vmem:[#allocation2 + $0x28] sm:$0xff] %vm1201, %v1102
        %1208 = vst.msk [vmem:[#allocation2 + $0x30] sm:$0xff] %vm1201, %v1103
        %1209 = vst.msk [vmem:[#allocation2 + $0x38] sm:$0xff] %vm1201, %v1104
        %1210 = vst.msk [vmem:[#allocation2 + $0x40] sm:$0xff] %vm1201, %v1105
        %1211 = vst.msk [vmem:[#allocation2 + $0x48] sm:$0xff] %vm1201, %v1106
        %1212 = vst.msk [vmem:[#allocation2 + $0x50] sm:$0xff] %vm1201, %v1107
        %1213 = vst.msk [vmem:[#allocation2 + $0x58] sm:$0xff] %vm1201, %v1108
        %1214 = vst.msk [vmem:[#allocation2 + $0x60] sm:$0xff] %vm1201, %v1109
        %1215 = vst.msk [vmem:[#allocation2 + $0x68] sm:$0xff] %vm1201, %v1110
        %1216 = vst.msk [vmem:[#allocation2 + $0x70] sm:$0xff] %vm1201, %v1111
        %1217 = vst.msk [vmem:[#allocation2 + $0x78] sm:$0xff] %vm1201, %v1112
        %1218 = vst.msk [vmem:[#allocation2 + $0x80] sm:$0xff] %vm1201, %v1113
        %1219 = vst.msk [vmem:[#allocation2 + $0x88] sm:$0xff] %vm1201, %v1114
        %1220 = vst.msk [vmem:[#allocation2 + $0x90] sm:$0xff] %vm1201, %v1115
        %1221 = vst.msk [vmem:[#allocation2 + $0x98] sm:$0xff] %vm1201, %v1116
        %1222 = vst.msk [vmem:[#allocation2 + $0xa0] sm:$0xff] %vm1201, %v1117
        %1223 = vst.msk [vmem:[#allocation2 + $0xa8] sm:$0xff] %vm1201, %v1118
        %1224 = vst.msk [vmem:[#allocation2 + $0xb0] sm:$0xff] %vm1201, %v1119
        %1225 = vst.msk [vmem:[#allocation2 + $0xb8] sm:$0xff] %vm1201, %v1120
        %1226 = vst.msk [vmem:[#allocation2 + $0xc0] sm:$0xff] %vm1201, %v1121
        %1227 = vst.msk [vmem:[#allocation2 + $0xc8] sm:$0xff] %vm1201, %v1122
        %1228 = vst.msk [vmem:[#allocation2 + $0xd0] sm:$0xff] %vm1201, %v1123
        %1229 = vst.msk [vmem:[#allocation2 + $0xd8] sm:$0xff] %vm1201, %v1124
        %1230 = vst.msk [vmem:[#allocation2 + $0xe0] sm:$0xff] %vm1201, %v1125
        %1231 = vst.msk [vmem:[#allocation2 + $0xe8] sm:$0xff] %vm1201, %v1126
        %1232 = vst.msk [vmem:[#allocation2 + $0xf0] sm:$0xff] %vm1201, %v1127
        %1233 = vst.msk [vmem:[#allocation2 + $0xf8] sm:$0xff] %vm1201, %v1128
        %1234 = vst.msk [vmem:[#allocation2 + $0x100] sm:$0xff] %vm1201, %v1129
        %1235 = vst.msk [vmem:[#allocation2 + $0x108] sm:$0xff] %vm1201, %v1130
        %1236 = vst.msk [vmem:[#allocation2 + $0x110] sm:$0xff] %vm1201, %v1131
        %1237 = vst.msk [vmem:[#allocation2 + $0x118] sm:$0xff] %vm1201, %v1132
        %1238 = vst.msk [vmem:[#allocation2 + $0x120] sm:$0xff] %vm1201, %v1133
        %1239 = vst.msk [vmem:[#allocation2 + $0x128] sm:$0xff] %vm1201, %v1134
        %1240 = vst.msk [vmem:[#allocation2 + $0x130] sm:$0xff] %vm1201, %v1135
        %1241 = vst.msk [vmem:[#allocation2 + $0x138] sm:$0xff] %vm1201, %v1136
        %1242 = vst.msk [vmem:[#allocation2 + $0x140] sm:$0xff] %vm1201, %v1137
        %1243 = vst.msk [vmem:[#allocation2 + $0x148] sm:$0xff] %vm1201, %v1138
        %1244 = vst.msk [vmem:[#allocation2 + $0x150] sm:$0xff] %vm1201, %v1139
        %1245 = vst.msk [vmem:[#allocation2 + $0x158] sm:$0xff] %vm1201, %v1140
        %1246 = vst.msk [vmem:[#allocation2 + $0x160] sm:$0xff] %vm1201, %v1141
        %1247 = vst.msk [vmem:[#allocation2 + $0x168] sm:$0xff] %vm1201, %v1142
        %1248 = vst.msk [vmem:[#allocation2 + $0x170] sm:$0xff] %vm1201, %v1143
        %1249 = vst.msk [vmem:[#allocation2 + $0x178] sm:$0xff] %vm1201, %v1144
        %1250 = vst.msk [vmem:[#allocation2 + $0x180] sm:$0xff] %vm1201, %v1145
        %1251 = vst.msk [vmem:[#allocation2 + $0x188] sm:$0xff] %vm1201, %v1146
        %1252 = vst.msk [vmem:[#allocation2 + $0x190] sm:$0xff] %vm1201, %v1147
        %1253 = vst.msk [vmem:[#allocation2 + $0x198] sm:$0xff] %vm1201, %v1148
        %1254 = vst.msk [vmem:[#allocation2 + $0x1a0] sm:$0xff] %vm1201, %v1149
        %1255 = vst.msk [vmem:[#allocation2 + $0x1a8] sm:$0xff] %vm1201, %v1150
        %1256 = vst.msk [vmem:[#allocation2 + $0x1b0] sm:$0xff] %vm1201, %v1151
        %1257 = vst.msk [vmem:[#allocation2 + $0x1b8] sm:$0xff] %vm1201, %v1152
        %1258 = vst.msk [vmem:[#allocation2 + $0x1c0] sm:$0xff] %vm1201, %v1153
        %1259 = vst.msk [vmem:[#allocation2 + $0x1c8] sm:$0xff] %vm1201, %v1154
        %1260 = vst.msk [vmem:[#allocation2 + $0x1d0] sm:$0xff] %vm1201, %v1155
        %1261 = vst.msk [vmem:[#allocation2 + $0x1d8] sm:$0xff] %vm1201, %v1156
        %1262 = vst.msk [vmem:[#allocation2 + $0x1e0] sm:$0xff] %vm1201, %v1157
        %1263 = vst.msk [vmem:[#allocation2 + $0x1e8] sm:$0xff] %vm1201, %v1158
        %1264 = vst.msk [vmem:[#allocation2 + $0x1f0] sm:$0xff] %vm1201, %v1159
        %1265 = vst.msk [vmem:[#allocation2 + $0x1f8] sm:$0xff] %vm1201, %v1160
        %1266 = vst.msk [vmem:[#allocation2 + $0x200] sm:$0xff] %vm1201, %v1161
        %1267 = vst.msk [vmem:[#allocation2 + $0x208] sm:$0xff] %vm1201, %v1162
        %1268 = vst.msk [vmem:[#allocation2 + $0x210] sm:$0xff] %vm1201, %v1163
        %1269 = vst.msk [vmem:[#allocation2 + $0x218] sm:$0xff] %vm1201, %v1164
        %1270 = vst.msk [vmem:[#allocation2 + $0x220] sm:$0xff] %vm1201, %v1165
        %1271 = vst.msk [vmem:[#allocation2 + $0x228] sm:$0xff] %vm1201, %v1166
        %1272 = vst.msk [vmem:[#allocation2 + $0x230] sm:$0xff] %vm1201, %v1167
        %1273 = vst.msk [vmem:[#allocation2 + $0x238] sm:$0xff] %vm1201, %v1168
        %1274 = vst.msk [vmem:[#allocation2 + $0x240] sm:$0xff] %vm1201, %v1169
        %1275 = vst.msk [vmem:[#allocation2 + $0x248] sm:$0xff] %vm1201, %v1170
        %1276 = vst.msk [vmem:[#allocation2 + $0x250] sm:$0xff] %vm1201, %v1171
        %1277 = vst.msk [vmem:[#allocation2 + $0x258] sm:$0xff] %vm1201, %v1172
        %1278 = vst.msk [vmem:[#allocation2 + $0x260] sm:$0xff] %vm1201, %v1173
        %1279 = vst.msk [vmem:[#allocation2 + $0x268] sm:$0xff] %vm1201, %v1174
        %1280 = vst.msk [vmem:[#allocation2 + $0x270] sm:$0xff] %vm1201, %v1175
        %1281 = vst.msk [vmem:[#allocation2 + $0x278] sm:$0xff] %vm1201, %v1176
        %1282 = vst.msk [vmem:[#allocation2 + $0x280] sm:$0xff] %vm1201, %v1177
        %1283 = vst.msk [vmem:[#allocation2 + $0x288] sm:$0xff] %vm1201, %v1178
        %1284 = vst.msk [vmem:[#allocation2 + $0x290] sm:$0xff] %vm1201, %v1179
        %1285 = vst.msk [vmem:[#allocation2 + $0x298] sm:$0xff] %vm1201, %v1180
        %1286 = vst.msk [vmem:[#allocation2 + $0x2a0] sm:$0xff] %vm1201, %v1181
        %1287 = vst.msk [vmem:[#allocation2 + $0x2a8] sm:$0xff] %vm1201, %v1182
        %1288 = vst.msk [vmem:[#allocation2 + $0x2b0] sm:$0xff] %vm1201, %v1183
        %1289 = vst.msk [vmem:[#allocation2 + $0x2b8] sm:$0xff] %vm1201, %v1184
        %1290 = vst.msk [vmem:[#allocation2 + $0x2c0] sm:$0xff] %vm1201, %v1185
        %1291 = vst.msk [vmem:[#allocation2 + $0x2c8] sm:$0xff] %vm1201, %v1186
        %1292 = vst.msk [vmem:[#allocation2 + $0x2d0] sm:$0xff] %vm1201, %v1187
        %1293 = vst.msk [vmem:[#allocation2 + $0x2d8] sm:$0xff] %vm1201, %v1188
        %1294 = vst.msk [vmem:[#allocation2 + $0x2e0] sm:$0xff] %vm1201, %v1189
        %1295 = vst.msk [vmem:[#allocation2 + $0x2e8] sm:$0xff] %vm1201, %v1190
        %1296 = vst.msk [vmem:[#allocation2 + $0x2f0] sm:$0xff] %vm1201, %v1191
        %1297 = vst.msk [vmem:[#allocation2 + $0x2f8] sm:$0xff] %vm1201, %v1192
        %1298 = vst.msk [vmem:[#allocation2 + $0x300] sm:$0xff] %vm1201, %v1193
        %1299 = vst.msk [vmem:[#allocation2 + $0x308] sm:$0xff] %vm1201, %v1194
        %1300 = vst.msk [vmem:[#allocation2 + $0x310] sm:$0xff] %vm1201, %v1195
        %1301 = vst.msk [vmem:[#allocation2 + $0x318] sm:$0xff] %vm1201, %v1196
        %1302 = vst.msk [vmem:[#allocation2 + $0x320] sm:$0xff] %vm1201, %v1197
        %1303 = vst.msk [vmem:[#allocation2 + $0x328] sm:$0xff] %vm1201, %v1198
        %1304 = vst.msk [vmem:[#allocation2 + $0x330] sm:$0xff] %vm1201, %v1199
        %1305 = vst.msk [vmem:[#allocation2 + $0x338] sm:$0xff] %vm1201, %v1200
        %v1306 = vld [vmem:[#allocation2] sm:$0xff]
        %v1307 = vld [vmem:[#allocation2 + $0x8] sm:$0xff]
        %v1308 = vld [vmem:[#allocation2 + $0x10] sm:$0xff]
        %v1309 = vld [vmem:[#allocation2 + $0x20] sm:$0xff]
        %v1310 = vld [vmem:[#allocation2 + $0x28] sm:$0xff]
        %v1311 = vld [vmem:[#allocation2 + $0x30] sm:$0xff]
        %v1312 = vld [vmem:[#allocation2 + $0x40] sm:$0xff]
        %v1313 = vld [vmem:[#allocation2 + $0x48] sm:$0xff]
        %v1314 = vld [vmem:[#allocation2 + $0x50] sm:$0xff]
        %v1315 = vld [vmem:[#allocation2 + $0x60] sm:$0xff]
        %v1316 = vld [vmem:[#allocation2 + $0x68] sm:$0xff]
        %v1317 = vld [vmem:[#allocation2 + $0x70] sm:$0xff]
        %v1318 = vld [vmem:[#allocation2 + $0x80] sm:$0xff]
        %v1319 = vld [vmem:[#allocation2 + $0x88] sm:$0xff]
        %v1320 = vld [vmem:[#allocation2 + $0x90] sm:$0xff]
        %v1321 = vld [vmem:[#allocation2 + $0xa0] sm:$0xff]
        %v1322 = vld [vmem:[#allocation2 + $0xa8] sm:$0xff]
        %v1323 = vld [vmem:[#allocation2 + $0xb0] sm:$0xff]
        %v1324 = vld [vmem:[#allocation2 + $0xc0] sm:$0xff]
        %v1325 = vld [vmem:[#allocation2 + $0xc8] sm:$0xff]
        %v1326 = vld [vmem:[#allocation2 + $0xd0] sm:$0xff]
        %v1327 = vld [vmem:[#allocation2 + $0xe0] sm:$0xff]
        %v1328 = vld [vmem:[#allocation2 + $0xe8] sm:$0xff]
        %v1329 = vld [vmem:[#allocation2 + $0xf0] sm:$0xff]
        %v1330 = vld [vmem:[#allocation2 + $0x100] sm:$0xff]
        %v1331 = vld [vmem:[#allocation2 + $0x108] sm:$0xff]
        %v1332 = vld [vmem:[#allocation2 + $0x110] sm:$0xff]
        %v1333 = vld [vmem:[#allocation2 + $0x120] sm:$0xff]
        %v1334 = vld [vmem:[#allocation2 + $0x128] sm:$0xff]
        %v1335 = vld [vmem:[#allocation2 + $0x130] sm:$0xff]
        %v1336 = vld [vmem:[#allocation2 + $0x140] sm:$0xff]
        %v1337 = vld [vmem:[#allocation2 + $0x148] sm:$0xff]
        %v1338 = vld [vmem:[#allocation2 + $0x150] sm:$0xff]
        %v1339 = vld [vmem:[#allocation2 + $0x160] sm:$0xff]
        %v1340 = vld [vmem:[#allocation2 + $0x168] sm:$0xff]
        %v1341 = vld [vmem:[#allocation2 + $0x170] sm:$0xff]
        %v1342 = vld [vmem:[#allocation2 + $0x180] sm:$0xff]
        %v1343 = vld [vmem:[#allocation2 + $0x188] sm:$0xff]
        %v1344 = vld [vmem:[#allocation2 + $0x190] sm:$0xff]
        %v1345 = vld [vmem:[#allocation2 + $0x1a0] sm:$0xff]
        %v1346 = vld [vmem:[#allocation2 + $0x1a8] sm:$0xff]
        %v1347 = vld [vmem:[#allocation2 + $0x1b0] sm:$0xff]
        %v1348 = vld [vmem:[#allocation2 + $0x1c0] sm:$0xff]
        %v1349 = vld [vmem:[#allocation2 + $0x1c8] sm:$0xff]
        %v1350 = vld [vmem:[#allocation2 + $0x1d0] sm:$0xff]
        %v1351 = vld [vmem:[#allocation2 + $0x1e0] sm:$0xff]
        %v1352 = vld [vmem:[#allocation2 + $0x1e8] sm:$0xff]
        %v1353 = vld [vmem:[#allocation2 + $0x1f0] sm:$0xff]
        %v1354 = vld [vmem:[#allocation2 + $0x200] sm:$0xff]
        %v1355 = vld [vmem:[#allocation2 + $0x208] sm:$0xff]
        %v1356 = vld [vmem:[#allocation2 + $0x210] sm:$0xff]
        %v1357 = vld [vmem:[#allocation2 + $0x220] sm:$0xff]
        %v1358 = vld [vmem:[#allocation2 + $0x228] sm:$0xff]
        %v1359 = vld [vmem:[#allocation2 + $0x230] sm:$0xff]
        %v1360 = vld [vmem:[#allocation2 + $0x240] sm:$0xff]
        %v1361 = vld [vmem:[#allocation2 + $0x248] sm:$0xff]
        %v1362 = vld [vmem:[#allocation2 + $0x250] sm:$0xff]
        %v1363 = vld [vmem:[#allocation2 + $0x260] sm:$0xff]
        %v1364 = vld [vmem:[#allocation2 + $0x268] sm:$0xff]
        %v1365 = vld [vmem:[#allocation2 + $0x270] sm:$0xff]
        %v1366 = vld [vmem:[#allocation2 + $0x280] sm:$0xff]
        %v1367 = vld [vmem:[#allocation2 + $0x288] sm:$0xff]
        %v1368 = vld [vmem:[#allocation2 + $0x290] sm:$0xff]
        %v1369 = vld [vmem:[#allocation2 + $0x2a0] sm:$0xff]
        %v1370 = vld [vmem:[#allocation2 + $0x2a8] sm:$0xff]
        %v1371 = vld [vmem:[#allocation2 + $0x2b0] sm:$0xff]
        %v1372 = vld [vmem:[#allocation2 + $0x2c0] sm:$0xff]
        %v1373 = vld [vmem:[#allocation2 + $0x2c8] sm:$0xff]
        %v1374 = vld [vmem:[#allocation2 + $0x2d0] sm:$0xff]
        %v1375 = vld [vmem:[#allocation2 + $0x2e0] sm:$0xff]
        %v1376 = vld [vmem:[#allocation2 + $0x2e8] sm:$0xff]
        %v1377 = vld [vmem:[#allocation2 + $0x2f0] sm:$0xff]
        %v1378 = vpack.c.bf16 %v1307, %v1306
        %v1379 = vpack.c.bf16 %v1309, %v1308
        %v1380 = vpack.c.bf16 %v1311, %v1310
        %v1381 = vpack.c.bf16 %v1313, %v1312
        %v1382 = vpack.c.bf16 %v1315, %v1314
        %v1383 = vpack.c.bf16 %v1317, %v1316
        %v1384 = vpack.c.bf16 %v1319, %v1318
        %v1385 = vpack.c.bf16 %v1321, %v1320
        %v1386 = vpack.c.bf16 %v1323, %v1322
        %v1387 = vpack.c.bf16 %v1325, %v1324
        %v1388 = vpack.c.bf16 %v1327, %v1326
        %v1389 = vpack.c.bf16 %v1329, %v1328
        %v1390 = vpack.c.bf16 %v1331, %v1330
        %v1391 = vpack.c.bf16 %v1333, %v1332
        %v1392 = vpack.c.bf16 %v1335, %v1334
        %v1393 = vpack.c.bf16 %v1337, %v1336
        %v1394 = vpack.c.bf16 %v1339, %v1338
        %v1395 = vpack.c.bf16 %v1341, %v1340
        %v1396 = vpack.c.bf16 %v1343, %v1342
        %v1397 = vpack.c.bf16 %v1345, %v1344
        %v1398 = vpack.c.bf16 %v1347, %v1346
        %v1399 = vpack.c.bf16 %v1349, %v1348
        %v1400 = vpack.c.bf16 %v1351, %v1350
        %v1401 = vpack.c.bf16 %v1353, %v1352
        %v1402 = vpack.c.bf16 %v1355, %v1354
        %v1403 = vpack.c.bf16 %v1357, %v1356
        %v1404 = vpack.c.bf16 %v1359, %v1358
        %v1405 = vpack.c.bf16 %v1361, %v1360
        %v1406 = vpack.c.bf16 %v1363, %v1362
        %v1407 = vpack.c.bf16 %v1365, %v1364
        %v1408 = vpack.c.bf16 %v1367, %v1366
        %v1409 = vpack.c.bf16 %v1369, %v1368
        %v1410 = vpack.c.bf16 %v1371, %v1370
        %v1411 = vpack.c.bf16 %v1373, %v1372
        %v1412 = vpack.c.bf16 %v1375, %v1374
        %v1413 = vpack.c.bf16 %v1377, %v1376
        %v1414 = vld [vmem:[#allocation9] sm:$0xf]
        %v1415 = vld [vmem:[#allocation9 + $0x4] sm:$0xf]
        %v1416 = vld [vmem:[#allocation9 + $0x8] sm:$0xf]
        %v1417 = vld [vmem:[#allocation9 + $0xc] sm:$0xf]
        %v1418 = vld [vmem:[#allocation2 + $0x1] sm:$0xff]
        %v1419 = vld [vmem:[#allocation2 + $0x9] sm:$0xff]
        %v1420 = vld [vmem:[#allocation2 + $0x11] sm:$0xff]
        %v1421 = vld [vmem:[#allocation2 + $0x21] sm:$0xff]
        %v1422 = vld [vmem:[#allocation2 + $0x29] sm:$0xff]
        %v1423 = vld [vmem:[#allocation2 + $0x31] sm:$0xff]
        %v1424 = vld [vmem:[#allocation2 + $0x41] sm:$0xff]
        %v1425 = vld [vmem:[#allocation2 + $0x49] sm:$0xff]
        %v1426 = vld [vmem:[#allocation2 + $0x51] sm:$0xff]
        %v1427 = vld [vmem:[#allocation2 + $0x61] sm:$0xff]
        %v1428 = vld [vmem:[#allocation2 + $0x69] sm:$0xff]
        %v1429 = vld [vmem:[#allocation2 + $0x71] sm:$0xff]
        %v1430 = vld [vmem:[#allocation2 + $0x81] sm:$0xff]
        %v1431 = vld [vmem:[#allocation2 + $0x89] sm:$0xff]
        %v1432 = vld [vmem:[#allocation2 + $0x91] sm:$0xff]
        %v1433 = vld [vmem:[#allocation2 + $0xa1] sm:$0xff]
        %v1434 = vld [vmem:[#allocation2 + $0xa9] sm:$0xff]
        %v1435 = vld [vmem:[#allocation2 + $0xb1] sm:$0xff]
        %v1436 = vld [vmem:[#allocation2 + $0xc1] sm:$0xff]
        %v1437 = vld [vmem:[#allocation2 + $0xc9] sm:$0xff]
        %v1438 = vld [vmem:[#allocation2 + $0xd1] sm:$0xff]
        %v1439 = vld [vmem:[#allocation2 + $0xe1] sm:$0xff]
        %v1440 = vld [vmem:[#allocation2 + $0xe9] sm:$0xff]
        %v1441 = vld [vmem:[#allocation2 + $0xf1] sm:$0xff]
        %v1442 = vld [vmem:[#allocation2 + $0x101] sm:$0xff]
        %v1443 = vld [vmem:[#allocation2 + $0x109] sm:$0xff]
        %v1444 = vld [vmem:[#allocation2 + $0x111] sm:$0xff]
        %v1445 = vld [vmem:[#allocation2 + $0x121] sm:$0xff]
        %v1446 = vld [vmem:[#allocation2 + $0x129] sm:$0xff]
        %v1447 = vld [vmem:[#allocation2 + $0x131] sm:$0xff]
        %v1448 = vld [vmem:[#allocation2 + $0x141] sm:$0xff]
        %v1449 = vld [vmem:[#allocation2 + $0x149] sm:$0xff]
        %v1450 = vld [vmem:[#allocation2 + $0x151] sm:$0xff]
        %v1451 = vld [vmem:[#allocation2 + $0x161] sm:$0xff]
        %v1452 = vld [vmem:[#allocation2 + $0x169] sm:$0xff]
        %v1453 = vld [vmem:[#allocation2 + $0x171] sm:$0xff]
        %v1454 = vld [vmem:[#allocation2 + $0x181] sm:$0xff]
        %v1455 = vld [vmem:[#allocation2 + $0x189] sm:$0xff]
        %v1456 = vld [vmem:[#allocation2 + $0x191] sm:$0xff]
        %v1457 = vld [vmem:[#allocation2 + $0x1a1] sm:$0xff]
        %v1458 = vld [vmem:[#allocation2 + $0x1a9] sm:$0xff]
        %v1459 = vld [vmem:[#allocation2 + $0x1b1] sm:$0xff]
        %v1460 = vld [vmem:[#allocation2 + $0x1c1] sm:$0xff]
        %v1461 = vld [vmem:[#allocation2 + $0x1c9] sm:$0xff]
        %v1462 = vld [vmem:[#allocation2 + $0x1d1] sm:$0xff]
        %v1463 = vld [vmem:[#allocation2 + $0x1e1] sm:$0xff]
        %v1464 = vld [vmem:[#allocation2 + $0x1e9] sm:$0xff]
        %v1465 = vld [vmem:[#allocation2 + $0x1f1] sm:$0xff]
        %v1466 = vld [vmem:[#allocation2 + $0x201] sm:$0xff]
        %v1467 = vld [vmem:[#allocation2 + $0x209] sm:$0xff]
        %v1468 = vld [vmem:[#allocation2 + $0x211] sm:$0xff]
        %v1469 = vld [vmem:[#allocation2 + $0x221] sm:$0xff]
        %v1470 = vld [vmem:[#allocation2 + $0x229] sm:$0xff]
        %v1471 = vld [vmem:[#allocation2 + $0x231] sm:$0xff]
        %v1472 = vld [vmem:[#allocation2 + $0x241] sm:$0xff]
        %v1473 = vld [vmem:[#allocation2 + $0x249] sm:$0xff]
        %v1474 = vld [vmem:[#allocation2 + $0x251] sm:$0xff]
        %v1475 = vld [vmem:[#allocation2 + $0x261] sm:$0xff]
        %v1476 = vld [vmem:[#allocation2 + $0x269] sm:$0xff]
        %v1477 = vld [vmem:[#allocation2 + $0x271] sm:$0xff]
        %v1478 = vld [vmem:[#allocation2 + $0x281] sm:$0xff]
        %v1479 = vld [vmem:[#allocation2 + $0x289] sm:$0xff]
        %v1480 = vld [vmem:[#allocation2 + $0x291] sm:$0xff]
        %v1481 = vld [vmem:[#allocation2 + $0x2a1] sm:$0xff]
        %v1482 = vld [vmem:[#allocation2 + $0x2a9] sm:$0xff]
        %v1483 = vld [vmem:[#allocation2 + $0x2b1] sm:$0xff]
        %v1484 = vld [vmem:[#allocation2 + $0x2c1] sm:$0xff]
        %v1485 = vld [vmem:[#allocation2 + $0x2c9] sm:$0xff]
        %v1486 = vld [vmem:[#allocation2 + $0x2d1] sm:$0xff]
        %v1487 = vld [vmem:[#allocation2 + $0x2e1] sm:$0xff]
        %v1488 = vld [vmem:[#allocation2 + $0x2e9] sm:$0xff]
        %v1489 = vld [vmem:[#allocation2 + $0x2f1] sm:$0xff]
        %v1490 = vpack.c.bf16 %v1419, %v1418
        %v1491 = vpack.c.bf16 %v1421, %v1420
        %v1492 = vpack.c.bf16 %v1423, %v1422
        %v1493 = vpack.c.bf16 %v1425, %v1424
        %v1494 = vpack.c.bf16 %v1427, %v1426
        %v1495 = vpack.c.bf16 %v1429, %v1428
        %v1496 = vpack.c.bf16 %v1431, %v1430
        %v1497 = vpack.c.bf16 %v1433, %v1432
        %v1498 = vpack.c.bf16 %v1435, %v1434
        %v1499 = vpack.c.bf16 %v1437, %v1436
        %v1500 = vpack.c.bf16 %v1439, %v1438
        %v1501 = vpack.c.bf16 %v1441, %v1440
        %v1502 = vpack.c.bf16 %v1443, %v1442
        %v1503 = vpack.c.bf16 %v1445, %v1444
        %v1504 = vpack.c.bf16 %v1447, %v1446
        %v1505 = vpack.c.bf16 %v1449, %v1448
        %v1506 = vpack.c.bf16 %v1451, %v1450
        %v1507 = vpack.c.bf16 %v1453, %v1452
        %v1508 = vpack.c.bf16 %v1455, %v1454
        %v1509 = vpack.c.bf16 %v1457, %v1456
        %v1510 = vpack.c.bf16 %v1459, %v1458
        %v1511 = vpack.c.bf16 %v1461, %v1460
        %v1512 = vpack.c.bf16 %v1463, %v1462
        %v1513 = vpack.c.bf16 %v1465, %v1464
        %v1514 = vpack.c.bf16 %v1467, %v1466
        %v1515 = vpack.c.bf16 %v1469, %v1468
        %v1516 = vpack.c.bf16 %v1471, %v1470
        %v1517 = vpack.c.bf16 %v1473, %v1472
        %v1518 = vpack.c.bf16 %v1475, %v1474
        %v1519 = vpack.c.bf16 %v1477, %v1476
        %v1520 = vpack.c.bf16 %v1479, %v1478
        %v1521 = vpack.c.bf16 %v1481, %v1480
        %v1522 = vpack.c.bf16 %v1483, %v1482
        %v1523 = vpack.c.bf16 %v1485, %v1484
        %v1524 = vpack.c.bf16 %v1487, %v1486
        %v1525 = vpack.c.bf16 %v1489, %v1488
        %s1526 = scalar_lea.vmem [#allocation9], 16
        %v1527 = vld [vmem:[%s1526] sm:$0xf]
        %v1528 = vld [vmem:[%s1526 + $0x4] sm:$0xf]
        %v1529 = vld [vmem:[%s1526 + $0x8] sm:$0xf]
        %v1530 = vld [vmem:[%s1526 + $0xc] sm:$0xf]
        %v1535 = vunpack.c.l.b16 %v1527
        %v1536 = vunpack.c.l.b16 %v1528
        %v1537 = vunpack.c.l.b16 %v1529
        %v1538 = vunpack.c.l.b16 %v1530
        %v1539 = vpack.c.b16 %v1536, %v1535
        %v1540 = vpack.c.b16 %v1538, %v1537
        %v1544 = vsel %vm1201, %v1490, 0
        %v1547 = vsel %vm1201, %v1491, 0
        %v1550 = vsel %vm1201, %v1492, 0
        %v1553 = vsel %vm1201, %v1493, 0
        %v1556 = vsel %vm1201, %v1494, 0
        %v1559 = vsel %vm1201, %v1495, 0
        %v1562 = vsel %vm1201, %v1496, 0
        %v1565 = vsel %vm1201, %v1497, 0
        %v1568 = vsel %vm1201, %v1498, 0
        %v1571 = vsel %vm1201, %v1499, 0
        %v1574 = vsel %vm1201, %v1500, 0
        %v1577 = vsel %vm1201, %v1501, 0
        %v1580 = vsel %vm1201, %v1502, 0
        %v1583 = vsel %vm1201, %v1503, 0
        %v1586 = vsel %vm1201, %v1504, 0
        %v1589 = vsel %vm1201, %v1505, 0
        %v1592 = vsel %vm1201, %v1506, 0
        %v1595 = vsel %vm1201, %v1507, 0
        %v1598 = vsel %vm1201, %v1508, 0
        %v1601 = vsel %vm1201, %v1509, 0
        %v1604 = vsel %vm1201, %v1510, 0
        %v1607 = vsel %vm1201, %v1511, 0
        %v1610 = vsel %vm1201, %v1512, 0
        %v1613 = vsel %vm1201, %v1513, 0
        %v1616 = vsel %vm1201, %v1514, 0
        %v1619 = vsel %vm1201, %v1515, 0
        %v1622 = vsel %vm1201, %v1516, 0
        %v1625 = vsel %vm1201, %v1517, 0
        %v1628 = vsel %vm1201, %v1518, 0
        %v1631 = vsel %vm1201, %v1519, 0
        %v1634 = vsel %vm1201, %v1520, 0
        %v1637 = vsel %vm1201, %v1521, 0
        %v1640 = vsel %vm1201, %v1522, 0
        %v1643 = vsel %vm1201, %v1523, 0
        %v1646 = vsel %vm1201, %v1524, 0
        %v1649 = vsel %vm1201, %v1525, 0
        %1651 = vmatpush.bf16.msra.mxu0 0
        %1652 = vmatpush.bf16.msra.mxu0 0
        %1653 = vmatpush.bf16.msra.mxu0 0
        %1654 = vmatpush.bf16.msra.mxu0 0
        %1655 = vmatpush.bf16.msra.mxu0 0
        %1656 = vmatpush.bf16.msra.mxu0 0
        %1657 = vmatpush.bf16.msra.mxu0 %v1540
        %1658 = vmatpush.bf16.msra.mxu0 %v1539
        %1659 = vmatmul.bf16.gmra.mxu0 %v1544
        %v1660 = vpop.f32.mrf.mxu0
        %v1661 = vadd.f32 0.0, %v1660
        %v1662 = vpop.f32.mrf.mxu0
        %v1663 = vadd.f32 0.0, %v1662
        %1664 = vmatmul.bf16.gmra.mxu0 %v1547
        %v1665 = vpop.f32.mrf.mxu0
        %v1666 = vadd.f32 0.0, %v1665
        %v1667 = vpop.f32.mrf.mxu0
        %v1668 = vadd.f32 0.0, %v1667
        %1669 = vmatmul.bf16.gmra.mxu0 %v1550
        %v1670 = vpop.f32.mrf.mxu0
        %v1671 = vadd.f32 0.0, %v1670
        %v1672 = vpop.f32.mrf.mxu0
        %v1673 = vadd.f32 0.0, %v1672
        %1674 = vmatmul.bf16.gmra.mxu0 %v1553
        %v1675 = vpop.f32.mrf.mxu0
        %v1676 = vadd.f32 0.0, %v1675
        %v1677 = vpop.f32.mrf.mxu0
        %v1678 = vadd.f32 0.0, %v1677
        %1679 = vmatmul.bf16.gmra.mxu0 %v1556
        %v1680 = vpop.f32.mrf.mxu0
        %v1681 = vadd.f32 0.0, %v1680
        %v1682 = vpop.f32.mrf.mxu0
        %v1683 = vadd.f32 0.0, %v1682
        %1684 = vmatmul.bf16.gmra.mxu0 %v1559
        %v1685 = vpop.f32.mrf.mxu0
        %v1686 = vadd.f32 0.0, %v1685
        %v1687 = vpop.f32.mrf.mxu0
        %v1688 = vadd.f32 0.0, %v1687
        %1689 = vmatmul.bf16.gmra.mxu0 %v1562
        %v1690 = vpop.f32.mrf.mxu0
        %v1691 = vadd.f32 0.0, %v1690
        %v1692 = vpop.f32.mrf.mxu0
        %v1693 = vadd.f32 0.0, %v1692
        %1694 = vmatmul.bf16.gmra.mxu0 %v1565
        %v1695 = vpop.f32.mrf.mxu0
        %v1696 = vadd.f32 0.0, %v1695
        %v1697 = vpop.f32.mrf.mxu0
        %v1698 = vadd.f32 0.0, %v1697
        %1699 = vmatmul.bf16.gmra.mxu0 %v1568
        %v1700 = vpop.f32.mrf.mxu0
        %v1701 = vadd.f32 0.0, %v1700
        %v1702 = vpop.f32.mrf.mxu0
        %v1703 = vadd.f32 0.0, %v1702
        %1704 = vmatmul.bf16.gmra.mxu0 %v1571
        %v1705 = vpop.f32.mrf.mxu0
        %v1706 = vadd.f32 0.0, %v1705
        %v1707 = vpop.f32.mrf.mxu0
        %v1708 = vadd.f32 0.0, %v1707
        %1709 = vmatmul.bf16.gmra.mxu0 %v1574
        %v1710 = vpop.f32.mrf.mxu0
        %v1711 = vadd.f32 0.0, %v1710
        %v1712 = vpop.f32.mrf.mxu0
        %v1713 = vadd.f32 0.0, %v1712
        %1714 = vmatmul.bf16.gmra.mxu0 %v1577
        %v1715 = vpop.f32.mrf.mxu0
        %v1716 = vadd.f32 0.0, %v1715
        %v1717 = vpop.f32.mrf.mxu0
        %v1718 = vadd.f32 0.0, %v1717
        %1719 = vmatmul.bf16.gmra.mxu0 %v1580
        %v1720 = vpop.f32.mrf.mxu0
        %v1721 = vadd.f32 0.0, %v1720
        %v1722 = vpop.f32.mrf.mxu0
        %v1723 = vadd.f32 0.0, %v1722
        %1724 = vmatmul.bf16.gmra.mxu0 %v1583
        %v1725 = vpop.f32.mrf.mxu0
        %v1726 = vadd.f32 0.0, %v1725
        %v1727 = vpop.f32.mrf.mxu0
        %v1728 = vadd.f32 0.0, %v1727
        %1729 = vmatmul.bf16.gmra.mxu0 %v1586
        %v1730 = vpop.f32.mrf.mxu0
        %v1731 = vadd.f32 0.0, %v1730
        %v1732 = vpop.f32.mrf.mxu0
        %v1733 = vadd.f32 0.0, %v1732
        %1734 = vmatmul.bf16.gmra.mxu0 %v1589
        %v1735 = vpop.f32.mrf.mxu0
        %v1736 = vadd.f32 0.0, %v1735
        %v1737 = vpop.f32.mrf.mxu0
        %v1738 = vadd.f32 0.0, %v1737
        %1739 = vmatmul.bf16.gmra.mxu0 %v1592
        %v1740 = vpop.f32.mrf.mxu0
        %v1741 = vadd.f32 0.0, %v1740
        %v1742 = vpop.f32.mrf.mxu0
        %v1743 = vadd.f32 0.0, %v1742
        %1744 = vmatmul.bf16.gmra.mxu0 %v1595
        %v1745 = vpop.f32.mrf.mxu0
        %v1746 = vadd.f32 0.0, %v1745
        %v1747 = vpop.f32.mrf.mxu0
        %v1748 = vadd.f32 0.0, %v1747
        %1749 = vmatmul.bf16.gmra.mxu0 %v1598
        %v1750 = vpop.f32.mrf.mxu0
        %v1751 = vadd.f32 0.0, %v1750
        %v1752 = vpop.f32.mrf.mxu0
        %v1753 = vadd.f32 0.0, %v1752
        %1754 = vmatmul.bf16.gmra.mxu0 %v1601
        %v1755 = vpop.f32.mrf.mxu0
        %v1756 = vadd.f32 0.0, %v1755
        %v1757 = vpop.f32.mrf.mxu0
        %v1758 = vadd.f32 0.0, %v1757
        %1759 = vmatmul.bf16.gmra.mxu0 %v1604
        %v1760 = vpop.f32.mrf.mxu0
        %v1761 = vadd.f32 0.0, %v1760
        %v1762 = vpop.f32.mrf.mxu0
        %v1763 = vadd.f32 0.0, %v1762
        %1764 = vmatmul.bf16.gmra.mxu0 %v1607
        %v1765 = vpop.f32.mrf.mxu0
        %v1766 = vadd.f32 0.0, %v1765
        %v1767 = vpop.f32.mrf.mxu0
        %v1768 = vadd.f32 0.0, %v1767
        %1769 = vmatmul.bf16.gmra.mxu0 %v1610
        %v1770 = vpop.f32.mrf.mxu0
        %v1771 = vadd.f32 0.0, %v1770
        %v1772 = vpop.f32.mrf.mxu0
        %v1773 = vadd.f32 0.0, %v1772
        %1774 = vmatmul.bf16.gmra.mxu0 %v1613
        %v1775 = vpop.f32.mrf.mxu0
        %v1776 = vadd.f32 0.0, %v1775
        %v1777 = vpop.f32.mrf.mxu0
        %v1778 = vadd.f32 0.0, %v1777
        %1779 = vmatmul.bf16.gmra.mxu0 %v1616
        %v1780 = vpop.f32.mrf.mxu0
        %v1781 = vadd.f32 0.0, %v1780
        %v1782 = vpop.f32.mrf.mxu0
        %v1783 = vadd.f32 0.0, %v1782
        %1784 = vmatmul.bf16.gmra.mxu0 %v1619
        %v1785 = vpop.f32.mrf.mxu0
        %v1786 = vadd.f32 0.0, %v1785
        %v1787 = vpop.f32.mrf.mxu0
        %v1788 = vadd.f32 0.0, %v1787
        %1789 = vmatmul.bf16.gmra.mxu0 %v1622
        %v1790 = vpop.f32.mrf.mxu0
        %v1791 = vadd.f32 0.0, %v1790
        %v1792 = vpop.f32.mrf.mxu0
        %v1793 = vadd.f32 0.0, %v1792
        %1794 = vmatmul.bf16.gmra.mxu0 %v1625
        %v1795 = vpop.f32.mrf.mxu0
        %v1796 = vadd.f32 0.0, %v1795
        %v1797 = vpop.f32.mrf.mxu0
        %v1798 = vadd.f32 0.0, %v1797
        %1799 = vmatmul.bf16.gmra.mxu0 %v1628
        %v1800 = vpop.f32.mrf.mxu0
        %v1801 = vadd.f32 0.0, %v1800
        %v1802 = vpop.f32.mrf.mxu0
        %v1803 = vadd.f32 0.0, %v1802
        %1804 = vmatmul.bf16.gmra.mxu0 %v1631
        %v1805 = vpop.f32.mrf.mxu0
        %v1806 = vadd.f32 0.0, %v1805
        %v1807 = vpop.f32.mrf.mxu0
        %v1808 = vadd.f32 0.0, %v1807
        %1809 = vmatmul.bf16.gmra.mxu0 %v1634
        %v1810 = vpop.f32.mrf.mxu0
        %v1811 = vadd.f32 0.0, %v1810
        %v1812 = vpop.f32.mrf.mxu0
        %v1813 = vadd.f32 0.0, %v1812
        %1814 = vmatmul.bf16.gmra.mxu0 %v1637
        %v1815 = vpop.f32.mrf.mxu0
        %v1816 = vadd.f32 0.0, %v1815
        %v1817 = vpop.f32.mrf.mxu0
        %v1818 = vadd.f32 0.0, %v1817
        %1819 = vmatmul.bf16.gmra.mxu0 %v1640
        %v1820 = vpop.f32.mrf.mxu0
        %v1821 = vadd.f32 0.0, %v1820
        %v1822 = vpop.f32.mrf.mxu0
        %v1823 = vadd.f32 0.0, %v1822
        %1824 = vmatmul.bf16.gmra.mxu0 %v1643
        %v1825 = vpop.f32.mrf.mxu0
        %v1826 = vadd.f32 0.0, %v1825
        %v1827 = vpop.f32.mrf.mxu0
        %v1828 = vadd.f32 0.0, %v1827
        %1829 = vmatmul.bf16.gmra.mxu0 %v1646
        %v1830 = vpop.f32.mrf.mxu0
        %v1831 = vadd.f32 0.0, %v1830
        %v1832 = vpop.f32.mrf.mxu0
        %v1833 = vadd.f32 0.0, %v1832
        %1834 = vmatmul.bf16.gmra.mxu0 %v1649
        %v1835 = vpop.f32.mrf.mxu0
        %v1836 = vadd.f32 0.0, %v1835
        %v1837 = vpop.f32.mrf.mxu0
        %v1838 = vadd.f32 0.0, %v1837
        %1839 = vdwg.mxu0
        %v1844 = vunpack.c.l.b16 %v1414
        %v1845 = vunpack.c.l.b16 %v1415
        %v1846 = vunpack.c.l.b16 %v1416
        %v1847 = vunpack.c.l.b16 %v1417
        %v1848 = vpack.c.b16 %v1845, %v1844
        %v1849 = vpack.c.b16 %v1847, %v1846
        %v1853 = vsel %vm1201, %v1378, 0
        %v1856 = vsel %vm1201, %v1379, 0
        %v1859 = vsel %vm1201, %v1380, 0
        %v1862 = vsel %vm1201, %v1381, 0
        %v1865 = vsel %vm1201, %v1382, 0
        %v1868 = vsel %vm1201, %v1383, 0
        %v1871 = vsel %vm1201, %v1384, 0
        %v1874 = vsel %vm1201, %v1385, 0
        %v1877 = vsel %vm1201, %v1386, 0
        %v1880 = vsel %vm1201, %v1387, 0
        %v1883 = vsel %vm1201, %v1388, 0
        %v1886 = vsel %vm1201, %v1389, 0
        %v1889 = vsel %vm1201, %v1390, 0
        %v1892 = vsel %vm1201, %v1391, 0
        %v1895 = vsel %vm1201, %v1392, 0
        %v1898 = vsel %vm1201, %v1393, 0
        %v1901 = vsel %vm1201, %v1394, 0
        %v1904 = vsel %vm1201, %v1395, 0
        %v1907 = vsel %vm1201, %v1396, 0
        %v1910 = vsel %vm1201, %v1397, 0
        %v1913 = vsel %vm1201, %v1398, 0
        %v1916 = vsel %vm1201, %v1399, 0
        %v1919 = vsel %vm1201, %v1400, 0
        %v1922 = vsel %vm1201, %v1401, 0
        %v1925 = vsel %vm1201, %v1402, 0
        %v1928 = vsel %vm1201, %v1403, 0
        %v1931 = vsel %vm1201, %v1404, 0
        %v1934 = vsel %vm1201, %v1405, 0
        %v1937 = vsel %vm1201, %v1406, 0
        %v1940 = vsel %vm1201, %v1407, 0
        %v1943 = vsel %vm1201, %v1408, 0
        %v1946 = vsel %vm1201, %v1409, 0
        %v1949 = vsel %vm1201, %v1410, 0
        %v1952 = vsel %vm1201, %v1411, 0
        %v1955 = vsel %vm1201, %v1412, 0
        %v1958 = vsel %vm1201, %v1413, 0
        %1960 = vmatpush.bf16.msra.mxu0 0
        %1961 = vmatpush.bf16.msra.mxu0 0
        %1962 = vmatpush.bf16.msra.mxu0 0
        %1963 = vmatpush.bf16.msra.mxu0 0
        %1964 = vmatpush.bf16.msra.mxu0 0
        %1965 = vmatpush.bf16.msra.mxu0 0
        %1966 = vmatpush.bf16.msra.mxu0 %v1849
        %1967 = vmatpush.bf16.msra.mxu0 %v1848
        %1968 = vmatmul.bf16.gmra.mxu0 %v1853
        %v1969 = vpop.f32.mrf.mxu0
        %v1970 = vadd.f32 %v1661, %v1969
        %v1971 = vpop.f32.mrf.mxu0
        %v1972 = vadd.f32 %v1663, %v1971
        %1973 = vmatmul.bf16.gmra.mxu0 %v1856
        %v1974 = vpop.f32.mrf.mxu0
        %v1975 = vadd.f32 %v1666, %v1974
        %v1976 = vpop.f32.mrf.mxu0
        %v1977 = vadd.f32 %v1668, %v1976
        %1978 = vmatmul.bf16.gmra.mxu0 %v1859
        %v1979 = vpop.f32.mrf.mxu0
        %v1980 = vadd.f32 %v1671, %v1979
        %v1981 = vpop.f32.mrf.mxu0
        %v1982 = vadd.f32 %v1673, %v1981
        %1983 = vmatmul.bf16.gmra.mxu0 %v1862
        %v1984 = vpop.f32.mrf.mxu0
        %v1985 = vadd.f32 %v1676, %v1984
        %v1986 = vpop.f32.mrf.mxu0
        %v1987 = vadd.f32 %v1678, %v1986
        %1988 = vmatmul.bf16.gmra.mxu0 %v1865
        %v1989 = vpop.f32.mrf.mxu0
        %v1990 = vadd.f32 %v1681, %v1989
        %v1991 = vpop.f32.mrf.mxu0
        %v1992 = vadd.f32 %v1683, %v1991
        %1993 = vmatmul.bf16.gmra.mxu0 %v1868
        %v1994 = vpop.f32.mrf.mxu0
        %v1995 = vadd.f32 %v1686, %v1994
        %v1996 = vpop.f32.mrf.mxu0
        %v1997 = vadd.f32 %v1688, %v1996
        %1998 = vmatmul.bf16.gmra.mxu0 %v1871
        %v1999 = vpop.f32.mrf.mxu0
        %v2000 = vadd.f32 %v1691, %v1999
        %v2001 = vpop.f32.mrf.mxu0
        %v2002 = vadd.f32 %v1693, %v2001
        %2003 = vmatmul.bf16.gmra.mxu0 %v1874
        %v2004 = vpop.f32.mrf.mxu0
        %v2005 = vadd.f32 %v1696, %v2004
        %v2006 = vpop.f32.mrf.mxu0
        %v2007 = vadd.f32 %v1698, %v2006
        %2008 = vmatmul.bf16.gmra.mxu0 %v1877
        %v2009 = vpop.f32.mrf.mxu0
        %v2010 = vadd.f32 %v1701, %v2009
        %v2011 = vpop.f32.mrf.mxu0
        %v2012 = vadd.f32 %v1703, %v2011
        %2013 = vmatmul.bf16.gmra.mxu0 %v1880
        %v2014 = vpop.f32.mrf.mxu0
        %v2015 = vadd.f32 %v1706, %v2014
        %v2016 = vpop.f32.mrf.mxu0
        %v2017 = vadd.f32 %v1708, %v2016
        %2018 = vmatmul.bf16.gmra.mxu0 %v1883
        %v2019 = vpop.f32.mrf.mxu0
        %v2020 = vadd.f32 %v1711, %v2019
        %v2021 = vpop.f32.mrf.mxu0
        %v2022 = vadd.f32 %v1713, %v2021
        %2023 = vmatmul.bf16.gmra.mxu0 %v1886
        %v2024 = vpop.f32.mrf.mxu0
        %v2025 = vadd.f32 %v1716, %v2024
        %v2026 = vpop.f32.mrf.mxu0
        %v2027 = vadd.f32 %v1718, %v2026
        %2028 = vmatmul.bf16.gmra.mxu0 %v1889
        %v2029 = vpop.f32.mrf.mxu0
        %v2030 = vadd.f32 %v1721, %v2029
        %v2031 = vpop.f32.mrf.mxu0
        %v2032 = vadd.f32 %v1723, %v2031
        %2033 = vmatmul.bf16.gmra.mxu0 %v1892
        %v2034 = vpop.f32.mrf.mxu0
        %v2035 = vadd.f32 %v1726, %v2034
        %v2036 = vpop.f32.mrf.mxu0
        %v2037 = vadd.f32 %v1728, %v2036
        %2038 = vmatmul.bf16.gmra.mxu0 %v1895
        %v2039 = vpop.f32.mrf.mxu0
        %v2040 = vadd.f32 %v1731, %v2039
        %v2041 = vpop.f32.mrf.mxu0
        %v2042 = vadd.f32 %v1733, %v2041
        %2043 = vmatmul.bf16.gmra.mxu0 %v1898
        %v2044 = vpop.f32.mrf.mxu0
        %v2045 = vadd.f32 %v1736, %v2044
        %v2046 = vpop.f32.mrf.mxu0
        %v2047 = vadd.f32 %v1738, %v2046
        %2048 = vmatmul.bf16.gmra.mxu0 %v1901
        %v2049 = vpop.f32.mrf.mxu0
        %v2050 = vadd.f32 %v1741, %v2049
        %v2051 = vpop.f32.mrf.mxu0
        %v2052 = vadd.f32 %v1743, %v2051
        %2053 = vmatmul.bf16.gmra.mxu0 %v1904
        %v2054 = vpop.f32.mrf.mxu0
        %v2055 = vadd.f32 %v1746, %v2054
        %v2056 = vpop.f32.mrf.mxu0
        %v2057 = vadd.f32 %v1748, %v2056
        %2058 = vmatmul.bf16.gmra.mxu0 %v1907
        %v2059 = vpop.f32.mrf.mxu0
        %v2060 = vadd.f32 %v1751, %v2059
        %v2061 = vpop.f32.mrf.mxu0
        %v2062 = vadd.f32 %v1753, %v2061
        %2063 = vmatmul.bf16.gmra.mxu0 %v1910
        %v2064 = vpop.f32.mrf.mxu0
        %v2065 = vadd.f32 %v1756, %v2064
        %v2066 = vpop.f32.mrf.mxu0
        %v2067 = vadd.f32 %v1758, %v2066
        %2068 = vmatmul.bf16.gmra.mxu0 %v1913
        %v2069 = vpop.f32.mrf.mxu0
        %v2070 = vadd.f32 %v1761, %v2069
        %v2071 = vpop.f32.mrf.mxu0
        %v2072 = vadd.f32 %v1763, %v2071
        %2073 = vmatmul.bf16.gmra.mxu0 %v1916
        %v2074 = vpop.f32.mrf.mxu0
        %v2075 = vadd.f32 %v1766, %v2074
        %v2076 = vpop.f32.mrf.mxu0
        %v2077 = vadd.f32 %v1768, %v2076
        %2078 = vmatmul.bf16.gmra.mxu0 %v1919
        %v2079 = vpop.f32.mrf.mxu0
        %v2080 = vadd.f32 %v1771, %v2079
        %v2081 = vpop.f32.mrf.mxu0
        %v2082 = vadd.f32 %v1773, %v2081
        %2083 = vmatmul.bf16.gmra.mxu0 %v1922
        %v2084 = vpop.f32.mrf.mxu0
        %v2085 = vadd.f32 %v1776, %v2084
        %v2086 = vpop.f32.mrf.mxu0
        %v2087 = vadd.f32 %v1778, %v2086
        %2088 = vmatmul.bf16.gmra.mxu0 %v1925
        %v2089 = vpop.f32.mrf.mxu0
        %v2090 = vadd.f32 %v1781, %v2089
        %v2091 = vpop.f32.mrf.mxu0
        %v2092 = vadd.f32 %v1783, %v2091
        %2093 = vmatmul.bf16.gmra.mxu0 %v1928
        %v2094 = vpop.f32.mrf.mxu0
        %v2095 = vadd.f32 %v1786, %v2094
        %v2096 = vpop.f32.mrf.mxu0
        %v2097 = vadd.f32 %v1788, %v2096
        %2098 = vmatmul.bf16.gmra.mxu0 %v1931
        %v2099 = vpop.f32.mrf.mxu0
        %v2100 = vadd.f32 %v1791, %v2099
        %v2101 = vpop.f32.mrf.mxu0
        %v2102 = vadd.f32 %v1793, %v2101
        %2103 = vmatmul.bf16.gmra.mxu0 %v1934
        %v2104 = vpop.f32.mrf.mxu0
        %v2105 = vadd.f32 %v1796, %v2104
        %v2106 = vpop.f32.mrf.mxu0
        %v2107 = vadd.f32 %v1798, %v2106
        %2108 = vmatmul.bf16.gmra.mxu0 %v1937
        %v2109 = vpop.f32.mrf.mxu0
        %v2110 = vadd.f32 %v1801, %v2109
        %v2111 = vpop.f32.mrf.mxu0
        %v2112 = vadd.f32 %v1803, %v2111
        %2113 = vmatmul.bf16.gmra.mxu0 %v1940
        %v2114 = vpop.f32.mrf.mxu0
        %v2115 = vadd.f32 %v1806, %v2114
        %v2116 = vpop.f32.mrf.mxu0
        %v2117 = vadd.f32 %v1808, %v2116
        %2118 = vmatmul.bf16.gmra.mxu0 %v1943
        %v2119 = vpop.f32.mrf.mxu0
        %v2120 = vadd.f32 %v1811, %v2119
        %v2121 = vpop.f32.mrf.mxu0
        %v2122 = vadd.f32 %v1813, %v2121
        %2123 = vmatmul.bf16.gmra.mxu0 %v1946
        %v2124 = vpop.f32.mrf.mxu0
        %v2125 = vadd.f32 %v1816, %v2124
        %v2126 = vpop.f32.mrf.mxu0
        %v2127 = vadd.f32 %v1818, %v2126
        %2128 = vmatmul.bf16.gmra.mxu0 %v1949
        %v2129 = vpop.f32.mrf.mxu0
        %v2130 = vadd.f32 %v1821, %v2129
        %v2131 = vpop.f32.mrf.mxu0
        %v2132 = vadd.f32 %v1823, %v2131
        %2133 = vmatmul.bf16.gmra.mxu0 %v1952
        %v2134 = vpop.f32.mrf.mxu0
        %v2135 = vadd.f32 %v1826, %v2134
        %v2136 = vpop.f32.mrf.mxu0
        %v2137 = vadd.f32 %v1828, %v2136
        %2138 = vmatmul.bf16.gmra.mxu0 %v1955
        %v2139 = vpop.f32.mrf.mxu0
        %v2140 = vadd.f32 %v1831, %v2139
        %v2141 = vpop.f32.mrf.mxu0
        %v2142 = vadd.f32 %v1833, %v2141
        %2143 = vmatmul.bf16.gmra.mxu0 %v1958
        %v2144 = vpop.f32.mrf.mxu0
        %v2145 = vadd.f32 %v1836, %v2144
        %v2146 = vpop.f32.mrf.mxu0
        %v2147 = vadd.f32 %v1838, %v2146
        %2148 = vdwg.mxu0
        %v2149 = vld [vmem:[#allocation2 + $0x2] sm:$0xff]
        %v2150 = vld [vmem:[#allocation2 + $0xa] sm:$0xff]
        %v2151 = vld [vmem:[#allocation2 + $0x12] sm:$0xff]
        %v2152 = vld [vmem:[#allocation2 + $0x22] sm:$0xff]
        %v2153 = vld [vmem:[#allocation2 + $0x2a] sm:$0xff]
        %v2154 = vld [vmem:[#allocation2 + $0x32] sm:$0xff]
        %v2155 = vld [vmem:[#allocation2 + $0x42] sm:$0xff]
        %v2156 = vld [vmem:[#allocation2 + $0x4a] sm:$0xff]
        %v2157 = vld [vmem:[#allocation2 + $0x52] sm:$0xff]
        %v2158 = vld [vmem:[#allocation2 + $0x62] sm:$0xff]
        %v2159 = vld [vmem:[#allocation2 + $0x6a] sm:$0xff]
        %v2160 = vld [vmem:[#allocation2 + $0x72] sm:$0xff]
        %v2161 = vld [vmem:[#allocation2 + $0x82] sm:$0xff]
        %v2162 = vld [vmem:[#allocation2 + $0x8a] sm:$0xff]
        %v2163 = vld [vmem:[#allocation2 + $0x92] sm:$0xff]
        %v2164 = vld [vmem:[#allocation2 + $0xa2] sm:$0xff]
        %v2165 = vld [vmem:[#allocation2 + $0xaa] sm:$0xff]
        %v2166 = vld [vmem:[#allocation2 + $0xb2] sm:$0xff]
        %v2167 = vld [vmem:[#allocation2 + $0xc2] sm:$0xff]
        %v2168 = vld [vmem:[#allocation2 + $0xca] sm:$0xff]
        %v2169 = vld [vmem:[#allocation2 + $0xd2] sm:$0xff]
        %v2170 = vld [vmem:[#allocation2 + $0xe2] sm:$0xff]
        %v2171 = vld [vmem:[#allocation2 + $0xea] sm:$0xff]
        %v2172 = vld [vmem:[#allocation2 + $0xf2] sm:$0xff]
        %v2173 = vld [vmem:[#allocation2 + $0x102] sm:$0xff]
        %v2174 = vld [vmem:[#allocation2 + $0x10a] sm:$0xff]
        %v2175 = vld [vmem:[#allocation2 + $0x112] sm:$0xff]
        %v2176 = vld [vmem:[#allocation2 + $0x122] sm:$0xff]
        %v2177 = vld [vmem:[#allocation2 + $0x12a] sm:$0xff]
        %v2178 = vld [vmem:[#allocation2 + $0x132] sm:$0xff]
        %v2179 = vld [vmem:[#allocation2 + $0x142] sm:$0xff]
        %v2180 = vld [vmem:[#allocation2 + $0x14a] sm:$0xff]
        %v2181 = vld [vmem:[#allocation2 + $0x152] sm:$0xff]
        %v2182 = vld [vmem:[#allocation2 + $0x162] sm:$0xff]
        %v2183 = vld [vmem:[#allocation2 + $0x16a] sm:$0xff]
        %v2184 = vld [vmem:[#allocation2 + $0x172] sm:$0xff]
        %v2185 = vld [vmem:[#allocation2 + $0x182] sm:$0xff]
        %v2186 = vld [vmem:[#allocation2 + $0x18a] sm:$0xff]
        %v2187 = vld [vmem:[#allocation2 + $0x192] sm:$0xff]
        %v2188 = vld [vmem:[#allocation2 + $0x1a2] sm:$0xff]
        %v2189 = vld [vmem:[#allocation2 + $0x1aa] sm:$0xff]
        %v2190 = vld [vmem:[#allocation2 + $0x1b2] sm:$0xff]
        %v2191 = vld [vmem:[#allocation2 + $0x1c2] sm:$0xff]
        %v2192 = vld [vmem:[#allocation2 + $0x1ca] sm:$0xff]
        %v2193 = vld [vmem:[#allocation2 + $0x1d2] sm:$0xff]
        %v2194 = vld [vmem:[#allocation2 + $0x1e2] sm:$0xff]
        %v2195 = vld [vmem:[#allocation2 + $0x1ea] sm:$0xff]
        %v2196 = vld [vmem:[#allocation2 + $0x1f2] sm:$0xff]
        %v2197 = vld [vmem:[#allocation2 + $0x202] sm:$0xff]
        %v2198 = vld [vmem:[#allocation2 + $0x20a] sm:$0xff]
        %v2199 = vld [vmem:[#allocation2 + $0x212] sm:$0xff]
        %v2200 = vld [vmem:[#allocation2 + $0x222] sm:$0xff]
        %v2201 = vld [vmem:[#allocation2 + $0x22a] sm:$0xff]
        %v2202 = vld [vmem:[#allocation2 + $0x232] sm:$0xff]
        %v2203 = vld [vmem:[#allocation2 + $0x242] sm:$0xff]
        %v2204 = vld [vmem:[#allocation2 + $0x24a] sm:$0xff]
        %v2205 = vld [vmem:[#allocation2 + $0x252] sm:$0xff]
        %v2206 = vld [vmem:[#allocation2 + $0x262] sm:$0xff]
        %v2207 = vld [vmem:[#allocation2 + $0x26a] sm:$0xff]
        %v2208 = vld [vmem:[#allocation2 + $0x272] sm:$0xff]
        %v2209 = vld [vmem:[#allocation2 + $0x282] sm:$0xff]
        %v2210 = vld [vmem:[#allocation2 + $0x28a] sm:$0xff]
        %v2211 = vld [vmem:[#allocation2 + $0x292] sm:$0xff]
        %v2212 = vld [vmem:[#allocation2 + $0x2a2] sm:$0xff]
        %v2213 = vld [vmem:[#allocation2 + $0x2aa] sm:$0xff]
        %v2214 = vld [vmem:[#allocation2 + $0x2b2] sm:$0xff]
        %v2215 = vld [vmem:[#allocation2 + $0x2c2] sm:$0xff]
        %v2216 = vld [vmem:[#allocation2 + $0x2ca] sm:$0xff]
        %v2217 = vld [vmem:[#allocation2 + $0x2d2] sm:$0xff]
        %v2218 = vld [vmem:[#allocation2 + $0x2e2] sm:$0xff]
        %v2219 = vld [vmem:[#allocation2 + $0x2ea] sm:$0xff]
        %v2220 = vld [vmem:[#allocation2 + $0x2f2] sm:$0xff]
        %v2221 = vpack.c.bf16 %v2150, %v2149
        %v2222 = vpack.c.bf16 %v2152, %v2151
        %v2223 = vpack.c.bf16 %v2154, %v2153
        %v2224 = vpack.c.bf16 %v2156, %v2155
        %v2225 = vpack.c.bf16 %v2158, %v2157
        %v2226 = vpack.c.bf16 %v2160, %v2159
        %v2227 = vpack.c.bf16 %v2162, %v2161
        %v2228 = vpack.c.bf16 %v2164, %v2163
        %v2229 = vpack.c.bf16 %v2166, %v2165
        %v2230 = vpack.c.bf16 %v2168, %v2167
        %v2231 = vpack.c.bf16 %v2170, %v2169
        %v2232 = vpack.c.bf16 %v2172, %v2171
        %v2233 = vpack.c.bf16 %v2174, %v2173
        %v2234 = vpack.c.bf16 %v2176, %v2175
        %v2235 = vpack.c.bf16 %v2178, %v2177
        %v2236 = vpack.c.bf16 %v2180, %v2179
        %v2237 = vpack.c.bf16 %v2182, %v2181
        %v2238 = vpack.c.bf16 %v2184, %v2183
        %v2239 = vpack.c.bf16 %v2186, %v2185
        %v2240 = vpack.c.bf16 %v2188, %v2187
        %v2241 = vpack.c.bf16 %v2190, %v2189
        %v2242 = vpack.c.bf16 %v2192, %v2191
        %v2243 = vpack.c.bf16 %v2194, %v2193
        %v2244 = vpack.c.bf16 %v2196, %v2195
        %v2245 = vpack.c.bf16 %v2198, %v2197
        %v2246 = vpack.c.bf16 %v2200, %v2199
        %v2247 = vpack.c.bf16 %v2202, %v2201
        %v2248 = vpack.c.bf16 %v2204, %v2203
        %v2249 = vpack.c.bf16 %v2206, %v2205
        %v2250 = vpack.c.bf16 %v2208, %v2207
        %v2251 = vpack.c.bf16 %v2210, %v2209
        %v2252 = vpack.c.bf16 %v2212, %v2211
        %v2253 = vpack.c.bf16 %v2214, %v2213
        %v2254 = vpack.c.bf16 %v2216, %v2215
        %v2255 = vpack.c.bf16 %v2218, %v2217
        %v2256 = vpack.c.bf16 %v2220, %v2219
        %s2257 = scalar_lea.vmem [#allocation9], 32
        %v2258 = vld [vmem:[%s2257] sm:$0xf]
        %v2259 = vld [vmem:[%s2257 + $0x4] sm:$0xf]
        %v2260 = vld [vmem:[%s2257 + $0x8] sm:$0xf]
        %v2261 = vld [vmem:[%s2257 + $0xc] sm:$0xf]
        %v2266 = vunpack.c.l.b16 %v2258
        %v2267 = vunpack.c.l.b16 %v2259
        %v2268 = vunpack.c.l.b16 %v2260
        %v2269 = vunpack.c.l.b16 %v2261
        %v2270 = vpack.c.b16 %v2267, %v2266
        %v2271 = vpack.c.b16 %v2269, %v2268
        %v2275 = vsel %vm1201, %v2221, 0
        %v2278 = vsel %vm1201, %v2222, 0
        %v2281 = vsel %vm1201, %v2223, 0
        %v2284 = vsel %vm1201, %v2224, 0
        %v2287 = vsel %vm1201, %v2225, 0
        %v2290 = vsel %vm1201, %v2226, 0
        %v2293 = vsel %vm1201, %v2227, 0
        %v2296 = vsel %vm1201, %v2228, 0
        %v2299 = vsel %vm1201, %v2229, 0
        %v2302 = vsel %vm1201, %v2230, 0
        %v2305 = vsel %vm1201, %v2231, 0
        %v2308 = vsel %vm1201, %v2232, 0
        %v2311 = vsel %vm1201, %v2233, 0
        %v2314 = vsel %vm1201, %v2234, 0
        %v2317 = vsel %vm1201, %v2235, 0
        %v2320 = vsel %vm1201, %v2236, 0
        %v2323 = vsel %vm1201, %v2237, 0
        %v2326 = vsel %vm1201, %v2238, 0
        %v2329 = vsel %vm1201, %v2239, 0
        %v2332 = vsel %vm1201, %v2240, 0
        %v2335 = vsel %vm1201, %v2241, 0
        %v2338 = vsel %vm1201, %v2242, 0
        %v2341 = vsel %vm1201, %v2243, 0
        %v2344 = vsel %vm1201, %v2244, 0
        %v2347 = vsel %vm1201, %v2245, 0
        %v2350 = vsel %vm1201, %v2246, 0
        %v2353 = vsel %vm1201, %v2247, 0
        %v2356 = vsel %vm1201, %v2248, 0
        %v2359 = vsel %vm1201, %v2249, 0
        %v2362 = vsel %vm1201, %v2250, 0
        %v2365 = vsel %vm1201, %v2251, 0
        %v2368 = vsel %vm1201, %v2252, 0
        %v2371 = vsel %vm1201, %v2253, 0
        %v2374 = vsel %vm1201, %v2254, 0
        %v2377 = vsel %vm1201, %v2255, 0
        %v2380 = vsel %vm1201, %v2256, 0
        %2382 = vmatpush.bf16.msra.mxu0 0
        %2383 = vmatpush.bf16.msra.mxu0 0
        %2384 = vmatpush.bf16.msra.mxu0 0
        %2385 = vmatpush.bf16.msra.mxu0 0
        %2386 = vmatpush.bf16.msra.mxu0 0
        %2387 = vmatpush.bf16.msra.mxu0 0
        %2388 = vmatpush.bf16.msra.mxu0 %v2271
        %2389 = vmatpush.bf16.msra.mxu0 %v2270
        %2390 = vmatmul.bf16.gmra.mxu0 %v2275
        %v2391 = vpop.f32.mrf.mxu0
        %v2392 = vadd.f32 0.0, %v2391
        %v2393 = vpop.f32.mrf.mxu0
        %v2394 = vadd.f32 0.0, %v2393
        %2395 = vmatmul.bf16.gmra.mxu0 %v2278
        %v2396 = vpop.f32.mrf.mxu0
        %v2397 = vadd.f32 0.0, %v2396
        %v2398 = vpop.f32.mrf.mxu0
        %v2399 = vadd.f32 0.0, %v2398
        %2400 = vmatmul.bf16.gmra.mxu0 %v2281
        %v2401 = vpop.f32.mrf.mxu0
        %v2402 = vadd.f32 0.0, %v2401
        %v2403 = vpop.f32.mrf.mxu0
        %v2404 = vadd.f32 0.0, %v2403
        %2405 = vmatmul.bf16.gmra.mxu0 %v2284
        %v2406 = vpop.f32.mrf.mxu0
        %v2407 = vadd.f32 0.0, %v2406
        %v2408 = vpop.f32.mrf.mxu0
        %v2409 = vadd.f32 0.0, %v2408
        %2410 = vmatmul.bf16.gmra.mxu0 %v2287
        %v2411 = vpop.f32.mrf.mxu0
        %v2412 = vadd.f32 0.0, %v2411
        %v2413 = vpop.f32.mrf.mxu0
        %v2414 = vadd.f32 0.0, %v2413
        %2415 = vmatmul.bf16.gmra.mxu0 %v2290
        %v2416 = vpop.f32.mrf.mxu0
        %v2417 = vadd.f32 0.0, %v2416
        %v2418 = vpop.f32.mrf.mxu0
        %v2419 = vadd.f32 0.0, %v2418
        %2420 = vmatmul.bf16.gmra.mxu0 %v2293
        %v2421 = vpop.f32.mrf.mxu0
        %v2422 = vadd.f32 0.0, %v2421
        %v2423 = vpop.f32.mrf.mxu0
        %v2424 = vadd.f32 0.0, %v2423
        %2425 = vmatmul.bf16.gmra.mxu0 %v2296
        %v2426 = vpop.f32.mrf.mxu0
        %v2427 = vadd.f32 0.0, %v2426
        %v2428 = vpop.f32.mrf.mxu0
        %v2429 = vadd.f32 0.0, %v2428
        %2430 = vmatmul.bf16.gmra.mxu0 %v2299
        %v2431 = vpop.f32.mrf.mxu0
        %v2432 = vadd.f32 0.0, %v2431
        %v2433 = vpop.f32.mrf.mxu0
        %v2434 = vadd.f32 0.0, %v2433
        %2435 = vmatmul.bf16.gmra.mxu0 %v2302
        %v2436 = vpop.f32.mrf.mxu0
        %v2437 = vadd.f32 0.0, %v2436
        %v2438 = vpop.f32.mrf.mxu0
        %v2439 = vadd.f32 0.0, %v2438
        %2440 = vmatmul.bf16.gmra.mxu0 %v2305
        %v2441 = vpop.f32.mrf.mxu0
        %v2442 = vadd.f32 0.0, %v2441
        %v2443 = vpop.f32.mrf.mxu0
        %v2444 = vadd.f32 0.0, %v2443
        %2445 = vmatmul.bf16.gmra.mxu0 %v2308
        %v2446 = vpop.f32.mrf.mxu0
        %v2447 = vadd.f32 0.0, %v2446
        %v2448 = vpop.f32.mrf.mxu0
        %v2449 = vadd.f32 0.0, %v2448
        %2450 = vmatmul.bf16.gmra.mxu0 %v2311
        %v2451 = vpop.f32.mrf.mxu0
        %v2452 = vadd.f32 0.0, %v2451
        %v2453 = vpop.f32.mrf.mxu0
        %v2454 = vadd.f32 0.0, %v2453
        %2455 = vmatmul.bf16.gmra.mxu0 %v2314
        %v2456 = vpop.f32.mrf.mxu0
        %v2457 = vadd.f32 0.0, %v2456
        %v2458 = vpop.f32.mrf.mxu0
        %v2459 = vadd.f32 0.0, %v2458
        %2460 = vmatmul.bf16.gmra.mxu0 %v2317
        %v2461 = vpop.f32.mrf.mxu0
        %v2462 = vadd.f32 0.0, %v2461
        %v2463 = vpop.f32.mrf.mxu0
        %v2464 = vadd.f32 0.0, %v2463
        %2465 = vmatmul.bf16.gmra.mxu0 %v2320
        %v2466 = vpop.f32.mrf.mxu0
        %v2467 = vadd.f32 0.0, %v2466
        %v2468 = vpop.f32.mrf.mxu0
        %v2469 = vadd.f32 0.0, %v2468
        %2470 = vmatmul.bf16.gmra.mxu0 %v2323
        %v2471 = vpop.f32.mrf.mxu0
        %v2472 = vadd.f32 0.0, %v2471
        %v2473 = vpop.f32.mrf.mxu0
        %v2474 = vadd.f32 0.0, %v2473
        %2475 = vmatmul.bf16.gmra.mxu0 %v2326
        %v2476 = vpop.f32.mrf.mxu0
        %v2477 = vadd.f32 0.0, %v2476
        %v2478 = vpop.f32.mrf.mxu0
        %v2479 = vadd.f32 0.0, %v2478
        %2480 = vmatmul.bf16.gmra.mxu0 %v2329
        %v2481 = vpop.f32.mrf.mxu0
        %v2482 = vadd.f32 0.0, %v2481
        %v2483 = vpop.f32.mrf.mxu0
        %v2484 = vadd.f32 0.0, %v2483
        %2485 = vmatmul.bf16.gmra.mxu0 %v2332
        %v2486 = vpop.f32.mrf.mxu0
        %v2487 = vadd.f32 0.0, %v2486
        %v2488 = vpop.f32.mrf.mxu0
        %v2489 = vadd.f32 0.0, %v2488
        %2490 = vmatmul.bf16.gmra.mxu0 %v2335
        %v2491 = vpop.f32.mrf.mxu0
        %v2492 = vadd.f32 0.0, %v2491
        %v2493 = vpop.f32.mrf.mxu0
        %v2494 = vadd.f32 0.0, %v2493
        %2495 = vmatmul.bf16.gmra.mxu0 %v2338
        %v2496 = vpop.f32.mrf.mxu0
        %v2497 = vadd.f32 0.0, %v2496
        %v2498 = vpop.f32.mrf.mxu0
        %v2499 = vadd.f32 0.0, %v2498
        %2500 = vmatmul.bf16.gmra.mxu0 %v2341
        %v2501 = vpop.f32.mrf.mxu0
        %v2502 = vadd.f32 0.0, %v2501
        %v2503 = vpop.f32.mrf.mxu0
        %v2504 = vadd.f32 0.0, %v2503
        %2505 = vmatmul.bf16.gmra.mxu0 %v2344
        %v2506 = vpop.f32.mrf.mxu0
        %v2507 = vadd.f32 0.0, %v2506
        %v2508 = vpop.f32.mrf.mxu0
        %v2509 = vadd.f32 0.0, %v2508
        %2510 = vmatmul.bf16.gmra.mxu0 %v2347
        %v2511 = vpop.f32.mrf.mxu0
        %v2512 = vadd.f32 0.0, %v2511
        %v2513 = vpop.f32.mrf.mxu0
        %v2514 = vadd.f32 0.0, %v2513
        %2515 = vmatmul.bf16.gmra.mxu0 %v2350
        %v2516 = vpop.f32.mrf.mxu0
        %v2517 = vadd.f32 0.0, %v2516
        %v2518 = vpop.f32.mrf.mxu0
        %v2519 = vadd.f32 0.0, %v2518
        %2520 = vmatmul.bf16.gmra.mxu0 %v2353
        %v2521 = vpop.f32.mrf.mxu0
        %v2522 = vadd.f32 0.0, %v2521
        %v2523 = vpop.f32.mrf.mxu0
        %v2524 = vadd.f32 0.0, %v2523
        %2525 = vmatmul.bf16.gmra.mxu0 %v2356
        %v2526 = vpop.f32.mrf.mxu0
        %v2527 = vadd.f32 0.0, %v2526
        %v2528 = vpop.f32.mrf.mxu0
        %v2529 = vadd.f32 0.0, %v2528
        %2530 = vmatmul.bf16.gmra.mxu0 %v2359
        %v2531 = vpop.f32.mrf.mxu0
        %v2532 = vadd.f32 0.0, %v2531
        %v2533 = vpop.f32.mrf.mxu0
        %v2534 = vadd.f32 0.0, %v2533
        %2535 = vmatmul.bf16.gmra.mxu0 %v2362
        %v2536 = vpop.f32.mrf.mxu0
        %v2537 = vadd.f32 0.0, %v2536
        %v2538 = vpop.f32.mrf.mxu0
        %v2539 = vadd.f32 0.0, %v2538
        %2540 = vmatmul.bf16.gmra.mxu0 %v2365
        %v2541 = vpop.f32.mrf.mxu0
        %v2542 = vadd.f32 0.0, %v2541
        %v2543 = vpop.f32.mrf.mxu0
        %v2544 = vadd.f32 0.0, %v2543
        %2545 = vmatmul.bf16.gmra.mxu0 %v2368
        %v2546 = vpop.f32.mrf.mxu0
        %v2547 = vadd.f32 0.0, %v2546
        %v2548 = vpop.f32.mrf.mxu0
        %v2549 = vadd.f32 0.0, %v2548
        %2550 = vmatmul.bf16.gmra.mxu0 %v2371
        %v2551 = vpop.f32.mrf.mxu0
        %v2552 = vadd.f32 0.0, %v2551
        %v2553 = vpop.f32.mrf.mxu0
        %v2554 = vadd.f32 0.0, %v2553
        %2555 = vmatmul.bf16.gmra.mxu0 %v2374
        %v2556 = vpop.f32.mrf.mxu0
        %v2557 = vadd.f32 0.0, %v2556
        %v2558 = vpop.f32.mrf.mxu0
        %v2559 = vadd.f32 0.0, %v2558
        %2560 = vmatmul.bf16.gmra.mxu0 %v2377
        %v2561 = vpop.f32.mrf.mxu0
        %v2562 = vadd.f32 0.0, %v2561
        %v2563 = vpop.f32.mrf.mxu0
        %v2564 = vadd.f32 0.0, %v2563
        %2565 = vmatmul.bf16.gmra.mxu0 %v2380
        %v2566 = vpop.f32.mrf.mxu0
        %v2567 = vadd.f32 0.0, %v2566
        %v2568 = vpop.f32.mrf.mxu0
        %v2569 = vadd.f32 0.0, %v2568
        %2570 = vdwg.mxu0
        %v2571 = vadd.f32 %v1970, %v2392
        %v2572 = vadd.f32 %v1972, %v2394
        %v2573 = vadd.f32 %v1975, %v2397
        %v2574 = vadd.f32 %v1977, %v2399
        %v2575 = vadd.f32 %v1980, %v2402
        %v2576 = vadd.f32 %v1982, %v2404
        %v2577 = vadd.f32 %v1985, %v2407
        %v2578 = vadd.f32 %v1987, %v2409
        %v2579 = vadd.f32 %v1990, %v2412
        %v2580 = vadd.f32 %v1992, %v2414
        %v2581 = vadd.f32 %v1995, %v2417
        %v2582 = vadd.f32 %v1997, %v2419
        %v2583 = vadd.f32 %v2000, %v2422
        %v2584 = vadd.f32 %v2002, %v2424
        %v2585 = vadd.f32 %v2005, %v2427
        %v2586 = vadd.f32 %v2007, %v2429
        %v2587 = vadd.f32 %v2010, %v2432
        %v2588 = vadd.f32 %v2012, %v2434
        %v2589 = vadd.f32 %v2015, %v2437
        %v2590 = vadd.f32 %v2017, %v2439
        %v2591 = vadd.f32 %v2020, %v2442
        %v2592 = vadd.f32 %v2022, %v2444
        %v2593 = vadd.f32 %v2025, %v2447
        %v2594 = vadd.f32 %v2027, %v2449
        %v2595 = vadd.f32 %v2030, %v2452
        %v2596 = vadd.f32 %v2032, %v2454
        %v2597 = vadd.f32 %v2035, %v2457
        %v2598 = vadd.f32 %v2037, %v2459
        %v2599 = vadd.f32 %v2040, %v2462
        %v2600 = vadd.f32 %v2042, %v2464
        %v2601 = vadd.f32 %v2045, %v2467
        %v2602 = vadd.f32 %v2047, %v2469
        %v2603 = vadd.f32 %v2050, %v2472
        %v2604 = vadd.f32 %v2052, %v2474
        %v2605 = vadd.f32 %v2055, %v2477
        %v2606 = vadd.f32 %v2057, %v2479
        %v2607 = vadd.f32 %v2060, %v2482
        %v2608 = vadd.f32 %v2062, %v2484
        %v2609 = vadd.f32 %v2065, %v2487
        %v2610 = vadd.f32 %v2067, %v2489
        %v2611 = vadd.f32 %v2070, %v2492
        %v2612 = vadd.f32 %v2072, %v2494
        %v2613 = vadd.f32 %v2075, %v2497
        %v2614 = vadd.f32 %v2077, %v2499
        %v2615 = vadd.f32 %v2080, %v2502
        %v2616 = vadd.f32 %v2082, %v2504
        %v2617 = vadd.f32 %v2085, %v2507
        %v2618 = vadd.f32 %v2087, %v2509
        %v2619 = vadd.f32 %v2090, %v2512
        %v2620 = vadd.f32 %v2092, %v2514
        %v2621 = vadd.f32 %v2095, %v2517
        %v2622 = vadd.f32 %v2097, %v2519
        %v2623 = vadd.f32 %v2100, %v2522
        %v2624 = vadd.f32 %v2102, %v2524
        %v2625 = vadd.f32 %v2105, %v2527
        %v2626 = vadd.f32 %v2107, %v2529
        %v2627 = vadd.f32 %v2110, %v2532
        %v2628 = vadd.f32 %v2112, %v2534
        %v2629 = vadd.f32 %v2115, %v2537
        %v2630 = vadd.f32 %v2117, %v2539
        %v2631 = vadd.f32 %v2120, %v2542
        %v2632 = vadd.f32 %v2122, %v2544
        %v2633 = vadd.f32 %v2125, %v2547
        %v2634 = vadd.f32 %v2127, %v2549
        %v2635 = vadd.f32 %v2130, %v2552
        %v2636 = vadd.f32 %v2132, %v2554
        %v2637 = vadd.f32 %v2135, %v2557
        %v2638 = vadd.f32 %v2137, %v2559
        %v2639 = vadd.f32 %v2140, %v2562
        %v2640 = vadd.f32 %v2142, %v2564
        %v2641 = vadd.f32 %v2145, %v2567
        %v2642 = vadd.f32 %v2147, %v2569
        %s2643 = scalar_lea.vmem [#allocation2], 32
        %v2644 = vld [vmem:[%s2643] sm:$0xff]
        %v2645 = vld [vmem:[%s2643 + $0x8] sm:$0xff]
        %v2646 = vld [vmem:[%s2643 + $0x10] sm:$0xff]
        %v2647 = vld [vmem:[%s2643 + $0x20] sm:$0xff]
        %v2648 = vld [vmem:[%s2643 + $0x28] sm:$0xff]
        %v2649 = vld [vmem:[%s2643 + $0x30] sm:$0xff]
        %v2650 = vld [vmem:[%s2643 + $0x40] sm:$0xff]
        %v2651 = vld [vmem:[%s2643 + $0x48] sm:$0xff]
        %v2652 = vld [vmem:[%s2643 + $0x50] sm:$0xff]
        %v2653 = vld [vmem:[%s2643 + $0x60] sm:$0xff]
        %v2654 = vld [vmem:[%s2643 + $0x68] sm:$0xff]
        %v2655 = vld [vmem:[%s2643 + $0x70] sm:$0xff]
        %v2656 = vld [vmem:[%s2643 + $0x80] sm:$0xff]
        %v2657 = vld [vmem:[%s2643 + $0x88] sm:$0xff]
        %v2658 = vld [vmem:[%s2643 + $0x90] sm:$0xff]
        %v2659 = vld [vmem:[%s2643 + $0xa0] sm:$0xff]
        %v2660 = vld [vmem:[%s2643 + $0xa8] sm:$0xff]
        %v2661 = vld [vmem:[%s2643 + $0xb0] sm:$0xff]
        %v2662 = vld [vmem:[%s2643 + $0xc0] sm:$0xff]
        %v2663 = vld [vmem:[%s2643 + $0xc8] sm:$0xff]
        %v2664 = vld [vmem:[%s2643 + $0xd0] sm:$0xff]
        %v2665 = vld [vmem:[%s2643 + $0xe0] sm:$0xff]
        %v2666 = vld [vmem:[%s2643 + $0xe8] sm:$0xff]
        %v2667 = vld [vmem:[%s2643 + $0xf0] sm:$0xff]
        %v2668 = vld [vmem:[%s2643 + $0x100] sm:$0xff]
        %v2669 = vld [vmem:[%s2643 + $0x108] sm:$0xff]
        %v2670 = vld [vmem:[%s2643 + $0x110] sm:$0xff]
        %v2671 = vld [vmem:[%s2643 + $0x120] sm:$0xff]
        %v2672 = vld [vmem:[%s2643 + $0x128] sm:$0xff]
        %v2673 = vld [vmem:[%s2643 + $0x130] sm:$0xff]
        %v2674 = vld [vmem:[%s2643 + $0x140] sm:$0xff]
        %v2675 = vld [vmem:[%s2643 + $0x148] sm:$0xff]
        %v2676 = vld [vmem:[%s2643 + $0x150] sm:$0xff]
        %v2677 = vld [vmem:[%s2643 + $0x160] sm:$0xff]
        %v2678 = vld [vmem:[%s2643 + $0x168] sm:$0xff]
        %v2679 = vld [vmem:[%s2643 + $0x170] sm:$0xff]
        %v2680 = vld [vmem:[%s2643 + $0x180] sm:$0xff]
        %v2681 = vld [vmem:[%s2643 + $0x188] sm:$0xff]
        %v2682 = vld [vmem:[%s2643 + $0x190] sm:$0xff]
        %v2683 = vld [vmem:[%s2643 + $0x1a0] sm:$0xff]
        %v2684 = vld [vmem:[%s2643 + $0x1a8] sm:$0xff]
        %v2685 = vld [vmem:[%s2643 + $0x1b0] sm:$0xff]
        %v2686 = vld [vmem:[%s2643 + $0x1c0] sm:$0xff]
        %v2687 = vld [vmem:[%s2643 + $0x1c8] sm:$0xff]
        %v2688 = vld [vmem:[%s2643 + $0x1d0] sm:$0xff]
        %v2689 = vld [vmem:[%s2643 + $0x1e0] sm:$0xff]
        %v2690 = vld [vmem:[%s2643 + $0x1e8] sm:$0xff]
        %v2691 = vld [vmem:[%s2643 + $0x1f0] sm:$0xff]
        %v2692 = vld [vmem:[%s2643 + $0x200] sm:$0xff]
        %v2693 = vld [vmem:[%s2643 + $0x208] sm:$0xff]
        %v2694 = vld [vmem:[%s2643 + $0x210] sm:$0xff]
        %v2695 = vld [vmem:[%s2643 + $0x220] sm:$0xff]
        %v2696 = vld [vmem:[%s2643 + $0x228] sm:$0xff]
        %v2697 = vld [vmem:[%s2643 + $0x230] sm:$0xff]
        %v2698 = vld [vmem:[%s2643 + $0x240] sm:$0xff]
        %v2699 = vld [vmem:[%s2643 + $0x248] sm:$0xff]
        %v2700 = vld [vmem:[%s2643 + $0x250] sm:$0xff]
        %v2701 = vld [vmem:[%s2643 + $0x260] sm:$0xff]
        %v2702 = vld [vmem:[%s2643 + $0x268] sm:$0xff]
        %v2703 = vld [vmem:[%s2643 + $0x270] sm:$0xff]
        %v2704 = vld [vmem:[%s2643 + $0x280] sm:$0xff]
        %v2705 = vld [vmem:[%s2643 + $0x288] sm:$0xff]
        %v2706 = vld [vmem:[%s2643 + $0x290] sm:$0xff]
        %v2707 = vld [vmem:[%s2643 + $0x2a0] sm:$0xff]
        %v2708 = vld [vmem:[%s2643 + $0x2a8] sm:$0xff]
        %v2709 = vld [vmem:[%s2643 + $0x2b0] sm:$0xff]
        %v2710 = vld [vmem:[%s2643 + $0x2c0] sm:$0xff]
        %v2711 = vld [vmem:[%s2643 + $0x2c8] sm:$0xff]
        %v2712 = vld [vmem:[%s2643 + $0x2d0] sm:$0xff]
        %v2713 = vld [vmem:[%s2643 + $0x2e0] sm:$0xff]
        %v2714 = vld [vmem:[%s2643 + $0x2e8] sm:$0xff]
        %v2715 = vld [vmem:[%s2643 + $0x2f0] sm:$0xff]
        %v2716 = vpack.c.bf16 %v2645, %v2644
        %v2717 = vpack.c.bf16 %v2647, %v2646
        %v2718 = vpack.c.bf16 %v2649, %v2648
        %v2719 = vpack.c.bf16 %v2651, %v2650
        %v2720 = vpack.c.bf16 %v2653, %v2652
        %v2721 = vpack.c.bf16 %v2655, %v2654
        %v2722 = vpack.c.bf16 %v2657, %v2656
        %v2723 = vpack.c.bf16 %v2659, %v2658
        %v2724 = vpack.c.bf16 %v2661, %v2660
        %v2725 = vpack.c.bf16 %v2663, %v2662
        %v2726 = vpack.c.bf16 %v2665, %v2664
        %v2727 = vpack.c.bf16 %v2667, %v2666
        %v2728 = vpack.c.bf16 %v2669, %v2668
        %v2729 = vpack.c.bf16 %v2671, %v2670
        %v2730 = vpack.c.bf16 %v2673, %v2672
        %v2731 = vpack.c.bf16 %v2675, %v2674
        %v2732 = vpack.c.bf16 %v2677, %v2676
        %v2733 = vpack.c.bf16 %v2679, %v2678
        %v2734 = vpack.c.bf16 %v2681, %v2680
        %v2735 = vpack.c.bf16 %v2683, %v2682
        %v2736 = vpack.c.bf16 %v2685, %v2684
        %v2737 = vpack.c.bf16 %v2687, %v2686
        %v2738 = vpack.c.bf16 %v2689, %v2688
        %v2739 = vpack.c.bf16 %v2691, %v2690
        %v2740 = vpack.c.bf16 %v2693, %v2692
        %v2741 = vpack.c.bf16 %v2695, %v2694
        %v2742 = vpack.c.bf16 %v2697, %v2696
        %v2743 = vpack.c.bf16 %v2699, %v2698
        %v2744 = vpack.c.bf16 %v2701, %v2700
        %v2745 = vpack.c.bf16 %v2703, %v2702
        %v2746 = vpack.c.bf16 %v2705, %v2704
        %v2747 = vpack.c.bf16 %v2707, %v2706
        %v2748 = vpack.c.bf16 %v2709, %v2708
        %v2749 = vpack.c.bf16 %v2711, %v2710
        %v2750 = vpack.c.bf16 %v2713, %v2712
        %v2751 = vpack.c.bf16 %v2715, %v2714
        %s2752 = scalar_lea.vmem [#allocation9], 48
        %v2753 = vld [vmem:[%s2752] sm:$0xf]
        %v2754 = vld [vmem:[%s2752 + $0x4] sm:$0xf]
        %v2755 = vld [vmem:[%s2752 + $0x8] sm:$0xf]
        %v2756 = vld [vmem:[%s2752 + $0xc] sm:$0xf]
        %v2761 = vunpack.c.l.b16 %v2753
        %v2762 = vunpack.c.l.b16 %v2754
        %v2763 = vunpack.c.l.b16 %v2755
        %v2764 = vunpack.c.l.b16 %v2756
        %v2765 = vpack.c.b16 %v2762, %v2761
        %v2766 = vpack.c.b16 %v2764, %v2763
        %v2770 = vsel %vm1201, %v2716, 0
        %v2773 = vsel %vm1201, %v2717, 0
        %v2776 = vsel %vm1201, %v2718, 0
        %v2779 = vsel %vm1201, %v2719, 0
        %v2782 = vsel %vm1201, %v2720, 0
        %v2785 = vsel %vm1201, %v2721, 0
        %v2788 = vsel %vm1201, %v2722, 0
        %v2791 = vsel %vm1201, %v2723, 0
        %v2794 = vsel %vm1201, %v2724, 0
        %v2797 = vsel %vm1201, %v2725, 0
        %v2800 = vsel %vm1201, %v2726, 0
        %v2803 = vsel %vm1201, %v2727, 0
        %v2806 = vsel %vm1201, %v2728, 0
        %v2809 = vsel %vm1201, %v2729, 0
        %v2812 = vsel %vm1201, %v2730, 0
        %v2815 = vsel %vm1201, %v2731, 0
        %v2818 = vsel %vm1201, %v2732, 0
        %v2821 = vsel %vm1201, %v2733, 0
        %v2824 = vsel %vm1201, %v2734, 0
        %v2827 = vsel %vm1201, %v2735, 0
        %v2830 = vsel %vm1201, %v2736, 0
        %v2833 = vsel %vm1201, %v2737, 0
        %v2836 = vsel %vm1201, %v2738, 0
        %v2839 = vsel %vm1201, %v2739, 0
        %v2842 = vsel %vm1201, %v2740, 0
        %v2845 = vsel %vm1201, %v2741, 0
        %v2848 = vsel %vm1201, %v2742, 0
        %v2851 = vsel %vm1201, %v2743, 0
        %v2854 = vsel %vm1201, %v2744, 0
        %v2857 = vsel %vm1201, %v2745, 0
        %v2860 = vsel %vm1201, %v2746, 0
        %v2863 = vsel %vm1201, %v2747, 0
        %v2866 = vsel %vm1201, %v2748, 0
        %v2869 = vsel %vm1201, %v2749, 0
        %v2872 = vsel %vm1201, %v2750, 0
        %v2875 = vsel %vm1201, %v2751, 0
        %2877 = vmatpush.bf16.msra.mxu0 0
        %2878 = vmatpush.bf16.msra.mxu0 0
        %2879 = vmatpush.bf16.msra.mxu0 0
        %2880 = vmatpush.bf16.msra.mxu0 0
        %2881 = vmatpush.bf16.msra.mxu0 0
        %2882 = vmatpush.bf16.msra.mxu0 0
        %2883 = vmatpush.bf16.msra.mxu0 %v2766
        %2884 = vmatpush.bf16.msra.mxu0 %v2765
        %2885 = vmatmul.bf16.gmra.mxu0 %v2770
        %v2886 = vpop.f32.mrf.mxu0
        %v2887 = vadd.f32 0.0, %v2886
        %v2888 = vpop.f32.mrf.mxu0
        %v2889 = vadd.f32 0.0, %v2888
        %2890 = vmatmul.bf16.gmra.mxu0 %v2773
        %v2891 = vpop.f32.mrf.mxu0
        %v2892 = vadd.f32 0.0, %v2891
        %v2893 = vpop.f32.mrf.mxu0
        %v2894 = vadd.f32 0.0, %v2893
        %2895 = vmatmul.bf16.gmra.mxu0 %v2776
        %v2896 = vpop.f32.mrf.mxu0
        %v2897 = vadd.f32 0.0, %v2896
        %v2898 = vpop.f32.mrf.mxu0
        %v2899 = vadd.f32 0.0, %v2898
        %2900 = vmatmul.bf16.gmra.mxu0 %v2779
        %v2901 = vpop.f32.mrf.mxu0
        %v2902 = vadd.f32 0.0, %v2901
        %v2903 = vpop.f32.mrf.mxu0
        %v2904 = vadd.f32 0.0, %v2903
        %2905 = vmatmul.bf16.gmra.mxu0 %v2782
        %v2906 = vpop.f32.mrf.mxu0
        %v2907 = vadd.f32 0.0, %v2906
        %v2908 = vpop.f32.mrf.mxu0
        %v2909 = vadd.f32 0.0, %v2908
        %2910 = vmatmul.bf16.gmra.mxu0 %v2785
        %v2911 = vpop.f32.mrf.mxu0
        %v2912 = vadd.f32 0.0, %v2911
        %v2913 = vpop.f32.mrf.mxu0
        %v2914 = vadd.f32 0.0, %v2913
        %2915 = vmatmul.bf16.gmra.mxu0 %v2788
        %v2916 = vpop.f32.mrf.mxu0
        %v2917 = vadd.f32 0.0, %v2916
        %v2918 = vpop.f32.mrf.mxu0
        %v2919 = vadd.f32 0.0, %v2918
        %2920 = vmatmul.bf16.gmra.mxu0 %v2791
        %v2921 = vpop.f32.mrf.mxu0
        %v2922 = vadd.f32 0.0, %v2921
        %v2923 = vpop.f32.mrf.mxu0
        %v2924 = vadd.f32 0.0, %v2923
        %2925 = vmatmul.bf16.gmra.mxu0 %v2794
        %v2926 = vpop.f32.mrf.mxu0
        %v2927 = vadd.f32 0.0, %v2926
        %v2928 = vpop.f32.mrf.mxu0
        %v2929 = vadd.f32 0.0, %v2928
        %2930 = vmatmul.bf16.gmra.mxu0 %v2797
        %v2931 = vpop.f32.mrf.mxu0
        %v2932 = vadd.f32 0.0, %v2931
        %v2933 = vpop.f32.mrf.mxu0
        %v2934 = vadd.f32 0.0, %v2933
        %2935 = vmatmul.bf16.gmra.mxu0 %v2800
        %v2936 = vpop.f32.mrf.mxu0
        %v2937 = vadd.f32 0.0, %v2936
        %v2938 = vpop.f32.mrf.mxu0
        %v2939 = vadd.f32 0.0, %v2938
        %2940 = vmatmul.bf16.gmra.mxu0 %v2803
        %v2941 = vpop.f32.mrf.mxu0
        %v2942 = vadd.f32 0.0, %v2941
        %v2943 = vpop.f32.mrf.mxu0
        %v2944 = vadd.f32 0.0, %v2943
        %2945 = vmatmul.bf16.gmra.mxu0 %v2806
        %v2946 = vpop.f32.mrf.mxu0
        %v2947 = vadd.f32 0.0, %v2946
        %v2948 = vpop.f32.mrf.mxu0
        %v2949 = vadd.f32 0.0, %v2948
        %2950 = vmatmul.bf16.gmra.mxu0 %v2809
        %v2951 = vpop.f32.mrf.mxu0
        %v2952 = vadd.f32 0.0, %v2951
        %v2953 = vpop.f32.mrf.mxu0
        %v2954 = vadd.f32 0.0, %v2953
        %2955 = vmatmul.bf16.gmra.mxu0 %v2812
        %v2956 = vpop.f32.mrf.mxu0
        %v2957 = vadd.f32 0.0, %v2956
        %v2958 = vpop.f32.mrf.mxu0
        %v2959 = vadd.f32 0.0, %v2958
        %2960 = vmatmul.bf16.gmra.mxu0 %v2815
        %v2961 = vpop.f32.mrf.mxu0
        %v2962 = vadd.f32 0.0, %v2961
        %v2963 = vpop.f32.mrf.mxu0
        %v2964 = vadd.f32 0.0, %v2963
        %2965 = vmatmul.bf16.gmra.mxu0 %v2818
        %v2966 = vpop.f32.mrf.mxu0
        %v2967 = vadd.f32 0.0, %v2966
        %v2968 = vpop.f32.mrf.mxu0
        %v2969 = vadd.f32 0.0, %v2968
        %2970 = vmatmul.bf16.gmra.mxu0 %v2821
        %v2971 = vpop.f32.mrf.mxu0
        %v2972 = vadd.f32 0.0, %v2971
        %v2973 = vpop.f32.mrf.mxu0
        %v2974 = vadd.f32 0.0, %v2973
        %2975 = vmatmul.bf16.gmra.mxu0 %v2824
        %v2976 = vpop.f32.mrf.mxu0
        %v2977 = vadd.f32 0.0, %v2976
        %v2978 = vpop.f32.mrf.mxu0
        %v2979 = vadd.f32 0.0, %v2978
        %2980 = vmatmul.bf16.gmra.mxu0 %v2827
        %v2981 = vpop.f32.mrf.mxu0
        %v2982 = vadd.f32 0.0, %v2981
        %v2983 = vpop.f32.mrf.mxu0
        %v2984 = vadd.f32 0.0, %v2983
        %2985 = vmatmul.bf16.gmra.mxu0 %v2830
        %v2986 = vpop.f32.mrf.mxu0
        %v2987 = vadd.f32 0.0, %v2986
        %v2988 = vpop.f32.mrf.mxu0
        %v2989 = vadd.f32 0.0, %v2988
        %2990 = vmatmul.bf16.gmra.mxu0 %v2833
        %v2991 = vpop.f32.mrf.mxu0
        %v2992 = vadd.f32 0.0, %v2991
        %v2993 = vpop.f32.mrf.mxu0
        %v2994 = vadd.f32 0.0, %v2993
        %2995 = vmatmul.bf16.gmra.mxu0 %v2836
        %v2996 = vpop.f32.mrf.mxu0
        %v2997 = vadd.f32 0.0, %v2996
        %v2998 = vpop.f32.mrf.mxu0
        %v2999 = vadd.f32 0.0, %v2998
        %3000 = vmatmul.bf16.gmra.mxu0 %v2839
        %v3001 = vpop.f32.mrf.mxu0
        %v3002 = vadd.f32 0.0, %v3001
        %v3003 = vpop.f32.mrf.mxu0
        %v3004 = vadd.f32 0.0, %v3003
        %3005 = vmatmul.bf16.gmra.mxu0 %v2842
        %v3006 = vpop.f32.mrf.mxu0
        %v3007 = vadd.f32 0.0, %v3006
        %v3008 = vpop.f32.mrf.mxu0
        %v3009 = vadd.f32 0.0, %v3008
        %3010 = vmatmul.bf16.gmra.mxu0 %v2845
        %v3011 = vpop.f32.mrf.mxu0
        %v3012 = vadd.f32 0.0, %v3011
        %v3013 = vpop.f32.mrf.mxu0
        %v3014 = vadd.f32 0.0, %v3013
        %3015 = vmatmul.bf16.gmra.mxu0 %v2848
        %v3016 = vpop.f32.mrf.mxu0
        %v3017 = vadd.f32 0.0, %v3016
        %v3018 = vpop.f32.mrf.mxu0
        %v3019 = vadd.f32 0.0, %v3018
        %3020 = vmatmul.bf16.gmra.mxu0 %v2851
        %v3021 = vpop.f32.mrf.mxu0
        %v3022 = vadd.f32 0.0, %v3021
        %v3023 = vpop.f32.mrf.mxu0
        %v3024 = vadd.f32 0.0, %v3023
        %3025 = vmatmul.bf16.gmra.mxu0 %v2854
        %v3026 = vpop.f32.mrf.mxu0
        %v3027 = vadd.f32 0.0, %v3026
        %v3028 = vpop.f32.mrf.mxu0
        %v3029 = vadd.f32 0.0, %v3028
        %3030 = vmatmul.bf16.gmra.mxu0 %v2857
        %v3031 = vpop.f32.mrf.mxu0
        %v3032 = vadd.f32 0.0, %v3031
        %v3033 = vpop.f32.mrf.mxu0
        %v3034 = vadd.f32 0.0, %v3033
        %3035 = vmatmul.bf16.gmra.mxu0 %v2860
        %v3036 = vpop.f32.mrf.mxu0
        %v3037 = vadd.f32 0.0, %v3036
        %v3038 = vpop.f32.mrf.mxu0
        %v3039 = vadd.f32 0.0, %v3038
        %3040 = vmatmul.bf16.gmra.mxu0 %v2863
        %v3041 = vpop.f32.mrf.mxu0
        %v3042 = vadd.f32 0.0, %v3041
        %v3043 = vpop.f32.mrf.mxu0
        %v3044 = vadd.f32 0.0, %v3043
        %3045 = vmatmul.bf16.gmra.mxu0 %v2866
        %v3046 = vpop.f32.mrf.mxu0
        %v3047 = vadd.f32 0.0, %v3046
        %v3048 = vpop.f32.mrf.mxu0
        %v3049 = vadd.f32 0.0, %v3048
        %3050 = vmatmul.bf16.gmra.mxu0 %v2869
        %v3051 = vpop.f32.mrf.mxu0
        %v3052 = vadd.f32 0.0, %v3051
        %v3053 = vpop.f32.mrf.mxu0
        %v3054 = vadd.f32 0.0, %v3053
        %3055 = vmatmul.bf16.gmra.mxu0 %v2872
        %v3056 = vpop.f32.mrf.mxu0
        %v3057 = vadd.f32 0.0, %v3056
        %v3058 = vpop.f32.mrf.mxu0
        %v3059 = vadd.f32 0.0, %v3058
        %3060 = vmatmul.bf16.gmra.mxu0 %v2875
        %v3061 = vpop.f32.mrf.mxu0
        %v3062 = vadd.f32 0.0, %v3061
        %v3063 = vpop.f32.mrf.mxu0
        %v3064 = vadd.f32 0.0, %v3063
        %3065 = vdwg.mxu0
        %v3066 = vadd.f32 %v2571, %v2887
        %v3067 = vadd.f32 %v2572, %v2889
        %v3068 = vadd.f32 %v2573, %v2892
        %v3069 = vadd.f32 %v2574, %v2894
        %v3070 = vadd.f32 %v2575, %v2897
        %v3071 = vadd.f32 %v2576, %v2899
        %v3072 = vadd.f32 %v2577, %v2902
        %v3073 = vadd.f32 %v2578, %v2904
        %v3074 = vadd.f32 %v2579, %v2907
        %v3075 = vadd.f32 %v2580, %v2909
        %v3076 = vadd.f32 %v2581, %v2912
        %v3077 = vadd.f32 %v2582, %v2914
        %v3078 = vadd.f32 %v2583, %v2917
        %v3079 = vadd.f32 %v2584, %v2919
        %v3080 = vadd.f32 %v2585, %v2922
        %v3081 = vadd.f32 %v2586, %v2924
        %v3082 = vadd.f32 %v2587, %v2927
        %v3083 = vadd.f32 %v2588, %v2929
        %v3084 = vadd.f32 %v2589, %v2932
        %v3085 = vadd.f32 %v2590, %v2934
        %v3086 = vadd.f32 %v2591, %v2937
        %v3087 = vadd.f32 %v2592, %v2939
        %v3088 = vadd.f32 %v2593, %v2942
        %v3089 = vadd.f32 %v2594, %v2944
        %v3090 = vadd.f32 %v2595, %v2947
        %v3091 = vadd.f32 %v2596, %v2949
        %v3092 = vadd.f32 %v2597, %v2952
        %v3093 = vadd.f32 %v2598, %v2954
        %v3094 = vadd.f32 %v2599, %v2957
        %v3095 = vadd.f32 %v2600, %v2959
        %v3096 = vadd.f32 %v2601, %v2962
        %v3097 = vadd.f32 %v2602, %v2964
        %v3098 = vadd.f32 %v2603, %v2967
        %v3099 = vadd.f32 %v2604, %v2969
        %v3100 = vadd.f32 %v2605, %v2972
        %v3101 = vadd.f32 %v2606, %v2974
        %v3102 = vadd.f32 %v2607, %v2977
        %v3103 = vadd.f32 %v2608, %v2979
        %v3104 = vadd.f32 %v2609, %v2982
        %v3105 = vadd.f32 %v2610, %v2984
        %v3106 = vadd.f32 %v2611, %v2987
        %v3107 = vadd.f32 %v2612, %v2989
        %v3108 = vadd.f32 %v2613, %v2992
        %v3109 = vadd.f32 %v2614, %v2994
        %v3110 = vadd.f32 %v2615, %v2997
        %v3111 = vadd.f32 %v2616, %v2999
        %v3112 = vadd.f32 %v2617, %v3002
        %v3113 = vadd.f32 %v2618, %v3004
        %v3114 = vadd.f32 %v2619, %v3007
        %v3115 = vadd.f32 %v2620, %v3009
        %v3116 = vadd.f32 %v2621, %v3012
        %v3117 = vadd.f32 %v2622, %v3014
        %v3118 = vadd.f32 %v2623, %v3017
        %v3119 = vadd.f32 %v2624, %v3019
        %v3120 = vadd.f32 %v2625, %v3022
        %v3121 = vadd.f32 %v2626, %v3024
        %v3122 = vadd.f32 %v2627, %v3027
        %v3123 = vadd.f32 %v2628, %v3029
        %v3124 = vadd.f32 %v2629, %v3032
        %v3125 = vadd.f32 %v2630, %v3034
        %v3126 = vadd.f32 %v2631, %v3037
        %v3127 = vadd.f32 %v2632, %v3039
        %v3128 = vadd.f32 %v2633, %v3042
        %v3129 = vadd.f32 %v2634, %v3044
        %v3130 = vadd.f32 %v2635, %v3047
        %v3131 = vadd.f32 %v2636, %v3049
        %v3132 = vadd.f32 %v2637, %v3052
        %v3133 = vadd.f32 %v2638, %v3054
        %v3134 = vadd.f32 %v2639, %v3057
        %v3135 = vadd.f32 %v2640, %v3059
        %v3136 = vadd.f32 %v2641, %v3062
        %v3137 = vadd.f32 %v2642, %v3064
        %v3138 = vld [vmem:[%s2643 + $0x1] sm:$0xff]
        %v3139 = vld [vmem:[%s2643 + $0x9] sm:$0xff]
        %v3140 = vld [vmem:[%s2643 + $0x11] sm:$0xff]
        %v3141 = vld [vmem:[%s2643 + $0x21] sm:$0xff]
        %v3142 = vld [vmem:[%s2643 + $0x29] sm:$0xff]
        %v3143 = vld [vmem:[%s2643 + $0x31] sm:$0xff]
        %v3144 = vld [vmem:[%s2643 + $0x41] sm:$0xff]
        %v3145 = vld [vmem:[%s2643 + $0x49] sm:$0xff]
        %v3146 = vld [vmem:[%s2643 + $0x51] sm:$0xff]
        %v3147 = vld [vmem:[%s2643 + $0x61] sm:$0xff]
        %v3148 = vld [vmem:[%s2643 + $0x69] sm:$0xff]
        %v3149 = vld [vmem:[%s2643 + $0x71] sm:$0xff]
        %v3150 = vld [vmem:[%s2643 + $0x81] sm:$0xff]
        %v3151 = vld [vmem:[%s2643 + $0x89] sm:$0xff]
        %v3152 = vld [vmem:[%s2643 + $0x91] sm:$0xff]
        %v3153 = vld [vmem:[%s2643 + $0xa1] sm:$0xff]
        %v3154 = vld [vmem:[%s2643 + $0xa9] sm:$0xff]
        %v3155 = vld [vmem:[%s2643 + $0xb1] sm:$0xff]
        %v3156 = vld [vmem:[%s2643 + $0xc1] sm:$0xff]
        %v3157 = vld [vmem:[%s2643 + $0xc9] sm:$0xff]
        %v3158 = vld [vmem:[%s2643 + $0xd1] sm:$0xff]
        %v3159 = vld [vmem:[%s2643 + $0xe1] sm:$0xff]
        %v3160 = vld [vmem:[%s2643 + $0xe9] sm:$0xff]
        %v3161 = vld [vmem:[%s2643 + $0xf1] sm:$0xff]
        %v3162 = vld [vmem:[%s2643 + $0x101] sm:$0xff]
        %v3163 = vld [vmem:[%s2643 + $0x109] sm:$0xff]
        %v3164 = vld [vmem:[%s2643 + $0x111] sm:$0xff]
        %v3165 = vld [vmem:[%s2643 + $0x121] sm:$0xff]
        %v3166 = vld [vmem:[%s2643 + $0x129] sm:$0xff]
        %v3167 = vld [vmem:[%s2643 + $0x131] sm:$0xff]
        %v3168 = vld [vmem:[%s2643 + $0x141] sm:$0xff]
        %v3169 = vld [vmem:[%s2643 + $0x149] sm:$0xff]
        %v3170 = vld [vmem:[%s2643 + $0x151] sm:$0xff]
        %v3171 = vld [vmem:[%s2643 + $0x161] sm:$0xff]
        %v3172 = vld [vmem:[%s2643 + $0x169] sm:$0xff]
        %v3173 = vld [vmem:[%s2643 + $0x171] sm:$0xff]
        %v3174 = vld [vmem:[%s2643 + $0x181] sm:$0xff]
        %v3175 = vld [vmem:[%s2643 + $0x189] sm:$0xff]
        %v3176 = vld [vmem:[%s2643 + $0x191] sm:$0xff]
        %v3177 = vld [vmem:[%s2643 + $0x1a1] sm:$0xff]
        %v3178 = vld [vmem:[%s2643 + $0x1a9] sm:$0xff]
        %v3179 = vld [vmem:[%s2643 + $0x1b1] sm:$0xff]
        %v3180 = vld [vmem:[%s2643 + $0x1c1] sm:$0xff]
        %v3181 = vld [vmem:[%s2643 + $0x1c9] sm:$0xff]
        %v3182 = vld [vmem:[%s2643 + $0x1d1] sm:$0xff]
        %v3183 = vld [vmem:[%s2643 + $0x1e1] sm:$0xff]
        %v3184 = vld [vmem:[%s2643 + $0x1e9] sm:$0xff]
        %v3185 = vld [vmem:[%s2643 + $0x1f1] sm:$0xff]
        %v3186 = vld [vmem:[%s2643 + $0x201] sm:$0xff]
        %v3187 = vld [vmem:[%s2643 + $0x209] sm:$0xff]
        %v3188 = vld [vmem:[%s2643 + $0x211] sm:$0xff]
        %v3189 = vld [vmem:[%s2643 + $0x221] sm:$0xff]
        %v3190 = vld [vmem:[%s2643 + $0x229] sm:$0xff]
        %v3191 = vld [vmem:[%s2643 + $0x231] sm:$0xff]
        %v3192 = vld [vmem:[%s2643 + $0x241] sm:$0xff]
        %v3193 = vld [vmem:[%s2643 + $0x249] sm:$0xff]
        %v3194 = vld [vmem:[%s2643 + $0x251] sm:$0xff]
        %v3195 = vld [vmem:[%s2643 + $0x261] sm:$0xff]
        %v3196 = vld [vmem:[%s2643 + $0x269] sm:$0xff]
        %v3197 = vld [vmem:[%s2643 + $0x271] sm:$0xff]
        %v3198 = vld [vmem:[%s2643 + $0x281] sm:$0xff]
        %v3199 = vld [vmem:[%s2643 + $0x289] sm:$0xff]
        %v3200 = vld [vmem:[%s2643 + $0x291] sm:$0xff]
        %v3201 = vld [vmem:[%s2643 + $0x2a1] sm:$0xff]
        %v3202 = vld [vmem:[%s2643 + $0x2a9] sm:$0xff]
        %v3203 = vld [vmem:[%s2643 + $0x2b1] sm:$0xff]
        %v3204 = vld [vmem:[%s2643 + $0x2c1] sm:$0xff]
        %v3205 = vld [vmem:[%s2643 + $0x2c9] sm:$0xff]
        %v3206 = vld [vmem:[%s2643 + $0x2d1] sm:$0xff]
        %v3207 = vld [vmem:[%s2643 + $0x2e1] sm:$0xff]
        %v3208 = vld [vmem:[%s2643 + $0x2e9] sm:$0xff]
        %v3209 = vld [vmem:[%s2643 + $0x2f1] sm:$0xff]
        %v3210 = vpack.c.bf16 %v3139, %v3138
        %v3211 = vpack.c.bf16 %v3141, %v3140
        %v3212 = vpack.c.bf16 %v3143, %v3142
        %v3213 = vpack.c.bf16 %v3145, %v3144
        %v3214 = vpack.c.bf16 %v3147, %v3146
        %v3215 = vpack.c.bf16 %v3149, %v3148
        %v3216 = vpack.c.bf16 %v3151, %v3150
        %v3217 = vpack.c.bf16 %v3153, %v3152
        %v3218 = vpack.c.bf16 %v3155, %v3154
        %v3219 = vpack.c.bf16 %v3157, %v3156
        %v3220 = vpack.c.bf16 %v3159, %v3158
        %v3221 = vpack.c.bf16 %v3161, %v3160
        %v3222 = vpack.c.bf16 %v3163, %v3162
        %v3223 = vpack.c.bf16 %v3165, %v3164
        %v3224 = vpack.c.bf16 %v3167, %v3166
        %v3225 = vpack.c.bf16 %v3169, %v3168
        %v3226 = vpack.c.bf16 %v3171, %v3170
        %v3227 = vpack.c.bf16 %v3173, %v3172
        %v3228 = vpack.c.bf16 %v3175, %v3174
        %v3229 = vpack.c.bf16 %v3177, %v3176
        %v3230 = vpack.c.bf16 %v3179, %v3178
        %v3231 = vpack.c.bf16 %v3181, %v3180
        %v3232 = vpack.c.bf16 %v3183, %v3182
        %v3233 = vpack.c.bf16 %v3185, %v3184
        %v3234 = vpack.c.bf16 %v3187, %v3186
        %v3235 = vpack.c.bf16 %v3189, %v3188
        %v3236 = vpack.c.bf16 %v3191, %v3190
        %v3237 = vpack.c.bf16 %v3193, %v3192
        %v3238 = vpack.c.bf16 %v3195, %v3194
        %v3239 = vpack.c.bf16 %v3197, %v3196
        %v3240 = vpack.c.bf16 %v3199, %v3198
        %v3241 = vpack.c.bf16 %v3201, %v3200
        %v3242 = vpack.c.bf16 %v3203, %v3202
        %v3243 = vpack.c.bf16 %v3205, %v3204
        %v3244 = vpack.c.bf16 %v3207, %v3206
        %v3245 = vpack.c.bf16 %v3209, %v3208
        %s3246 = scalar_lea.vmem [#allocation9], 64
        %v3247 = vld [vmem:[%s3246] sm:$0xf]
        %v3248 = vld [vmem:[%s3246 + $0x4] sm:$0xf]
        %v3249 = vld [vmem:[%s3246 + $0x8] sm:$0xf]
        %v3250 = vld [vmem:[%s3246 + $0xc] sm:$0xf]
        %v3255 = vunpack.c.l.b16 %v3247
        %v3256 = vunpack.c.l.b16 %v3248
        %v3257 = vunpack.c.l.b16 %v3249
        %v3258 = vunpack.c.l.b16 %v3250
        %v3259 = vpack.c.b16 %v3256, %v3255
        %v3260 = vpack.c.b16 %v3258, %v3257
        %v3264 = vsel %vm1201, %v3210, 0
        %v3267 = vsel %vm1201, %v3211, 0
        %v3270 = vsel %vm1201, %v3212, 0
        %v3273 = vsel %vm1201, %v3213, 0
        %v3276 = vsel %vm1201, %v3214, 0
        %v3279 = vsel %vm1201, %v3215, 0
        %v3282 = vsel %vm1201, %v3216, 0
        %v3285 = vsel %vm1201, %v3217, 0
        %v3288 = vsel %vm1201, %v3218, 0
        %v3291 = vsel %vm1201, %v3219, 0
        %v3294 = vsel %vm1201, %v3220, 0
        %v3297 = vsel %vm1201, %v3221, 0
        %v3300 = vsel %vm1201, %v3222, 0
        %v3303 = vsel %vm1201, %v3223, 0
        %v3306 = vsel %vm1201, %v3224, 0
        %v3309 = vsel %vm1201, %v3225, 0
        %v3312 = vsel %vm1201, %v3226, 0
        %v3315 = vsel %vm1201, %v3227, 0
        %v3318 = vsel %vm1201, %v3228, 0
        %v3321 = vsel %vm1201, %v3229, 0
        %v3324 = vsel %vm1201, %v3230, 0
        %v3327 = vsel %vm1201, %v3231, 0
        %v3330 = vsel %vm1201, %v3232, 0
        %v3333 = vsel %vm1201, %v3233, 0
        %v3336 = vsel %vm1201, %v3234, 0
        %v3339 = vsel %vm1201, %v3235, 0
        %v3342 = vsel %vm1201, %v3236, 0
        %v3345 = vsel %vm1201, %v3237, 0
        %v3348 = vsel %vm1201, %v3238, 0
        %v3351 = vsel %vm1201, %v3239, 0
        %v3354 = vsel %vm1201, %v3240, 0
        %v3357 = vsel %vm1201, %v3241, 0
        %v3360 = vsel %vm1201, %v3242, 0
        %v3363 = vsel %vm1201, %v3243, 0
        %v3366 = vsel %vm1201, %v3244, 0
        %v3369 = vsel %vm1201, %v3245, 0
        %3371 = vmatpush.bf16.msra.mxu0 0
        %3372 = vmatpush.bf16.msra.mxu0 0
        %3373 = vmatpush.bf16.msra.mxu0 0
        %3374 = vmatpush.bf16.msra.mxu0 0
        %3375 = vmatpush.bf16.msra.mxu0 0
        %3376 = vmatpush.bf16.msra.mxu0 0
        %3377 = vmatpush.bf16.msra.mxu0 %v3260
        %3378 = vmatpush.bf16.msra.mxu0 %v3259
        %3379 = vmatmul.bf16.gmra.mxu0 %v3264
        %v3380 = vpop.f32.mrf.mxu0
        %v3381 = vadd.f32 0.0, %v3380
        %v3382 = vpop.f32.mrf.mxu0
        %v3383 = vadd.f32 0.0, %v3382
        %3384 = vmatmul.bf16.gmra.mxu0 %v3267
        %v3385 = vpop.f32.mrf.mxu0
        %v3386 = vadd.f32 0.0, %v3385
        %v3387 = vpop.f32.mrf.mxu0
        %v3388 = vadd.f32 0.0, %v3387
        %3389 = vmatmul.bf16.gmra.mxu0 %v3270
        %v3390 = vpop.f32.mrf.mxu0
        %v3391 = vadd.f32 0.0, %v3390
        %v3392 = vpop.f32.mrf.mxu0
        %v3393 = vadd.f32 0.0, %v3392
        %3394 = vmatmul.bf16.gmra.mxu0 %v3273
        %v3395 = vpop.f32.mrf.mxu0
        %v3396 = vadd.f32 0.0, %v3395
        %v3397 = vpop.f32.mrf.mxu0
        %v3398 = vadd.f32 0.0, %v3397
        %3399 = vmatmul.bf16.gmra.mxu0 %v3276
        %v3400 = vpop.f32.mrf.mxu0
        %v3401 = vadd.f32 0.0, %v3400
        %v3402 = vpop.f32.mrf.mxu0
        %v3403 = vadd.f32 0.0, %v3402
        %3404 = vmatmul.bf16.gmra.mxu0 %v3279
        %v3405 = vpop.f32.mrf.mxu0
        %v3406 = vadd.f32 0.0, %v3405
        %v3407 = vpop.f32.mrf.mxu0
        %v3408 = vadd.f32 0.0, %v3407
        %3409 = vmatmul.bf16.gmra.mxu0 %v3282
        %v3410 = vpop.f32.mrf.mxu0
        %v3411 = vadd.f32 0.0, %v3410
        %v3412 = vpop.f32.mrf.mxu0
        %v3413 = vadd.f32 0.0, %v3412
        %3414 = vmatmul.bf16.gmra.mxu0 %v3285
        %v3415 = vpop.f32.mrf.mxu0
        %v3416 = vadd.f32 0.0, %v3415
        %v3417 = vpop.f32.mrf.mxu0
        %v3418 = vadd.f32 0.0, %v3417
        %3419 = vmatmul.bf16.gmra.mxu0 %v3288
        %v3420 = vpop.f32.mrf.mxu0
        %v3421 = vadd.f32 0.0, %v3420
        %v3422 = vpop.f32.mrf.mxu0
        %v3423 = vadd.f32 0.0, %v3422
        %3424 = vmatmul.bf16.gmra.mxu0 %v3291
        %v3425 = vpop.f32.mrf.mxu0
        %v3426 = vadd.f32 0.0, %v3425
        %v3427 = vpop.f32.mrf.mxu0
        %v3428 = vadd.f32 0.0, %v3427
        %3429 = vmatmul.bf16.gmra.mxu0 %v3294
        %v3430 = vpop.f32.mrf.mxu0
        %v3431 = vadd.f32 0.0, %v3430
        %v3432 = vpop.f32.mrf.mxu0
        %v3433 = vadd.f32 0.0, %v3432
        %3434 = vmatmul.bf16.gmra.mxu0 %v3297
        %v3435 = vpop.f32.mrf.mxu0
        %v3436 = vadd.f32 0.0, %v3435
        %v3437 = vpop.f32.mrf.mxu0
        %v3438 = vadd.f32 0.0, %v3437
        %3439 = vmatmul.bf16.gmra.mxu0 %v3300
        %v3440 = vpop.f32.mrf.mxu0
        %v3441 = vadd.f32 0.0, %v3440
        %v3442 = vpop.f32.mrf.mxu0
        %v3443 = vadd.f32 0.0, %v3442
        %3444 = vmatmul.bf16.gmra.mxu0 %v3303
        %v3445 = vpop.f32.mrf.mxu0
        %v3446 = vadd.f32 0.0, %v3445
        %v3447 = vpop.f32.mrf.mxu0
        %v3448 = vadd.f32 0.0, %v3447
        %3449 = vmatmul.bf16.gmra.mxu0 %v3306
        %v3450 = vpop.f32.mrf.mxu0
        %v3451 = vadd.f32 0.0, %v3450
        %v3452 = vpop.f32.mrf.mxu0
        %v3453 = vadd.f32 0.0, %v3452
        %3454 = vmatmul.bf16.gmra.mxu0 %v3309
        %v3455 = vpop.f32.mrf.mxu0
        %v3456 = vadd.f32 0.0, %v3455
        %v3457 = vpop.f32.mrf.mxu0
        %v3458 = vadd.f32 0.0, %v3457
        %3459 = vmatmul.bf16.gmra.mxu0 %v3312
        %v3460 = vpop.f32.mrf.mxu0
        %v3461 = vadd.f32 0.0, %v3460
        %v3462 = vpop.f32.mrf.mxu0
        %v3463 = vadd.f32 0.0, %v3462
        %3464 = vmatmul.bf16.gmra.mxu0 %v3315
        %v3465 = vpop.f32.mrf.mxu0
        %v3466 = vadd.f32 0.0, %v3465
        %v3467 = vpop.f32.mrf.mxu0
        %v3468 = vadd.f32 0.0, %v3467
        %3469 = vmatmul.bf16.gmra.mxu0 %v3318
        %v3470 = vpop.f32.mrf.mxu0
        %v3471 = vadd.f32 0.0, %v3470
        %v3472 = vpop.f32.mrf.mxu0
        %v3473 = vadd.f32 0.0, %v3472
        %3474 = vmatmul.bf16.gmra.mxu0 %v3321
        %v3475 = vpop.f32.mrf.mxu0
        %v3476 = vadd.f32 0.0, %v3475
        %v3477 = vpop.f32.mrf.mxu0
        %v3478 = vadd.f32 0.0, %v3477
        %3479 = vmatmul.bf16.gmra.mxu0 %v3324
        %v3480 = vpop.f32.mrf.mxu0
        %v3481 = vadd.f32 0.0, %v3480
        %v3482 = vpop.f32.mrf.mxu0
        %v3483 = vadd.f32 0.0, %v3482
        %3484 = vmatmul.bf16.gmra.mxu0 %v3327
        %v3485 = vpop.f32.mrf.mxu0
        %v3486 = vadd.f32 0.0, %v3485
        %v3487 = vpop.f32.mrf.mxu0
        %v3488 = vadd.f32 0.0, %v3487
        %3489 = vmatmul.bf16.gmra.mxu0 %v3330
        %v3490 = vpop.f32.mrf.mxu0
        %v3491 = vadd.f32 0.0, %v3490
        %v3492 = vpop.f32.mrf.mxu0
        %v3493 = vadd.f32 0.0, %v3492
        %3494 = vmatmul.bf16.gmra.mxu0 %v3333
        %v3495 = vpop.f32.mrf.mxu0
        %v3496 = vadd.f32 0.0, %v3495
        %v3497 = vpop.f32.mrf.mxu0
        %v3498 = vadd.f32 0.0, %v3497
        %3499 = vmatmul.bf16.gmra.mxu0 %v3336
        %v3500 = vpop.f32.mrf.mxu0
        %v3501 = vadd.f32 0.0, %v3500
        %v3502 = vpop.f32.mrf.mxu0
        %v3503 = vadd.f32 0.0, %v3502
        %3504 = vmatmul.bf16.gmra.mxu0 %v3339
        %v3505 = vpop.f32.mrf.mxu0
        %v3506 = vadd.f32 0.0, %v3505
        %v3507 = vpop.f32.mrf.mxu0
        %v3508 = vadd.f32 0.0, %v3507
        %3509 = vmatmul.bf16.gmra.mxu0 %v3342
        %v3510 = vpop.f32.mrf.mxu0
        %v3511 = vadd.f32 0.0, %v3510
        %v3512 = vpop.f32.mrf.mxu0
        %v3513 = vadd.f32 0.0, %v3512
        %3514 = vmatmul.bf16.gmra.mxu0 %v3345
        %v3515 = vpop.f32.mrf.mxu0
        %v3516 = vadd.f32 0.0, %v3515
        %v3517 = vpop.f32.mrf.mxu0
        %v3518 = vadd.f32 0.0, %v3517
        %3519 = vmatmul.bf16.gmra.mxu0 %v3348
        %v3520 = vpop.f32.mrf.mxu0
        %v3521 = vadd.f32 0.0, %v3520
        %v3522 = vpop.f32.mrf.mxu0
        %v3523 = vadd.f32 0.0, %v3522
        %3524 = vmatmul.bf16.gmra.mxu0 %v3351
        %v3525 = vpop.f32.mrf.mxu0
        %v3526 = vadd.f32 0.0, %v3525
        %v3527 = vpop.f32.mrf.mxu0
        %v3528 = vadd.f32 0.0, %v3527
        %3529 = vmatmul.bf16.gmra.mxu0 %v3354
        %v3530 = vpop.f32.mrf.mxu0
        %v3531 = vadd.f32 0.0, %v3530
        %v3532 = vpop.f32.mrf.mxu0
        %v3533 = vadd.f32 0.0, %v3532
        %3534 = vmatmul.bf16.gmra.mxu0 %v3357
        %v3535 = vpop.f32.mrf.mxu0
        %v3536 = vadd.f32 0.0, %v3535
        %v3537 = vpop.f32.mrf.mxu0
        %v3538 = vadd.f32 0.0, %v3537
        %3539 = vmatmul.bf16.gmra.mxu0 %v3360
        %v3540 = vpop.f32.mrf.mxu0
        %v3541 = vadd.f32 0.0, %v3540
        %v3542 = vpop.f32.mrf.mxu0
        %v3543 = vadd.f32 0.0, %v3542
        %3544 = vmatmul.bf16.gmra.mxu0 %v3363
        %v3545 = vpop.f32.mrf.mxu0
        %v3546 = vadd.f32 0.0, %v3545
        %v3547 = vpop.f32.mrf.mxu0
        %v3548 = vadd.f32 0.0, %v3547
        %3549 = vmatmul.bf16.gmra.mxu0 %v3366
        %v3550 = vpop.f32.mrf.mxu0
        %v3551 = vadd.f32 0.0, %v3550
        %v3552 = vpop.f32.mrf.mxu0
        %v3553 = vadd.f32 0.0, %v3552
        %3554 = vmatmul.bf16.gmra.mxu0 %v3369
        %v3555 = vpop.f32.mrf.mxu0
        %v3556 = vadd.f32 0.0, %v3555
        %v3557 = vpop.f32.mrf.mxu0
        %v3558 = vadd.f32 0.0, %v3557
        %3559 = vdwg.mxu0
        %v3560 = vadd.f32 %v3066, %v3381
        %v3561 = vadd.f32 %v3067, %v3383
        %v3562 = vadd.f32 %v3068, %v3386
        %v3563 = vadd.f32 %v3069, %v3388
        %v3564 = vadd.f32 %v3070, %v3391
        %v3565 = vadd.f32 %v3071, %v3393
        %v3566 = vadd.f32 %v3072, %v3396
        %v3567 = vadd.f32 %v3073, %v3398
        %v3568 = vadd.f32 %v3074, %v3401
        %v3569 = vadd.f32 %v3075, %v3403
        %v3570 = vadd.f32 %v3076, %v3406
        %v3571 = vadd.f32 %v3077, %v3408
        %v3572 = vadd.f32 %v3078, %v3411
        %v3573 = vadd.f32 %v3079, %v3413
        %v3574 = vadd.f32 %v3080, %v3416
        %v3575 = vadd.f32 %v3081, %v3418
        %v3576 = vadd.f32 %v3082, %v3421
        %v3577 = vadd.f32 %v3083, %v3423
        %v3578 = vadd.f32 %v3084, %v3426
        %v3579 = vadd.f32 %v3085, %v3428
        %v3580 = vadd.f32 %v3086, %v3431
        %v3581 = vadd.f32 %v3087, %v3433
        %v3582 = vadd.f32 %v3088, %v3436
        %v3583 = vadd.f32 %v3089, %v3438
        %v3584 = vadd.f32 %v3090, %v3441
        %v3585 = vadd.f32 %v3091, %v3443
        %v3586 = vadd.f32 %v3092, %v3446
        %v3587 = vadd.f32 %v3093, %v3448
        %v3588 = vadd.f32 %v3094, %v3451
        %v3589 = vadd.f32 %v3095, %v3453
        %v3590 = vadd.f32 %v3096, %v3456
        %v3591 = vadd.f32 %v3097, %v3458
        %v3592 = vadd.f32 %v3098, %v3461
        %v3593 = vadd.f32 %v3099, %v3463
        %v3594 = vadd.f32 %v3100, %v3466
        %v3595 = vadd.f32 %v3101, %v3468
        %v3596 = vadd.f32 %v3102, %v3471
        %v3597 = vadd.f32 %v3103, %v3473
        %v3598 = vadd.f32 %v3104, %v3476
        %v3599 = vadd.f32 %v3105, %v3478
        %v3600 = vadd.f32 %v3106, %v3481
        %v3601 = vadd.f32 %v3107, %v3483
        %v3602 = vadd.f32 %v3108, %v3486
        %v3603 = vadd.f32 %v3109, %v3488
        %v3604 = vadd.f32 %v3110, %v3491
        %v3605 = vadd.f32 %v3111, %v3493
        %v3606 = vadd.f32 %v3112, %v3496
        %v3607 = vadd.f32 %v3113, %v3498
        %v3608 = vadd.f32 %v3114, %v3501
        %v3609 = vadd.f32 %v3115, %v3503
        %v3610 = vadd.f32 %v3116, %v3506
        %v3611 = vadd.f32 %v3117, %v3508
        %v3612 = vadd.f32 %v3118, %v3511
        %v3613 = vadd.f32 %v3119, %v3513
        %v3614 = vadd.f32 %v3120, %v3516
        %v3615 = vadd.f32 %v3121, %v3518
        %v3616 = vadd.f32 %v3122, %v3521
        %v3617 = vadd.f32 %v3123, %v3523
        %v3618 = vadd.f32 %v3124, %v3526
        %v3619 = vadd.f32 %v3125, %v3528
        %v3620 = vadd.f32 %v3126, %v3531
        %v3621 = vadd.f32 %v3127, %v3533
        %v3622 = vadd.f32 %v3128, %v3536
        %v3623 = vadd.f32 %v3129, %v3538
        %v3624 = vadd.f32 %v3130, %v3541
        %v3625 = vadd.f32 %v3131, %v3543
        %v3626 = vadd.f32 %v3132, %v3546
        %v3627 = vadd.f32 %v3133, %v3548
        %v3628 = vadd.f32 %v3134, %v3551
        %v3629 = vadd.f32 %v3135, %v3553
        %v3630 = vadd.f32 %v3136, %v3556
        %v3631 = vadd.f32 %v3137, %v3558
        %v3632 = vld [vmem:[%s2643 + $0x2] sm:$0xff]
        %v3633 = vld [vmem:[%s2643 + $0xa] sm:$0xff]
        %v3634 = vld [vmem:[%s2643 + $0x12] sm:$0xff]
        %v3635 = vld [vmem:[%s2643 + $0x22] sm:$0xff]
        %v3636 = vld [vmem:[%s2643 + $0x2a] sm:$0xff]
        %v3637 = vld [vmem:[%s2643 + $0x32] sm:$0xff]
        %v3638 = vld [vmem:[%s2643 + $0x42] sm:$0xff]
        %v3639 = vld [vmem:[%s2643 + $0x4a] sm:$0xff]
        %v3640 = vld [vmem:[%s2643 + $0x52] sm:$0xff]
        %v3641 = vld [vmem:[%s2643 + $0x62] sm:$0xff]
        %v3642 = vld [vmem:[%s2643 + $0x6a] sm:$0xff]
        %v3643 = vld [vmem:[%s2643 + $0x72] sm:$0xff]
        %v3644 = vld [vmem:[%s2643 + $0x82] sm:$0xff]
        %v3645 = vld [vmem:[%s2643 + $0x8a] sm:$0xff]
        %v3646 = vld [vmem:[%s2643 + $0x92] sm:$0xff]
        %v3647 = vld [vmem:[%s2643 + $0xa2] sm:$0xff]
        %v3648 = vld [vmem:[%s2643 + $0xaa] sm:$0xff]
        %v3649 = vld [vmem:[%s2643 + $0xb2] sm:$0xff]
        %v3650 = vld [vmem:[%s2643 + $0xc2] sm:$0xff]
        %v3651 = vld [vmem:[%s2643 + $0xca] sm:$0xff]
        %v3652 = vld [vmem:[%s2643 + $0xd2] sm:$0xff]
        %v3653 = vld [vmem:[%s2643 + $0xe2] sm:$0xff]
        %v3654 = vld [vmem:[%s2643 + $0xea] sm:$0xff]
        %v3655 = vld [vmem:[%s2643 + $0xf2] sm:$0xff]
        %v3656 = vld [vmem:[%s2643 + $0x102] sm:$0xff]
        %v3657 = vld [vmem:[%s2643 + $0x10a] sm:$0xff]
        %v3658 = vld [vmem:[%s2643 + $0x112] sm:$0xff]
        %v3659 = vld [vmem:[%s2643 + $0x122] sm:$0xff]
        %v3660 = vld [vmem:[%s2643 + $0x12a] sm:$0xff]
        %v3661 = vld [vmem:[%s2643 + $0x132] sm:$0xff]
        %v3662 = vld [vmem:[%s2643 + $0x142] sm:$0xff]
        %v3663 = vld [vmem:[%s2643 + $0x14a] sm:$0xff]
        %v3664 = vld [vmem:[%s2643 + $0x152] sm:$0xff]
        %v3665 = vld [vmem:[%s2643 + $0x162] sm:$0xff]
        %v3666 = vld [vmem:[%s2643 + $0x16a] sm:$0xff]
        %v3667 = vld [vmem:[%s2643 + $0x172] sm:$0xff]
        %v3668 = vld [vmem:[%s2643 + $0x182] sm:$0xff]
        %v3669 = vld [vmem:[%s2643 + $0x18a] sm:$0xff]
        %v3670 = vld [vmem:[%s2643 + $0x192] sm:$0xff]
        %v3671 = vld [vmem:[%s2643 + $0x1a2] sm:$0xff]
        %v3672 = vld [vmem:[%s2643 + $0x1aa] sm:$0xff]
        %v3673 = vld [vmem:[%s2643 + $0x1b2] sm:$0xff]
        %v3674 = vld [vmem:[%s2643 + $0x1c2] sm:$0xff]
        %v3675 = vld [vmem:[%s2643 + $0x1ca] sm:$0xff]
        %v3676 = vld [vmem:[%s2643 + $0x1d2] sm:$0xff]
        %v3677 = vld [vmem:[%s2643 + $0x1e2] sm:$0xff]
        %v3678 = vld [vmem:[%s2643 + $0x1ea] sm:$0xff]
        %v3679 = vld [vmem:[%s2643 + $0x1f2] sm:$0xff]
        %v3680 = vld [vmem:[%s2643 + $0x202] sm:$0xff]
        %v3681 = vld [vmem:[%s2643 + $0x20a] sm:$0xff]
        %v3682 = vld [vmem:[%s2643 + $0x212] sm:$0xff]
        %v3683 = vld [vmem:[%s2643 + $0x222] sm:$0xff]
        %v3684 = vld [vmem:[%s2643 + $0x22a] sm:$0xff]
        %v3685 = vld [vmem:[%s2643 + $0x232] sm:$0xff]
        %v3686 = vld [vmem:[%s2643 + $0x242] sm:$0xff]
        %v3687 = vld [vmem:[%s2643 + $0x24a] sm:$0xff]
        %v3688 = vld [vmem:[%s2643 + $0x252] sm:$0xff]
        %v3689 = vld [vmem:[%s2643 + $0x262] sm:$0xff]
        %v3690 = vld [vmem:[%s2643 + $0x26a] sm:$0xff]
        %v3691 = vld [vmem:[%s2643 + $0x272] sm:$0xff]
        %v3692 = vld [vmem:[%s2643 + $0x282] sm:$0xff]
        %v3693 = vld [vmem:[%s2643 + $0x28a] sm:$0xff]
        %v3694 = vld [vmem:[%s2643 + $0x292] sm:$0xff]
        %v3695 = vld [vmem:[%s2643 + $0x2a2] sm:$0xff]
        %v3696 = vld [vmem:[%s2643 + $0x2aa] sm:$0xff]
        %v3697 = vld [vmem:[%s2643 + $0x2b2] sm:$0xff]
        %v3698 = vld [vmem:[%s2643 + $0x2c2] sm:$0xff]
        %v3699 = vld [vmem:[%s2643 + $0x2ca] sm:$0xff]
        %v3700 = vld [vmem:[%s2643 + $0x2d2] sm:$0xff]
        %v3701 = vld [vmem:[%s2643 + $0x2e2] sm:$0xff]
        %v3702 = vld [vmem:[%s2643 + $0x2ea] sm:$0xff]
        %v3703 = vld [vmem:[%s2643 + $0x2f2] sm:$0xff]
        %v3704 = vpack.c.bf16 %v3633, %v3632
        %v3705 = vpack.c.bf16 %v3635, %v3634
        %v3706 = vpack.c.bf16 %v3637, %v3636
        %v3707 = vpack.c.bf16 %v3639, %v3638
        %v3708 = vpack.c.bf16 %v3641, %v3640
        %v3709 = vpack.c.bf16 %v3643, %v3642
        %v3710 = vpack.c.bf16 %v3645, %v3644
        %v3711 = vpack.c.bf16 %v3647, %v3646
        %v3712 = vpack.c.bf16 %v3649, %v3648
        %v3713 = vpack.c.bf16 %v3651, %v3650
        %v3714 = vpack.c.bf16 %v3653, %v3652
        %v3715 = vpack.c.bf16 %v3655, %v3654
        %v3716 = vpack.c.bf16 %v3657, %v3656
        %v3717 = vpack.c.bf16 %v3659, %v3658
        %v3718 = vpack.c.bf16 %v3661, %v3660
        %v3719 = vpack.c.bf16 %v3663, %v3662
        %v3720 = vpack.c.bf16 %v3665, %v3664
        %v3721 = vpack.c.bf16 %v3667, %v3666
        %v3722 = vpack.c.bf16 %v3669, %v3668
        %v3723 = vpack.c.bf16 %v3671, %v3670
        %v3724 = vpack.c.bf16 %v3673, %v3672
        %v3725 = vpack.c.bf16 %v3675, %v3674
        %v3726 = vpack.c.bf16 %v3677, %v3676
        %v3727 = vpack.c.bf16 %v3679, %v3678
        %v3728 = vpack.c.bf16 %v3681, %v3680
        %v3729 = vpack.c.bf16 %v3683, %v3682
        %v3730 = vpack.c.bf16 %v3685, %v3684
        %v3731 = vpack.c.bf16 %v3687, %v3686
        %v3732 = vpack.c.bf16 %v3689, %v3688
        %v3733 = vpack.c.bf16 %v3691, %v3690
        %v3734 = vpack.c.bf16 %v3693, %v3692
        %v3735 = vpack.c.bf16 %v3695, %v3694
        %v3736 = vpack.c.bf16 %v3697, %v3696
        %v3737 = vpack.c.bf16 %v3699, %v3698
        %v3738 = vpack.c.bf16 %v3701, %v3700
        %v3739 = vpack.c.bf16 %v3703, %v3702
        %s3740 = scalar_lea.vmem [#allocation9], 80
        %v3741 = vld [vmem:[%s3740] sm:$0xf]
        %v3742 = vld [vmem:[%s3740 + $0x4] sm:$0xf]
        %v3743 = vld [vmem:[%s3740 + $0x8] sm:$0xf]
        %v3744 = vld [vmem:[%s3740 + $0xc] sm:$0xf]
        %v3749 = vunpack.c.l.b16 %v3741
        %v3750 = vunpack.c.l.b16 %v3742
        %v3751 = vunpack.c.l.b16 %v3743
        %v3752 = vunpack.c.l.b16 %v3744
        %v3753 = vpack.c.b16 %v3750, %v3749
        %v3754 = vpack.c.b16 %v3752, %v3751
        %v3758 = vsel %vm1201, %v3704, 0
        %v3761 = vsel %vm1201, %v3705, 0
        %v3764 = vsel %vm1201, %v3706, 0
        %v3767 = vsel %vm1201, %v3707, 0
        %v3770 = vsel %vm1201, %v3708, 0
        %v3773 = vsel %vm1201, %v3709, 0
        %v3776 = vsel %vm1201, %v3710, 0
        %v3779 = vsel %vm1201, %v3711, 0
        %v3782 = vsel %vm1201, %v3712, 0
        %v3785 = vsel %vm1201, %v3713, 0
        %v3788 = vsel %vm1201, %v3714, 0
        %v3791 = vsel %vm1201, %v3715, 0
        %v3794 = vsel %vm1201, %v3716, 0
        %v3797 = vsel %vm1201, %v3717, 0
        %v3800 = vsel %vm1201, %v3718, 0
        %v3803 = vsel %vm1201, %v3719, 0
        %v3806 = vsel %vm1201, %v3720, 0
        %v3809 = vsel %vm1201, %v3721, 0
        %v3812 = vsel %vm1201, %v3722, 0
        %v3815 = vsel %vm1201, %v3723, 0
        %v3818 = vsel %vm1201, %v3724, 0
        %v3821 = vsel %vm1201, %v3725, 0
        %v3824 = vsel %vm1201, %v3726, 0
        %v3827 = vsel %vm1201, %v3727, 0
        %v3830 = vsel %vm1201, %v3728, 0
        %v3833 = vsel %vm1201, %v3729, 0
        %v3836 = vsel %vm1201, %v3730, 0
        %v3839 = vsel %vm1201, %v3731, 0
        %v3842 = vsel %vm1201, %v3732, 0
        %v3845 = vsel %vm1201, %v3733, 0
        %v3848 = vsel %vm1201, %v3734, 0
        %v3851 = vsel %vm1201, %v3735, 0
        %v3854 = vsel %vm1201, %v3736, 0
        %v3857 = vsel %vm1201, %v3737, 0
        %v3860 = vsel %vm1201, %v3738, 0
        %v3863 = vsel %vm1201, %v3739, 0
        %3865 = vmatpush.bf16.msra.mxu0 0
        %3866 = vmatpush.bf16.msra.mxu0 0
        %3867 = vmatpush.bf16.msra.mxu0 0
        %3868 = vmatpush.bf16.msra.mxu0 0
        %3869 = vmatpush.bf16.msra.mxu0 0
        %3870 = vmatpush.bf16.msra.mxu0 0
        %3871 = vmatpush.bf16.msra.mxu0 %v3754
        %3872 = vmatpush.bf16.msra.mxu0 %v3753
        %3873 = vmatmul.bf16.gmra.mxu0 %v3758
        %v3874 = vpop.f32.mrf.mxu0
        %v3875 = vadd.f32 0.0, %v3874
        %v3876 = vpop.f32.mrf.mxu0
        %v3877 = vadd.f32 0.0, %v3876
        %3878 = vmatmul.bf16.gmra.mxu0 %v3761
        %v3879 = vpop.f32.mrf.mxu0
        %v3880 = vadd.f32 0.0, %v3879
        %v3881 = vpop.f32.mrf.mxu0
        %v3882 = vadd.f32 0.0, %v3881
        %3883 = vmatmul.bf16.gmra.mxu0 %v3764
        %v3884 = vpop.f32.mrf.mxu0
        %v3885 = vadd.f32 0.0, %v3884
        %v3886 = vpop.f32.mrf.mxu0
        %v3887 = vadd.f32 0.0, %v3886
        %3888 = vmatmul.bf16.gmra.mxu0 %v3767
        %v3889 = vpop.f32.mrf.mxu0
        %v3890 = vadd.f32 0.0, %v3889
        %v3891 = vpop.f32.mrf.mxu0
        %v3892 = vadd.f32 0.0, %v3891
        %3893 = vmatmul.bf16.gmra.mxu0 %v3770
        %v3894 = vpop.f32.mrf.mxu0
        %v3895 = vadd.f32 0.0, %v3894
        %v3896 = vpop.f32.mrf.mxu0
        %v3897 = vadd.f32 0.0, %v3896
        %3898 = vmatmul.bf16.gmra.mxu0 %v3773
        %v3899 = vpop.f32.mrf.mxu0
        %v3900 = vadd.f32 0.0, %v3899
        %v3901 = vpop.f32.mrf.mxu0
        %v3902 = vadd.f32 0.0, %v3901
        %3903 = vmatmul.bf16.gmra.mxu0 %v3776
        %v3904 = vpop.f32.mrf.mxu0
        %v3905 = vadd.f32 0.0, %v3904
        %v3906 = vpop.f32.mrf.mxu0
        %v3907 = vadd.f32 0.0, %v3906
        %3908 = vmatmul.bf16.gmra.mxu0 %v3779
        %v3909 = vpop.f32.mrf.mxu0
        %v3910 = vadd.f32 0.0, %v3909
        %v3911 = vpop.f32.mrf.mxu0
        %v3912 = vadd.f32 0.0, %v3911
        %3913 = vmatmul.bf16.gmra.mxu0 %v3782
        %v3914 = vpop.f32.mrf.mxu0
        %v3915 = vadd.f32 0.0, %v3914
        %v3916 = vpop.f32.mrf.mxu0
        %v3917 = vadd.f32 0.0, %v3916
        %3918 = vmatmul.bf16.gmra.mxu0 %v3785
        %v3919 = vpop.f32.mrf.mxu0
        %v3920 = vadd.f32 0.0, %v3919
        %v3921 = vpop.f32.mrf.mxu0
        %v3922 = vadd.f32 0.0, %v3921
        %3923 = vmatmul.bf16.gmra.mxu0 %v3788
        %v3924 = vpop.f32.mrf.mxu0
        %v3925 = vadd.f32 0.0, %v3924
        %v3926 = vpop.f32.mrf.mxu0
        %v3927 = vadd.f32 0.0, %v3926
        %3928 = vmatmul.bf16.gmra.mxu0 %v3791
        %v3929 = vpop.f32.mrf.mxu0
        %v3930 = vadd.f32 0.0, %v3929
        %v3931 = vpop.f32.mrf.mxu0
        %v3932 = vadd.f32 0.0, %v3931
        %3933 = vmatmul.bf16.gmra.mxu0 %v3794
        %v3934 = vpop.f32.mrf.mxu0
        %v3935 = vadd.f32 0.0, %v3934
        %v3936 = vpop.f32.mrf.mxu0
        %v3937 = vadd.f32 0.0, %v3936
        %3938 = vmatmul.bf16.gmra.mxu0 %v3797
        %v3939 = vpop.f32.mrf.mxu0
        %v3940 = vadd.f32 0.0, %v3939
        %v3941 = vpop.f32.mrf.mxu0
        %v3942 = vadd.f32 0.0, %v3941
        %3943 = vmatmul.bf16.gmra.mxu0 %v3800
        %v3944 = vpop.f32.mrf.mxu0
        %v3945 = vadd.f32 0.0, %v3944
        %v3946 = vpop.f32.mrf.mxu0
        %v3947 = vadd.f32 0.0, %v3946
        %3948 = vmatmul.bf16.gmra.mxu0 %v3803
        %v3949 = vpop.f32.mrf.mxu0
        %v3950 = vadd.f32 0.0, %v3949
        %v3951 = vpop.f32.mrf.mxu0
        %v3952 = vadd.f32 0.0, %v3951
        %3953 = vmatmul.bf16.gmra.mxu0 %v3806
        %v3954 = vpop.f32.mrf.mxu0
        %v3955 = vadd.f32 0.0, %v3954
        %v3956 = vpop.f32.mrf.mxu0
        %v3957 = vadd.f32 0.0, %v3956
        %3958 = vmatmul.bf16.gmra.mxu0 %v3809
        %v3959 = vpop.f32.mrf.mxu0
        %v3960 = vadd.f32 0.0, %v3959
        %v3961 = vpop.f32.mrf.mxu0
        %v3962 = vadd.f32 0.0, %v3961
        %3963 = vmatmul.bf16.gmra.mxu0 %v3812
        %v3964 = vpop.f32.mrf.mxu0
        %v3965 = vadd.f32 0.0, %v3964
        %v3966 = vpop.f32.mrf.mxu0
        %v3967 = vadd.f32 0.0, %v3966
        %3968 = vmatmul.bf16.gmra.mxu0 %v3815
        %v3969 = vpop.f32.mrf.mxu0
        %v3970 = vadd.f32 0.0, %v3969
        %v3971 = vpop.f32.mrf.mxu0
        %v3972 = vadd.f32 0.0, %v3971
        %3973 = vmatmul.bf16.gmra.mxu0 %v3818
        %v3974 = vpop.f32.mrf.mxu0
        %v3975 = vadd.f32 0.0, %v3974
        %v3976 = vpop.f32.mrf.mxu0
        %v3977 = vadd.f32 0.0, %v3976
        %3978 = vmatmul.bf16.gmra.mxu0 %v3821
        %v3979 = vpop.f32.mrf.mxu0
        %v3980 = vadd.f32 0.0, %v3979
        %v3981 = vpop.f32.mrf.mxu0
        %v3982 = vadd.f32 0.0, %v3981
        %3983 = vmatmul.bf16.gmra.mxu0 %v3824
        %v3984 = vpop.f32.mrf.mxu0
        %v3985 = vadd.f32 0.0, %v3984
        %v3986 = vpop.f32.mrf.mxu0
        %v3987 = vadd.f32 0.0, %v3986
        %3988 = vmatmul.bf16.gmra.mxu0 %v3827
        %v3989 = vpop.f32.mrf.mxu0
        %v3990 = vadd.f32 0.0, %v3989
        %v3991 = vpop.f32.mrf.mxu0
        %v3992 = vadd.f32 0.0, %v3991
        %3993 = vmatmul.bf16.gmra.mxu0 %v3830
        %v3994 = vpop.f32.mrf.mxu0
        %v3995 = vadd.f32 0.0, %v3994
        %v3996 = vpop.f32.mrf.mxu0
        %v3997 = vadd.f32 0.0, %v3996
        %3998 = vmatmul.bf16.gmra.mxu0 %v3833
        %v3999 = vpop.f32.mrf.mxu0
        %v4000 = vadd.f32 0.0, %v3999
        %v4001 = vpop.f32.mrf.mxu0
        %v4002 = vadd.f32 0.0, %v4001
        %4003 = vmatmul.bf16.gmra.mxu0 %v3836
        %v4004 = vpop.f32.mrf.mxu0
        %v4005 = vadd.f32 0.0, %v4004
        %v4006 = vpop.f32.mrf.mxu0
        %v4007 = vadd.f32 0.0, %v4006
        %4008 = vmatmul.bf16.gmra.mxu0 %v3839
        %v4009 = vpop.f32.mrf.mxu0
        %v4010 = vadd.f32 0.0, %v4009
        %v4011 = vpop.f32.mrf.mxu0
        %v4012 = vadd.f32 0.0, %v4011
        %4013 = vmatmul.bf16.gmra.mxu0 %v3842
        %v4014 = vpop.f32.mrf.mxu0
        %v4015 = vadd.f32 0.0, %v4014
        %v4016 = vpop.f32.mrf.mxu0
        %v4017 = vadd.f32 0.0, %v4016
        %4018 = vmatmul.bf16.gmra.mxu0 %v3845
        %v4019 = vpop.f32.mrf.mxu0
        %v4020 = vadd.f32 0.0, %v4019
        %v4021 = vpop.f32.mrf.mxu0
        %v4022 = vadd.f32 0.0, %v4021
        %4023 = vmatmul.bf16.gmra.mxu0 %v3848
        %v4024 = vpop.f32.mrf.mxu0
        %v4025 = vadd.f32 0.0, %v4024
        %v4026 = vpop.f32.mrf.mxu0
        %v4027 = vadd.f32 0.0, %v4026
        %4028 = vmatmul.bf16.gmra.mxu0 %v3851
        %v4029 = vpop.f32.mrf.mxu0
        %v4030 = vadd.f32 0.0, %v4029
        %v4031 = vpop.f32.mrf.mxu0
        %v4032 = vadd.f32 0.0, %v4031
        %4033 = vmatmul.bf16.gmra.mxu0 %v3854
        %v4034 = vpop.f32.mrf.mxu0
        %v4035 = vadd.f32 0.0, %v4034
        %v4036 = vpop.f32.mrf.mxu0
        %v4037 = vadd.f32 0.0, %v4036
        %4038 = vmatmul.bf16.gmra.mxu0 %v3857
        %v4039 = vpop.f32.mrf.mxu0
        %v4040 = vadd.f32 0.0, %v4039
        %v4041 = vpop.f32.mrf.mxu0
        %v4042 = vadd.f32 0.0, %v4041
        %4043 = vmatmul.bf16.gmra.mxu0 %v3860
        %v4044 = vpop.f32.mrf.mxu0
        %v4045 = vadd.f32 0.0, %v4044
        %v4046 = vpop.f32.mrf.mxu0
        %v4047 = vadd.f32 0.0, %v4046
        %4048 = vmatmul.bf16.gmra.mxu0 %v3863
        %v4049 = vpop.f32.mrf.mxu0
        %v4050 = vadd.f32 0.0, %v4049
        %v4051 = vpop.f32.mrf.mxu0
        %v4052 = vadd.f32 0.0, %v4051
        %4053 = vdwg.mxu0
        %v4054 = vadd.f32 %v3560, %v3875
        %v4055 = vadd.f32 %v3561, %v3877
        %v4056 = vadd.f32 %v3562, %v3880
        %v4057 = vadd.f32 %v3563, %v3882
        %v4058 = vadd.f32 %v3564, %v3885
        %v4059 = vadd.f32 %v3565, %v3887
        %v4060 = vadd.f32 %v3566, %v3890
        %v4061 = vadd.f32 %v3567, %v3892
        %v4062 = vadd.f32 %v3568, %v3895
        %v4063 = vadd.f32 %v3569, %v3897
        %v4064 = vadd.f32 %v3570, %v3900
        %v4065 = vadd.f32 %v3571, %v3902
        %v4066 = vadd.f32 %v3572, %v3905
        %v4067 = vadd.f32 %v3573, %v3907
        %v4068 = vadd.f32 %v3574, %v3910
        %v4069 = vadd.f32 %v3575, %v3912
        %v4070 = vadd.f32 %v3576, %v3915
        %v4071 = vadd.f32 %v3577, %v3917
        %v4072 = vadd.f32 %v3578, %v3920
        %v4073 = vadd.f32 %v3579, %v3922
        %v4074 = vadd.f32 %v3580, %v3925
        %v4075 = vadd.f32 %v3581, %v3927
        %v4076 = vadd.f32 %v3582, %v3930
        %v4077 = vadd.f32 %v3583, %v3932
        %v4078 = vadd.f32 %v3584, %v3935
        %v4079 = vadd.f32 %v3585, %v3937
        %v4080 = vadd.f32 %v3586, %v3940
        %v4081 = vadd.f32 %v3587, %v3942
        %v4082 = vadd.f32 %v3588, %v3945
        %v4083 = vadd.f32 %v3589, %v3947
        %v4084 = vadd.f32 %v3590, %v3950
        %v4085 = vadd.f32 %v3591, %v3952
        %v4086 = vadd.f32 %v3592, %v3955
        %v4087 = vadd.f32 %v3593, %v3957
        %v4088 = vadd.f32 %v3594, %v3960
        %v4089 = vadd.f32 %v3595, %v3962
        %v4090 = vadd.f32 %v3596, %v3965
        %v4091 = vadd.f32 %v3597, %v3967
        %v4092 = vadd.f32 %v3598, %v3970
        %v4093 = vadd.f32 %v3599, %v3972
        %v4094 = vadd.f32 %v3600, %v3975
        %v4095 = vadd.f32 %v3601, %v3977
        %v4096 = vadd.f32 %v3602, %v3980
        %v4097 = vadd.f32 %v3603, %v3982
        %v4098 = vadd.f32 %v3604, %v3985
        %v4099 = vadd.f32 %v3605, %v3987
        %v4100 = vadd.f32 %v3606, %v3990
        %v4101 = vadd.f32 %v3607, %v3992
        %v4102 = vadd.f32 %v3608, %v3995
        %v4103 = vadd.f32 %v3609, %v3997
        %v4104 = vadd.f32 %v3610, %v4000
        %v4105 = vadd.f32 %v3611, %v4002
        %v4106 = vadd.f32 %v3612, %v4005
        %v4107 = vadd.f32 %v3613, %v4007
        %v4108 = vadd.f32 %v3614, %v4010
        %v4109 = vadd.f32 %v3615, %v4012
        %v4110 = vadd.f32 %v3616, %v4015
        %v4111 = vadd.f32 %v3617, %v4017
        %v4112 = vadd.f32 %v3618, %v4020
        %v4113 = vadd.f32 %v3619, %v4022
        %v4114 = vadd.f32 %v3620, %v4025
        %v4115 = vadd.f32 %v3621, %v4027
        %v4116 = vadd.f32 %v3622, %v4030
        %v4117 = vadd.f32 %v3623, %v4032
        %v4118 = vadd.f32 %v3624, %v4035
        %v4119 = vadd.f32 %v3625, %v4037
        %v4120 = vadd.f32 %v3626, %v4040
        %v4121 = vadd.f32 %v3627, %v4042
        %v4122 = vadd.f32 %v3628, %v4045
        %v4123 = vadd.f32 %v3629, %v4047
        %v4124 = vadd.f32 %v3630, %v4050
        %v4125 = vadd.f32 %v3631, %v4052
        %s4126 = scalar_lea.vmem [#allocation2], 64
        %v4127 = vld [vmem:[%s4126] sm:$0xff]
        %v4128 = vld [vmem:[%s4126 + $0x8] sm:$0xff]
        %v4129 = vld [vmem:[%s4126 + $0x10] sm:$0xff]
        %v4130 = vld [vmem:[%s4126 + $0x20] sm:$0xff]
        %v4131 = vld [vmem:[%s4126 + $0x28] sm:$0xff]
        %v4132 = vld [vmem:[%s4126 + $0x30] sm:$0xff]
        %v4133 = vld [vmem:[%s4126 + $0x40] sm:$0xff]
        %v4134 = vld [vmem:[%s4126 + $0x48] sm:$0xff]
        %v4135 = vld [vmem:[%s4126 + $0x50] sm:$0xff]
        %v4136 = vld [vmem:[%s4126 + $0x60] sm:$0xff]
        %v4137 = vld [vmem:[%s4126 + $0x68] sm:$0xff]
        %v4138 = vld [vmem:[%s4126 + $0x70] sm:$0xff]
        %v4139 = vld [vmem:[%s4126 + $0x80] sm:$0xff]
        %v4140 = vld [vmem:[%s4126 + $0x88] sm:$0xff]
        %v4141 = vld [vmem:[%s4126 + $0x90] sm:$0xff]
        %v4142 = vld [vmem:[%s4126 + $0xa0] sm:$0xff]
        %v4143 = vld [vmem:[%s4126 + $0xa8] sm:$0xff]
        %v4144 = vld [vmem:[%s4126 + $0xb0] sm:$0xff]
        %v4145 = vld [vmem:[%s4126 + $0xc0] sm:$0xff]
        %v4146 = vld [vmem:[%s4126 + $0xc8] sm:$0xff]
        %v4147 = vld [vmem:[%s4126 + $0xd0] sm:$0xff]
        %v4148 = vld [vmem:[%s4126 + $0xe0] sm:$0xff]
        %v4149 = vld [vmem:[%s4126 + $0xe8] sm:$0xff]
        %v4150 = vld [vmem:[%s4126 + $0xf0] sm:$0xff]
        %v4151 = vld [vmem:[%s4126 + $0x100] sm:$0xff]
        %v4152 = vld [vmem:[%s4126 + $0x108] sm:$0xff]
        %v4153 = vld [vmem:[%s4126 + $0x110] sm:$0xff]
        %v4154 = vld [vmem:[%s4126 + $0x120] sm:$0xff]
        %v4155 = vld [vmem:[%s4126 + $0x128] sm:$0xff]
        %v4156 = vld [vmem:[%s4126 + $0x130] sm:$0xff]
        %v4157 = vld [vmem:[%s4126 + $0x140] sm:$0xff]
        %v4158 = vld [vmem:[%s4126 + $0x148] sm:$0xff]
        %v4159 = vld [vmem:[%s4126 + $0x150] sm:$0xff]
        %v4160 = vld [vmem:[%s4126 + $0x160] sm:$0xff]
        %v4161 = vld [vmem:[%s4126 + $0x168] sm:$0xff]
        %v4162 = vld [vmem:[%s4126 + $0x170] sm:$0xff]
        %v4163 = vld [vmem:[%s4126 + $0x180] sm:$0xff]
        %v4164 = vld [vmem:[%s4126 + $0x188] sm:$0xff]
        %v4165 = vld [vmem:[%s4126 + $0x190] sm:$0xff]
        %v4166 = vld [vmem:[%s4126 + $0x1a0] sm:$0xff]
        %v4167 = vld [vmem:[%s4126 + $0x1a8] sm:$0xff]
        %v4168 = vld [vmem:[%s4126 + $0x1b0] sm:$0xff]
        %v4169 = vld [vmem:[%s4126 + $0x1c0] sm:$0xff]
        %v4170 = vld [vmem:[%s4126 + $0x1c8] sm:$0xff]
        %v4171 = vld [vmem:[%s4126 + $0x1d0] sm:$0xff]
        %v4172 = vld [vmem:[%s4126 + $0x1e0] sm:$0xff]
        %v4173 = vld [vmem:[%s4126 + $0x1e8] sm:$0xff]
        %v4174 = vld [vmem:[%s4126 + $0x1f0] sm:$0xff]
        %v4175 = vld [vmem:[%s4126 + $0x200] sm:$0xff]
        %v4176 = vld [vmem:[%s4126 + $0x208] sm:$0xff]
        %v4177 = vld [vmem:[%s4126 + $0x210] sm:$0xff]
        %v4178 = vld [vmem:[%s4126 + $0x220] sm:$0xff]
        %v4179 = vld [vmem:[%s4126 + $0x228] sm:$0xff]
        %v4180 = vld [vmem:[%s4126 + $0x230] sm:$0xff]
        %v4181 = vld [vmem:[%s4126 + $0x240] sm:$0xff]
        %v4182 = vld [vmem:[%s4126 + $0x248] sm:$0xff]
        %v4183 = vld [vmem:[%s4126 + $0x250] sm:$0xff]
        %v4184 = vld [vmem:[%s4126 + $0x260] sm:$0xff]
        %v4185 = vld [vmem:[%s4126 + $0x268] sm:$0xff]
        %v4186 = vld [vmem:[%s4126 + $0x270] sm:$0xff]
        %v4187 = vld [vmem:[%s4126 + $0x280] sm:$0xff]
        %v4188 = vld [vmem:[%s4126 + $0x288] sm:$0xff]
        %v4189 = vld [vmem:[%s4126 + $0x290] sm:$0xff]
        %v4190 = vld [vmem:[%s4126 + $0x2a0] sm:$0xff]
        %v4191 = vld [vmem:[%s4126 + $0x2a8] sm:$0xff]
        %v4192 = vld [vmem:[%s4126 + $0x2b0] sm:$0xff]
        %v4193 = vld [vmem:[%s4126 + $0x2c0] sm:$0xff]
        %v4194 = vld [vmem:[%s4126 + $0x2c8] sm:$0xff]
        %v4195 = vld [vmem:[%s4126 + $0x2d0] sm:$0xff]
        %v4196 = vld [vmem:[%s4126 + $0x2e0] sm:$0xff]
        %v4197 = vld [vmem:[%s4126 + $0x2e8] sm:$0xff]
        %v4198 = vld [vmem:[%s4126 + $0x2f0] sm:$0xff]
        %v4199 = vpack.c.bf16 %v4128, %v4127
        %v4200 = vpack.c.bf16 %v4130, %v4129
        %v4201 = vpack.c.bf16 %v4132, %v4131
        %v4202 = vpack.c.bf16 %v4134, %v4133
        %v4203 = vpack.c.bf16 %v4136, %v4135
        %v4204 = vpack.c.bf16 %v4138, %v4137
        %v4205 = vpack.c.bf16 %v4140, %v4139
        %v4206 = vpack.c.bf16 %v4142, %v4141
        %v4207 = vpack.c.bf16 %v4144, %v4143
        %v4208 = vpack.c.bf16 %v4146, %v4145
        %v4209 = vpack.c.bf16 %v4148, %v4147
        %v4210 = vpack.c.bf16 %v4150, %v4149
        %v4211 = vpack.c.bf16 %v4152, %v4151
        %v4212 = vpack.c.bf16 %v4154, %v4153
        %v4213 = vpack.c.bf16 %v4156, %v4155
        %v4214 = vpack.c.bf16 %v4158, %v4157
        %v4215 = vpack.c.bf16 %v4160, %v4159
        %v4216 = vpack.c.bf16 %v4162, %v4161
        %v4217 = vpack.c.bf16 %v4164, %v4163
        %v4218 = vpack.c.bf16 %v4166, %v4165
        %v4219 = vpack.c.bf16 %v4168, %v4167
        %v4220 = vpack.c.bf16 %v4170, %v4169
        %v4221 = vpack.c.bf16 %v4172, %v4171
        %v4222 = vpack.c.bf16 %v4174, %v4173
        %v4223 = vpack.c.bf16 %v4176, %v4175
        %v4224 = vpack.c.bf16 %v4178, %v4177
        %v4225 = vpack.c.bf16 %v4180, %v4179
        %v4226 = vpack.c.bf16 %v4182, %v4181
        %v4227 = vpack.c.bf16 %v4184, %v4183
        %v4228 = vpack.c.bf16 %v4186, %v4185
        %v4229 = vpack.c.bf16 %v4188, %v4187
        %v4230 = vpack.c.bf16 %v4190, %v4189
        %v4231 = vpack.c.bf16 %v4192, %v4191
        %v4232 = vpack.c.bf16 %v4194, %v4193
        %v4233 = vpack.c.bf16 %v4196, %v4195
        %v4234 = vpack.c.bf16 %v4198, %v4197
        %s4235 = scalar_lea.vmem [#allocation9], 96
        %v4236 = vld [vmem:[%s4235] sm:$0xf]
        %v4237 = vld [vmem:[%s4235 + $0x4] sm:$0xf]
        %v4238 = vld [vmem:[%s4235 + $0x8] sm:$0xf]
        %v4239 = vld [vmem:[%s4235 + $0xc] sm:$0xf]
        %v4244 = vunpack.c.l.b16 %v4236
        %v4245 = vunpack.c.l.b16 %v4237
        %v4246 = vunpack.c.l.b16 %v4238
        %v4247 = vunpack.c.l.b16 %v4239
        %v4248 = vpack.c.b16 %v4245, %v4244
        %v4249 = vpack.c.b16 %v4247, %v4246
        %v4253 = vsel %vm1201, %v4199, 0
        %v4256 = vsel %vm1201, %v4200, 0
        %v4259 = vsel %vm1201, %v4201, 0
        %v4262 = vsel %vm1201, %v4202, 0
        %v4265 = vsel %vm1201, %v4203, 0
        %v4268 = vsel %vm1201, %v4204, 0
        %v4271 = vsel %vm1201, %v4205, 0
        %v4274 = vsel %vm1201, %v4206, 0
        %v4277 = vsel %vm1201, %v4207, 0
        %v4280 = vsel %vm1201, %v4208, 0
        %v4283 = vsel %vm1201, %v4209, 0
        %v4286 = vsel %vm1201, %v4210, 0
        %v4289 = vsel %vm1201, %v4211, 0
        %v4292 = vsel %vm1201, %v4212, 0
        %v4295 = vsel %vm1201, %v4213, 0
        %v4298 = vsel %vm1201, %v4214, 0
        %v4301 = vsel %vm1201, %v4215, 0
        %v4304 = vsel %vm1201, %v4216, 0
        %v4307 = vsel %vm1201, %v4217, 0
        %v4310 = vsel %vm1201, %v4218, 0
        %v4313 = vsel %vm1201, %v4219, 0
        %v4316 = vsel %vm1201, %v4220, 0
        %v4319 = vsel %vm1201, %v4221, 0
        %v4322 = vsel %vm1201, %v4222, 0
        %v4325 = vsel %vm1201, %v4223, 0
        %v4328 = vsel %vm1201, %v4224, 0
        %v4331 = vsel %vm1201, %v4225, 0
        %v4334 = vsel %vm1201, %v4226, 0
        %v4337 = vsel %vm1201, %v4227, 0
        %v4340 = vsel %vm1201, %v4228, 0
        %v4343 = vsel %vm1201, %v4229, 0
        %v4346 = vsel %vm1201, %v4230, 0
        %v4349 = vsel %vm1201, %v4231, 0
        %v4352 = vsel %vm1201, %v4232, 0
        %v4355 = vsel %vm1201, %v4233, 0
        %v4358 = vsel %vm1201, %v4234, 0
        %4360 = vmatpush.bf16.msra.mxu0 0
        %4361 = vmatpush.bf16.msra.mxu0 0
        %4362 = vmatpush.bf16.msra.mxu0 0
        %4363 = vmatpush.bf16.msra.mxu0 0
        %4364 = vmatpush.bf16.msra.mxu0 0
        %4365 = vmatpush.bf16.msra.mxu0 0
        %4366 = vmatpush.bf16.msra.mxu0 %v4249
        %4367 = vmatpush.bf16.msra.mxu0 %v4248
        %4368 = vmatmul.bf16.gmra.mxu0 %v4253
        %v4369 = vpop.f32.mrf.mxu0
        %v4370 = vadd.f32 0.0, %v4369
        %v4371 = vpop.f32.mrf.mxu0
        %v4372 = vadd.f32 0.0, %v4371
        %4373 = vmatmul.bf16.gmra.mxu0 %v4256
        %v4374 = vpop.f32.mrf.mxu0
        %v4375 = vadd.f32 0.0, %v4374
        %v4376 = vpop.f32.mrf.mxu0
        %v4377 = vadd.f32 0.0, %v4376
        %4378 = vmatmul.bf16.gmra.mxu0 %v4259
        %v4379 = vpop.f32.mrf.mxu0
        %v4380 = vadd.f32 0.0, %v4379
        %v4381 = vpop.f32.mrf.mxu0
        %v4382 = vadd.f32 0.0, %v4381
        %4383 = vmatmul.bf16.gmra.mxu0 %v4262
        %v4384 = vpop.f32.mrf.mxu0
        %v4385 = vadd.f32 0.0, %v4384
        %v4386 = vpop.f32.mrf.mxu0
        %v4387 = vadd.f32 0.0, %v4386
        %4388 = vmatmul.bf16.gmra.mxu0 %v4265
        %v4389 = vpop.f32.mrf.mxu0
        %v4390 = vadd.f32 0.0, %v4389
        %v4391 = vpop.f32.mrf.mxu0
        %v4392 = vadd.f32 0.0, %v4391
        %4393 = vmatmul.bf16.gmra.mxu0 %v4268
        %v4394 = vpop.f32.mrf.mxu0
        %v4395 = vadd.f32 0.0, %v4394
        %v4396 = vpop.f32.mrf.mxu0
        %v4397 = vadd.f32 0.0, %v4396
        %4398 = vmatmul.bf16.gmra.mxu0 %v4271
        %v4399 = vpop.f32.mrf.mxu0
        %v4400 = vadd.f32 0.0, %v4399
        %v4401 = vpop.f32.mrf.mxu0
        %v4402 = vadd.f32 0.0, %v4401
        %4403 = vmatmul.bf16.gmra.mxu0 %v4274
        %v4404 = vpop.f32.mrf.mxu0
        %v4405 = vadd.f32 0.0, %v4404
        %v4406 = vpop.f32.mrf.mxu0
        %v4407 = vadd.f32 0.0, %v4406
        %4408 = vmatmul.bf16.gmra.mxu0 %v4277
        %v4409 = vpop.f32.mrf.mxu0
        %v4410 = vadd.f32 0.0, %v4409
        %v4411 = vpop.f32.mrf.mxu0
        %v4412 = vadd.f32 0.0, %v4411
        %4413 = vmatmul.bf16.gmra.mxu0 %v4280
        %v4414 = vpop.f32.mrf.mxu0
        %v4415 = vadd.f32 0.0, %v4414
        %v4416 = vpop.f32.mrf.mxu0
        %v4417 = vadd.f32 0.0, %v4416
        %4418 = vmatmul.bf16.gmra.mxu0 %v4283
        %v4419 = vpop.f32.mrf.mxu0
        %v4420 = vadd.f32 0.0, %v4419
        %v4421 = vpop.f32.mrf.mxu0
        %v4422 = vadd.f32 0.0, %v4421
        %4423 = vmatmul.bf16.gmra.mxu0 %v4286
        %v4424 = vpop.f32.mrf.mxu0
        %v4425 = vadd.f32 0.0, %v4424
        %v4426 = vpop.f32.mrf.mxu0
        %v4427 = vadd.f32 0.0, %v4426
        %4428 = vmatmul.bf16.gmra.mxu0 %v4289
        %v4429 = vpop.f32.mrf.mxu0
        %v4430 = vadd.f32 0.0, %v4429
        %v4431 = vpop.f32.mrf.mxu0
        %v4432 = vadd.f32 0.0, %v4431
        %4433 = vmatmul.bf16.gmra.mxu0 %v4292
        %v4434 = vpop.f32.mrf.mxu0
        %v4435 = vadd.f32 0.0, %v4434
        %v4436 = vpop.f32.mrf.mxu0
        %v4437 = vadd.f32 0.0, %v4436
        %4438 = vmatmul.bf16.gmra.mxu0 %v4295
        %v4439 = vpop.f32.mrf.mxu0
        %v4440 = vadd.f32 0.0, %v4439
        %v4441 = vpop.f32.mrf.mxu0
        %v4442 = vadd.f32 0.0, %v4441
        %4443 = vmatmul.bf16.gmra.mxu0 %v4298
        %v4444 = vpop.f32.mrf.mxu0
        %v4445 = vadd.f32 0.0, %v4444
        %v4446 = vpop.f32.mrf.mxu0
        %v4447 = vadd.f32 0.0, %v4446
        %4448 = vmatmul.bf16.gmra.mxu0 %v4301
        %v4449 = vpop.f32.mrf.mxu0
        %v4450 = vadd.f32 0.0, %v4449
        %v4451 = vpop.f32.mrf.mxu0
        %v4452 = vadd.f32 0.0, %v4451
        %4453 = vmatmul.bf16.gmra.mxu0 %v4304
        %v4454 = vpop.f32.mrf.mxu0
        %v4455 = vadd.f32 0.0, %v4454
        %v4456 = vpop.f32.mrf.mxu0
        %v4457 = vadd.f32 0.0, %v4456
        %4458 = vmatmul.bf16.gmra.mxu0 %v4307
        %v4459 = vpop.f32.mrf.mxu0
        %v4460 = vadd.f32 0.0, %v4459
        %v4461 = vpop.f32.mrf.mxu0
        %v4462 = vadd.f32 0.0, %v4461
        %4463 = vmatmul.bf16.gmra.mxu0 %v4310
        %v4464 = vpop.f32.mrf.mxu0
        %v4465 = vadd.f32 0.0, %v4464
        %v4466 = vpop.f32.mrf.mxu0
        %v4467 = vadd.f32 0.0, %v4466
        %4468 = vmatmul.bf16.gmra.mxu0 %v4313
        %v4469 = vpop.f32.mrf.mxu0
        %v4470 = vadd.f32 0.0, %v4469
        %v4471 = vpop.f32.mrf.mxu0
        %v4472 = vadd.f32 0.0, %v4471
        %4473 = vmatmul.bf16.gmra.mxu0 %v4316
        %v4474 = vpop.f32.mrf.mxu0
        %v4475 = vadd.f32 0.0, %v4474
        %v4476 = vpop.f32.mrf.mxu0
        %v4477 = vadd.f32 0.0, %v4476
        %4478 = vmatmul.bf16.gmra.mxu0 %v4319
        %v4479 = vpop.f32.mrf.mxu0
        %v4480 = vadd.f32 0.0, %v4479
        %v4481 = vpop.f32.mrf.mxu0
        %v4482 = vadd.f32 0.0, %v4481
        %4483 = vmatmul.bf16.gmra.mxu0 %v4322
        %v4484 = vpop.f32.mrf.mxu0
        %v4485 = vadd.f32 0.0, %v4484
        %v4486 = vpop.f32.mrf.mxu0
        %v4487 = vadd.f32 0.0, %v4486
        %4488 = vmatmul.bf16.gmra.mxu0 %v4325
        %v4489 = vpop.f32.mrf.mxu0
        %v4490 = vadd.f32 0.0, %v4489
        %v4491 = vpop.f32.mrf.mxu0
        %v4492 = vadd.f32 0.0, %v4491
        %4493 = vmatmul.bf16.gmra.mxu0 %v4328
        %v4494 = vpop.f32.mrf.mxu0
        %v4495 = vadd.f32 0.0, %v4494
        %v4496 = vpop.f32.mrf.mxu0
        %v4497 = vadd.f32 0.0, %v4496
        %4498 = vmatmul.bf16.gmra.mxu0 %v4331
        %v4499 = vpop.f32.mrf.mxu0
        %v4500 = vadd.f32 0.0, %v4499
        %v4501 = vpop.f32.mrf.mxu0
        %v4502 = vadd.f32 0.0, %v4501
        %4503 = vmatmul.bf16.gmra.mxu0 %v4334
        %v4504 = vpop.f32.mrf.mxu0
        %v4505 = vadd.f32 0.0, %v4504
        %v4506 = vpop.f32.mrf.mxu0
        %v4507 = vadd.f32 0.0, %v4506
        %4508 = vmatmul.bf16.gmra.mxu0 %v4337
        %v4509 = vpop.f32.mrf.mxu0
        %v4510 = vadd.f32 0.0, %v4509
        %v4511 = vpop.f32.mrf.mxu0
        %v4512 = vadd.f32 0.0, %v4511
        %4513 = vmatmul.bf16.gmra.mxu0 %v4340
        %v4514 = vpop.f32.mrf.mxu0
        %v4515 = vadd.f32 0.0, %v4514
        %v4516 = vpop.f32.mrf.mxu0
        %v4517 = vadd.f32 0.0, %v4516
        %4518 = vmatmul.bf16.gmra.mxu0 %v4343
        %v4519 = vpop.f32.mrf.mxu0
        %v4520 = vadd.f32 0.0, %v4519
        %v4521 = vpop.f32.mrf.mxu0
        %v4522 = vadd.f32 0.0, %v4521
        %4523 = vmatmul.bf16.gmra.mxu0 %v4346
        %v4524 = vpop.f32.mrf.mxu0
        %v4525 = vadd.f32 0.0, %v4524
        %v4526 = vpop.f32.mrf.mxu0
        %v4527 = vadd.f32 0.0, %v4526
        %4528 = vmatmul.bf16.gmra.mxu0 %v4349
        %v4529 = vpop.f32.mrf.mxu0
        %v4530 = vadd.f32 0.0, %v4529
        %v4531 = vpop.f32.mrf.mxu0
        %v4532 = vadd.f32 0.0, %v4531
        %4533 = vmatmul.bf16.gmra.mxu0 %v4352
        %v4534 = vpop.f32.mrf.mxu0
        %v4535 = vadd.f32 0.0, %v4534
        %v4536 = vpop.f32.mrf.mxu0
        %v4537 = vadd.f32 0.0, %v4536
        %4538 = vmatmul.bf16.gmra.mxu0 %v4355
        %v4539 = vpop.f32.mrf.mxu0
        %v4540 = vadd.f32 0.0, %v4539
        %v4541 = vpop.f32.mrf.mxu0
        %v4542 = vadd.f32 0.0, %v4541
        %4543 = vmatmul.bf16.gmra.mxu0 %v4358
        %v4544 = vpop.f32.mrf.mxu0
        %v4545 = vadd.f32 0.0, %v4544
        %v4546 = vpop.f32.mrf.mxu0
        %v4547 = vadd.f32 0.0, %v4546
        %4548 = vdwg.mxu0
        %v4549 = vadd.f32 %v4054, %v4370
        %v4550 = vadd.f32 %v4055, %v4372
        %v4551 = vadd.f32 %v4056, %v4375
        %v4552 = vadd.f32 %v4057, %v4377
        %v4553 = vadd.f32 %v4058, %v4380
        %v4554 = vadd.f32 %v4059, %v4382
        %v4555 = vadd.f32 %v4060, %v4385
        %v4556 = vadd.f32 %v4061, %v4387
        %v4557 = vadd.f32 %v4062, %v4390
        %v4558 = vadd.f32 %v4063, %v4392
        %v4559 = vadd.f32 %v4064, %v4395
        %v4560 = vadd.f32 %v4065, %v4397
        %v4561 = vadd.f32 %v4066, %v4400
        %v4562 = vadd.f32 %v4067, %v4402
        %v4563 = vadd.f32 %v4068, %v4405
        %v4564 = vadd.f32 %v4069, %v4407
        %v4565 = vadd.f32 %v4070, %v4410
        %v4566 = vadd.f32 %v4071, %v4412
        %v4567 = vadd.f32 %v4072, %v4415
        %v4568 = vadd.f32 %v4073, %v4417
        %v4569 = vadd.f32 %v4074, %v4420
        %v4570 = vadd.f32 %v4075, %v4422
        %v4571 = vadd.f32 %v4076, %v4425
        %v4572 = vadd.f32 %v4077, %v4427
        %v4573 = vadd.f32 %v4078, %v4430
        %v4574 = vadd.f32 %v4079, %v4432
        %v4575 = vadd.f32 %v4080, %v4435
        %v4576 = vadd.f32 %v4081, %v4437
        %v4577 = vadd.f32 %v4082, %v4440
        %v4578 = vadd.f32 %v4083, %v4442
        %v4579 = vadd.f32 %v4084, %v4445
        %v4580 = vadd.f32 %v4085, %v4447
        %v4581 = vadd.f32 %v4086, %v4450
        %v4582 = vadd.f32 %v4087, %v4452
        %v4583 = vadd.f32 %v4088, %v4455
        %v4584 = vadd.f32 %v4089, %v4457
        %v4585 = vadd.f32 %v4090, %v4460
        %v4586 = vadd.f32 %v4091, %v4462
        %v4587 = vadd.f32 %v4092, %v4465
        %v4588 = vadd.f32 %v4093, %v4467
        %v4589 = vadd.f32 %v4094, %v4470
        %v4590 = vadd.f32 %v4095, %v4472
        %v4591 = vadd.f32 %v4096, %v4475
        %v4592 = vadd.f32 %v4097, %v4477
        %v4593 = vadd.f32 %v4098, %v4480
        %v4594 = vadd.f32 %v4099, %v4482
        %v4595 = vadd.f32 %v4100, %v4485
        %v4596 = vadd.f32 %v4101, %v4487
        %v4597 = vadd.f32 %v4102, %v4490
        %v4598 = vadd.f32 %v4103, %v4492
        %v4599 = vadd.f32 %v4104, %v4495
        %v4600 = vadd.f32 %v4105, %v4497
        %v4601 = vadd.f32 %v4106, %v4500
        %v4602 = vadd.f32 %v4107, %v4502
        %v4603 = vadd.f32 %v4108, %v4505
        %v4604 = vadd.f32 %v4109, %v4507
        %v4605 = vadd.f32 %v4110, %v4510
        %v4606 = vadd.f32 %v4111, %v4512
        %v4607 = vadd.f32 %v4112, %v4515
        %v4608 = vadd.f32 %v4113, %v4517
        %v4609 = vadd.f32 %v4114, %v4520
        %v4610 = vadd.f32 %v4115, %v4522
        %v4611 = vadd.f32 %v4116, %v4525
        %v4612 = vadd.f32 %v4117, %v4527
        %v4613 = vadd.f32 %v4118, %v4530
        %v4614 = vadd.f32 %v4119, %v4532
        %v4615 = vadd.f32 %v4120, %v4535
        %v4616 = vadd.f32 %v4121, %v4537
        %v4617 = vadd.f32 %v4122, %v4540
        %v4618 = vadd.f32 %v4123, %v4542
        %v4619 = vadd.f32 %v4124, %v4545
        %v4620 = vadd.f32 %v4125, %v4547
        %v4621 = vld [vmem:[%s4126 + $0x1] sm:$0xff]
        %v4622 = vld [vmem:[%s4126 + $0x9] sm:$0xff]
        %v4623 = vld [vmem:[%s4126 + $0x11] sm:$0xff]
        %v4624 = vld [vmem:[%s4126 + $0x21] sm:$0xff]
        %v4625 = vld [vmem:[%s4126 + $0x29] sm:$0xff]
        %v4626 = vld [vmem:[%s4126 + $0x31] sm:$0xff]
        %v4627 = vld [vmem:[%s4126 + $0x41] sm:$0xff]
        %v4628 = vld [vmem:[%s4126 + $0x49] sm:$0xff]
        %v4629 = vld [vmem:[%s4126 + $0x51] sm:$0xff]
        %v4630 = vld [vmem:[%s4126 + $0x61] sm:$0xff]
        %v4631 = vld [vmem:[%s4126 + $0x69] sm:$0xff]
        %v4632 = vld [vmem:[%s4126 + $0x71] sm:$0xff]
        %v4633 = vld [vmem:[%s4126 + $0x81] sm:$0xff]
        %v4634 = vld [vmem:[%s4126 + $0x89] sm:$0xff]
        %v4635 = vld [vmem:[%s4126 + $0x91] sm:$0xff]
        %v4636 = vld [vmem:[%s4126 + $0xa1] sm:$0xff]
        %v4637 = vld [vmem:[%s4126 + $0xa9] sm:$0xff]
        %v4638 = vld [vmem:[%s4126 + $0xb1] sm:$0xff]
        %v4639 = vld [vmem:[%s4126 + $0xc1] sm:$0xff]
        %v4640 = vld [vmem:[%s4126 + $0xc9] sm:$0xff]
        %v4641 = vld [vmem:[%s4126 + $0xd1] sm:$0xff]
        %v4642 = vld [vmem:[%s4126 + $0xe1] sm:$0xff]
        %v4643 = vld [vmem:[%s4126 + $0xe9] sm:$0xff]
        %v4644 = vld [vmem:[%s4126 + $0xf1] sm:$0xff]
        %v4645 = vld [vmem:[%s4126 + $0x101] sm:$0xff]
        %v4646 = vld [vmem:[%s4126 + $0x109] sm:$0xff]
        %v4647 = vld [vmem:[%s4126 + $0x111] sm:$0xff]
        %v4648 = vld [vmem:[%s4126 + $0x121] sm:$0xff]
        %v4649 = vld [vmem:[%s4126 + $0x129] sm:$0xff]
        %v4650 = vld [vmem:[%s4126 + $0x131] sm:$0xff]
        %v4651 = vld [vmem:[%s4126 + $0x141] sm:$0xff]
        %v4652 = vld [vmem:[%s4126 + $0x149] sm:$0xff]
        %v4653 = vld [vmem:[%s4126 + $0x151] sm:$0xff]
        %v4654 = vld [vmem:[%s4126 + $0x161] sm:$0xff]
        %v4655 = vld [vmem:[%s4126 + $0x169] sm:$0xff]
        %v4656 = vld [vmem:[%s4126 + $0x171] sm:$0xff]
        %v4657 = vld [vmem:[%s4126 + $0x181] sm:$0xff]
        %v4658 = vld [vmem:[%s4126 + $0x189] sm:$0xff]
        %v4659 = vld [vmem:[%s4126 + $0x191] sm:$0xff]
        %v4660 = vld [vmem:[%s4126 + $0x1a1] sm:$0xff]
        %v4661 = vld [vmem:[%s4126 + $0x1a9] sm:$0xff]
        %v4662 = vld [vmem:[%s4126 + $0x1b1] sm:$0xff]
        %v4663 = vld [vmem:[%s4126 + $0x1c1] sm:$0xff]
        %v4664 = vld [vmem:[%s4126 + $0x1c9] sm:$0xff]
        %v4665 = vld [vmem:[%s4126 + $0x1d1] sm:$0xff]
        %v4666 = vld [vmem:[%s4126 + $0x1e1] sm:$0xff]
        %v4667 = vld [vmem:[%s4126 + $0x1e9] sm:$0xff]
        %v4668 = vld [vmem:[%s4126 + $0x1f1] sm:$0xff]
        %v4669 = vld [vmem:[%s4126 + $0x201] sm:$0xff]
        %v4670 = vld [vmem:[%s4126 + $0x209] sm:$0xff]
        %v4671 = vld [vmem:[%s4126 + $0x211] sm:$0xff]
        %v4672 = vld [vmem:[%s4126 + $0x221] sm:$0xff]
        %v4673 = vld [vmem:[%s4126 + $0x229] sm:$0xff]
        %v4674 = vld [vmem:[%s4126 + $0x231] sm:$0xff]
        %v4675 = vld [vmem:[%s4126 + $0x241] sm:$0xff]
        %v4676 = vld [vmem:[%s4126 + $0x249] sm:$0xff]
        %v4677 = vld [vmem:[%s4126 + $0x251] sm:$0xff]
        %v4678 = vld [vmem:[%s4126 + $0x261] sm:$0xff]
        %v4679 = vld [vmem:[%s4126 + $0x269] sm:$0xff]
        %v4680 = vld [vmem:[%s4126 + $0x271] sm:$0xff]
        %v4681 = vld [vmem:[%s4126 + $0x281] sm:$0xff]
        %v4682 = vld [vmem:[%s4126 + $0x289] sm:$0xff]
        %v4683 = vld [vmem:[%s4126 + $0x291] sm:$0xff]
        %v4684 = vld [vmem:[%s4126 + $0x2a1] sm:$0xff]
        %v4685 = vld [vmem:[%s4126 + $0x2a9] sm:$0xff]
        %v4686 = vld [vmem:[%s4126 + $0x2b1] sm:$0xff]
        %v4687 = vld [vmem:[%s4126 + $0x2c1] sm:$0xff]
        %v4688 = vld [vmem:[%s4126 + $0x2c9] sm:$0xff]
        %v4689 = vld [vmem:[%s4126 + $0x2d1] sm:$0xff]
        %v4690 = vld [vmem:[%s4126 + $0x2e1] sm:$0xff]
        %v4691 = vld [vmem:[%s4126 + $0x2e9] sm:$0xff]
        %v4692 = vld [vmem:[%s4126 + $0x2f1] sm:$0xff]
        %v4693 = vpack.c.bf16 %v4622, %v4621
        %v4694 = vpack.c.bf16 %v4624, %v4623
        %v4695 = vpack.c.bf16 %v4626, %v4625
        %v4696 = vpack.c.bf16 %v4628, %v4627
        %v4697 = vpack.c.bf16 %v4630, %v4629
        %v4698 = vpack.c.bf16 %v4632, %v4631
        %v4699 = vpack.c.bf16 %v4634, %v4633
        %v4700 = vpack.c.bf16 %v4636, %v4635
        %v4701 = vpack.c.bf16 %v4638, %v4637
        %v4702 = vpack.c.bf16 %v4640, %v4639
        %v4703 = vpack.c.bf16 %v4642, %v4641
        %v4704 = vpack.c.bf16 %v4644, %v4643
        %v4705 = vpack.c.bf16 %v4646, %v4645
        %v4706 = vpack.c.bf16 %v4648, %v4647
        %v4707 = vpack.c.bf16 %v4650, %v4649
        %v4708 = vpack.c.bf16 %v4652, %v4651
        %v4709 = vpack.c.bf16 %v4654, %v4653
        %v4710 = vpack.c.bf16 %v4656, %v4655
        %v4711 = vpack.c.bf16 %v4658, %v4657
        %v4712 = vpack.c.bf16 %v4660, %v4659
        %v4713 = vpack.c.bf16 %v4662, %v4661
        %v4714 = vpack.c.bf16 %v4664, %v4663
        %v4715 = vpack.c.bf16 %v4666, %v4665
        %v4716 = vpack.c.bf16 %v4668, %v4667
        %v4717 = vpack.c.bf16 %v4670, %v4669
        %v4718 = vpack.c.bf16 %v4672, %v4671
        %v4719 = vpack.c.bf16 %v4674, %v4673
        %v4720 = vpack.c.bf16 %v4676, %v4675
        %v4721 = vpack.c.bf16 %v4678, %v4677
        %v4722 = vpack.c.bf16 %v4680, %v4679
        %v4723 = vpack.c.bf16 %v4682, %v4681
        %v4724 = vpack.c.bf16 %v4684, %v4683
        %v4725 = vpack.c.bf16 %v4686, %v4685
        %v4726 = vpack.c.bf16 %v4688, %v4687
        %v4727 = vpack.c.bf16 %v4690, %v4689
        %v4728 = vpack.c.bf16 %v4692, %v4691
        %s4729 = scalar_lea.vmem [#allocation9], 112
        %v4730 = vld [vmem:[%s4729] sm:$0xf]
        %v4731 = vld [vmem:[%s4729 + $0x4] sm:$0xf]
        %v4732 = vld [vmem:[%s4729 + $0x8] sm:$0xf]
        %v4733 = vld [vmem:[%s4729 + $0xc] sm:$0xf]
        %v4738 = vunpack.c.l.b16 %v4730
        %v4739 = vunpack.c.l.b16 %v4731
        %v4740 = vunpack.c.l.b16 %v4732
        %v4741 = vunpack.c.l.b16 %v4733
        %v4742 = vpack.c.b16 %v4739, %v4738
        %v4743 = vpack.c.b16 %v4741, %v4740
        %v4747 = vsel %vm1201, %v4693, 0
        %v4750 = vsel %vm1201, %v4694, 0
        %v4753 = vsel %vm1201, %v4695, 0
        %v4756 = vsel %vm1201, %v4696, 0
        %v4759 = vsel %vm1201, %v4697, 0
        %v4762 = vsel %vm1201, %v4698, 0
        %v4765 = vsel %vm1201, %v4699, 0
        %v4768 = vsel %vm1201, %v4700, 0
        %v4771 = vsel %vm1201, %v4701, 0
        %v4774 = vsel %vm1201, %v4702, 0
        %v4777 = vsel %vm1201, %v4703, 0
        %v4780 = vsel %vm1201, %v4704, 0
        %v4783 = vsel %vm1201, %v4705, 0
        %v4786 = vsel %vm1201, %v4706, 0
        %v4789 = vsel %vm1201, %v4707, 0
        %v4792 = vsel %vm1201, %v4708, 0
        %v4795 = vsel %vm1201, %v4709, 0
        %v4798 = vsel %vm1201, %v4710, 0
        %v4801 = vsel %vm1201, %v4711, 0
        %v4804 = vsel %vm1201, %v4712, 0
        %v4807 = vsel %vm1201, %v4713, 0
        %v4810 = vsel %vm1201, %v4714, 0
        %v4813 = vsel %vm1201, %v4715, 0
        %v4816 = vsel %vm1201, %v4716, 0
        %v4819 = vsel %vm1201, %v4717, 0
        %v4822 = vsel %vm1201, %v4718, 0
        %v4825 = vsel %vm1201, %v4719, 0
        %v4828 = vsel %vm1201, %v4720, 0
        %v4831 = vsel %vm1201, %v4721, 0
        %v4834 = vsel %vm1201, %v4722, 0
        %v4837 = vsel %vm1201, %v4723, 0
        %v4840 = vsel %vm1201, %v4724, 0
        %v4843 = vsel %vm1201, %v4725, 0
        %v4846 = vsel %vm1201, %v4726, 0
        %v4849 = vsel %vm1201, %v4727, 0
        %v4852 = vsel %vm1201, %v4728, 0
        %4854 = vmatpush.bf16.msra.mxu0 0
        %4855 = vmatpush.bf16.msra.mxu0 0
        %4856 = vmatpush.bf16.msra.mxu0 0
        %4857 = vmatpush.bf16.msra.mxu0 0
        %4858 = vmatpush.bf16.msra.mxu0 0
        %4859 = vmatpush.bf16.msra.mxu0 0
        %4860 = vmatpush.bf16.msra.mxu0 %v4743
        %4861 = vmatpush.bf16.msra.mxu0 %v4742
        %4862 = vmatmul.bf16.gmra.mxu0 %v4747
        %v4863 = vpop.f32.mrf.mxu0
        %v4864 = vadd.f32 0.0, %v4863
        %v4865 = vpop.f32.mrf.mxu0
        %v4866 = vadd.f32 0.0, %v4865
        %4867 = vmatmul.bf16.gmra.mxu0 %v4750
        %v4868 = vpop.f32.mrf.mxu0
        %v4869 = vadd.f32 0.0, %v4868
        %v4870 = vpop.f32.mrf.mxu0
        %v4871 = vadd.f32 0.0, %v4870
        %4872 = vmatmul.bf16.gmra.mxu0 %v4753
        %v4873 = vpop.f32.mrf.mxu0
        %v4874 = vadd.f32 0.0, %v4873
        %v4875 = vpop.f32.mrf.mxu0
        %v4876 = vadd.f32 0.0, %v4875
        %4877 = vmatmul.bf16.gmra.mxu0 %v4756
        %v4878 = vpop.f32.mrf.mxu0
        %v4879 = vadd.f32 0.0, %v4878
        %v4880 = vpop.f32.mrf.mxu0
        %v4881 = vadd.f32 0.0, %v4880
        %4882 = vmatmul.bf16.gmra.mxu0 %v4759
        %v4883 = vpop.f32.mrf.mxu0
        %v4884 = vadd.f32 0.0, %v4883
        %v4885 = vpop.f32.mrf.mxu0
        %v4886 = vadd.f32 0.0, %v4885
        %4887 = vmatmul.bf16.gmra.mxu0 %v4762
        %v4888 = vpop.f32.mrf.mxu0
        %v4889 = vadd.f32 0.0, %v4888
        %v4890 = vpop.f32.mrf.mxu0
        %v4891 = vadd.f32 0.0, %v4890
        %4892 = vmatmul.bf16.gmra.mxu0 %v4765
        %v4893 = vpop.f32.mrf.mxu0
        %v4894 = vadd.f32 0.0, %v4893
        %v4895 = vpop.f32.mrf.mxu0
        %v4896 = vadd.f32 0.0, %v4895
        %4897 = vmatmul.bf16.gmra.mxu0 %v4768
        %v4898 = vpop.f32.mrf.mxu0
        %v4899 = vadd.f32 0.0, %v4898
        %v4900 = vpop.f32.mrf.mxu0
        %v4901 = vadd.f32 0.0, %v4900
        %4902 = vmatmul.bf16.gmra.mxu0 %v4771
        %v4903 = vpop.f32.mrf.mxu0
        %v4904 = vadd.f32 0.0, %v4903
        %v4905 = vpop.f32.mrf.mxu0
        %v4906 = vadd.f32 0.0, %v4905
        %4907 = vmatmul.bf16.gmra.mxu0 %v4774
        %v4908 = vpop.f32.mrf.mxu0
        %v4909 = vadd.f32 0.0, %v4908
        %v4910 = vpop.f32.mrf.mxu0
        %v4911 = vadd.f32 0.0, %v4910
        %4912 = vmatmul.bf16.gmra.mxu0 %v4777
        %v4913 = vpop.f32.mrf.mxu0
        %v4914 = vadd.f32 0.0, %v4913
        %v4915 = vpop.f32.mrf.mxu0
        %v4916 = vadd.f32 0.0, %v4915
        %4917 = vmatmul.bf16.gmra.mxu0 %v4780
        %v4918 = vpop.f32.mrf.mxu0
        %v4919 = vadd.f32 0.0, %v4918
        %v4920 = vpop.f32.mrf.mxu0
        %v4921 = vadd.f32 0.0, %v4920
        %4922 = vmatmul.bf16.gmra.mxu0 %v4783
        %v4923 = vpop.f32.mrf.mxu0
        %v4924 = vadd.f32 0.0, %v4923
        %v4925 = vpop.f32.mrf.mxu0
        %v4926 = vadd.f32 0.0, %v4925
        %4927 = vmatmul.bf16.gmra.mxu0 %v4786
        %v4928 = vpop.f32.mrf.mxu0
        %v4929 = vadd.f32 0.0, %v4928
        %v4930 = vpop.f32.mrf.mxu0
        %v4931 = vadd.f32 0.0, %v4930
        %4932 = vmatmul.bf16.gmra.mxu0 %v4789
        %v4933 = vpop.f32.mrf.mxu0
        %v4934 = vadd.f32 0.0, %v4933
        %v4935 = vpop.f32.mrf.mxu0
        %v4936 = vadd.f32 0.0, %v4935
        %4937 = vmatmul.bf16.gmra.mxu0 %v4792
        %v4938 = vpop.f32.mrf.mxu0
        %v4939 = vadd.f32 0.0, %v4938
        %v4940 = vpop.f32.mrf.mxu0
        %v4941 = vadd.f32 0.0, %v4940
        %4942 = vmatmul.bf16.gmra.mxu0 %v4795
        %v4943 = vpop.f32.mrf.mxu0
        %v4944 = vadd.f32 0.0, %v4943
        %v4945 = vpop.f32.mrf.mxu0
        %v4946 = vadd.f32 0.0, %v4945
        %4947 = vmatmul.bf16.gmra.mxu0 %v4798
        %v4948 = vpop.f32.mrf.mxu0
        %v4949 = vadd.f32 0.0, %v4948
        %v4950 = vpop.f32.mrf.mxu0
        %v4951 = vadd.f32 0.0, %v4950
        %4952 = vmatmul.bf16.gmra.mxu0 %v4801
        %v4953 = vpop.f32.mrf.mxu0
        %v4954 = vadd.f32 0.0, %v4953
        %v4955 = vpop.f32.mrf.mxu0
        %v4956 = vadd.f32 0.0, %v4955
        %4957 = vmatmul.bf16.gmra.mxu0 %v4804
        %v4958 = vpop.f32.mrf.mxu0
        %v4959 = vadd.f32 0.0, %v4958
        %v4960 = vpop.f32.mrf.mxu0
        %v4961 = vadd.f32 0.0, %v4960
        %4962 = vmatmul.bf16.gmra.mxu0 %v4807
        %v4963 = vpop.f32.mrf.mxu0
        %v4964 = vadd.f32 0.0, %v4963
        %v4965 = vpop.f32.mrf.mxu0
        %v4966 = vadd.f32 0.0, %v4965
        %4967 = vmatmul.bf16.gmra.mxu0 %v4810
        %v4968 = vpop.f32.mrf.mxu0
        %v4969 = vadd.f32 0.0, %v4968
        %v4970 = vpop.f32.mrf.mxu0
        %v4971 = vadd.f32 0.0, %v4970
        %4972 = vmatmul.bf16.gmra.mxu0 %v4813
        %v4973 = vpop.f32.mrf.mxu0
        %v4974 = vadd.f32 0.0, %v4973
        %v4975 = vpop.f32.mrf.mxu0
        %v4976 = vadd.f32 0.0, %v4975
        %4977 = vmatmul.bf16.gmra.mxu0 %v4816
        %v4978 = vpop.f32.mrf.mxu0
        %v4979 = vadd.f32 0.0, %v4978
        %v4980 = vpop.f32.mrf.mxu0
        %v4981 = vadd.f32 0.0, %v4980
        %4982 = vmatmul.bf16.gmra.mxu0 %v4819
        %v4983 = vpop.f32.mrf.mxu0
        %v4984 = vadd.f32 0.0, %v4983
        %v4985 = vpop.f32.mrf.mxu0
        %v4986 = vadd.f32 0.0, %v4985
        %4987 = vmatmul.bf16.gmra.mxu0 %v4822
        %v4988 = vpop.f32.mrf.mxu0
        %v4989 = vadd.f32 0.0, %v4988
        %v4990 = vpop.f32.mrf.mxu0
        %v4991 = vadd.f32 0.0, %v4990
        %4992 = vmatmul.bf16.gmra.mxu0 %v4825
        %v4993 = vpop.f32.mrf.mxu0
        %v4994 = vadd.f32 0.0, %v4993
        %v4995 = vpop.f32.mrf.mxu0
        %v4996 = vadd.f32 0.0, %v4995
        %4997 = vmatmul.bf16.gmra.mxu0 %v4828
        %v4998 = vpop.f32.mrf.mxu0
        %v4999 = vadd.f32 0.0, %v4998
        %v5000 = vpop.f32.mrf.mxu0
        %v5001 = vadd.f32 0.0, %v5000
        %5002 = vmatmul.bf16.gmra.mxu0 %v4831
        %v5003 = vpop.f32.mrf.mxu0
        %v5004 = vadd.f32 0.0, %v5003
        %v5005 = vpop.f32.mrf.mxu0
        %v5006 = vadd.f32 0.0, %v5005
        %5007 = vmatmul.bf16.gmra.mxu0 %v4834
        %v5008 = vpop.f32.mrf.mxu0
        %v5009 = vadd.f32 0.0, %v5008
        %v5010 = vpop.f32.mrf.mxu0
        %v5011 = vadd.f32 0.0, %v5010
        %5012 = vmatmul.bf16.gmra.mxu0 %v4837
        %v5013 = vpop.f32.mrf.mxu0
        %v5014 = vadd.f32 0.0, %v5013
        %v5015 = vpop.f32.mrf.mxu0
        %v5016 = vadd.f32 0.0, %v5015
        %5017 = vmatmul.bf16.gmra.mxu0 %v4840
        %v5018 = vpop.f32.mrf.mxu0
        %v5019 = vadd.f32 0.0, %v5018
        %v5020 = vpop.f32.mrf.mxu0
        %v5021 = vadd.f32 0.0, %v5020
        %5022 = vmatmul.bf16.gmra.mxu0 %v4843
        %v5023 = vpop.f32.mrf.mxu0
        %v5024 = vadd.f32 0.0, %v5023
        %v5025 = vpop.f32.mrf.mxu0
        %v5026 = vadd.f32 0.0, %v5025
        %5027 = vmatmul.bf16.gmra.mxu0 %v4846
        %v5028 = vpop.f32.mrf.mxu0
        %v5029 = vadd.f32 0.0, %v5028
        %v5030 = vpop.f32.mrf.mxu0
        %v5031 = vadd.f32 0.0, %v5030
        %5032 = vmatmul.bf16.gmra.mxu0 %v4849
        %v5033 = vpop.f32.mrf.mxu0
        %v5034 = vadd.f32 0.0, %v5033
        %v5035 = vpop.f32.mrf.mxu0
        %v5036 = vadd.f32 0.0, %v5035
        %5037 = vmatmul.bf16.gmra.mxu0 %v4852
        %v5038 = vpop.f32.mrf.mxu0
        %v5039 = vadd.f32 0.0, %v5038
        %v5040 = vpop.f32.mrf.mxu0
        %v5041 = vadd.f32 0.0, %v5040
        %5042 = vdwg.mxu0
        %v5043 = vadd.f32 %v4549, %v4864
        %v5044 = vadd.f32 %v4550, %v4866
        %v5045 = vadd.f32 %v4551, %v4869
        %v5046 = vadd.f32 %v4552, %v4871
        %v5047 = vadd.f32 %v4553, %v4874
        %v5048 = vadd.f32 %v4554, %v4876
        %v5049 = vadd.f32 %v4555, %v4879
        %v5050 = vadd.f32 %v4556, %v4881
        %v5051 = vadd.f32 %v4557, %v4884
        %v5052 = vadd.f32 %v4558, %v4886
        %v5053 = vadd.f32 %v4559, %v4889
        %v5054 = vadd.f32 %v4560, %v4891
        %v5055 = vadd.f32 %v4561, %v4894
        %v5056 = vadd.f32 %v4562, %v4896
        %v5057 = vadd.f32 %v4563, %v4899
        %v5058 = vadd.f32 %v4564, %v4901
        %v5059 = vadd.f32 %v4565, %v4904
        %v5060 = vadd.f32 %v4566, %v4906
        %v5061 = vadd.f32 %v4567, %v4909
        %v5062 = vadd.f32 %v4568, %v4911
        %v5063 = vadd.f32 %v4569, %v4914
        %v5064 = vadd.f32 %v4570, %v4916
        %v5065 = vadd.f32 %v4571, %v4919
        %v5066 = vadd.f32 %v4572, %v4921
        %v5067 = vadd.f32 %v4573, %v4924
        %v5068 = vadd.f32 %v4574, %v4926
        %v5069 = vadd.f32 %v4575, %v4929
        %v5070 = vadd.f32 %v4576, %v4931
        %v5071 = vadd.f32 %v4577, %v4934
        %v5072 = vadd.f32 %v4578, %v4936
        %v5073 = vadd.f32 %v4579, %v4939
        %v5074 = vadd.f32 %v4580, %v4941
        %v5075 = vadd.f32 %v4581, %v4944
        %v5076 = vadd.f32 %v4582, %v4946
        %v5077 = vadd.f32 %v4583, %v4949
        %v5078 = vadd.f32 %v4584, %v4951
        %v5079 = vadd.f32 %v4585, %v4954
        %v5080 = vadd.f32 %v4586, %v4956
        %v5081 = vadd.f32 %v4587, %v4959
        %v5082 = vadd.f32 %v4588, %v4961
        %v5083 = vadd.f32 %v4589, %v4964
        %v5084 = vadd.f32 %v4590, %v4966
        %v5085 = vadd.f32 %v4591, %v4969
        %v5086 = vadd.f32 %v4592, %v4971
        %v5087 = vadd.f32 %v4593, %v4974
        %v5088 = vadd.f32 %v4594, %v4976
        %v5089 = vadd.f32 %v4595, %v4979
        %v5090 = vadd.f32 %v4596, %v4981
        %v5091 = vadd.f32 %v4597, %v4984
        %v5092 = vadd.f32 %v4598, %v4986
        %v5093 = vadd.f32 %v4599, %v4989
        %v5094 = vadd.f32 %v4600, %v4991
        %v5095 = vadd.f32 %v4601, %v4994
        %v5096 = vadd.f32 %v4602, %v4996
        %v5097 = vadd.f32 %v4603, %v4999
        %v5098 = vadd.f32 %v4604, %v5001
        %v5099 = vadd.f32 %v4605, %v5004
        %v5100 = vadd.f32 %v4606, %v5006
        %v5101 = vadd.f32 %v4607, %v5009
        %v5102 = vadd.f32 %v4608, %v5011
        %v5103 = vadd.f32 %v4609, %v5014
        %v5104 = vadd.f32 %v4610, %v5016
        %v5105 = vadd.f32 %v4611, %v5019
        %v5106 = vadd.f32 %v4612, %v5021
        %v5107 = vadd.f32 %v4613, %v5024
        %v5108 = vadd.f32 %v4614, %v5026
        %v5109 = vadd.f32 %v4615, %v5029
        %v5110 = vadd.f32 %v4616, %v5031
        %v5111 = vadd.f32 %v4617, %v5034
        %v5112 = vadd.f32 %v4618, %v5036
        %v5113 = vadd.f32 %v4619, %v5039
        %v5114 = vadd.f32 %v4620, %v5041
        %v5115 = vld [vmem:[%s4126 + $0x2] sm:$0xff]
        %v5116 = vld [vmem:[%s4126 + $0xa] sm:$0xff]
        %v5117 = vld [vmem:[%s4126 + $0x12] sm:$0xff]
        %v5118 = vld [vmem:[%s4126 + $0x22] sm:$0xff]
        %v5119 = vld [vmem:[%s4126 + $0x2a] sm:$0xff]
        %v5120 = vld [vmem:[%s4126 + $0x32] sm:$0xff]
        %v5121 = vld [vmem:[%s4126 + $0x42] sm:$0xff]
        %v5122 = vld [vmem:[%s4126 + $0x4a] sm:$0xff]
        %v5123 = vld [vmem:[%s4126 + $0x52] sm:$0xff]
        %v5124 = vld [vmem:[%s4126 + $0x62] sm:$0xff]
        %v5125 = vld [vmem:[%s4126 + $0x6a] sm:$0xff]
        %v5126 = vld [vmem:[%s4126 + $0x72] sm:$0xff]
        %v5127 = vld [vmem:[%s4126 + $0x82] sm:$0xff]
        %v5128 = vld [vmem:[%s4126 + $0x8a] sm:$0xff]
        %v5129 = vld [vmem:[%s4126 + $0x92] sm:$0xff]
        %v5130 = vld [vmem:[%s4126 + $0xa2] sm:$0xff]
        %v5131 = vld [vmem:[%s4126 + $0xaa] sm:$0xff]
        %v5132 = vld [vmem:[%s4126 + $0xb2] sm:$0xff]
        %v5133 = vld [vmem:[%s4126 + $0xc2] sm:$0xff]
        %v5134 = vld [vmem:[%s4126 + $0xca] sm:$0xff]
        %v5135 = vld [vmem:[%s4126 + $0xd2] sm:$0xff]
        %v5136 = vld [vmem:[%s4126 + $0xe2] sm:$0xff]
        %v5137 = vld [vmem:[%s4126 + $0xea] sm:$0xff]
        %v5138 = vld [vmem:[%s4126 + $0xf2] sm:$0xff]
        %v5139 = vld [vmem:[%s4126 + $0x102] sm:$0xff]
        %v5140 = vld [vmem:[%s4126 + $0x10a] sm:$0xff]
        %v5141 = vld [vmem:[%s4126 + $0x112] sm:$0xff]
        %v5142 = vld [vmem:[%s4126 + $0x122] sm:$0xff]
        %v5143 = vld [vmem:[%s4126 + $0x12a] sm:$0xff]
        %v5144 = vld [vmem:[%s4126 + $0x132] sm:$0xff]
        %v5145 = vld [vmem:[%s4126 + $0x142] sm:$0xff]
        %v5146 = vld [vmem:[%s4126 + $0x14a] sm:$0xff]
        %v5147 = vld [vmem:[%s4126 + $0x152] sm:$0xff]
        %v5148 = vld [vmem:[%s4126 + $0x162] sm:$0xff]
        %v5149 = vld [vmem:[%s4126 + $0x16a] sm:$0xff]
        %v5150 = vld [vmem:[%s4126 + $0x172] sm:$0xff]
        %v5151 = vld [vmem:[%s4126 + $0x182] sm:$0xff]
        %v5152 = vld [vmem:[%s4126 + $0x18a] sm:$0xff]
        %v5153 = vld [vmem:[%s4126 + $0x192] sm:$0xff]
        %v5154 = vld [vmem:[%s4126 + $0x1a2] sm:$0xff]
        %v5155 = vld [vmem:[%s4126 + $0x1aa] sm:$0xff]
        %v5156 = vld [vmem:[%s4126 + $0x1b2] sm:$0xff]
        %v5157 = vld [vmem:[%s4126 + $0x1c2] sm:$0xff]
        %v5158 = vld [vmem:[%s4126 + $0x1ca] sm:$0xff]
        %v5159 = vld [vmem:[%s4126 + $0x1d2] sm:$0xff]
        %v5160 = vld [vmem:[%s4126 + $0x1e2] sm:$0xff]
        %v5161 = vld [vmem:[%s4126 + $0x1ea] sm:$0xff]
        %v5162 = vld [vmem:[%s4126 + $0x1f2] sm:$0xff]
        %v5163 = vld [vmem:[%s4126 + $0x202] sm:$0xff]
        %v5164 = vld [vmem:[%s4126 + $0x20a] sm:$0xff]
        %v5165 = vld [vmem:[%s4126 + $0x212] sm:$0xff]
        %v5166 = vld [vmem:[%s4126 + $0x222] sm:$0xff]
        %v5167 = vld [vmem:[%s4126 + $0x22a] sm:$0xff]
        %v5168 = vld [vmem:[%s4126 + $0x232] sm:$0xff]
        %v5169 = vld [vmem:[%s4126 + $0x242] sm:$0xff]
        %v5170 = vld [vmem:[%s4126 + $0x24a] sm:$0xff]
        %v5171 = vld [vmem:[%s4126 + $0x252] sm:$0xff]
        %v5172 = vld [vmem:[%s4126 + $0x262] sm:$0xff]
        %v5173 = vld [vmem:[%s4126 + $0x26a] sm:$0xff]
        %v5174 = vld [vmem:[%s4126 + $0x272] sm:$0xff]
        %v5175 = vld [vmem:[%s4126 + $0x282] sm:$0xff]
        %v5176 = vld [vmem:[%s4126 + $0x28a] sm:$0xff]
        %v5177 = vld [vmem:[%s4126 + $0x292] sm:$0xff]
        %v5178 = vld [vmem:[%s4126 + $0x2a2] sm:$0xff]
        %v5179 = vld [vmem:[%s4126 + $0x2aa] sm:$0xff]
        %v5180 = vld [vmem:[%s4126 + $0x2b2] sm:$0xff]
        %v5181 = vld [vmem:[%s4126 + $0x2c2] sm:$0xff]
        %v5182 = vld [vmem:[%s4126 + $0x2ca] sm:$0xff]
        %v5183 = vld [vmem:[%s4126 + $0x2d2] sm:$0xff]
        %v5184 = vld [vmem:[%s4126 + $0x2e2] sm:$0xff]
        %v5185 = vld [vmem:[%s4126 + $0x2ea] sm:$0xff]
        %v5186 = vld [vmem:[%s4126 + $0x2f2] sm:$0xff]
        %v5187 = vpack.c.bf16 %v5116, %v5115
        %v5188 = vpack.c.bf16 %v5118, %v5117
        %v5189 = vpack.c.bf16 %v5120, %v5119
        %v5190 = vpack.c.bf16 %v5122, %v5121
        %v5191 = vpack.c.bf16 %v5124, %v5123
        %v5192 = vpack.c.bf16 %v5126, %v5125
        %v5193 = vpack.c.bf16 %v5128, %v5127
        %v5194 = vpack.c.bf16 %v5130, %v5129
        %v5195 = vpack.c.bf16 %v5132, %v5131
        %v5196 = vpack.c.bf16 %v5134, %v5133
        %v5197 = vpack.c.bf16 %v5136, %v5135
        %v5198 = vpack.c.bf16 %v5138, %v5137
        %v5199 = vpack.c.bf16 %v5140, %v5139
        %v5200 = vpack.c.bf16 %v5142, %v5141
        %v5201 = vpack.c.bf16 %v5144, %v5143
        %v5202 = vpack.c.bf16 %v5146, %v5145
        %v5203 = vpack.c.bf16 %v5148, %v5147
        %v5204 = vpack.c.bf16 %v5150, %v5149
        %v5205 = vpack.c.bf16 %v5152, %v5151
        %v5206 = vpack.c.bf16 %v5154, %v5153
        %v5207 = vpack.c.bf16 %v5156, %v5155
        %v5208 = vpack.c.bf16 %v5158, %v5157
        %v5209 = vpack.c.bf16 %v5160, %v5159
        %v5210 = vpack.c.bf16 %v5162, %v5161
        %v5211 = vpack.c.bf16 %v5164, %v5163
        %v5212 = vpack.c.bf16 %v5166, %v5165
        %v5213 = vpack.c.bf16 %v5168, %v5167
        %v5214 = vpack.c.bf16 %v5170, %v5169
        %v5215 = vpack.c.bf16 %v5172, %v5171
        %v5216 = vpack.c.bf16 %v5174, %v5173
        %v5217 = vpack.c.bf16 %v5176, %v5175
        %v5218 = vpack.c.bf16 %v5178, %v5177
        %v5219 = vpack.c.bf16 %v5180, %v5179
        %v5220 = vpack.c.bf16 %v5182, %v5181
        %v5221 = vpack.c.bf16 %v5184, %v5183
        %v5222 = vpack.c.bf16 %v5186, %v5185
        %s5223 = scalar_lea.vmem [#allocation9], 128
        %v5224 = vld [vmem:[%s5223] sm:$0xf]
        %v5225 = vld [vmem:[%s5223 + $0x4] sm:$0xf]
        %v5226 = vld [vmem:[%s5223 + $0x8] sm:$0xf]
        %v5227 = vld [vmem:[%s5223 + $0xc] sm:$0xf]
        %v5232 = vunpack.c.l.b16 %v5224
        %v5233 = vunpack.c.l.b16 %v5225
        %v5234 = vunpack.c.l.b16 %v5226
        %v5235 = vunpack.c.l.b16 %v5227
        %v5236 = vpack.c.b16 %v5233, %v5232
        %v5237 = vpack.c.b16 %v5235, %v5234
        %v5241 = vsel %vm1201, %v5187, 0
        %v5244 = vsel %vm1201, %v5188, 0
        %v5247 = vsel %vm1201, %v5189, 0
        %v5250 = vsel %vm1201, %v5190, 0
        %v5253 = vsel %vm1201, %v5191, 0
        %v5256 = vsel %vm1201, %v5192, 0
        %v5259 = vsel %vm1201, %v5193, 0
        %v5262 = vsel %vm1201, %v5194, 0
        %v5265 = vsel %vm1201, %v5195, 0
        %v5268 = vsel %vm1201, %v5196, 0
        %v5271 = vsel %vm1201, %v5197, 0
        %v5274 = vsel %vm1201, %v5198, 0
        %v5277 = vsel %vm1201, %v5199, 0
        %v5280 = vsel %vm1201, %v5200, 0
        %v5283 = vsel %vm1201, %v5201, 0
        %v5286 = vsel %vm1201, %v5202, 0
        %v5289 = vsel %vm1201, %v5203, 0
        %v5292 = vsel %vm1201, %v5204, 0
        %v5295 = vsel %vm1201, %v5205, 0
        %v5298 = vsel %vm1201, %v5206, 0
        %v5301 = vsel %vm1201, %v5207, 0
        %v5304 = vsel %vm1201, %v5208, 0
        %v5307 = vsel %vm1201, %v5209, 0
        %v5310 = vsel %vm1201, %v5210, 0
        %v5313 = vsel %vm1201, %v5211, 0
        %v5316 = vsel %vm1201, %v5212, 0
        %v5319 = vsel %vm1201, %v5213, 0
        %v5322 = vsel %vm1201, %v5214, 0
        %v5325 = vsel %vm1201, %v5215, 0
        %v5328 = vsel %vm1201, %v5216, 0
        %v5331 = vsel %vm1201, %v5217, 0
        %v5334 = vsel %vm1201, %v5218, 0
        %v5337 = vsel %vm1201, %v5219, 0
        %v5340 = vsel %vm1201, %v5220, 0
        %v5343 = vsel %vm1201, %v5221, 0
        %v5346 = vsel %vm1201, %v5222, 0
        %5348 = vmatpush.bf16.msra.mxu0 0
        %5349 = vmatpush.bf16.msra.mxu0 0
        %5350 = vmatpush.bf16.msra.mxu0 0
        %5351 = vmatpush.bf16.msra.mxu0 0
        %5352 = vmatpush.bf16.msra.mxu0 0
        %5353 = vmatpush.bf16.msra.mxu0 0
        %5354 = vmatpush.bf16.msra.mxu0 %v5237
        %5355 = vmatpush.bf16.msra.mxu0 %v5236
        %5356 = vmatmul.bf16.gmra.mxu0 %v5241
        %v5357 = vpop.f32.mrf.mxu0
        %v5358 = vadd.f32 0.0, %v5357
        %v5359 = vpop.f32.mrf.mxu0
        %v5360 = vadd.f32 0.0, %v5359
        %5361 = vmatmul.bf16.gmra.mxu0 %v5244
        %v5362 = vpop.f32.mrf.mxu0
        %v5363 = vadd.f32 0.0, %v5362
        %v5364 = vpop.f32.mrf.mxu0
        %v5365 = vadd.f32 0.0, %v5364
        %5366 = vmatmul.bf16.gmra.mxu0 %v5247
        %v5367 = vpop.f32.mrf.mxu0
        %v5368 = vadd.f32 0.0, %v5367
        %v5369 = vpop.f32.mrf.mxu0
        %v5370 = vadd.f32 0.0, %v5369
        %5371 = vmatmul.bf16.gmra.mxu0 %v5250
        %v5372 = vpop.f32.mrf.mxu0
        %v5373 = vadd.f32 0.0, %v5372
        %v5374 = vpop.f32.mrf.mxu0
        %v5375 = vadd.f32 0.0, %v5374
        %5376 = vmatmul.bf16.gmra.mxu0 %v5253
        %v5377 = vpop.f32.mrf.mxu0
        %v5378 = vadd.f32 0.0, %v5377
        %v5379 = vpop.f32.mrf.mxu0
        %v5380 = vadd.f32 0.0, %v5379
        %5381 = vmatmul.bf16.gmra.mxu0 %v5256
        %v5382 = vpop.f32.mrf.mxu0
        %v5383 = vadd.f32 0.0, %v5382
        %v5384 = vpop.f32.mrf.mxu0
        %v5385 = vadd.f32 0.0, %v5384
        %5386 = vmatmul.bf16.gmra.mxu0 %v5259
        %v5387 = vpop.f32.mrf.mxu0
        %v5388 = vadd.f32 0.0, %v5387
        %v5389 = vpop.f32.mrf.mxu0
        %v5390 = vadd.f32 0.0, %v5389
        %5391 = vmatmul.bf16.gmra.mxu0 %v5262
        %v5392 = vpop.f32.mrf.mxu0
        %v5393 = vadd.f32 0.0, %v5392
        %v5394 = vpop.f32.mrf.mxu0
        %v5395 = vadd.f32 0.0, %v5394
        %5396 = vmatmul.bf16.gmra.mxu0 %v5265
        %v5397 = vpop.f32.mrf.mxu0
        %v5398 = vadd.f32 0.0, %v5397
        %v5399 = vpop.f32.mrf.mxu0
        %v5400 = vadd.f32 0.0, %v5399
        %5401 = vmatmul.bf16.gmra.mxu0 %v5268
        %v5402 = vpop.f32.mrf.mxu0
        %v5403 = vadd.f32 0.0, %v5402
        %v5404 = vpop.f32.mrf.mxu0
        %v5405 = vadd.f32 0.0, %v5404
        %5406 = vmatmul.bf16.gmra.mxu0 %v5271
        %v5407 = vpop.f32.mrf.mxu0
        %v5408 = vadd.f32 0.0, %v5407
        %v5409 = vpop.f32.mrf.mxu0
        %v5410 = vadd.f32 0.0, %v5409
        %5411 = vmatmul.bf16.gmra.mxu0 %v5274
        %v5412 = vpop.f32.mrf.mxu0
        %v5413 = vadd.f32 0.0, %v5412
        %v5414 = vpop.f32.mrf.mxu0
        %v5415 = vadd.f32 0.0, %v5414
        %5416 = vmatmul.bf16.gmra.mxu0 %v5277
        %v5417 = vpop.f32.mrf.mxu0
        %v5418 = vadd.f32 0.0, %v5417
        %v5419 = vpop.f32.mrf.mxu0
        %v5420 = vadd.f32 0.0, %v5419
        %5421 = vmatmul.bf16.gmra.mxu0 %v5280
        %v5422 = vpop.f32.mrf.mxu0
        %v5423 = vadd.f32 0.0, %v5422
        %v5424 = vpop.f32.mrf.mxu0
        %v5425 = vadd.f32 0.0, %v5424
        %5426 = vmatmul.bf16.gmra.mxu0 %v5283
        %v5427 = vpop.f32.mrf.mxu0
        %v5428 = vadd.f32 0.0, %v5427
        %v5429 = vpop.f32.mrf.mxu0
        %v5430 = vadd.f32 0.0, %v5429
        %5431 = vmatmul.bf16.gmra.mxu0 %v5286
        %v5432 = vpop.f32.mrf.mxu0
        %v5433 = vadd.f32 0.0, %v5432
        %v5434 = vpop.f32.mrf.mxu0
        %v5435 = vadd.f32 0.0, %v5434
        %5436 = vmatmul.bf16.gmra.mxu0 %v5289
        %v5437 = vpop.f32.mrf.mxu0
        %v5438 = vadd.f32 0.0, %v5437
        %v5439 = vpop.f32.mrf.mxu0
        %v5440 = vadd.f32 0.0, %v5439
        %5441 = vmatmul.bf16.gmra.mxu0 %v5292
        %v5442 = vpop.f32.mrf.mxu0
        %v5443 = vadd.f32 0.0, %v5442
        %v5444 = vpop.f32.mrf.mxu0
        %v5445 = vadd.f32 0.0, %v5444
        %5446 = vmatmul.bf16.gmra.mxu0 %v5295
        %v5447 = vpop.f32.mrf.mxu0
        %v5448 = vadd.f32 0.0, %v5447
        %v5449 = vpop.f32.mrf.mxu0
        %v5450 = vadd.f32 0.0, %v5449
        %5451 = vmatmul.bf16.gmra.mxu0 %v5298
        %v5452 = vpop.f32.mrf.mxu0
        %v5453 = vadd.f32 0.0, %v5452
        %v5454 = vpop.f32.mrf.mxu0
        %v5455 = vadd.f32 0.0, %v5454
        %5456 = vmatmul.bf16.gmra.mxu0 %v5301
        %v5457 = vpop.f32.mrf.mxu0
        %v5458 = vadd.f32 0.0, %v5457
        %v5459 = vpop.f32.mrf.mxu0
        %v5460 = vadd.f32 0.0, %v5459
        %5461 = vmatmul.bf16.gmra.mxu0 %v5304
        %v5462 = vpop.f32.mrf.mxu0
        %v5463 = vadd.f32 0.0, %v5462
        %v5464 = vpop.f32.mrf.mxu0
        %v5465 = vadd.f32 0.0, %v5464
        %5466 = vmatmul.bf16.gmra.mxu0 %v5307
        %v5467 = vpop.f32.mrf.mxu0
        %v5468 = vadd.f32 0.0, %v5467
        %v5469 = vpop.f32.mrf.mxu0
        %v5470 = vadd.f32 0.0, %v5469
        %5471 = vmatmul.bf16.gmra.mxu0 %v5310
        %v5472 = vpop.f32.mrf.mxu0
        %v5473 = vadd.f32 0.0, %v5472
        %v5474 = vpop.f32.mrf.mxu0
        %v5475 = vadd.f32 0.0, %v5474
        %5476 = vmatmul.bf16.gmra.mxu0 %v5313
        %v5477 = vpop.f32.mrf.mxu0
        %v5478 = vadd.f32 0.0, %v5477
        %v5479 = vpop.f32.mrf.mxu0
        %v5480 = vadd.f32 0.0, %v5479
        %5481 = vmatmul.bf16.gmra.mxu0 %v5316
        %v5482 = vpop.f32.mrf.mxu0
        %v5483 = vadd.f32 0.0, %v5482
        %v5484 = vpop.f32.mrf.mxu0
        %v5485 = vadd.f32 0.0, %v5484
        %5486 = vmatmul.bf16.gmra.mxu0 %v5319
        %v5487 = vpop.f32.mrf.mxu0
        %v5488 = vadd.f32 0.0, %v5487
        %v5489 = vpop.f32.mrf.mxu0
        %v5490 = vadd.f32 0.0, %v5489
        %5491 = vmatmul.bf16.gmra.mxu0 %v5322
        %v5492 = vpop.f32.mrf.mxu0
        %v5493 = vadd.f32 0.0, %v5492
        %v5494 = vpop.f32.mrf.mxu0
        %v5495 = vadd.f32 0.0, %v5494
        %5496 = vmatmul.bf16.gmra.mxu0 %v5325
        %v5497 = vpop.f32.mrf.mxu0
        %v5498 = vadd.f32 0.0, %v5497
        %v5499 = vpop.f32.mrf.mxu0
        %v5500 = vadd.f32 0.0, %v5499
        %5501 = vmatmul.bf16.gmra.mxu0 %v5328
        %v5502 = vpop.f32.mrf.mxu0
        %v5503 = vadd.f32 0.0, %v5502
        %v5504 = vpop.f32.mrf.mxu0
        %v5505 = vadd.f32 0.0, %v5504
        %5506 = vmatmul.bf16.gmra.mxu0 %v5331
        %v5507 = vpop.f32.mrf.mxu0
        %v5508 = vadd.f32 0.0, %v5507
        %v5509 = vpop.f32.mrf.mxu0
        %v5510 = vadd.f32 0.0, %v5509
        %5511 = vmatmul.bf16.gmra.mxu0 %v5334
        %v5512 = vpop.f32.mrf.mxu0
        %v5513 = vadd.f32 0.0, %v5512
        %v5514 = vpop.f32.mrf.mxu0
        %v5515 = vadd.f32 0.0, %v5514
        %5516 = vmatmul.bf16.gmra.mxu0 %v5337
        %v5517 = vpop.f32.mrf.mxu0
        %v5518 = vadd.f32 0.0, %v5517
        %v5519 = vpop.f32.mrf.mxu0
        %v5520 = vadd.f32 0.0, %v5519
        %5521 = vmatmul.bf16.gmra.mxu0 %v5340
        %v5522 = vpop.f32.mrf.mxu0
        %v5523 = vadd.f32 0.0, %v5522
        %v5524 = vpop.f32.mrf.mxu0
        %v5525 = vadd.f32 0.0, %v5524
        %5526 = vmatmul.bf16.gmra.mxu0 %v5343
        %v5527 = vpop.f32.mrf.mxu0
        %v5528 = vadd.f32 0.0, %v5527
        %v5529 = vpop.f32.mrf.mxu0
        %v5530 = vadd.f32 0.0, %v5529
        %5531 = vmatmul.bf16.gmra.mxu0 %v5346
        %v5532 = vpop.f32.mrf.mxu0
        %v5533 = vadd.f32 0.0, %v5532
        %v5534 = vpop.f32.mrf.mxu0
        %v5535 = vadd.f32 0.0, %v5534
        %5536 = vdwg.mxu0
        %v5537 = vadd.f32 %v5043, %v5358
        %v5538 = vadd.f32 %v5044, %v5360
        %v5539 = vadd.f32 %v5045, %v5363
        %v5540 = vadd.f32 %v5046, %v5365
        %v5541 = vadd.f32 %v5047, %v5368
        %v5542 = vadd.f32 %v5048, %v5370
        %v5543 = vadd.f32 %v5049, %v5373
        %v5544 = vadd.f32 %v5050, %v5375
        %v5545 = vadd.f32 %v5051, %v5378
        %v5546 = vadd.f32 %v5052, %v5380
        %v5547 = vadd.f32 %v5053, %v5383
        %v5548 = vadd.f32 %v5054, %v5385
        %v5549 = vadd.f32 %v5055, %v5388
        %v5550 = vadd.f32 %v5056, %v5390
        %v5551 = vadd.f32 %v5057, %v5393
        %v5552 = vadd.f32 %v5058, %v5395
        %v5553 = vadd.f32 %v5059, %v5398
        %v5554 = vadd.f32 %v5060, %v5400
        %v5555 = vadd.f32 %v5061, %v5403
        %v5556 = vadd.f32 %v5062, %v5405
        %v5557 = vadd.f32 %v5063, %v5408
        %v5558 = vadd.f32 %v5064, %v5410
        %v5559 = vadd.f32 %v5065, %v5413
        %v5560 = vadd.f32 %v5066, %v5415
        %v5561 = vadd.f32 %v5067, %v5418
        %v5562 = vadd.f32 %v5068, %v5420
        %v5563 = vadd.f32 %v5069, %v5423
        %v5564 = vadd.f32 %v5070, %v5425
        %v5565 = vadd.f32 %v5071, %v5428
        %v5566 = vadd.f32 %v5072, %v5430
        %v5567 = vadd.f32 %v5073, %v5433
        %v5568 = vadd.f32 %v5074, %v5435
        %v5569 = vadd.f32 %v5075, %v5438
        %v5570 = vadd.f32 %v5076, %v5440
        %v5571 = vadd.f32 %v5077, %v5443
        %v5572 = vadd.f32 %v5078, %v5445
        %v5573 = vadd.f32 %v5079, %v5448
        %v5574 = vadd.f32 %v5080, %v5450
        %v5575 = vadd.f32 %v5081, %v5453
        %v5576 = vadd.f32 %v5082, %v5455
        %v5577 = vadd.f32 %v5083, %v5458
        %v5578 = vadd.f32 %v5084, %v5460
        %v5579 = vadd.f32 %v5085, %v5463
        %v5580 = vadd.f32 %v5086, %v5465
        %v5581 = vadd.f32 %v5087, %v5468
        %v5582 = vadd.f32 %v5088, %v5470
        %v5583 = vadd.f32 %v5089, %v5473
        %v5584 = vadd.f32 %v5090, %v5475
        %v5585 = vadd.f32 %v5091, %v5478
        %v5586 = vadd.f32 %v5092, %v5480
        %v5587 = vadd.f32 %v5093, %v5483
        %v5588 = vadd.f32 %v5094, %v5485
        %v5589 = vadd.f32 %v5095, %v5488
        %v5590 = vadd.f32 %v5096, %v5490
        %v5591 = vadd.f32 %v5097, %v5493
        %v5592 = vadd.f32 %v5098, %v5495
        %v5593 = vadd.f32 %v5099, %v5498
        %v5594 = vadd.f32 %v5100, %v5500
        %v5595 = vadd.f32 %v5101, %v5503
        %v5596 = vadd.f32 %v5102, %v5505
        %v5597 = vadd.f32 %v5103, %v5508
        %v5598 = vadd.f32 %v5104, %v5510
        %v5599 = vadd.f32 %v5105, %v5513
        %v5600 = vadd.f32 %v5106, %v5515
        %v5601 = vadd.f32 %v5107, %v5518
        %v5602 = vadd.f32 %v5108, %v5520
        %v5603 = vadd.f32 %v5109, %v5523
        %v5604 = vadd.f32 %v5110, %v5525
        %v5605 = vadd.f32 %v5111, %v5528
        %v5606 = vadd.f32 %v5112, %v5530
        %v5607 = vadd.f32 %v5113, %v5533
        %v5608 = vadd.f32 %v5114, %v5535
        %v5609 = vld [vmem:[#allocation10] sm:$0x1]
        %v5611 = vperm.slane %v5609, 0
        %v5613 = vadd.f32 %v5537, %v5611
        %v5614 = vadd.f32 %v5538, %v5611
        %v5615 = vadd.f32 %v5539, %v5611
        %v5616 = vadd.f32 %v5540, %v5611
        %v5617 = vadd.f32 %v5541, %v5611
        %v5618 = vadd.f32 %v5542, %v5611
        %v5619 = vadd.f32 %v5543, %v5611
        %v5620 = vadd.f32 %v5544, %v5611
        %v5621 = vadd.f32 %v5545, %v5611
        %v5622 = vadd.f32 %v5546, %v5611
        %v5623 = vadd.f32 %v5547, %v5611
        %v5624 = vadd.f32 %v5548, %v5611
        %v5625 = vadd.f32 %v5549, %v5611
        %v5626 = vadd.f32 %v5550, %v5611
        %v5627 = vadd.f32 %v5551, %v5611
        %v5628 = vadd.f32 %v5552, %v5611
        %v5629 = vadd.f32 %v5553, %v5611
        %v5630 = vadd.f32 %v5554, %v5611
        %v5631 = vadd.f32 %v5555, %v5611
        %v5632 = vadd.f32 %v5556, %v5611
        %v5633 = vadd.f32 %v5557, %v5611
        %v5634 = vadd.f32 %v5558, %v5611
        %v5635 = vadd.f32 %v5559, %v5611
        %v5636 = vadd.f32 %v5560, %v5611
        %v5637 = vadd.f32 %v5561, %v5611
        %v5638 = vadd.f32 %v5562, %v5611
        %v5639 = vadd.f32 %v5563, %v5611
        %v5640 = vadd.f32 %v5564, %v5611
        %v5641 = vadd.f32 %v5565, %v5611
        %v5642 = vadd.f32 %v5566, %v5611
        %v5643 = vadd.f32 %v5567, %v5611
        %v5644 = vadd.f32 %v5568, %v5611
        %v5645 = vadd.f32 %v5569, %v5611
        %v5646 = vadd.f32 %v5570, %v5611
        %v5647 = vadd.f32 %v5571, %v5611
        %v5648 = vadd.f32 %v5572, %v5611
        %v5649 = vadd.f32 %v5573, %v5611
        %v5650 = vadd.f32 %v5574, %v5611
        %v5651 = vadd.f32 %v5575, %v5611
        %v5652 = vadd.f32 %v5576, %v5611
        %v5653 = vadd.f32 %v5577, %v5611
        %v5654 = vadd.f32 %v5578, %v5611
        %v5655 = vadd.f32 %v5579, %v5611
        %v5656 = vadd.f32 %v5580, %v5611
        %v5657 = vadd.f32 %v5581, %v5611
        %v5658 = vadd.f32 %v5582, %v5611
        %v5659 = vadd.f32 %v5583, %v5611
        %v5660 = vadd.f32 %v5584, %v5611
        %v5661 = vadd.f32 %v5585, %v5611
        %v5662 = vadd.f32 %v5586, %v5611
        %v5663 = vadd.f32 %v5587, %v5611
        %v5664 = vadd.f32 %v5588, %v5611
        %v5665 = vadd.f32 %v5589, %v5611
        %v5666 = vadd.f32 %v5590, %v5611
        %v5667 = vadd.f32 %v5591, %v5611
        %v5668 = vadd.f32 %v5592, %v5611
        %v5669 = vadd.f32 %v5593, %v5611
        %v5670 = vadd.f32 %v5594, %v5611
        %v5671 = vadd.f32 %v5595, %v5611
        %v5672 = vadd.f32 %v5596, %v5611
        %v5673 = vadd.f32 %v5597, %v5611
        %v5674 = vadd.f32 %v5598, %v5611
        %v5675 = vadd.f32 %v5599, %v5611
        %v5676 = vadd.f32 %v5600, %v5611
        %v5677 = vadd.f32 %v5601, %v5611
        %v5678 = vadd.f32 %v5602, %v5611
        %v5679 = vadd.f32 %v5603, %v5611
        %v5680 = vadd.f32 %v5604, %v5611
        %v5681 = vadd.f32 %v5605, %v5611
        %v5682 = vadd.f32 %v5606, %v5611
        %v5683 = vadd.f32 %v5607, %v5611
        %v5684 = vadd.f32 %v5608, %v5611
        %v5685 = vmax.f32 %v5613, 0.0
        %v5686 = vmax.f32 %v5614, 0.0
        %v5687 = vmax.f32 %v5615, 0.0
        %v5688 = vmax.f32 %v5616, 0.0
        %v5689 = vmax.f32 %v5617, 0.0
        %v5690 = vmax.f32 %v5618, 0.0
        %v5691 = vmax.f32 %v5619, 0.0
        %v5692 = vmax.f32 %v5620, 0.0
        %v5693 = vmax.f32 %v5621, 0.0
        %v5694 = vmax.f32 %v5622, 0.0
        %v5695 = vmax.f32 %v5623, 0.0
        %v5696 = vmax.f32 %v5624, 0.0
        %v5697 = vmax.f32 %v5625, 0.0
        %v5698 = vmax.f32 %v5626, 0.0
        %v5699 = vmax.f32 %v5627, 0.0
        %v5700 = vmax.f32 %v5628, 0.0
        %v5701 = vmax.f32 %v5629, 0.0
        %v5702 = vmax.f32 %v5630, 0.0
        %v5703 = vmax.f32 %v5631, 0.0
        %v5704 = vmax.f32 %v5632, 0.0
        %v5705 = vmax.f32 %v5633, 0.0
        %v5706 = vmax.f32 %v5634, 0.0
        %v5707 = vmax.f32 %v5635, 0.0
        %v5708 = vmax.f32 %v5636, 0.0
        %v5709 = vmax.f32 %v5637, 0.0
        %v5710 = vmax.f32 %v5638, 0.0
        %v5711 = vmax.f32 %v5639, 0.0
        %v5712 = vmax.f32 %v5640, 0.0
        %v5713 = vmax.f32 %v5641, 0.0
        %v5714 = vmax.f32 %v5642, 0.0
        %v5715 = vmax.f32 %v5643, 0.0
        %v5716 = vmax.f32 %v5644, 0.0
        %v5717 = vmax.f32 %v5645, 0.0
        %v5718 = vmax.f32 %v5646, 0.0
        %v5719 = vmax.f32 %v5647, 0.0
        %v5720 = vmax.f32 %v5648, 0.0
        %v5721 = vmax.f32 %v5649, 0.0
        %v5722 = vmax.f32 %v5650, 0.0
        %v5723 = vmax.f32 %v5651, 0.0
        %v5724 = vmax.f32 %v5652, 0.0
        %v5725 = vmax.f32 %v5653, 0.0
        %v5726 = vmax.f32 %v5654, 0.0
        %v5727 = vmax.f32 %v5655, 0.0
        %v5728 = vmax.f32 %v5656, 0.0
        %v5729 = vmax.f32 %v5657, 0.0
        %v5730 = vmax.f32 %v5658, 0.0
        %v5731 = vmax.f32 %v5659, 0.0
        %v5732 = vmax.f32 %v5660, 0.0
        %v5733 = vmax.f32 %v5661, 0.0
        %v5734 = vmax.f32 %v5662, 0.0
        %v5735 = vmax.f32 %v5663, 0.0
        %v5736 = vmax.f32 %v5664, 0.0
        %v5737 = vmax.f32 %v5665, 0.0
        %v5738 = vmax.f32 %v5666, 0.0
        %v5739 = vmax.f32 %v5667, 0.0
        %v5740 = vmax.f32 %v5668, 0.0
        %v5741 = vmax.f32 %v5669, 0.0
        %v5742 = vmax.f32 %v5670, 0.0
        %v5743 = vmax.f32 %v5671, 0.0
        %v5744 = vmax.f32 %v5672, 0.0
        %v5745 = vmax.f32 %v5673, 0.0
        %v5746 = vmax.f32 %v5674, 0.0
        %v5747 = vmax.f32 %v5675, 0.0
        %v5748 = vmax.f32 %v5676, 0.0
        %v5749 = vmax.f32 %v5677, 0.0
        %v5750 = vmax.f32 %v5678, 0.0
        %v5751 = vmax.f32 %v5679, 0.0
        %v5752 = vmax.f32 %v5680, 0.0
        %v5753 = vmax.f32 %v5681, 0.0
        %v5754 = vmax.f32 %v5682, 0.0
        %v5755 = vmax.f32 %v5683, 0.0
        %v5756 = vmax.f32 %v5684, 0.0
        %vm5757 = vcmask 523264
        %5758 = vst.msk [vmem:[#allocation3] sm:$0xff] %vm5757, %v5685
        %5759 = vst.msk [vmem:[#allocation3 + $0x8] sm:$0xff] %vm5757, %v5686
        %5760 = vst.msk [vmem:[#allocation3 + $0x10] sm:$0xff] %vm5757, %v5687
        %5761 = vst.msk [vmem:[#allocation3 + $0x18] sm:$0xff] %vm5757, %v5688
        %5762 = vst.msk [vmem:[#allocation3 + $0x20] sm:$0xff] %vm5757, %v5689
        %5763 = vst.msk [vmem:[#allocation3 + $0x28] sm:$0xff] %vm5757, %v5690
        %5764 = vst.msk [vmem:[#allocation3 + $0x30] sm:$0xff] %vm5757, %v5691
        %5765 = vst.msk [vmem:[#allocation3 + $0x38] sm:$0xff] %vm5757, %v5692
        %5766 = vst.msk [vmem:[#allocation3 + $0x40] sm:$0xff] %vm5757, %v5693
        %5767 = vst.msk [vmem:[#allocation3 + $0x48] sm:$0xff] %vm5757, %v5694
        %5768 = vst.msk [vmem:[#allocation3 + $0x50] sm:$0xff] %vm5757, %v5695
        %5769 = vst.msk [vmem:[#allocation3 + $0x58] sm:$0xff] %vm5757, %v5696
        %5770 = vst.msk [vmem:[#allocation3 + $0x60] sm:$0xff] %vm5757, %v5697
        %5771 = vst.msk [vmem:[#allocation3 + $0x68] sm:$0xff] %vm5757, %v5698
        %5772 = vst.msk [vmem:[#allocation3 + $0x70] sm:$0xff] %vm5757, %v5699
        %5773 = vst.msk [vmem:[#allocation3 + $0x78] sm:$0xff] %vm5757, %v5700
        %5774 = vst.msk [vmem:[#allocation3 + $0x80] sm:$0xff] %vm5757, %v5701
        %5775 = vst.msk [vmem:[#allocation3 + $0x88] sm:$0xff] %vm5757, %v5702
        %5776 = vst.msk [vmem:[#allocation3 + $0x90] sm:$0xff] %vm5757, %v5703
        %5777 = vst.msk [vmem:[#allocation3 + $0x98] sm:$0xff] %vm5757, %v5704
        %5778 = vst.msk [vmem:[#allocation3 + $0xa0] sm:$0xff] %vm5757, %v5705
        %5779 = vst.msk [vmem:[#allocation3 + $0xa8] sm:$0xff] %vm5757, %v5706
        %5780 = vst.msk [vmem:[#allocation3 + $0xb0] sm:$0xff] %vm5757, %v5707
        %5781 = vst.msk [vmem:[#allocation3 + $0xb8] sm:$0xff] %vm5757, %v5708
        %5782 = vst.msk [vmem:[#allocation3 + $0xc0] sm:$0xff] %vm5757, %v5709
        %5783 = vst.msk [vmem:[#allocation3 + $0xc8] sm:$0xff] %vm5757, %v5710
        %5784 = vst.msk [vmem:[#allocation3 + $0xd0] sm:$0xff] %vm5757, %v5711
        %5785 = vst.msk [vmem:[#allocation3 + $0xd8] sm:$0xff] %vm5757, %v5712
        %5786 = vst.msk [vmem:[#allocation3 + $0xe0] sm:$0xff] %vm5757, %v5713
        %5787 = vst.msk [vmem:[#allocation3 + $0xe8] sm:$0xff] %vm5757, %v5714
        %5788 = vst.msk [vmem:[#allocation3 + $0xf0] sm:$0xff] %vm5757, %v5715
        %5789 = vst.msk [vmem:[#allocation3 + $0xf8] sm:$0xff] %vm5757, %v5716
        %5790 = vst.msk [vmem:[#allocation3 + $0x100] sm:$0xff] %vm5757, %v5717
        %5791 = vst.msk [vmem:[#allocation3 + $0x108] sm:$0xff] %vm5757, %v5718
        %5792 = vst.msk [vmem:[#allocation3 + $0x110] sm:$0xff] %vm5757, %v5719
        %5793 = vst.msk [vmem:[#allocation3 + $0x118] sm:$0xff] %vm5757, %v5720
        %5794 = vst.msk [vmem:[#allocation3 + $0x120] sm:$0xff] %vm5757, %v5721
        %5795 = vst.msk [vmem:[#allocation3 + $0x128] sm:$0xff] %vm5757, %v5722
        %5796 = vst.msk [vmem:[#allocation3 + $0x130] sm:$0xff] %vm5757, %v5723
        %5797 = vst.msk [vmem:[#allocation3 + $0x138] sm:$0xff] %vm5757, %v5724
        %5798 = vst.msk [vmem:[#allocation3 + $0x140] sm:$0xff] %vm5757, %v5725
        %5799 = vst.msk [vmem:[#allocation3 + $0x148] sm:$0xff] %vm5757, %v5726
        %5800 = vst.msk [vmem:[#allocation3 + $0x150] sm:$0xff] %vm5757, %v5727
        %5801 = vst.msk [vmem:[#allocation3 + $0x158] sm:$0xff] %vm5757, %v5728
        %5802 = vst.msk [vmem:[#allocation3 + $0x160] sm:$0xff] %vm5757, %v5729
        %5803 = vst.msk [vmem:[#allocation3 + $0x168] sm:$0xff] %vm5757, %v5730
        %5804 = vst.msk [vmem:[#allocation3 + $0x170] sm:$0xff] %vm5757, %v5731
        %5805 = vst.msk [vmem:[#allocation3 + $0x178] sm:$0xff] %vm5757, %v5732
        %5806 = vst.msk [vmem:[#allocation3 + $0x180] sm:$0xff] %vm5757, %v5733
        %5807 = vst.msk [vmem:[#allocation3 + $0x188] sm:$0xff] %vm5757, %v5734
        %5808 = vst.msk [vmem:[#allocation3 + $0x190] sm:$0xff] %vm5757, %v5735
        %5809 = vst.msk [vmem:[#allocation3 + $0x198] sm:$0xff] %vm5757, %v5736
        %5810 = vst.msk [vmem:[#allocation3 + $0x1a0] sm:$0xff] %vm5757, %v5737
        %5811 = vst.msk [vmem:[#allocation3 + $0x1a8] sm:$0xff] %vm5757, %v5738
        %5812 = vst.msk [vmem:[#allocation3 + $0x1b0] sm:$0xff] %vm5757, %v5739
        %5813 = vst.msk [vmem:[#allocation3 + $0x1b8] sm:$0xff] %vm5757, %v5740
        %5814 = vst.msk [vmem:[#allocation3 + $0x1c0] sm:$0xff] %vm5757, %v5741
        %5815 = vst.msk [vmem:[#allocation3 + $0x1c8] sm:$0xff] %vm5757, %v5742
        %5816 = vst.msk [vmem:[#allocation3 + $0x1d0] sm:$0xff] %vm5757, %v5743
        %5817 = vst.msk [vmem:[#allocation3 + $0x1d8] sm:$0xff] %vm5757, %v5744
        %5818 = vst.msk [vmem:[#allocation3 + $0x1e0] sm:$0xff] %vm5757, %v5745
        %5819 = vst.msk [vmem:[#allocation3 + $0x1e8] sm:$0xff] %vm5757, %v5746
        %5820 = vst.msk [vmem:[#allocation3 + $0x1f0] sm:$0xff] %vm5757, %v5747
        %5821 = vst.msk [vmem:[#allocation3 + $0x1f8] sm:$0xff] %vm5757, %v5748
        %5822 = vst.msk [vmem:[#allocation3 + $0x200] sm:$0xff] %vm5757, %v5749
        %5823 = vst.msk [vmem:[#allocation3 + $0x208] sm:$0xff] %vm5757, %v5750
        %5824 = vst.msk [vmem:[#allocation3 + $0x210] sm:$0xff] %vm5757, %v5751
        %5825 = vst.msk [vmem:[#allocation3 + $0x218] sm:$0xff] %vm5757, %v5752
        %5826 = vst.msk [vmem:[#allocation3 + $0x220] sm:$0xff] %vm5757, %v5753
        %5827 = vst.msk [vmem:[#allocation3 + $0x228] sm:$0xff] %vm5757, %v5754
        %5828 = vst.msk [vmem:[#allocation3 + $0x230] sm:$0xff] %vm5757, %v5755
        %5829 = vst.msk [vmem:[#allocation3 + $0x238] sm:$0xff] %vm5757, %v5756
        %v5830 = vld [vmem:[#allocation3] sm:$0x1]
        %v5831 = vld [vmem:[#allocation3 + $0x18] sm:$0x1]
        %v5832 = vld [vmem:[#allocation3 + $0x30] sm:$0x1]
        %v5833 = vld [vmem:[#allocation3 + $0x48] sm:$0x1]
        %v5834 = vld [vmem:[#allocation3 + $0x60] sm:$0x1]
        %v5835 = vld [vmem:[#allocation3 + $0x78] sm:$0x1]
        %v5836 = vld [vmem:[#allocation3 + $0x90] sm:$0x1]
        %v5837 = vld [vmem:[#allocation3 + $0xa8] sm:$0x1]
        %v5838 = vld [vmem:[#allocation3 + $0xc0] sm:$0x1]
        %v5839 = vld [vmem:[#allocation3 + $0xd8] sm:$0x1]
        %v5840 = vld [vmem:[#allocation3 + $0xf0] sm:$0x1]
        %v5841 = vld [vmem:[#allocation3 + $0x108] sm:$0x1]
        %v5842 = vld [vmem:[#allocation3 + $0x120] sm:$0x1]
        %v5843 = vld [vmem:[#allocation3 + $0x138] sm:$0x1]
        %v5844 = vld [vmem:[#allocation3 + $0x150] sm:$0x1]
        %v5845 = vld [vmem:[#allocation3 + $0x168] sm:$0x1]
        %v5846 = vld [vmem:[#allocation3 + $0x180] sm:$0x1]
        %v5847 = vld [vmem:[#allocation3 + $0x198] sm:$0x1]
        %v5848 = vld [vmem:[#allocation3 + $0x1b0] sm:$0x1]
        %v5849 = vld [vmem:[#allocation3 + $0x1c8] sm:$0x1]
        %v5850 = vld [vmem:[#allocation3 + $0x1e0] sm:$0x1]
        %v5851 = vld [vmem:[#allocation3 + $0x1f8] sm:$0x1]
        %v5852 = vld [vmem:[#allocation3 + $0x210] sm:$0x1]
        %v5853 = vld [vmem:[#allocation3 + $0x228] sm:$0x1]
        %v5854 = vld [vmem:[#allocation3 + $0x1] sm:$0x1]
        %v5855 = vld [vmem:[#allocation3 + $0x19] sm:$0x1]
        %v5856 = vld [vmem:[#allocation3 + $0x31] sm:$0x1]
        %v5857 = vld [vmem:[#allocation3 + $0x49] sm:$0x1]
        %v5858 = vld [vmem:[#allocation3 + $0x61] sm:$0x1]
        %v5859 = vld [vmem:[#allocation3 + $0x79] sm:$0x1]
        %v5860 = vld [vmem:[#allocation3 + $0x91] sm:$0x1]
        %v5861 = vld [vmem:[#allocation3 + $0xa9] sm:$0x1]
        %v5862 = vld [vmem:[#allocation3 + $0xc1] sm:$0x1]
        %v5863 = vld [vmem:[#allocation3 + $0xd9] sm:$0x1]
        %v5864 = vld [vmem:[#allocation3 + $0xf1] sm:$0x1]
        %v5865 = vld [vmem:[#allocation3 + $0x109] sm:$0x1]
        %v5866 = vld [vmem:[#allocation3 + $0x121] sm:$0x1]
        %v5867 = vld [vmem:[#allocation3 + $0x139] sm:$0x1]
        %v5868 = vld [vmem:[#allocation3 + $0x151] sm:$0x1]
        %v5869 = vld [vmem:[#allocation3 + $0x169] sm:$0x1]
        %v5870 = vld [vmem:[#allocation3 + $0x181] sm:$0x1]
        %v5871 = vld [vmem:[#allocation3 + $0x199] sm:$0x1]
        %v5872 = vld [vmem:[#allocation3 + $0x1b1] sm:$0x1]
        %v5873 = vld [vmem:[#allocation3 + $0x1c9] sm:$0x1]
        %v5874 = vld [vmem:[#allocation3 + $0x1e1] sm:$0x1]
        %v5875 = vld [vmem:[#allocation3 + $0x1f9] sm:$0x1]
        %v5876 = vld [vmem:[#allocation3 + $0x211] sm:$0x1]
        %v5877 = vld [vmem:[#allocation3 + $0x229] sm:$0x1]
        %v5878 = vmax.f32 %v5830, %v5854
        %v5879 = vmax.f32 %v5831, %v5855
        %v5880 = vmax.f32 %v5832, %v5856
        %v5881 = vmax.f32 %v5833, %v5857
        %v5882 = vmax.f32 %v5834, %v5858
        %v5883 = vmax.f32 %v5835, %v5859
        %v5884 = vmax.f32 %v5836, %v5860
        %v5885 = vmax.f32 %v5837, %v5861
        %v5886 = vmax.f32 %v5838, %v5862
        %v5887 = vmax.f32 %v5839, %v5863
        %v5888 = vmax.f32 %v5840, %v5864
        %v5889 = vmax.f32 %v5841, %v5865
        %v5890 = vmax.f32 %v5842, %v5866
        %v5891 = vmax.f32 %v5843, %v5867
        %v5892 = vmax.f32 %v5844, %v5868
        %v5893 = vmax.f32 %v5845, %v5869
        %v5894 = vmax.f32 %v5846, %v5870
        %v5895 = vmax.f32 %v5847, %v5871
        %v5896 = vmax.f32 %v5848, %v5872
        %v5897 = vmax.f32 %v5849, %v5873
        %v5898 = vmax.f32 %v5850, %v5874
        %v5899 = vmax.f32 %v5851, %v5875
        %v5900 = vmax.f32 %v5852, %v5876
        %v5901 = vmax.f32 %v5853, %v5877
        %vm5902 = vcmask 516096
        %5903 = vst.msk [vmem:[#allocation4] sm:$0x1] %vm5902, %v5878
        %5904 = vst.msk [vmem:[#allocation4 + $0x10] sm:$0x1] %vm5902, %v5879
        %5905 = vst.msk [vmem:[#allocation4 + $0x20] sm:$0x1] %vm5902, %v5880
        %5906 = vst.msk [vmem:[#allocation4 + $0x30] sm:$0x1] %vm5902, %v5881
        %5907 = vst.msk [vmem:[#allocation4 + $0x40] sm:$0x1] %vm5902, %v5882
        %5908 = vst.msk [vmem:[#allocation4 + $0x50] sm:$0x1] %vm5902, %v5883
        %5909 = vst.msk [vmem:[#allocation4 + $0x60] sm:$0x1] %vm5902, %v5884
        %5910 = vst.msk [vmem:[#allocation4 + $0x70] sm:$0x1] %vm5902, %v5885
        %5911 = vst.msk [vmem:[#allocation4 + $0x80] sm:$0x1] %vm5902, %v5886
        %5912 = vst.msk [vmem:[#allocation4 + $0x90] sm:$0x1] %vm5902, %v5887
        %5913 = vst.msk [vmem:[#allocation4 + $0xa0] sm:$0x1] %vm5902, %v5888
        %5914 = vst.msk [vmem:[#allocation4 + $0xb0] sm:$0x1] %vm5902, %v5889
        %5915 = vst.msk [vmem:[#allocation4 + $0xc0] sm:$0x1] %vm5902, %v5890
        %5916 = vst.msk [vmem:[#allocation4 + $0xd0] sm:$0x1] %vm5902, %v5891
        %5917 = vst.msk [vmem:[#allocation4 + $0xe0] sm:$0x1] %vm5902, %v5892
        %5918 = vst.msk [vmem:[#allocation4 + $0xf0] sm:$0x1] %vm5902, %v5893
        %5919 = vst.msk [vmem:[#allocation4 + $0x100] sm:$0x1] %vm5902, %v5894
        %5920 = vst.msk [vmem:[#allocation4 + $0x110] sm:$0x1] %vm5902, %v5895
        %5921 = vst.msk [vmem:[#allocation4 + $0x120] sm:$0x1] %vm5902, %v5896
        %5922 = vst.msk [vmem:[#allocation4 + $0x130] sm:$0x1] %vm5902, %v5897
        %5923 = vst.msk [vmem:[#allocation4 + $0x140] sm:$0x1] %vm5902, %v5898
        %5924 = vst.msk [vmem:[#allocation4 + $0x150] sm:$0x1] %vm5902, %v5899
        %5925 = vst.msk [vmem:[#allocation4 + $0x160] sm:$0x1] %vm5902, %v5900
        %5926 = vst.msk [vmem:[#allocation4 + $0x170] sm:$0x1] %vm5902, %v5901
        %v5927 = vld [vmem:[#allocation3 + $0x2] sm:$0x1]
        %v5928 = vld [vmem:[#allocation3 + $0x1a] sm:$0x1]
        %v5929 = vld [vmem:[#allocation3 + $0x32] sm:$0x1]
        %v5930 = vld [vmem:[#allocation3 + $0x4a] sm:$0x1]
        %v5931 = vld [vmem:[#allocation3 + $0x62] sm:$0x1]
        %v5932 = vld [vmem:[#allocation3 + $0x7a] sm:$0x1]
        %v5933 = vld [vmem:[#allocation3 + $0x92] sm:$0x1]
        %v5934 = vld [vmem:[#allocation3 + $0xaa] sm:$0x1]
        %v5935 = vld [vmem:[#allocation3 + $0xc2] sm:$0x1]
        %v5936 = vld [vmem:[#allocation3 + $0xda] sm:$0x1]
        %v5937 = vld [vmem:[#allocation3 + $0xf2] sm:$0x1]
        %v5938 = vld [vmem:[#allocation3 + $0x10a] sm:$0x1]
        %v5939 = vld [vmem:[#allocation3 + $0x122] sm:$0x1]
        %v5940 = vld [vmem:[#allocation3 + $0x13a] sm:$0x1]
        %v5941 = vld [vmem:[#allocation3 + $0x152] sm:$0x1]
        %v5942 = vld [vmem:[#allocation3 + $0x16a] sm:$0x1]
        %v5943 = vld [vmem:[#allocation3 + $0x182] sm:$0x1]
        %v5944 = vld [vmem:[#allocation3 + $0x19a] sm:$0x1]
        %v5945 = vld [vmem:[#allocation3 + $0x1b2] sm:$0x1]
        %v5946 = vld [vmem:[#allocation3 + $0x1ca] sm:$0x1]
        %v5947 = vld [vmem:[#allocation3 + $0x1e2] sm:$0x1]
        %v5948 = vld [vmem:[#allocation3 + $0x1fa] sm:$0x1]
        %v5949 = vld [vmem:[#allocation3 + $0x212] sm:$0x1]
        %v5950 = vld [vmem:[#allocation3 + $0x22a] sm:$0x1]
        %v5951 = vld [vmem:[#allocation3 + $0x3] sm:$0x1]
        %v5952 = vld [vmem:[#allocation3 + $0x1b] sm:$0x1]
        %v5953 = vld [vmem:[#allocation3 + $0x33] sm:$0x1]
        %v5954 = vld [vmem:[#allocation3 + $0x4b] sm:$0x1]
        %v5955 = vld [vmem:[#allocation3 + $0x63] sm:$0x1]
        %v5956 = vld [vmem:[#allocation3 + $0x7b] sm:$0x1]
        %v5957 = vld [vmem:[#allocation3 + $0x93] sm:$0x1]
        %v5958 = vld [vmem:[#allocation3 + $0xab] sm:$0x1]
        %v5959 = vld [vmem:[#allocation3 + $0xc3] sm:$0x1]
        %v5960 = vld [vmem:[#allocation3 + $0xdb] sm:$0x1]
        %v5961 = vld [vmem:[#allocation3 + $0xf3] sm:$0x1]
        %v5962 = vld [vmem:[#allocation3 + $0x10b] sm:$0x1]
        %v5963 = vld [vmem:[#allocation3 + $0x123] sm:$0x1]
        %v5964 = vld [vmem:[#allocation3 + $0x13b] sm:$0x1]
        %v5965 = vld [vmem:[#allocation3 + $0x153] sm:$0x1]
        %v5966 = vld [vmem:[#allocation3 + $0x16b] sm:$0x1]
        %v5967 = vld [vmem:[#allocation3 + $0x183] sm:$0x1]
        %v5968 = vld [vmem:[#allocation3 + $0x19b] sm:$0x1]
        %v5969 = vld [vmem:[#allocation3 + $0x1b3] sm:$0x1]
        %v5970 = vld [vmem:[#allocation3 + $0x1cb] sm:$0x1]
        %v5971 = vld [vmem:[#allocation3 + $0x1e3] sm:$0x1]
        %v5972 = vld [vmem:[#allocation3 + $0x1fb] sm:$0x1]
        %v5973 = vld [vmem:[#allocation3 + $0x213] sm:$0x1]
        %v5974 = vld [vmem:[#allocation3 + $0x22b] sm:$0x1]
        %v5975 = vmax.f32 %v5927, %v5951
        %v5976 = vmax.f32 %v5928, %v5952
        %v5977 = vmax.f32 %v5929, %v5953
        %v5978 = vmax.f32 %v5930, %v5954
        %v5979 = vmax.f32 %v5931, %v5955
        %v5980 = vmax.f32 %v5932, %v5956
        %v5981 = vmax.f32 %v5933, %v5957
        %v5982 = vmax.f32 %v5934, %v5958
        %v5983 = vmax.f32 %v5935, %v5959
        %v5984 = vmax.f32 %v5936, %v5960
        %v5985 = vmax.f32 %v5937, %v5961
        %v5986 = vmax.f32 %v5938, %v5962
        %v5987 = vmax.f32 %v5939, %v5963
        %v5988 = vmax.f32 %v5940, %v5964
        %v5989 = vmax.f32 %v5941, %v5965
        %v5990 = vmax.f32 %v5942, %v5966
        %v5991 = vmax.f32 %v5943, %v5967
        %v5992 = vmax.f32 %v5944, %v5968
        %v5993 = vmax.f32 %v5945, %v5969
        %v5994 = vmax.f32 %v5946, %v5970
        %v5995 = vmax.f32 %v5947, %v5971
        %v5996 = vmax.f32 %v5948, %v5972
        %v5997 = vmax.f32 %v5949, %v5973
        %v5998 = vmax.f32 %v5950, %v5974
        %5999 = vst.msk [vmem:[#allocation4 + $0x1] sm:$0x1] %vm5902, %v5975
        %6000 = vst.msk [vmem:[#allocation4 + $0x11] sm:$0x1] %vm5902, %v5976
        %6001 = vst.msk [vmem:[#allocation4 + $0x21] sm:$0x1] %vm5902, %v5977
        %6002 = vst.msk [vmem:[#allocation4 + $0x31] sm:$0x1] %vm5902, %v5978
        %6003 = vst.msk [vmem:[#allocation4 + $0x41] sm:$0x1] %vm5902, %v5979
        %6004 = vst.msk [vmem:[#allocation4 + $0x51] sm:$0x1] %vm5902, %v5980
        %6005 = vst.msk [vmem:[#allocation4 + $0x61] sm:$0x1] %vm5902, %v5981
        %6006 = vst.msk [vmem:[#allocation4 + $0x71] sm:$0x1] %vm5902, %v5982
        %6007 = vst.msk [vmem:[#allocation4 + $0x81] sm:$0x1] %vm5902, %v5983
        %6008 = vst.msk [vmem:[#allocation4 + $0x91] sm:$0x1] %vm5902, %v5984
        %6009 = vst.msk [vmem:[#allocation4 + $0xa1] sm:$0x1] %vm5902, %v5985
        %6010 = vst.msk [vmem:[#allocation4 + $0xb1] sm:$0x1] %vm5902, %v5986
        %6011 = vst.msk [vmem:[#allocation4 + $0xc1] sm:$0x1] %vm5902, %v5987
        %6012 = vst.msk [vmem:[#allocation4 + $0xd1] sm:$0x1] %vm5902, %v5988
        %6013 = vst.msk [vmem:[#allocation4 + $0xe1] sm:$0x1] %vm5902, %v5989
        %6014 = vst.msk [vmem:[#allocation4 + $0xf1] sm:$0x1] %vm5902, %v5990
        %6015 = vst.msk [vmem:[#allocation4 + $0x101] sm:$0x1] %vm5902, %v5991
        %6016 = vst.msk [vmem:[#allocation4 + $0x111] sm:$0x1] %vm5902, %v5992
        %6017 = vst.msk [vmem:[#allocation4 + $0x121] sm:$0x1] %vm5902, %v5993
        %6018 = vst.msk [vmem:[#allocation4 + $0x131] sm:$0x1] %vm5902, %v5994
        %6019 = vst.msk [vmem:[#allocation4 + $0x141] sm:$0x1] %vm5902, %v5995
        %6020 = vst.msk [vmem:[#allocation4 + $0x151] sm:$0x1] %vm5902, %v5996
        %6021 = vst.msk [vmem:[#allocation4 + $0x161] sm:$0x1] %vm5902, %v5997
        %6022 = vst.msk [vmem:[#allocation4 + $0x171] sm:$0x1] %vm5902, %v5998
        %v6023 = vld [vmem:[#allocation3 + $0x4] sm:$0x1]
        %v6024 = vld [vmem:[#allocation3 + $0x1c] sm:$0x1]
        %v6025 = vld [vmem:[#allocation3 + $0x34] sm:$0x1]
        %v6026 = vld [vmem:[#allocation3 + $0x4c] sm:$0x1]
        %v6027 = vld [vmem:[#allocation3 + $0x64] sm:$0x1]
        %v6028 = vld [vmem:[#allocation3 + $0x7c] sm:$0x1]
        %v6029 = vld [vmem:[#allocation3 + $0x94] sm:$0x1]
        %v6030 = vld [vmem:[#allocation3 + $0xac] sm:$0x1]
        %v6031 = vld [vmem:[#allocation3 + $0xc4] sm:$0x1]
        %v6032 = vld [vmem:[#allocation3 + $0xdc] sm:$0x1]
        %v6033 = vld [vmem:[#allocation3 + $0xf4] sm:$0x1]
        %v6034 = vld [vmem:[#allocation3 + $0x10c] sm:$0x1]
        %v6035 = vld [vmem:[#allocation3 + $0x124] sm:$0x1]
        %v6036 = vld [vmem:[#allocation3 + $0x13c] sm:$0x1]
        %v6037 = vld [vmem:[#allocation3 + $0x154] sm:$0x1]
        %v6038 = vld [vmem:[#allocation3 + $0x16c] sm:$0x1]
        %v6039 = vld [vmem:[#allocation3 + $0x184] sm:$0x1]
        %v6040 = vld [vmem:[#allocation3 + $0x19c] sm:$0x1]
        %v6041 = vld [vmem:[#allocation3 + $0x1b4] sm:$0x1]
        %v6042 = vld [vmem:[#allocation3 + $0x1cc] sm:$0x1]
        %v6043 = vld [vmem:[#allocation3 + $0x1e4] sm:$0x1]
        %v6044 = vld [vmem:[#allocation3 + $0x1fc] sm:$0x1]
        %v6045 = vld [vmem:[#allocation3 + $0x214] sm:$0x1]
        %v6046 = vld [vmem:[#allocation3 + $0x22c] sm:$0x1]
        %v6047 = vld [vmem:[#allocation3 + $0x5] sm:$0x1]
        %v6048 = vld [vmem:[#allocation3 + $0x1d] sm:$0x1]
        %v6049 = vld [vmem:[#allocation3 + $0x35] sm:$0x1]
        %v6050 = vld [vmem:[#allocation3 + $0x4d] sm:$0x1]
        %v6051 = vld [vmem:[#allocation3 + $0x65] sm:$0x1]
        %v6052 = vld [vmem:[#allocation3 + $0x7d] sm:$0x1]
        %v6053 = vld [vmem:[#allocation3 + $0x95] sm:$0x1]
        %v6054 = vld [vmem:[#allocation3 + $0xad] sm:$0x1]
        %v6055 = vld [vmem:[#allocation3 + $0xc5] sm:$0x1]
        %v6056 = vld [vmem:[#allocation3 + $0xdd] sm:$0x1]
        %v6057 = vld [vmem:[#allocation3 + $0xf5] sm:$0x1]
        %v6058 = vld [vmem:[#allocation3 + $0x10d] sm:$0x1]
        %v6059 = vld [vmem:[#allocation3 + $0x125] sm:$0x1]
        %v6060 = vld [vmem:[#allocation3 + $0x13d] sm:$0x1]
        %v6061 = vld [vmem:[#allocation3 + $0x155] sm:$0x1]
        %v6062 = vld [vmem:[#allocation3 + $0x16d] sm:$0x1]
        %v6063 = vld [vmem:[#allocation3 + $0x185] sm:$0x1]
        %v6064 = vld [vmem:[#allocation3 + $0x19d] sm:$0x1]
        %v6065 = vld [vmem:[#allocation3 + $0x1b5] sm:$0x1]
        %v6066 = vld [vmem:[#allocation3 + $0x1cd] sm:$0x1]
        %v6067 = vld [vmem:[#allocation3 + $0x1e5] sm:$0x1]
        %v6068 = vld [vmem:[#allocation3 + $0x1fd] sm:$0x1]
        %v6069 = vld [vmem:[#allocation3 + $0x215] sm:$0x1]
        %v6070 = vld [vmem:[#allocation3 + $0x22d] sm:$0x1]
        %v6071 = vmax.f32 %v6023, %v6047
        %v6072 = vmax.f32 %v6024, %v6048
        %v6073 = vmax.f32 %v6025, %v6049
        %v6074 = vmax.f32 %v6026, %v6050
        %v6075 = vmax.f32 %v6027, %v6051
        %v6076 = vmax.f32 %v6028, %v6052
        %v6077 = vmax.f32 %v6029, %v6053
        %v6078 = vmax.f32 %v6030, %v6054
        %v6079 = vmax.f32 %v6031, %v6055
        %v6080 = vmax.f32 %v6032, %v6056
        %v6081 = vmax.f32 %v6033, %v6057
        %v6082 = vmax.f32 %v6034, %v6058
        %v6083 = vmax.f32 %v6035, %v6059
        %v6084 = vmax.f32 %v6036, %v6060
        %v6085 = vmax.f32 %v6037, %v6061
        %v6086 = vmax.f32 %v6038, %v6062
        %v6087 = vmax.f32 %v6039, %v6063
        %v6088 = vmax.f32 %v6040, %v6064
        %v6089 = vmax.f32 %v6041, %v6065
        %v6090 = vmax.f32 %v6042, %v6066
        %v6091 = vmax.f32 %v6043, %v6067
        %v6092 = vmax.f32 %v6044, %v6068
        %v6093 = vmax.f32 %v6045, %v6069
        %v6094 = vmax.f32 %v6046, %v6070
        %6095 = vst.msk [vmem:[#allocation4 + $0x2] sm:$0x1] %vm5902, %v6071
        %6096 = vst.msk [vmem:[#allocation4 + $0x12] sm:$0x1] %vm5902, %v6072
        %6097 = vst.msk [vmem:[#allocation4 + $0x22] sm:$0x1] %vm5902, %v6073
        %6098 = vst.msk [vmem:[#allocation4 + $0x32] sm:$0x1] %vm5902, %v6074
        %6099 = vst.msk [vmem:[#allocation4 + $0x42] sm:$0x1] %vm5902, %v6075
        %6100 = vst.msk [vmem:[#allocation4 + $0x52] sm:$0x1] %vm5902, %v6076
        %6101 = vst.msk [vmem:[#allocation4 + $0x62] sm:$0x1] %vm5902, %v6077
        %6102 = vst.msk [vmem:[#allocation4 + $0x72] sm:$0x1] %vm5902, %v6078
        %6103 = vst.msk [vmem:[#allocation4 + $0x82] sm:$0x1] %vm5902, %v6079
        %6104 = vst.msk [vmem:[#allocation4 + $0x92] sm:$0x1] %vm5902, %v6080
        %6105 = vst.msk [vmem:[#allocation4 + $0xa2] sm:$0x1] %vm5902, %v6081
        %6106 = vst.msk [vmem:[#allocation4 + $0xb2] sm:$0x1] %vm5902, %v6082
        %6107 = vst.msk [vmem:[#allocation4 + $0xc2] sm:$0x1] %vm5902, %v6083
        %6108 = vst.msk [vmem:[#allocation4 + $0xd2] sm:$0x1] %vm5902, %v6084
        %6109 = vst.msk [vmem:[#allocation4 + $0xe2] sm:$0x1] %vm5902, %v6085
        %6110 = vst.msk [vmem:[#allocation4 + $0xf2] sm:$0x1] %vm5902, %v6086
        %6111 = vst.msk [vmem:[#allocation4 + $0x102] sm:$0x1] %vm5902, %v6087
        %6112 = vst.msk [vmem:[#allocation4 + $0x112] sm:$0x1] %vm5902, %v6088
        %6113 = vst.msk [vmem:[#allocation4 + $0x122] sm:$0x1] %vm5902, %v6089
        %6114 = vst.msk [vmem:[#allocation4 + $0x132] sm:$0x1] %vm5902, %v6090
        %6115 = vst.msk [vmem:[#allocation4 + $0x142] sm:$0x1] %vm5902, %v6091
        %6116 = vst.msk [vmem:[#allocation4 + $0x152] sm:$0x1] %vm5902, %v6092
        %6117 = vst.msk [vmem:[#allocation4 + $0x162] sm:$0x1] %vm5902, %v6093
        %6118 = vst.msk [vmem:[#allocation4 + $0x172] sm:$0x1] %vm5902, %v6094
        %v6119 = vld [vmem:[#allocation3 + $0x6] sm:$0x1]
        %v6120 = vld [vmem:[#allocation3 + $0x1e] sm:$0x1]
        %v6121 = vld [vmem:[#allocation3 + $0x36] sm:$0x1]
        %v6122 = vld [vmem:[#allocation3 + $0x4e] sm:$0x1]
        %v6123 = vld [vmem:[#allocation3 + $0x66] sm:$0x1]
        %v6124 = vld [vmem:[#allocation3 + $0x7e] sm:$0x1]
        %v6125 = vld [vmem:[#allocation3 + $0x96] sm:$0x1]
        %v6126 = vld [vmem:[#allocation3 + $0xae] sm:$0x1]
        %v6127 = vld [vmem:[#allocation3 + $0xc6] sm:$0x1]
        %v6128 = vld [vmem:[#allocation3 + $0xde] sm:$0x1]
        %v6129 = vld [vmem:[#allocation3 + $0xf6] sm:$0x1]
        %v6130 = vld [vmem:[#allocation3 + $0x10e] sm:$0x1]
        %v6131 = vld [vmem:[#allocation3 + $0x126] sm:$0x1]
        %v6132 = vld [vmem:[#allocation3 + $0x13e] sm:$0x1]
        %v6133 = vld [vmem:[#allocation3 + $0x156] sm:$0x1]
        %v6134 = vld [vmem:[#allocation3 + $0x16e] sm:$0x1]
        %v6135 = vld [vmem:[#allocation3 + $0x186] sm:$0x1]
        %v6136 = vld [vmem:[#allocation3 + $0x19e] sm:$0x1]
        %v6137 = vld [vmem:[#allocation3 + $0x1b6] sm:$0x1]
        %v6138 = vld [vmem:[#allocation3 + $0x1ce] sm:$0x1]
        %v6139 = vld [vmem:[#allocation3 + $0x1e6] sm:$0x1]
        %v6140 = vld [vmem:[#allocation3 + $0x1fe] sm:$0x1]
        %v6141 = vld [vmem:[#allocation3 + $0x216] sm:$0x1]
        %v6142 = vld [vmem:[#allocation3 + $0x22e] sm:$0x1]
        %v6143 = vld [vmem:[#allocation3 + $0x7] sm:$0x1]
        %v6144 = vld [vmem:[#allocation3 + $0x1f] sm:$0x1]
        %v6145 = vld [vmem:[#allocation3 + $0x37] sm:$0x1]
        %v6146 = vld [vmem:[#allocation3 + $0x4f] sm:$0x1]
        %v6147 = vld [vmem:[#allocation3 + $0x67] sm:$0x1]
        %v6148 = vld [vmem:[#allocation3 + $0x7f] sm:$0x1]
        %v6149 = vld [vmem:[#allocation3 + $0x97] sm:$0x1]
        %v6150 = vld [vmem:[#allocation3 + $0xaf] sm:$0x1]
        %v6151 = vld [vmem:[#allocation3 + $0xc7] sm:$0x1]
        %v6152 = vld [vmem:[#allocation3 + $0xdf] sm:$0x1]
        %v6153 = vld [vmem:[#allocation3 + $0xf7] sm:$0x1]
        %v6154 = vld [vmem:[#allocation3 + $0x10f] sm:$0x1]
        %v6155 = vld [vmem:[#allocation3 + $0x127] sm:$0x1]
        %v6156 = vld [vmem:[#allocation3 + $0x13f] sm:$0x1]
        %v6157 = vld [vmem:[#allocation3 + $0x157] sm:$0x1]
        %v6158 = vld [vmem:[#allocation3 + $0x16f] sm:$0x1]
        %v6159 = vld [vmem:[#allocation3 + $0x187] sm:$0x1]
        %v6160 = vld [vmem:[#allocation3 + $0x19f] sm:$0x1]
        %v6161 = vld [vmem:[#allocation3 + $0x1b7] sm:$0x1]
        %v6162 = vld [vmem:[#allocation3 + $0x1cf] sm:$0x1]
        %v6163 = vld [vmem:[#allocation3 + $0x1e7] sm:$0x1]
        %v6164 = vld [vmem:[#allocation3 + $0x1ff] sm:$0x1]
        %v6165 = vld [vmem:[#allocation3 + $0x217] sm:$0x1]
        %v6166 = vld [vmem:[#allocation3 + $0x22f] sm:$0x1]
        %v6167 = vmax.f32 %v6119, %v6143
        %v6168 = vmax.f32 %v6120, %v6144
        %v6169 = vmax.f32 %v6121, %v6145
        %v6170 = vmax.f32 %v6122, %v6146
        %v6171 = vmax.f32 %v6123, %v6147
        %v6172 = vmax.f32 %v6124, %v6148
        %v6173 = vmax.f32 %v6125, %v6149
        %v6174 = vmax.f32 %v6126, %v6150
        %v6175 = vmax.f32 %v6127, %v6151
        %v6176 = vmax.f32 %v6128, %v6152
        %v6177 = vmax.f32 %v6129, %v6153
        %v6178 = vmax.f32 %v6130, %v6154
        %v6179 = vmax.f32 %v6131, %v6155
        %v6180 = vmax.f32 %v6132, %v6156
        %v6181 = vmax.f32 %v6133, %v6157
        %v6182 = vmax.f32 %v6134, %v6158
        %v6183 = vmax.f32 %v6135, %v6159
        %v6184 = vmax.f32 %v6136, %v6160
        %v6185 = vmax.f32 %v6137, %v6161
        %v6186 = vmax.f32 %v6138, %v6162
        %v6187 = vmax.f32 %v6139, %v6163
        %v6188 = vmax.f32 %v6140, %v6164
        %v6189 = vmax.f32 %v6141, %v6165
        %v6190 = vmax.f32 %v6142, %v6166
        %6191 = vst.msk [vmem:[#allocation4 + $0x3] sm:$0x1] %vm5902, %v6167
        %6192 = vst.msk [vmem:[#allocation4 + $0x13] sm:$0x1] %vm5902, %v6168
        %6193 = vst.msk [vmem:[#allocation4 + $0x23] sm:$0x1] %vm5902, %v6169
        %6194 = vst.msk [vmem:[#allocation4 + $0x33] sm:$0x1] %vm5902, %v6170
        %6195 = vst.msk [vmem:[#allocation4 + $0x43] sm:$0x1] %vm5902, %v6171
        %6196 = vst.msk [vmem:[#allocation4 + $0x53] sm:$0x1] %vm5902, %v6172
        %6197 = vst.msk [vmem:[#allocation4 + $0x63] sm:$0x1] %vm5902, %v6173
        %6198 = vst.msk [vmem:[#allocation4 + $0x73] sm:$0x1] %vm5902, %v6174
        %6199 = vst.msk [vmem:[#allocation4 + $0x83] sm:$0x1] %vm5902, %v6175
        %6200 = vst.msk [vmem:[#allocation4 + $0x93] sm:$0x1] %vm5902, %v6176
        %6201 = vst.msk [vmem:[#allocation4 + $0xa3] sm:$0x1] %vm5902, %v6177
        %6202 = vst.msk [vmem:[#allocation4 + $0xb3] sm:$0x1] %vm5902, %v6178
        %6203 = vst.msk [vmem:[#allocation4 + $0xc3] sm:$0x1] %vm5902, %v6179
        %6204 = vst.msk [vmem:[#allocation4 + $0xd3] sm:$0x1] %vm5902, %v6180
        %6205 = vst.msk [vmem:[#allocation4 + $0xe3] sm:$0x1] %vm5902, %v6181
        %6206 = vst.msk [vmem:[#allocation4 + $0xf3] sm:$0x1] %vm5902, %v6182
        %6207 = vst.msk [vmem:[#allocation4 + $0x103] sm:$0x1] %vm5902, %v6183
        %6208 = vst.msk [vmem:[#allocation4 + $0x113] sm:$0x1] %vm5902, %v6184
        %6209 = vst.msk [vmem:[#allocation4 + $0x123] sm:$0x1] %vm5902, %v6185
        %6210 = vst.msk [vmem:[#allocation4 + $0x133] sm:$0x1] %vm5902, %v6186
        %6211 = vst.msk [vmem:[#allocation4 + $0x143] sm:$0x1] %vm5902, %v6187
        %6212 = vst.msk [vmem:[#allocation4 + $0x153] sm:$0x1] %vm5902, %v6188
        %6213 = vst.msk [vmem:[#allocation4 + $0x163] sm:$0x1] %vm5902, %v6189
        %6214 = vst.msk [vmem:[#allocation4 + $0x173] sm:$0x1] %vm5902, %v6190
        %v6215 = vld [vmem:[#allocation3 + $0x8] sm:$0x1]
        %v6216 = vld [vmem:[#allocation3 + $0x20] sm:$0x1]
        %v6217 = vld [vmem:[#allocation3 + $0x38] sm:$0x1]
        %v6218 = vld [vmem:[#allocation3 + $0x50] sm:$0x1]
        %v6219 = vld [vmem:[#allocation3 + $0x68] sm:$0x1]
        %v6220 = vld [vmem:[#allocation3 + $0x80] sm:$0x1]
        %v6221 = vld [vmem:[#allocation3 + $0x98] sm:$0x1]
        %v6222 = vld [vmem:[#allocation3 + $0xb0] sm:$0x1]
        %v6223 = vld [vmem:[#allocation3 + $0xc8] sm:$0x1]
        %v6224 = vld [vmem:[#allocation3 + $0xe0] sm:$0x1]
        %v6225 = vld [vmem:[#allocation3 + $0xf8] sm:$0x1]
        %v6226 = vld [vmem:[#allocation3 + $0x110] sm:$0x1]
        %v6227 = vld [vmem:[#allocation3 + $0x128] sm:$0x1]
        %v6228 = vld [vmem:[#allocation3 + $0x140] sm:$0x1]
        %v6229 = vld [vmem:[#allocation3 + $0x158] sm:$0x1]
        %v6230 = vld [vmem:[#allocation3 + $0x170] sm:$0x1]
        %v6231 = vld [vmem:[#allocation3 + $0x188] sm:$0x1]
        %v6232 = vld [vmem:[#allocation3 + $0x1a0] sm:$0x1]
        %v6233 = vld [vmem:[#allocation3 + $0x1b8] sm:$0x1]
        %v6234 = vld [vmem:[#allocation3 + $0x1d0] sm:$0x1]
        %v6235 = vld [vmem:[#allocation3 + $0x1e8] sm:$0x1]
        %v6236 = vld [vmem:[#allocation3 + $0x200] sm:$0x1]
        %v6237 = vld [vmem:[#allocation3 + $0x218] sm:$0x1]
        %v6238 = vld [vmem:[#allocation3 + $0x230] sm:$0x1]
        %v6239 = vld [vmem:[#allocation3 + $0x9] sm:$0x1]
        %v6240 = vld [vmem:[#allocation3 + $0x21] sm:$0x1]
        %v6241 = vld [vmem:[#allocation3 + $0x39] sm:$0x1]
        %v6242 = vld [vmem:[#allocation3 + $0x51] sm:$0x1]
        %v6243 = vld [vmem:[#allocation3 + $0x69] sm:$0x1]
        %v6244 = vld [vmem:[#allocation3 + $0x81] sm:$0x1]
        %v6245 = vld [vmem:[#allocation3 + $0x99] sm:$0x1]
        %v6246 = vld [vmem:[#allocation3 + $0xb1] sm:$0x1]
        %v6247 = vld [vmem:[#allocation3 + $0xc9] sm:$0x1]
        %v6248 = vld [vmem:[#allocation3 + $0xe1] sm:$0x1]
        %v6249 = vld [vmem:[#allocation3 + $0xf9] sm:$0x1]
        %v6250 = vld [vmem:[#allocation3 + $0x111] sm:$0x1]
        %v6251 = vld [vmem:[#allocation3 + $0x129] sm:$0x1]
        %v6252 = vld [vmem:[#allocation3 + $0x141] sm:$0x1]
        %v6253 = vld [vmem:[#allocation3 + $0x159] sm:$0x1]
        %v6254 = vld [vmem:[#allocation3 + $0x171] sm:$0x1]
        %v6255 = vld [vmem:[#allocation3 + $0x189] sm:$0x1]
        %v6256 = vld [vmem:[#allocation3 + $0x1a1] sm:$0x1]
        %v6257 = vld [vmem:[#allocation3 + $0x1b9] sm:$0x1]
        %v6258 = vld [vmem:[#allocation3 + $0x1d1] sm:$0x1]
        %v6259 = vld [vmem:[#allocation3 + $0x1e9] sm:$0x1]
        %v6260 = vld [vmem:[#allocation3 + $0x201] sm:$0x1]
        %v6261 = vld [vmem:[#allocation3 + $0x219] sm:$0x1]
        %v6262 = vld [vmem:[#allocation3 + $0x231] sm:$0x1]
        %v6263 = vmax.f32 %v6215, %v6239
        %v6264 = vmax.f32 %v6216, %v6240
        %v6265 = vmax.f32 %v6217, %v6241
        %v6266 = vmax.f32 %v6218, %v6242
        %v6267 = vmax.f32 %v6219, %v6243
        %v6268 = vmax.f32 %v6220, %v6244
        %v6269 = vmax.f32 %v6221, %v6245
        %v6270 = vmax.f32 %v6222, %v6246
        %v6271 = vmax.f32 %v6223, %v6247
        %v6272 = vmax.f32 %v6224, %v6248
        %v6273 = vmax.f32 %v6225, %v6249
        %v6274 = vmax.f32 %v6226, %v6250
        %v6275 = vmax.f32 %v6227, %v6251
        %v6276 = vmax.f32 %v6228, %v6252
        %v6277 = vmax.f32 %v6229, %v6253
        %v6278 = vmax.f32 %v6230, %v6254
        %v6279 = vmax.f32 %v6231, %v6255
        %v6280 = vmax.f32 %v6232, %v6256
        %v6281 = vmax.f32 %v6233, %v6257
        %v6282 = vmax.f32 %v6234, %v6258
        %v6283 = vmax.f32 %v6235, %v6259
        %v6284 = vmax.f32 %v6236, %v6260
        %v6285 = vmax.f32 %v6237, %v6261
        %v6286 = vmax.f32 %v6238, %v6262
        %6287 = vst.msk [vmem:[#allocation4 + $0x4] sm:$0x1] %vm5902, %v6263
        %6288 = vst.msk [vmem:[#allocation4 + $0x14] sm:$0x1] %vm5902, %v6264
        %6289 = vst.msk [vmem:[#allocation4 + $0x24] sm:$0x1] %vm5902, %v6265
        %6290 = vst.msk [vmem:[#allocation4 + $0x34] sm:$0x1] %vm5902, %v6266
        %6291 = vst.msk [vmem:[#allocation4 + $0x44] sm:$0x1] %vm5902, %v6267
        %6292 = vst.msk [vmem:[#allocation4 + $0x54] sm:$0x1] %vm5902, %v6268
        %6293 = vst.msk [vmem:[#allocation4 + $0x64] sm:$0x1] %vm5902, %v6269
        %6294 = vst.msk [vmem:[#allocation4 + $0x74] sm:$0x1] %vm5902, %v6270
        %6295 = vst.msk [vmem:[#allocation4 + $0x84] sm:$0x1] %vm5902, %v6271
        %6296 = vst.msk [vmem:[#allocation4 + $0x94] sm:$0x1] %vm5902, %v6272
        %6297 = vst.msk [vmem:[#allocation4 + $0xa4] sm:$0x1] %vm5902, %v6273
        %6298 = vst.msk [vmem:[#allocation4 + $0xb4] sm:$0x1] %vm5902, %v6274
        %6299 = vst.msk [vmem:[#allocation4 + $0xc4] sm:$0x1] %vm5902, %v6275
        %6300 = vst.msk [vmem:[#allocation4 + $0xd4] sm:$0x1] %vm5902, %v6276
        %6301 = vst.msk [vmem:[#allocation4 + $0xe4] sm:$0x1] %vm5902, %v6277
        %6302 = vst.msk [vmem:[#allocation4 + $0xf4] sm:$0x1] %vm5902, %v6278
        %6303 = vst.msk [vmem:[#allocation4 + $0x104] sm:$0x1] %vm5902, %v6279
        %6304 = vst.msk [vmem:[#allocation4 + $0x114] sm:$0x1] %vm5902, %v6280
        %6305 = vst.msk [vmem:[#allocation4 + $0x124] sm:$0x1] %vm5902, %v6281
        %6306 = vst.msk [vmem:[#allocation4 + $0x134] sm:$0x1] %vm5902, %v6282
        %6307 = vst.msk [vmem:[#allocation4 + $0x144] sm:$0x1] %vm5902, %v6283
        %6308 = vst.msk [vmem:[#allocation4 + $0x154] sm:$0x1] %vm5902, %v6284
        %6309 = vst.msk [vmem:[#allocation4 + $0x164] sm:$0x1] %vm5902, %v6285
        %6310 = vst.msk [vmem:[#allocation4 + $0x174] sm:$0x1] %vm5902, %v6286
        %v6311 = vld [vmem:[#allocation3 + $0xa] sm:$0x1]
        %v6312 = vld [vmem:[#allocation3 + $0x22] sm:$0x1]
        %v6313 = vld [vmem:[#allocation3 + $0x3a] sm:$0x1]
        %v6314 = vld [vmem:[#allocation3 + $0x52] sm:$0x1]
        %v6315 = vld [vmem:[#allocation3 + $0x6a] sm:$0x1]
        %v6316 = vld [vmem:[#allocation3 + $0x82] sm:$0x1]
        %v6317 = vld [vmem:[#allocation3 + $0x9a] sm:$0x1]
        %v6318 = vld [vmem:[#allocation3 + $0xb2] sm:$0x1]
        %v6319 = vld [vmem:[#allocation3 + $0xca] sm:$0x1]
        %v6320 = vld [vmem:[#allocation3 + $0xe2] sm:$0x1]
        %v6321 = vld [vmem:[#allocation3 + $0xfa] sm:$0x1]
        %v6322 = vld [vmem:[#allocation3 + $0x112] sm:$0x1]
        %v6323 = vld [vmem:[#allocation3 + $0x12a] sm:$0x1]
        %v6324 = vld [vmem:[#allocation3 + $0x142] sm:$0x1]
        %v6325 = vld [vmem:[#allocation3 + $0x15a] sm:$0x1]
        %v6326 = vld [vmem:[#allocation3 + $0x172] sm:$0x1]
        %v6327 = vld [vmem:[#allocation3 + $0x18a] sm:$0x1]
        %v6328 = vld [vmem:[#allocation3 + $0x1a2] sm:$0x1]
        %v6329 = vld [vmem:[#allocation3 + $0x1ba] sm:$0x1]
        %v6330 = vld [vmem:[#allocation3 + $0x1d2] sm:$0x1]
        %v6331 = vld [vmem:[#allocation3 + $0x1ea] sm:$0x1]
        %v6332 = vld [vmem:[#allocation3 + $0x202] sm:$0x1]
        %v6333 = vld [vmem:[#allocation3 + $0x21a] sm:$0x1]
        %v6334 = vld [vmem:[#allocation3 + $0x232] sm:$0x1]
        %v6335 = vld [vmem:[#allocation3 + $0xb] sm:$0x1]
        %v6336 = vld [vmem:[#allocation3 + $0x23] sm:$0x1]
        %v6337 = vld [vmem:[#allocation3 + $0x3b] sm:$0x1]
        %v6338 = vld [vmem:[#allocation3 + $0x53] sm:$0x1]
        %v6339 = vld [vmem:[#allocation3 + $0x6b] sm:$0x1]
        %v6340 = vld [vmem:[#allocation3 + $0x83] sm:$0x1]
        %v6341 = vld [vmem:[#allocation3 + $0x9b] sm:$0x1]
        %v6342 = vld [vmem:[#allocation3 + $0xb3] sm:$0x1]
        %v6343 = vld [vmem:[#allocation3 + $0xcb] sm:$0x1]
        %v6344 = vld [vmem:[#allocation3 + $0xe3] sm:$0x1]
        %v6345 = vld [vmem:[#allocation3 + $0xfb] sm:$0x1]
        %v6346 = vld [vmem:[#allocation3 + $0x113] sm:$0x1]
        %v6347 = vld [vmem:[#allocation3 + $0x12b] sm:$0x1]
        %v6348 = vld [vmem:[#allocation3 + $0x143] sm:$0x1]
        %v6349 = vld [vmem:[#allocation3 + $0x15b] sm:$0x1]
        %v6350 = vld [vmem:[#allocation3 + $0x173] sm:$0x1]
        %v6351 = vld [vmem:[#allocation3 + $0x18b] sm:$0x1]
        %v6352 = vld [vmem:[#allocation3 + $0x1a3] sm:$0x1]
        %v6353 = vld [vmem:[#allocation3 + $0x1bb] sm:$0x1]
        %v6354 = vld [vmem:[#allocation3 + $0x1d3] sm:$0x1]
        %v6355 = vld [vmem:[#allocation3 + $0x1eb] sm:$0x1]
        %v6356 = vld [vmem:[#allocation3 + $0x203] sm:$0x1]
        %v6357 = vld [vmem:[#allocation3 + $0x21b] sm:$0x1]
        %v6358 = vld [vmem:[#allocation3 + $0x233] sm:$0x1]
        %v6359 = vmax.f32 %v6311, %v6335
        %v6360 = vmax.f32 %v6312, %v6336
        %v6361 = vmax.f32 %v6313, %v6337
        %v6362 = vmax.f32 %v6314, %v6338
        %v6363 = vmax.f32 %v6315, %v6339
        %v6364 = vmax.f32 %v6316, %v6340
        %v6365 = vmax.f32 %v6317, %v6341
        %v6366 = vmax.f32 %v6318, %v6342
        %v6367 = vmax.f32 %v6319, %v6343
        %v6368 = vmax.f32 %v6320, %v6344
        %v6369 = vmax.f32 %v6321, %v6345
        %v6370 = vmax.f32 %v6322, %v6346
        %v6371 = vmax.f32 %v6323, %v6347
        %v6372 = vmax.f32 %v6324, %v6348
        %v6373 = vmax.f32 %v6325, %v6349
        %v6374 = vmax.f32 %v6326, %v6350
        %v6375 = vmax.f32 %v6327, %v6351
        %v6376 = vmax.f32 %v6328, %v6352
        %v6377 = vmax.f32 %v6329, %v6353
        %v6378 = vmax.f32 %v6330, %v6354
        %v6379 = vmax.f32 %v6331, %v6355
        %v6380 = vmax.f32 %v6332, %v6356
        %v6381 = vmax.f32 %v6333, %v6357
        %v6382 = vmax.f32 %v6334, %v6358
        %6383 = vst.msk [vmem:[#allocation4 + $0x5] sm:$0x1] %vm5902, %v6359
        %6384 = vst.msk [vmem:[#allocation4 + $0x15] sm:$0x1] %vm5902, %v6360
        %6385 = vst.msk [vmem:[#allocation4 + $0x25] sm:$0x1] %vm5902, %v6361
        %6386 = vst.msk [vmem:[#allocation4 + $0x35] sm:$0x1] %vm5902, %v6362
        %6387 = vst.msk [vmem:[#allocation4 + $0x45] sm:$0x1] %vm5902, %v6363
        %6388 = vst.msk [vmem:[#allocation4 + $0x55] sm:$0x1] %vm5902, %v6364
        %6389 = vst.msk [vmem:[#allocation4 + $0x65] sm:$0x1] %vm5902, %v6365
        %6390 = vst.msk [vmem:[#allocation4 + $0x75] sm:$0x1] %vm5902, %v6366
        %6391 = vst.msk [vmem:[#allocation4 + $0x85] sm:$0x1] %vm5902, %v6367
        %6392 = vst.msk [vmem:[#allocation4 + $0x95] sm:$0x1] %vm5902, %v6368
        %6393 = vst.msk [vmem:[#allocation4 + $0xa5] sm:$0x1] %vm5902, %v6369
        %6394 = vst.msk [vmem:[#allocation4 + $0xb5] sm:$0x1] %vm5902, %v6370
        %6395 = vst.msk [vmem:[#allocation4 + $0xc5] sm:$0x1] %vm5902, %v6371
        %6396 = vst.msk [vmem:[#allocation4 + $0xd5] sm:$0x1] %vm5902, %v6372
        %6397 = vst.msk [vmem:[#allocation4 + $0xe5] sm:$0x1] %vm5902, %v6373
        %6398 = vst.msk [vmem:[#allocation4 + $0xf5] sm:$0x1] %vm5902, %v6374
        %6399 = vst.msk [vmem:[#allocation4 + $0x105] sm:$0x1] %vm5902, %v6375
        %6400 = vst.msk [vmem:[#allocation4 + $0x115] sm:$0x1] %vm5902, %v6376
        %6401 = vst.msk [vmem:[#allocation4 + $0x125] sm:$0x1] %vm5902, %v6377
        %6402 = vst.msk [vmem:[#allocation4 + $0x135] sm:$0x1] %vm5902, %v6378
        %6403 = vst.msk [vmem:[#allocation4 + $0x145] sm:$0x1] %vm5902, %v6379
        %6404 = vst.msk [vmem:[#allocation4 + $0x155] sm:$0x1] %vm5902, %v6380
        %6405 = vst.msk [vmem:[#allocation4 + $0x165] sm:$0x1] %vm5902, %v6381
        %6406 = vst.msk [vmem:[#allocation4 + $0x175] sm:$0x1] %vm5902, %v6382
        %v6407 = vld [vmem:[#allocation3 + $0xc] sm:$0x1]
        %v6408 = vld [vmem:[#allocation3 + $0x24] sm:$0x1]
        %v6409 = vld [vmem:[#allocation3 + $0x3c] sm:$0x1]
        %v6410 = vld [vmem:[#allocation3 + $0x54] sm:$0x1]
        %v6411 = vld [vmem:[#allocation3 + $0x6c] sm:$0x1]
        %v6412 = vld [vmem:[#allocation3 + $0x84] sm:$0x1]
        %v6413 = vld [vmem:[#allocation3 + $0x9c] sm:$0x1]
        %v6414 = vld [vmem:[#allocation3 + $0xb4] sm:$0x1]
        %v6415 = vld [vmem:[#allocation3 + $0xcc] sm:$0x1]
        %v6416 = vld [vmem:[#allocation3 + $0xe4] sm:$0x1]
        %v6417 = vld [vmem:[#allocation3 + $0xfc] sm:$0x1]
        %v6418 = vld [vmem:[#allocation3 + $0x114] sm:$0x1]
        %v6419 = vld [vmem:[#allocation3 + $0x12c] sm:$0x1]
        %v6420 = vld [vmem:[#allocation3 + $0x144] sm:$0x1]
        %v6421 = vld [vmem:[#allocation3 + $0x15c] sm:$0x1]
        %v6422 = vld [vmem:[#allocation3 + $0x174] sm:$0x1]
        %v6423 = vld [vmem:[#allocation3 + $0x18c] sm:$0x1]
        %v6424 = vld [vmem:[#allocation3 + $0x1a4] sm:$0x1]
        %v6425 = vld [vmem:[#allocation3 + $0x1bc] sm:$0x1]
        %v6426 = vld [vmem:[#allocation3 + $0x1d4] sm:$0x1]
        %v6427 = vld [vmem:[#allocation3 + $0x1ec] sm:$0x1]
        %v6428 = vld [vmem:[#allocation3 + $0x204] sm:$0x1]
        %v6429 = vld [vmem:[#allocation3 + $0x21c] sm:$0x1]
        %v6430 = vld [vmem:[#allocation3 + $0x234] sm:$0x1]
        %v6431 = vld [vmem:[#allocation3 + $0xd] sm:$0x1]
        %v6432 = vld [vmem:[#allocation3 + $0x25] sm:$0x1]
        %v6433 = vld [vmem:[#allocation3 + $0x3d] sm:$0x1]
        %v6434 = vld [vmem:[#allocation3 + $0x55] sm:$0x1]
        %v6435 = vld [vmem:[#allocation3 + $0x6d] sm:$0x1]
        %v6436 = vld [vmem:[#allocation3 + $0x85] sm:$0x1]
        %v6437 = vld [vmem:[#allocation3 + $0x9d] sm:$0x1]
        %v6438 = vld [vmem:[#allocation3 + $0xb5] sm:$0x1]
        %v6439 = vld [vmem:[#allocation3 + $0xcd] sm:$0x1]
        %v6440 = vld [vmem:[#allocation3 + $0xe5] sm:$0x1]
        %v6441 = vld [vmem:[#allocation3 + $0xfd] sm:$0x1]
        %v6442 = vld [vmem:[#allocation3 + $0x115] sm:$0x1]
        %v6443 = vld [vmem:[#allocation3 + $0x12d] sm:$0x1]
        %v6444 = vld [vmem:[#allocation3 + $0x145] sm:$0x1]
        %v6445 = vld [vmem:[#allocation3 + $0x15d] sm:$0x1]
        %v6446 = vld [vmem:[#allocation3 + $0x175] sm:$0x1]
        %v6447 = vld [vmem:[#allocation3 + $0x18d] sm:$0x1]
        %v6448 = vld [vmem:[#allocation3 + $0x1a5] sm:$0x1]
        %v6449 = vld [vmem:[#allocation3 + $0x1bd] sm:$0x1]
        %v6450 = vld [vmem:[#allocation3 + $0x1d5] sm:$0x1]
        %v6451 = vld [vmem:[#allocation3 + $0x1ed] sm:$0x1]
        %v6452 = vld [vmem:[#allocation3 + $0x205] sm:$0x1]
        %v6453 = vld [vmem:[#allocation3 + $0x21d] sm:$0x1]
        %v6454 = vld [vmem:[#allocation3 + $0x235] sm:$0x1]
        %v6455 = vmax.f32 %v6407, %v6431
        %v6456 = vmax.f32 %v6408, %v6432
        %v6457 = vmax.f32 %v6409, %v6433
        %v6458 = vmax.f32 %v6410, %v6434
        %v6459 = vmax.f32 %v6411, %v6435
        %v6460 = vmax.f32 %v6412, %v6436
        %v6461 = vmax.f32 %v6413, %v6437
        %v6462 = vmax.f32 %v6414, %v6438
        %v6463 = vmax.f32 %v6415, %v6439
        %v6464 = vmax.f32 %v6416, %v6440
        %v6465 = vmax.f32 %v6417, %v6441
        %v6466 = vmax.f32 %v6418, %v6442
        %v6467 = vmax.f32 %v6419, %v6443
        %v6468 = vmax.f32 %v6420, %v6444
        %v6469 = vmax.f32 %v6421, %v6445
        %v6470 = vmax.f32 %v6422, %v6446
        %v6471 = vmax.f32 %v6423, %v6447
        %v6472 = vmax.f32 %v6424, %v6448
        %v6473 = vmax.f32 %v6425, %v6449
        %v6474 = vmax.f32 %v6426, %v6450
        %v6475 = vmax.f32 %v6427, %v6451
        %v6476 = vmax.f32 %v6428, %v6452
        %v6477 = vmax.f32 %v6429, %v6453
        %v6478 = vmax.f32 %v6430, %v6454
        %6479 = vst.msk [vmem:[#allocation4 + $0x6] sm:$0x1] %vm5902, %v6455
        %6480 = vst.msk [vmem:[#allocation4 + $0x16] sm:$0x1] %vm5902, %v6456
        %6481 = vst.msk [vmem:[#allocation4 + $0x26] sm:$0x1] %vm5902, %v6457
        %6482 = vst.msk [vmem:[#allocation4 + $0x36] sm:$0x1] %vm5902, %v6458
        %6483 = vst.msk [vmem:[#allocation4 + $0x46] sm:$0x1] %vm5902, %v6459
        %6484 = vst.msk [vmem:[#allocation4 + $0x56] sm:$0x1] %vm5902, %v6460
        %6485 = vst.msk [vmem:[#allocation4 + $0x66] sm:$0x1] %vm5902, %v6461
        %6486 = vst.msk [vmem:[#allocation4 + $0x76] sm:$0x1] %vm5902, %v6462
        %6487 = vst.msk [vmem:[#allocation4 + $0x86] sm:$0x1] %vm5902, %v6463
        %6488 = vst.msk [vmem:[#allocation4 + $0x96] sm:$0x1] %vm5902, %v6464
        %6489 = vst.msk [vmem:[#allocation4 + $0xa6] sm:$0x1] %vm5902, %v6465
        %6490 = vst.msk [vmem:[#allocation4 + $0xb6] sm:$0x1] %vm5902, %v6466
        %6491 = vst.msk [vmem:[#allocation4 + $0xc6] sm:$0x1] %vm5902, %v6467
        %6492 = vst.msk [vmem:[#allocation4 + $0xd6] sm:$0x1] %vm5902, %v6468
        %6493 = vst.msk [vmem:[#allocation4 + $0xe6] sm:$0x1] %vm5902, %v6469
        %6494 = vst.msk [vmem:[#allocation4 + $0xf6] sm:$0x1] %vm5902, %v6470
        %6495 = vst.msk [vmem:[#allocation4 + $0x106] sm:$0x1] %vm5902, %v6471
        %6496 = vst.msk [vmem:[#allocation4 + $0x116] sm:$0x1] %vm5902, %v6472
        %6497 = vst.msk [vmem:[#allocation4 + $0x126] sm:$0x1] %vm5902, %v6473
        %6498 = vst.msk [vmem:[#allocation4 + $0x136] sm:$0x1] %vm5902, %v6474
        %6499 = vst.msk [vmem:[#allocation4 + $0x146] sm:$0x1] %vm5902, %v6475
        %6500 = vst.msk [vmem:[#allocation4 + $0x156] sm:$0x1] %vm5902, %v6476
        %6501 = vst.msk [vmem:[#allocation4 + $0x166] sm:$0x1] %vm5902, %v6477
        %6502 = vst.msk [vmem:[#allocation4 + $0x176] sm:$0x1] %vm5902, %v6478
        %v6503 = vld [vmem:[#allocation3 + $0xe] sm:$0x1]
        %v6504 = vld [vmem:[#allocation3 + $0x26] sm:$0x1]
        %v6505 = vld [vmem:[#allocation3 + $0x3e] sm:$0x1]
        %v6506 = vld [vmem:[#allocation3 + $0x56] sm:$0x1]
        %v6507 = vld [vmem:[#allocation3 + $0x6e] sm:$0x1]
        %v6508 = vld [vmem:[#allocation3 + $0x86] sm:$0x1]
        %v6509 = vld [vmem:[#allocation3 + $0x9e] sm:$0x1]
        %v6510 = vld [vmem:[#allocation3 + $0xb6] sm:$0x1]
        %v6511 = vld [vmem:[#allocation3 + $0xce] sm:$0x1]
        %v6512 = vld [vmem:[#allocation3 + $0xe6] sm:$0x1]
        %v6513 = vld [vmem:[#allocation3 + $0xfe] sm:$0x1]
        %v6514 = vld [vmem:[#allocation3 + $0x116] sm:$0x1]
        %v6515 = vld [vmem:[#allocation3 + $0x12e] sm:$0x1]
        %v6516 = vld [vmem:[#allocation3 + $0x146] sm:$0x1]
        %v6517 = vld [vmem:[#allocation3 + $0x15e] sm:$0x1]
        %v6518 = vld [vmem:[#allocation3 + $0x176] sm:$0x1]
        %v6519 = vld [vmem:[#allocation3 + $0x18e] sm:$0x1]
        %v6520 = vld [vmem:[#allocation3 + $0x1a6] sm:$0x1]
        %v6521 = vld [vmem:[#allocation3 + $0x1be] sm:$0x1]
        %v6522 = vld [vmem:[#allocation3 + $0x1d6] sm:$0x1]
        %v6523 = vld [vmem:[#allocation3 + $0x1ee] sm:$0x1]
        %v6524 = vld [vmem:[#allocation3 + $0x206] sm:$0x1]
        %v6525 = vld [vmem:[#allocation3 + $0x21e] sm:$0x1]
        %v6526 = vld [vmem:[#allocation3 + $0x236] sm:$0x1]
        %v6527 = vld [vmem:[#allocation3 + $0xf] sm:$0x1]
        %v6528 = vld [vmem:[#allocation3 + $0x27] sm:$0x1]
        %v6529 = vld [vmem:[#allocation3 + $0x3f] sm:$0x1]
        %v6530 = vld [vmem:[#allocation3 + $0x57] sm:$0x1]
        %v6531 = vld [vmem:[#allocation3 + $0x6f] sm:$0x1]
        %v6532 = vld [vmem:[#allocation3 + $0x87] sm:$0x1]
        %v6533 = vld [vmem:[#allocation3 + $0x9f] sm:$0x1]
        %v6534 = vld [vmem:[#allocation3 + $0xb7] sm:$0x1]
        %v6535 = vld [vmem:[#allocation3 + $0xcf] sm:$0x1]
        %v6536 = vld [vmem:[#allocation3 + $0xe7] sm:$0x1]
        %v6537 = vld [vmem:[#allocation3 + $0xff] sm:$0x1]
        %v6538 = vld [vmem:[#allocation3 + $0x117] sm:$0x1]
        %v6539 = vld [vmem:[#allocation3 + $0x12f] sm:$0x1]
        %v6540 = vld [vmem:[#allocation3 + $0x147] sm:$0x1]
        %v6541 = vld [vmem:[#allocation3 + $0x15f] sm:$0x1]
        %v6542 = vld [vmem:[#allocation3 + $0x177] sm:$0x1]
        %v6543 = vld [vmem:[#allocation3 + $0x18f] sm:$0x1]
        %v6544 = vld [vmem:[#allocation3 + $0x1a7] sm:$0x1]
        %v6545 = vld [vmem:[#allocation3 + $0x1bf] sm:$0x1]
        %v6546 = vld [vmem:[#allocation3 + $0x1d7] sm:$0x1]
        %v6547 = vld [vmem:[#allocation3 + $0x1ef] sm:$0x1]
        %v6548 = vld [vmem:[#allocation3 + $0x207] sm:$0x1]
        %v6549 = vld [vmem:[#allocation3 + $0x21f] sm:$0x1]
        %v6550 = vld [vmem:[#allocation3 + $0x237] sm:$0x1]
        %v6551 = vmax.f32 %v6503, %v6527
        %v6552 = vmax.f32 %v6504, %v6528
        %v6553 = vmax.f32 %v6505, %v6529
        %v6554 = vmax.f32 %v6506, %v6530
        %v6555 = vmax.f32 %v6507, %v6531
        %v6556 = vmax.f32 %v6508, %v6532
        %v6557 = vmax.f32 %v6509, %v6533
        %v6558 = vmax.f32 %v6510, %v6534
        %v6559 = vmax.f32 %v6511, %v6535
        %v6560 = vmax.f32 %v6512, %v6536
        %v6561 = vmax.f32 %v6513, %v6537
        %v6562 = vmax.f32 %v6514, %v6538
        %v6563 = vmax.f32 %v6515, %v6539
        %v6564 = vmax.f32 %v6516, %v6540
        %v6565 = vmax.f32 %v6517, %v6541
        %v6566 = vmax.f32 %v6518, %v6542
        %v6567 = vmax.f32 %v6519, %v6543
        %v6568 = vmax.f32 %v6520, %v6544
        %v6569 = vmax.f32 %v6521, %v6545
        %v6570 = vmax.f32 %v6522, %v6546
        %v6571 = vmax.f32 %v6523, %v6547
        %v6572 = vmax.f32 %v6524, %v6548
        %v6573 = vmax.f32 %v6525, %v6549
        %v6574 = vmax.f32 %v6526, %v6550
        %6575 = vst.msk [vmem:[#allocation4 + $0x7] sm:$0x1] %vm5902, %v6551
        %6576 = vst.msk [vmem:[#allocation4 + $0x17] sm:$0x1] %vm5902, %v6552
        %6577 = vst.msk [vmem:[#allocation4 + $0x27] sm:$0x1] %vm5902, %v6553
        %6578 = vst.msk [vmem:[#allocation4 + $0x37] sm:$0x1] %vm5902, %v6554
        %6579 = vst.msk [vmem:[#allocation4 + $0x47] sm:$0x1] %vm5902, %v6555
        %6580 = vst.msk [vmem:[#allocation4 + $0x57] sm:$0x1] %vm5902, %v6556
        %6581 = vst.msk [vmem:[#allocation4 + $0x67] sm:$0x1] %vm5902, %v6557
        %6582 = vst.msk [vmem:[#allocation4 + $0x77] sm:$0x1] %vm5902, %v6558
        %6583 = vst.msk [vmem:[#allocation4 + $0x87] sm:$0x1] %vm5902, %v6559
        %6584 = vst.msk [vmem:[#allocation4 + $0x97] sm:$0x1] %vm5902, %v6560
        %6585 = vst.msk [vmem:[#allocation4 + $0xa7] sm:$0x1] %vm5902, %v6561
        %6586 = vst.msk [vmem:[#allocation4 + $0xb7] sm:$0x1] %vm5902, %v6562
        %6587 = vst.msk [vmem:[#allocation4 + $0xc7] sm:$0x1] %vm5902, %v6563
        %6588 = vst.msk [vmem:[#allocation4 + $0xd7] sm:$0x1] %vm5902, %v6564
        %6589 = vst.msk [vmem:[#allocation4 + $0xe7] sm:$0x1] %vm5902, %v6565
        %6590 = vst.msk [vmem:[#allocation4 + $0xf7] sm:$0x1] %vm5902, %v6566
        %6591 = vst.msk [vmem:[#allocation4 + $0x107] sm:$0x1] %vm5902, %v6567
        %6592 = vst.msk [vmem:[#allocation4 + $0x117] sm:$0x1] %vm5902, %v6568
        %6593 = vst.msk [vmem:[#allocation4 + $0x127] sm:$0x1] %vm5902, %v6569
        %6594 = vst.msk [vmem:[#allocation4 + $0x137] sm:$0x1] %vm5902, %v6570
        %6595 = vst.msk [vmem:[#allocation4 + $0x147] sm:$0x1] %vm5902, %v6571
        %6596 = vst.msk [vmem:[#allocation4 + $0x157] sm:$0x1] %vm5902, %v6572
        %6597 = vst.msk [vmem:[#allocation4 + $0x167] sm:$0x1] %vm5902, %v6573
        %6598 = vst.msk [vmem:[#allocation4 + $0x177] sm:$0x1] %vm5902, %v6574
        %v6599 = vld [vmem:[#allocation3 + $0x10] sm:$0x1]
        %v6600 = vld [vmem:[#allocation3 + $0x28] sm:$0x1]
        %v6601 = vld [vmem:[#allocation3 + $0x40] sm:$0x1]
        %v6602 = vld [vmem:[#allocation3 + $0x58] sm:$0x1]
        %v6603 = vld [vmem:[#allocation3 + $0x70] sm:$0x1]
        %v6604 = vld [vmem:[#allocation3 + $0x88] sm:$0x1]
        %v6605 = vld [vmem:[#allocation3 + $0xa0] sm:$0x1]
        %v6606 = vld [vmem:[#allocation3 + $0xb8] sm:$0x1]
        %v6607 = vld [vmem:[#allocation3 + $0xd0] sm:$0x1]
        %v6608 = vld [vmem:[#allocation3 + $0xe8] sm:$0x1]
        %v6609 = vld [vmem:[#allocation3 + $0x100] sm:$0x1]
        %v6610 = vld [vmem:[#allocation3 + $0x118] sm:$0x1]
        %v6611 = vld [vmem:[#allocation3 + $0x130] sm:$0x1]
        %v6612 = vld [vmem:[#allocation3 + $0x148] sm:$0x1]
        %v6613 = vld [vmem:[#allocation3 + $0x160] sm:$0x1]
        %v6614 = vld [vmem:[#allocation3 + $0x178] sm:$0x1]
        %v6615 = vld [vmem:[#allocation3 + $0x190] sm:$0x1]
        %v6616 = vld [vmem:[#allocation3 + $0x1a8] sm:$0x1]
        %v6617 = vld [vmem:[#allocation3 + $0x1c0] sm:$0x1]
        %v6618 = vld [vmem:[#allocation3 + $0x1d8] sm:$0x1]
        %v6619 = vld [vmem:[#allocation3 + $0x1f0] sm:$0x1]
        %v6620 = vld [vmem:[#allocation3 + $0x208] sm:$0x1]
        %v6621 = vld [vmem:[#allocation3 + $0x220] sm:$0x1]
        %v6622 = vld [vmem:[#allocation3 + $0x238] sm:$0x1]
        %v6623 = vld [vmem:[#allocation3 + $0x11] sm:$0x1]
        %v6624 = vld [vmem:[#allocation3 + $0x29] sm:$0x1]
        %v6625 = vld [vmem:[#allocation3 + $0x41] sm:$0x1]
        %v6626 = vld [vmem:[#allocation3 + $0x59] sm:$0x1]
        %v6627 = vld [vmem:[#allocation3 + $0x71] sm:$0x1]
        %v6628 = vld [vmem:[#allocation3 + $0x89] sm:$0x1]
        %v6629 = vld [vmem:[#allocation3 + $0xa1] sm:$0x1]
        %v6630 = vld [vmem:[#allocation3 + $0xb9] sm:$0x1]
        %v6631 = vld [vmem:[#allocation3 + $0xd1] sm:$0x1]
        %v6632 = vld [vmem:[#allocation3 + $0xe9] sm:$0x1]
        %v6633 = vld [vmem:[#allocation3 + $0x101] sm:$0x1]
        %v6634 = vld [vmem:[#allocation3 + $0x119] sm:$0x1]
        %v6635 = vld [vmem:[#allocation3 + $0x131] sm:$0x1]
        %v6636 = vld [vmem:[#allocation3 + $0x149] sm:$0x1]
        %v6637 = vld [vmem:[#allocation3 + $0x161] sm:$0x1]
        %v6638 = vld [vmem:[#allocation3 + $0x179] sm:$0x1]
        %v6639 = vld [vmem:[#allocation3 + $0x191] sm:$0x1]
        %v6640 = vld [vmem:[#allocation3 + $0x1a9] sm:$0x1]
        %v6641 = vld [vmem:[#allocation3 + $0x1c1] sm:$0x1]
        %v6642 = vld [vmem:[#allocation3 + $0x1d9] sm:$0x1]
        %v6643 = vld [vmem:[#allocation3 + $0x1f1] sm:$0x1]
        %v6644 = vld [vmem:[#allocation3 + $0x209] sm:$0x1]
        %v6645 = vld [vmem:[#allocation3 + $0x221] sm:$0x1]
        %v6646 = vld [vmem:[#allocation3 + $0x239] sm:$0x1]
        %v6647 = vmax.f32 %v6599, %v6623
        %v6648 = vmax.f32 %v6600, %v6624
        %v6649 = vmax.f32 %v6601, %v6625
        %v6650 = vmax.f32 %v6602, %v6626
        %v6651 = vmax.f32 %v6603, %v6627
        %v6652 = vmax.f32 %v6604, %v6628
        %v6653 = vmax.f32 %v6605, %v6629
        %v6654 = vmax.f32 %v6606, %v6630
        %v6655 = vmax.f32 %v6607, %v6631
        %v6656 = vmax.f32 %v6608, %v6632
        %v6657 = vmax.f32 %v6609, %v6633
        %v6658 = vmax.f32 %v6610, %v6634
        %v6659 = vmax.f32 %v6611, %v6635
        %v6660 = vmax.f32 %v6612, %v6636
        %v6661 = vmax.f32 %v6613, %v6637
        %v6662 = vmax.f32 %v6614, %v6638
        %v6663 = vmax.f32 %v6615, %v6639
        %v6664 = vmax.f32 %v6616, %v6640
        %v6665 = vmax.f32 %v6617, %v6641
        %v6666 = vmax.f32 %v6618, %v6642
        %v6667 = vmax.f32 %v6619, %v6643
        %v6668 = vmax.f32 %v6620, %v6644
        %v6669 = vmax.f32 %v6621, %v6645
        %v6670 = vmax.f32 %v6622, %v6646
        %6671 = vst.msk [vmem:[#allocation4 + $0x8] sm:$0x1] %vm5902, %v6647
        %6672 = vst.msk [vmem:[#allocation4 + $0x18] sm:$0x1] %vm5902, %v6648
        %6673 = vst.msk [vmem:[#allocation4 + $0x28] sm:$0x1] %vm5902, %v6649
        %6674 = vst.msk [vmem:[#allocation4 + $0x38] sm:$0x1] %vm5902, %v6650
        %6675 = vst.msk [vmem:[#allocation4 + $0x48] sm:$0x1] %vm5902, %v6651
        %6676 = vst.msk [vmem:[#allocation4 + $0x58] sm:$0x1] %vm5902, %v6652
        %6677 = vst.msk [vmem:[#allocation4 + $0x68] sm:$0x1] %vm5902, %v6653
        %6678 = vst.msk [vmem:[#allocation4 + $0x78] sm:$0x1] %vm5902, %v6654
        %6679 = vst.msk [vmem:[#allocation4 + $0x88] sm:$0x1] %vm5902, %v6655
        %6680 = vst.msk [vmem:[#allocation4 + $0x98] sm:$0x1] %vm5902, %v6656
        %6681 = vst.msk [vmem:[#allocation4 + $0xa8] sm:$0x1] %vm5902, %v6657
        %6682 = vst.msk [vmem:[#allocation4 + $0xb8] sm:$0x1] %vm5902, %v6658
        %6683 = vst.msk [vmem:[#allocation4 + $0xc8] sm:$0x1] %vm5902, %v6659
        %6684 = vst.msk [vmem:[#allocation4 + $0xd8] sm:$0x1] %vm5902, %v6660
        %6685 = vst.msk [vmem:[#allocation4 + $0xe8] sm:$0x1] %vm5902, %v6661
        %6686 = vst.msk [vmem:[#allocation4 + $0xf8] sm:$0x1] %vm5902, %v6662
        %6687 = vst.msk [vmem:[#allocation4 + $0x108] sm:$0x1] %vm5902, %v6663
        %6688 = vst.msk [vmem:[#allocation4 + $0x118] sm:$0x1] %vm5902, %v6664
        %6689 = vst.msk [vmem:[#allocation4 + $0x128] sm:$0x1] %vm5902, %v6665
        %6690 = vst.msk [vmem:[#allocation4 + $0x138] sm:$0x1] %vm5902, %v6666
        %6691 = vst.msk [vmem:[#allocation4 + $0x148] sm:$0x1] %vm5902, %v6667
        %6692 = vst.msk [vmem:[#allocation4 + $0x158] sm:$0x1] %vm5902, %v6668
        %6693 = vst.msk [vmem:[#allocation4 + $0x168] sm:$0x1] %vm5902, %v6669
        %6694 = vst.msk [vmem:[#allocation4 + $0x178] sm:$0x1] %vm5902, %v6670
        %v6695 = vld [vmem:[#allocation3 + $0x12] sm:$0x1]
        %v6696 = vld [vmem:[#allocation3 + $0x2a] sm:$0x1]
        %v6697 = vld [vmem:[#allocation3 + $0x42] sm:$0x1]
        %v6698 = vld [vmem:[#allocation3 + $0x5a] sm:$0x1]
        %v6699 = vld [vmem:[#allocation3 + $0x72] sm:$0x1]
        %v6700 = vld [vmem:[#allocation3 + $0x8a] sm:$0x1]
        %v6701 = vld [vmem:[#allocation3 + $0xa2] sm:$0x1]
        %v6702 = vld [vmem:[#allocation3 + $0xba] sm:$0x1]
        %v6703 = vld [vmem:[#allocation3 + $0xd2] sm:$0x1]
        %v6704 = vld [vmem:[#allocation3 + $0xea] sm:$0x1]
        %v6705 = vld [vmem:[#allocation3 + $0x102] sm:$0x1]
        %v6706 = vld [vmem:[#allocation3 + $0x11a] sm:$0x1]
        %v6707 = vld [vmem:[#allocation3 + $0x132] sm:$0x1]
        %v6708 = vld [vmem:[#allocation3 + $0x14a] sm:$0x1]
        %v6709 = vld [vmem:[#allocation3 + $0x162] sm:$0x1]
        %v6710 = vld [vmem:[#allocation3 + $0x17a] sm:$0x1]
        %v6711 = vld [vmem:[#allocation3 + $0x192] sm:$0x1]
        %v6712 = vld [vmem:[#allocation3 + $0x1aa] sm:$0x1]
        %v6713 = vld [vmem:[#allocation3 + $0x1c2] sm:$0x1]
        %v6714 = vld [vmem:[#allocation3 + $0x1da] sm:$0x1]
        %v6715 = vld [vmem:[#allocation3 + $0x1f2] sm:$0x1]
        %v6716 = vld [vmem:[#allocation3 + $0x20a] sm:$0x1]
        %v6717 = vld [vmem:[#allocation3 + $0x222] sm:$0x1]
        %v6718 = vld [vmem:[#allocation3 + $0x23a] sm:$0x1]
        %v6719 = vld [vmem:[#allocation3 + $0x13] sm:$0x1]
        %v6720 = vld [vmem:[#allocation3 + $0x2b] sm:$0x1]
        %v6721 = vld [vmem:[#allocation3 + $0x43] sm:$0x1]
        %v6722 = vld [vmem:[#allocation3 + $0x5b] sm:$0x1]
        %v6723 = vld [vmem:[#allocation3 + $0x73] sm:$0x1]
        %v6724 = vld [vmem:[#allocation3 + $0x8b] sm:$0x1]
        %v6725 = vld [vmem:[#allocation3 + $0xa3] sm:$0x1]
        %v6726 = vld [vmem:[#allocation3 + $0xbb] sm:$0x1]
        %v6727 = vld [vmem:[#allocation3 + $0xd3] sm:$0x1]
        %v6728 = vld [vmem:[#allocation3 + $0xeb] sm:$0x1]
        %v6729 = vld [vmem:[#allocation3 + $0x103] sm:$0x1]
        %v6730 = vld [vmem:[#allocation3 + $0x11b] sm:$0x1]
        %v6731 = vld [vmem:[#allocation3 + $0x133] sm:$0x1]
        %v6732 = vld [vmem:[#allocation3 + $0x14b] sm:$0x1]
        %v6733 = vld [vmem:[#allocation3 + $0x163] sm:$0x1]
        %v6734 = vld [vmem:[#allocation3 + $0x17b] sm:$0x1]
        %v6735 = vld [vmem:[#allocation3 + $0x193] sm:$0x1]
        %v6736 = vld [vmem:[#allocation3 + $0x1ab] sm:$0x1]
        %v6737 = vld [vmem:[#allocation3 + $0x1c3] sm:$0x1]
        %v6738 = vld [vmem:[#allocation3 + $0x1db] sm:$0x1]
        %v6739 = vld [vmem:[#allocation3 + $0x1f3] sm:$0x1]
        %v6740 = vld [vmem:[#allocation3 + $0x20b] sm:$0x1]
        %v6741 = vld [vmem:[#allocation3 + $0x223] sm:$0x1]
        %v6742 = vld [vmem:[#allocation3 + $0x23b] sm:$0x1]
        %v6743 = vmax.f32 %v6695, %v6719
        %v6744 = vmax.f32 %v6696, %v6720
        %v6745 = vmax.f32 %v6697, %v6721
        %v6746 = vmax.f32 %v6698, %v6722
        %v6747 = vmax.f32 %v6699, %v6723
        %v6748 = vmax.f32 %v6700, %v6724
        %v6749 = vmax.f32 %v6701, %v6725
        %v6750 = vmax.f32 %v6702, %v6726
        %v6751 = vmax.f32 %v6703, %v6727
        %v6752 = vmax.f32 %v6704, %v6728
        %v6753 = vmax.f32 %v6705, %v6729
        %v6754 = vmax.f32 %v6706, %v6730
        %v6755 = vmax.f32 %v6707, %v6731
        %v6756 = vmax.f32 %v6708, %v6732
        %v6757 = vmax.f32 %v6709, %v6733
        %v6758 = vmax.f32 %v6710, %v6734
        %v6759 = vmax.f32 %v6711, %v6735
        %v6760 = vmax.f32 %v6712, %v6736
        %v6761 = vmax.f32 %v6713, %v6737
        %v6762 = vmax.f32 %v6714, %v6738
        %v6763 = vmax.f32 %v6715, %v6739
        %v6764 = vmax.f32 %v6716, %v6740
        %v6765 = vmax.f32 %v6717, %v6741
        %v6766 = vmax.f32 %v6718, %v6742
        %6767 = vst.msk [vmem:[#allocation4 + $0x9] sm:$0x1] %vm5902, %v6743
        %6768 = vst.msk [vmem:[#allocation4 + $0x19] sm:$0x1] %vm5902, %v6744
        %6769 = vst.msk [vmem:[#allocation4 + $0x29] sm:$0x1] %vm5902, %v6745
        %6770 = vst.msk [vmem:[#allocation4 + $0x39] sm:$0x1] %vm5902, %v6746
        %6771 = vst.msk [vmem:[#allocation4 + $0x49] sm:$0x1] %vm5902, %v6747
        %6772 = vst.msk [vmem:[#allocation4 + $0x59] sm:$0x1] %vm5902, %v6748
        %6773 = vst.msk [vmem:[#allocation4 + $0x69] sm:$0x1] %vm5902, %v6749
        %6774 = vst.msk [vmem:[#allocation4 + $0x79] sm:$0x1] %vm5902, %v6750
        %6775 = vst.msk [vmem:[#allocation4 + $0x89] sm:$0x1] %vm5902, %v6751
        %6776 = vst.msk [vmem:[#allocation4 + $0x99] sm:$0x1] %vm5902, %v6752
        %6777 = vst.msk [vmem:[#allocation4 + $0xa9] sm:$0x1] %vm5902, %v6753
        %6778 = vst.msk [vmem:[#allocation4 + $0xb9] sm:$0x1] %vm5902, %v6754
        %6779 = vst.msk [vmem:[#allocation4 + $0xc9] sm:$0x1] %vm5902, %v6755
        %6780 = vst.msk [vmem:[#allocation4 + $0xd9] sm:$0x1] %vm5902, %v6756
        %6781 = vst.msk [vmem:[#allocation4 + $0xe9] sm:$0x1] %vm5902, %v6757
        %6782 = vst.msk [vmem:[#allocation4 + $0xf9] sm:$0x1] %vm5902, %v6758
        %6783 = vst.msk [vmem:[#allocation4 + $0x109] sm:$0x1] %vm5902, %v6759
        %6784 = vst.msk [vmem:[#allocation4 + $0x119] sm:$0x1] %vm5902, %v6760
        %6785 = vst.msk [vmem:[#allocation4 + $0x129] sm:$0x1] %vm5902, %v6761
        %6786 = vst.msk [vmem:[#allocation4 + $0x139] sm:$0x1] %vm5902, %v6762
        %6787 = vst.msk [vmem:[#allocation4 + $0x149] sm:$0x1] %vm5902, %v6763
        %6788 = vst.msk [vmem:[#allocation4 + $0x159] sm:$0x1] %vm5902, %v6764
        %6789 = vst.msk [vmem:[#allocation4 + $0x169] sm:$0x1] %vm5902, %v6765
        %6790 = vst.msk [vmem:[#allocation4 + $0x179] sm:$0x1] %vm5902, %v6766
        %v6791 = vld [vmem:[#allocation3 + $0x14] sm:$0x1]
        %v6792 = vld [vmem:[#allocation3 + $0x2c] sm:$0x1]
        %v6793 = vld [vmem:[#allocation3 + $0x44] sm:$0x1]
        %v6794 = vld [vmem:[#allocation3 + $0x5c] sm:$0x1]
        %v6795 = vld [vmem:[#allocation3 + $0x74] sm:$0x1]
        %v6796 = vld [vmem:[#allocation3 + $0x8c] sm:$0x1]
        %v6797 = vld [vmem:[#allocation3 + $0xa4] sm:$0x1]
        %v6798 = vld [vmem:[#allocation3 + $0xbc] sm:$0x1]
        %v6799 = vld [vmem:[#allocation3 + $0xd4] sm:$0x1]
        %v6800 = vld [vmem:[#allocation3 + $0xec] sm:$0x1]
        %v6801 = vld [vmem:[#allocation3 + $0x104] sm:$0x1]
        %v6802 = vld [vmem:[#allocation3 + $0x11c] sm:$0x1]
        %v6803 = vld [vmem:[#allocation3 + $0x134] sm:$0x1]
        %v6804 = vld [vmem:[#allocation3 + $0x14c] sm:$0x1]
        %v6805 = vld [vmem:[#allocation3 + $0x164] sm:$0x1]
        %v6806 = vld [vmem:[#allocation3 + $0x17c] sm:$0x1]
        %v6807 = vld [vmem:[#allocation3 + $0x194] sm:$0x1]
        %v6808 = vld [vmem:[#allocation3 + $0x1ac] sm:$0x1]
        %v6809 = vld [vmem:[#allocation3 + $0x1c4] sm:$0x1]
        %v6810 = vld [vmem:[#allocation3 + $0x1dc] sm:$0x1]
        %v6811 = vld [vmem:[#allocation3 + $0x1f4] sm:$0x1]
        %v6812 = vld [vmem:[#allocation3 + $0x20c] sm:$0x1]
        %v6813 = vld [vmem:[#allocation3 + $0x224] sm:$0x1]
        %v6814 = vld [vmem:[#allocation3 + $0x23c] sm:$0x1]
        %v6815 = vld [vmem:[#allocation3 + $0x15] sm:$0x1]
        %v6816 = vld [vmem:[#allocation3 + $0x2d] sm:$0x1]
        %v6817 = vld [vmem:[#allocation3 + $0x45] sm:$0x1]
        %v6818 = vld [vmem:[#allocation3 + $0x5d] sm:$0x1]
        %v6819 = vld [vmem:[#allocation3 + $0x75] sm:$0x1]
        %v6820 = vld [vmem:[#allocation3 + $0x8d] sm:$0x1]
        %v6821 = vld [vmem:[#allocation3 + $0xa5] sm:$0x1]
        %v6822 = vld [vmem:[#allocation3 + $0xbd] sm:$0x1]
        %v6823 = vld [vmem:[#allocation3 + $0xd5] sm:$0x1]
        %v6824 = vld [vmem:[#allocation3 + $0xed] sm:$0x1]
        %v6825 = vld [vmem:[#allocation3 + $0x105] sm:$0x1]
        %v6826 = vld [vmem:[#allocation3 + $0x11d] sm:$0x1]
        %v6827 = vld [vmem:[#allocation3 + $0x135] sm:$0x1]
        %v6828 = vld [vmem:[#allocation3 + $0x14d] sm:$0x1]
        %v6829 = vld [vmem:[#allocation3 + $0x165] sm:$0x1]
        %v6830 = vld [vmem:[#allocation3 + $0x17d] sm:$0x1]
        %v6831 = vld [vmem:[#allocation3 + $0x195] sm:$0x1]
        %v6832 = vld [vmem:[#allocation3 + $0x1ad] sm:$0x1]
        %v6833 = vld [vmem:[#allocation3 + $0x1c5] sm:$0x1]
        %v6834 = vld [vmem:[#allocation3 + $0x1dd] sm:$0x1]
        %v6835 = vld [vmem:[#allocation3 + $0x1f5] sm:$0x1]
        %v6836 = vld [vmem:[#allocation3 + $0x20d] sm:$0x1]
        %v6837 = vld [vmem:[#allocation3 + $0x225] sm:$0x1]
        %v6838 = vld [vmem:[#allocation3 + $0x23d] sm:$0x1]
        %v6839 = vmax.f32 %v6791, %v6815
        %v6840 = vmax.f32 %v6792, %v6816
        %v6841 = vmax.f32 %v6793, %v6817
        %v6842 = vmax.f32 %v6794, %v6818
        %v6843 = vmax.f32 %v6795, %v6819
        %v6844 = vmax.f32 %v6796, %v6820
        %v6845 = vmax.f32 %v6797, %v6821
        %v6846 = vmax.f32 %v6798, %v6822
        %v6847 = vmax.f32 %v6799, %v6823
        %v6848 = vmax.f32 %v6800, %v6824
        %v6849 = vmax.f32 %v6801, %v6825
        %v6850 = vmax.f32 %v6802, %v6826
        %v6851 = vmax.f32 %v6803, %v6827
        %v6852 = vmax.f32 %v6804, %v6828
        %v6853 = vmax.f32 %v6805, %v6829
        %v6854 = vmax.f32 %v6806, %v6830
        %v6855 = vmax.f32 %v6807, %v6831
        %v6856 = vmax.f32 %v6808, %v6832
        %v6857 = vmax.f32 %v6809, %v6833
        %v6858 = vmax.f32 %v6810, %v6834
        %v6859 = vmax.f32 %v6811, %v6835
        %v6860 = vmax.f32 %v6812, %v6836
        %v6861 = vmax.f32 %v6813, %v6837
        %v6862 = vmax.f32 %v6814, %v6838
        %6863 = vst.msk [vmem:[#allocation4 + $0xa] sm:$0x1] %vm5902, %v6839
        %6864 = vst.msk [vmem:[#allocation4 + $0x1a] sm:$0x1] %vm5902, %v6840
        %6865 = vst.msk [vmem:[#allocation4 + $0x2a] sm:$0x1] %vm5902, %v6841
        %6866 = vst.msk [vmem:[#allocation4 + $0x3a] sm:$0x1] %vm5902, %v6842
        %6867 = vst.msk [vmem:[#allocation4 + $0x4a] sm:$0x1] %vm5902, %v6843
        %6868 = vst.msk [vmem:[#allocation4 + $0x5a] sm:$0x1] %vm5902, %v6844
        %6869 = vst.msk [vmem:[#allocation4 + $0x6a] sm:$0x1] %vm5902, %v6845
        %6870 = vst.msk [vmem:[#allocation4 + $0x7a] sm:$0x1] %vm5902, %v6846
        %6871 = vst.msk [vmem:[#allocation4 + $0x8a] sm:$0x1] %vm5902, %v6847
        %6872 = vst.msk [vmem:[#allocation4 + $0x9a] sm:$0x1] %vm5902, %v6848
        %6873 = vst.msk [vmem:[#allocation4 + $0xaa] sm:$0x1] %vm5902, %v6849
        %6874 = vst.msk [vmem:[#allocation4 + $0xba] sm:$0x1] %vm5902, %v6850
        %6875 = vst.msk [vmem:[#allocation4 + $0xca] sm:$0x1] %vm5902, %v6851
        %6876 = vst.msk [vmem:[#allocation4 + $0xda] sm:$0x1] %vm5902, %v6852
        %6877 = vst.msk [vmem:[#allocation4 + $0xea] sm:$0x1] %vm5902, %v6853
        %6878 = vst.msk [vmem:[#allocation4 + $0xfa] sm:$0x1] %vm5902, %v6854
        %6879 = vst.msk [vmem:[#allocation4 + $0x10a] sm:$0x1] %vm5902, %v6855
        %6880 = vst.msk [vmem:[#allocation4 + $0x11a] sm:$0x1] %vm5902, %v6856
        %6881 = vst.msk [vmem:[#allocation4 + $0x12a] sm:$0x1] %vm5902, %v6857
        %6882 = vst.msk [vmem:[#allocation4 + $0x13a] sm:$0x1] %vm5902, %v6858
        %6883 = vst.msk [vmem:[#allocation4 + $0x14a] sm:$0x1] %vm5902, %v6859
        %6884 = vst.msk [vmem:[#allocation4 + $0x15a] sm:$0x1] %vm5902, %v6860
        %6885 = vst.msk [vmem:[#allocation4 + $0x16a] sm:$0x1] %vm5902, %v6861
        %6886 = vst.msk [vmem:[#allocation4 + $0x17a] sm:$0x1] %vm5902, %v6862
        %v6887 = vld [vmem:[#allocation3 + $0x16] sm:$0x1]
        %v6888 = vld [vmem:[#allocation3 + $0x2e] sm:$0x1]
        %v6889 = vld [vmem:[#allocation3 + $0x46] sm:$0x1]
        %v6890 = vld [vmem:[#allocation3 + $0x5e] sm:$0x1]
        %v6891 = vld [vmem:[#allocation3 + $0x76] sm:$0x1]
        %v6892 = vld [vmem:[#allocation3 + $0x8e] sm:$0x1]
        %v6893 = vld [vmem:[#allocation3 + $0xa6] sm:$0x1]
        %v6894 = vld [vmem:[#allocation3 + $0xbe] sm:$0x1]
        %v6895 = vld [vmem:[#allocation3 + $0xd6] sm:$0x1]
        %v6896 = vld [vmem:[#allocation3 + $0xee] sm:$0x1]
        %v6897 = vld [vmem:[#allocation3 + $0x106] sm:$0x1]
        %v6898 = vld [vmem:[#allocation3 + $0x11e] sm:$0x1]
        %v6899 = vld [vmem:[#allocation3 + $0x136] sm:$0x1]
        %v6900 = vld [vmem:[#allocation3 + $0x14e] sm:$0x1]
        %v6901 = vld [vmem:[#allocation3 + $0x166] sm:$0x1]
        %v6902 = vld [vmem:[#allocation3 + $0x17e] sm:$0x1]
        %v6903 = vld [vmem:[#allocation3 + $0x196] sm:$0x1]
        %v6904 = vld [vmem:[#allocation3 + $0x1ae] sm:$0x1]
        %v6905 = vld [vmem:[#allocation3 + $0x1c6] sm:$0x1]
        %v6906 = vld [vmem:[#allocation3 + $0x1de] sm:$0x1]
        %v6907 = vld [vmem:[#allocation3 + $0x1f6] sm:$0x1]
        %v6908 = vld [vmem:[#allocation3 + $0x20e] sm:$0x1]
        %v6909 = vld [vmem:[#allocation3 + $0x226] sm:$0x1]
        %v6910 = vld [vmem:[#allocation3 + $0x23e] sm:$0x1]
        %v6911 = vld [vmem:[#allocation3 + $0x17] sm:$0x1]
        %v6912 = vld [vmem:[#allocation3 + $0x2f] sm:$0x1]
        %v6913 = vld [vmem:[#allocation3 + $0x47] sm:$0x1]
        %v6914 = vld [vmem:[#allocation3 + $0x5f] sm:$0x1]
        %v6915 = vld [vmem:[#allocation3 + $0x77] sm:$0x1]
        %v6916 = vld [vmem:[#allocation3 + $0x8f] sm:$0x1]
        %v6917 = vld [vmem:[#allocation3 + $0xa7] sm:$0x1]
        %v6918 = vld [vmem:[#allocation3 + $0xbf] sm:$0x1]
        %v6919 = vld [vmem:[#allocation3 + $0xd7] sm:$0x1]
        %v6920 = vld [vmem:[#allocation3 + $0xef] sm:$0x1]
        %v6921 = vld [vmem:[#allocation3 + $0x107] sm:$0x1]
        %v6922 = vld [vmem:[#allocation3 + $0x11f] sm:$0x1]
        %v6923 = vld [vmem:[#allocation3 + $0x137] sm:$0x1]
        %v6924 = vld [vmem:[#allocation3 + $0x14f] sm:$0x1]
        %v6925 = vld [vmem:[#allocation3 + $0x167] sm:$0x1]
        %v6926 = vld [vmem:[#allocation3 + $0x17f] sm:$0x1]
        %v6927 = vld [vmem:[#allocation3 + $0x197] sm:$0x1]
        %v6928 = vld [vmem:[#allocation3 + $0x1af] sm:$0x1]
        %v6929 = vld [vmem:[#allocation3 + $0x1c7] sm:$0x1]
        %v6930 = vld [vmem:[#allocation3 + $0x1df] sm:$0x1]
        %v6931 = vld [vmem:[#allocation3 + $0x1f7] sm:$0x1]
        %v6932 = vld [vmem:[#allocation3 + $0x20f] sm:$0x1]
        %v6933 = vld [vmem:[#allocation3 + $0x227] sm:$0x1]
        %v6934 = vld [vmem:[#allocation3 + $0x23f] sm:$0x1]
        %v6935 = vmax.f32 %v6887, %v6911
        %v6936 = vmax.f32 %v6888, %v6912
        %v6937 = vmax.f32 %v6889, %v6913
        %v6938 = vmax.f32 %v6890, %v6914
        %v6939 = vmax.f32 %v6891, %v6915
        %v6940 = vmax.f32 %v6892, %v6916
        %v6941 = vmax.f32 %v6893, %v6917
        %v6942 = vmax.f32 %v6894, %v6918
        %v6943 = vmax.f32 %v6895, %v6919
        %v6944 = vmax.f32 %v6896, %v6920
        %v6945 = vmax.f32 %v6897, %v6921
        %v6946 = vmax.f32 %v6898, %v6922
        %v6947 = vmax.f32 %v6899, %v6923
        %v6948 = vmax.f32 %v6900, %v6924
        %v6949 = vmax.f32 %v6901, %v6925
        %v6950 = vmax.f32 %v6902, %v6926
        %v6951 = vmax.f32 %v6903, %v6927
        %v6952 = vmax.f32 %v6904, %v6928
        %v6953 = vmax.f32 %v6905, %v6929
        %v6954 = vmax.f32 %v6906, %v6930
        %v6955 = vmax.f32 %v6907, %v6931
        %v6956 = vmax.f32 %v6908, %v6932
        %v6957 = vmax.f32 %v6909, %v6933
        %v6958 = vmax.f32 %v6910, %v6934
        %6959 = vst.msk [vmem:[#allocation4 + $0xb] sm:$0x1] %vm5902, %v6935
        %6960 = vst.msk [vmem:[#allocation4 + $0x1b] sm:$0x1] %vm5902, %v6936
        %6961 = vst.msk [vmem:[#allocation4 + $0x2b] sm:$0x1] %vm5902, %v6937
        %6962 = vst.msk [vmem:[#allocation4 + $0x3b] sm:$0x1] %vm5902, %v6938
        %6963 = vst.msk [vmem:[#allocation4 + $0x4b] sm:$0x1] %vm5902, %v6939
        %6964 = vst.msk [vmem:[#allocation4 + $0x5b] sm:$0x1] %vm5902, %v6940
        %6965 = vst.msk [vmem:[#allocation4 + $0x6b] sm:$0x1] %vm5902, %v6941
        %6966 = vst.msk [vmem:[#allocation4 + $0x7b] sm:$0x1] %vm5902, %v6942
        %6967 = vst.msk [vmem:[#allocation4 + $0x8b] sm:$0x1] %vm5902, %v6943
        %6968 = vst.msk [vmem:[#allocation4 + $0x9b] sm:$0x1] %vm5902, %v6944
        %6969 = vst.msk [vmem:[#allocation4 + $0xab] sm:$0x1] %vm5902, %v6945
        %6970 = vst.msk [vmem:[#allocation4 + $0xbb] sm:$0x1] %vm5902, %v6946
        %6971 = vst.msk [vmem:[#allocation4 + $0xcb] sm:$0x1] %vm5902, %v6947
        %6972 = vst.msk [vmem:[#allocation4 + $0xdb] sm:$0x1] %vm5902, %v6948
        %6973 = vst.msk [vmem:[#allocation4 + $0xeb] sm:$0x1] %vm5902, %v6949
        %6974 = vst.msk [vmem:[#allocation4 + $0xfb] sm:$0x1] %vm5902, %v6950
        %6975 = vst.msk [vmem:[#allocation4 + $0x10b] sm:$0x1] %vm5902, %v6951
        %6976 = vst.msk [vmem:[#allocation4 + $0x11b] sm:$0x1] %vm5902, %v6952
        %6977 = vst.msk [vmem:[#allocation4 + $0x12b] sm:$0x1] %vm5902, %v6953
        %6978 = vst.msk [vmem:[#allocation4 + $0x13b] sm:$0x1] %vm5902, %v6954
        %6979 = vst.msk [vmem:[#allocation4 + $0x14b] sm:$0x1] %vm5902, %v6955
        %6980 = vst.msk [vmem:[#allocation4 + $0x15b] sm:$0x1] %vm5902, %v6956
        %6981 = vst.msk [vmem:[#allocation4 + $0x16b] sm:$0x1] %vm5902, %v6957
        %6982 = vst.msk [vmem:[#allocation4 + $0x17b] sm:$0x1] %vm5902, %v6958
        %v6983 = vld [vmem:[#allocation4] sm:$0xff]
        %v6984 = vld [vmem:[#allocation4 + $0x8] sm:$0xf]
        %s6985 = scalar_lea.vmem [#allocation4], 16
        %v6986 = vld [vmem:[%s6985] sm:$0xff]
        %v6987 = vld [vmem:[%s6985 + $0x8] sm:$0xf]
        %v6988 = vmax.f32 %v6983, %v6986
        %v6989 = vmax.f32 %v6984, %v6987
        %v6990 = vpack.c.bf16 %v6988, %v6988
        %v6991 = vpack.c.bf16 %v6989, %v6989
        %vm6992 = vcmask 519168
        %6993 = vst.msk [vmem:[%s287] sm:$0xf] %vm6992, %v6990
        %vm6994 = vcmask 517120
        %6995 = vst.msk [vmem:[%s287 + $0x4] sm:$0x3] %vm6994, %v6991
        %s6996 = scalar_lea.vmem [#allocation4], 32
        %v6997 = vld [vmem:[%s6996] sm:$0xff]
        %v6998 = vld [vmem:[%s6996 + $0x8] sm:$0xf]
        %s6999 = scalar_lea.vmem [#allocation4], 48
        %v7000 = vld [vmem:[%s6999] sm:$0xff]
        %v7001 = vld [vmem:[%s6999 + $0x8] sm:$0xf]
        %v7002 = vmax.f32 %v6997, %v7000
        %v7003 = vmax.f32 %v6998, %v7001
        %v7004 = vpack.c.bf16 %v7002, %v7002
        %v7005 = vpack.c.bf16 %v7003, %v7003
        %s7006 = scalar_lea.vmem %s287, 8
        %7007 = vst.msk [vmem:[%s7006] sm:$0xf] %vm6992, %v7004
        %7008 = vst.msk [vmem:[%s7006 + $0x4] sm:$0x3] %vm6994, %v7005
        %s7009 = scalar_lea.vmem [#allocation4], 64
        %v7010 = vld [vmem:[%s7009] sm:$0xff]
        %v7011 = vld [vmem:[%s7009 + $0x8] sm:$0xf]
        %s7012 = scalar_lea.vmem [#allocation4], 80
        %v7013 = vld [vmem:[%s7012] sm:$0xff]
        %v7014 = vld [vmem:[%s7012 + $0x8] sm:$0xf]
        %v7015 = vmax.f32 %v7010, %v7013
        %v7016 = vmax.f32 %v7011, %v7014
        %v7017 = vpack.c.bf16 %v7015, %v7015
        %v7018 = vpack.c.bf16 %v7016, %v7016
        %s7019 = scalar_lea.vmem %s287, 16
        %7020 = vst.msk [vmem:[%s7019] sm:$0xf] %vm6992, %v7017
        %7021 = vst.msk [vmem:[%s7019 + $0x4] sm:$0x3] %vm6994, %v7018
        %s7022 = scalar_lea.vmem [#allocation4], 96
        %v7023 = vld [vmem:[%s7022] sm:$0xff]
        %v7024 = vld [vmem:[%s7022 + $0x8] sm:$0xf]
        %s7025 = scalar_lea.vmem [#allocation4], 112
        %v7026 = vld [vmem:[%s7025] sm:$0xff]
        %v7027 = vld [vmem:[%s7025 + $0x8] sm:$0xf]
        %v7028 = vmax.f32 %v7023, %v7026
        %v7029 = vmax.f32 %v7024, %v7027
        %v7030 = vpack.c.bf16 %v7028, %v7028
        %v7031 = vpack.c.bf16 %v7029, %v7029
        %s7032 = scalar_lea.vmem %s287, 24
        %7033 = vst.msk [vmem:[%s7032] sm:$0xf] %vm6992, %v7030
        %7034 = vst.msk [vmem:[%s7032 + $0x4] sm:$0x3] %vm6994, %v7031
        %s7035 = scalar_lea.vmem [#allocation4], 128
        %v7036 = vld [vmem:[%s7035] sm:$0xff]
        %v7037 = vld [vmem:[%s7035 + $0x8] sm:$0xf]
        %s7038 = scalar_lea.vmem [#allocation4], 144
        %v7039 = vld [vmem:[%s7038] sm:$0xff]
        %v7040 = vld [vmem:[%s7038 + $0x8] sm:$0xf]
        %v7041 = vmax.f32 %v7036, %v7039
        %v7042 = vmax.f32 %v7037, %v7040
        %v7043 = vpack.c.bf16 %v7041, %v7041
        %v7044 = vpack.c.bf16 %v7042, %v7042
        %s7045 = scalar_lea.vmem %s287, 32
        %7046 = vst.msk [vmem:[%s7045] sm:$0xf] %vm6992, %v7043
        %7047 = vst.msk [vmem:[%s7045 + $0x4] sm:$0x3] %vm6994, %v7044
        %s7048 = scalar_lea.vmem [#allocation4], 160
        %v7049 = vld [vmem:[%s7048] sm:$0xff]
        %v7050 = vld [vmem:[%s7048 + $0x8] sm:$0xf]
        %s7051 = scalar_lea.vmem [#allocation4], 176
        %v7052 = vld [vmem:[%s7051] sm:$0xff]
        %v7053 = vld [vmem:[%s7051 + $0x8] sm:$0xf]
        %v7054 = vmax.f32 %v7049, %v7052
        %v7055 = vmax.f32 %v7050, %v7053
        %v7056 = vpack.c.bf16 %v7054, %v7054
        %v7057 = vpack.c.bf16 %v7055, %v7055
        %s7058 = scalar_lea.vmem %s287, 40
        %7059 = vst.msk [vmem:[%s7058] sm:$0xf] %vm6992, %v7056
        %7060 = vst.msk [vmem:[%s7058 + $0x4] sm:$0x3] %vm6994, %v7057
        %s7061 = scalar_lea.vmem [#allocation4], 192
        %v7062 = vld [vmem:[%s7061] sm:$0xff]
        %v7063 = vld [vmem:[%s7061 + $0x8] sm:$0xf]
        %s7064 = scalar_lea.vmem [#allocation4], 208
        %v7065 = vld [vmem:[%s7064] sm:$0xff]
        %v7066 = vld [vmem:[%s7064 + $0x8] sm:$0xf]
        %v7067 = vmax.f32 %v7062, %v7065
        %v7068 = vmax.f32 %v7063, %v7066
        %v7069 = vpack.c.bf16 %v7067, %v7067
        %v7070 = vpack.c.bf16 %v7068, %v7068
        %s7071 = scalar_lea.vmem %s287, 48
        %7072 = vst.msk [vmem:[%s7071] sm:$0xf] %vm6992, %v7069
        %7073 = vst.msk [vmem:[%s7071 + $0x4] sm:$0x3] %vm6994, %v7070
        %s7074 = scalar_lea.vmem [#allocation4], 224
        %v7075 = vld [vmem:[%s7074] sm:$0xff]
        %v7076 = vld [vmem:[%s7074 + $0x8] sm:$0xf]
        %s7077 = scalar_lea.vmem [#allocation4], 240
        %v7078 = vld [vmem:[%s7077] sm:$0xff]
        %v7079 = vld [vmem:[%s7077 + $0x8] sm:$0xf]
        %v7080 = vmax.f32 %v7075, %v7078
        %v7081 = vmax.f32 %v7076, %v7079
        %v7082 = vpack.c.bf16 %v7080, %v7080
        %v7083 = vpack.c.bf16 %v7081, %v7081
        %s7084 = scalar_lea.vmem %s287, 56
        %7085 = vst.msk [vmem:[%s7084] sm:$0xf] %vm6992, %v7082
        %7086 = vst.msk [vmem:[%s7084 + $0x4] sm:$0x3] %vm6994, %v7083
        %s7087 = scalar_lea.vmem [#allocation4], 256
        %v7088 = vld [vmem:[%s7087] sm:$0xff]
        %v7089 = vld [vmem:[%s7087 + $0x8] sm:$0xf]
        %s7090 = scalar_lea.vmem [#allocation4], 272
        %v7091 = vld [vmem:[%s7090] sm:$0xff]
        %v7092 = vld [vmem:[%s7090 + $0x8] sm:$0xf]
        %v7093 = vmax.f32 %v7088, %v7091
        %v7094 = vmax.f32 %v7089, %v7092
        %v7095 = vpack.c.bf16 %v7093, %v7093
        %v7096 = vpack.c.bf16 %v7094, %v7094
        %s7097 = scalar_lea.vmem %s287, 64
        %7098 = vst.msk [vmem:[%s7097] sm:$0xf] %vm6992, %v7095
        %7099 = vst.msk [vmem:[%s7097 + $0x4] sm:$0x3] %vm6994, %v7096
        %s7100 = scalar_lea.vmem [#allocation4], 288
        %v7101 = vld [vmem:[%s7100] sm:$0xff]
        %v7102 = vld [vmem:[%s7100 + $0x8] sm:$0xf]
        %s7103 = scalar_lea.vmem [#allocation4], 304
        %v7104 = vld [vmem:[%s7103] sm:$0xff]
        %v7105 = vld [vmem:[%s7103 + $0x8] sm:$0xf]
        %v7106 = vmax.f32 %v7101, %v7104
        %v7107 = vmax.f32 %v7102, %v7105
        %v7108 = vpack.c.bf16 %v7106, %v7106
        %v7109 = vpack.c.bf16 %v7107, %v7107
        %s7110 = scalar_lea.vmem %s287, 72
        %7111 = vst.msk [vmem:[%s7110] sm:$0xf] %vm6992, %v7108
        %7112 = vst.msk [vmem:[%s7110 + $0x4] sm:$0x3] %vm6994, %v7109
        %s7113 = scalar_lea.vmem [#allocation4], 320
        %v7114 = vld [vmem:[%s7113] sm:$0xff]
        %v7115 = vld [vmem:[%s7113 + $0x8] sm:$0xf]
        %s7116 = scalar_lea.vmem [#allocation4], 336
        %v7117 = vld [vmem:[%s7116] sm:$0xff]
        %v7118 = vld [vmem:[%s7116 + $0x8] sm:$0xf]
        %v7119 = vmax.f32 %v7114, %v7117
        %v7120 = vmax.f32 %v7115, %v7118
        %v7121 = vpack.c.bf16 %v7119, %v7119
        %v7122 = vpack.c.bf16 %v7120, %v7120
        %s7123 = scalar_lea.vmem %s287, 80
        %7124 = vst.msk [vmem:[%s7123] sm:$0xf] %vm6992, %v7121
        %7125 = vst.msk [vmem:[%s7123 + $0x4] sm:$0x3] %vm6994, %v7122
        %s7126 = scalar_lea.vmem [#allocation4], 352
        %v7127 = vld [vmem:[%s7126] sm:$0xff]
        %v7128 = vld [vmem:[%s7126 + $0x8] sm:$0xf]
        %s7129 = scalar_lea.vmem [#allocation4], 368
        %v7130 = vld [vmem:[%s7129] sm:$0xff]
        %v7131 = vld [vmem:[%s7129 + $0x8] sm:$0xf]
        %v7132 = vmax.f32 %v7127, %v7130
        %v7133 = vmax.f32 %v7128, %v7131
        %v7134 = vpack.c.bf16 %v7132, %v7132
        %v7135 = vpack.c.bf16 %v7133, %v7133
        %s7136 = scalar_lea.vmem %s287, 88
        %7137 = vst.msk [vmem:[%s7136] sm:$0xf] %vm6992, %v7134
        %7138 = vst.msk [vmem:[%s7136 + $0x4] sm:$0x3] %vm6994, %v7135
        %p7139 = scmp.lt.s32.totalorder %s19, 1
        %s7140 = scalar_select %p7139, %s19, 1
        %s7141 = smul.addr %s7140, 24
        %s7142 = smul.addr %s7141, 4
        %s7143 = scalar_lea.vmem %s5, %s7142
        // Predicated region
        $region57: #{net_forward.2} parent=39 // pred_check
          %p7144 = pneg %p147
        $region58: #{net_forward.2} parent=39 // pred_check_branch
          %7146 = sbr.rel (%p7144) target = $region60
        $region59: #{net_forward.2} parent=39 // pred_region
          _
        $region60: #{net_forward.2} parent=39 // pred_fallthru
          _
      $region40: #{net_forward.2} parent=5 // pred_fallthru
        _
      %p7147 = scmp.le.s32.totalorder 2, %s14
      // Predicated region
      $region61: #{net_forward.2} parent=5 // pred_check
        %p7148 = pneg %p7147
      $region62: #{net_forward.2} parent=5 // pred_check_branch
        %7150 = sbr.rel (%p7148) target = $region64
      $region63: #{net_forward.2} parent=5 // pred_region
        %s7151 = ssub.s32 %s14, 2
        // Predicated region
        $region65: #{net_forward.2} parent=63 // pred_check
          %p7152 = pneg %p153
        $region66: #{net_forward.2} parent=63 // pred_check_branch
          %7154 = sbr.rel (%p7152) target = $region68
        $region67: #{net_forward.2} parent=63 // pred_region
          %p7155 = scmp.lt.s32.totalorder %s20, 1
          %s7156 = scalar_select %p7155, %s20, 1
          %s7157 = smul.addr %s7156, 24
          %s7158 = smul.addr %s7157, 4
          %s7159 = scalar_lea.vmem %s5, %s7158
        $region68: #{net_forward.2} parent=63 // pred_fallthru
          _
      $region64: #{net_forward.2} parent=5 // pred_fallthru
        _
    $region6: #{net_forward.2} parent=1 // loop_footer
      %s18 = sadd.s32 1, %s14
    $region7: #{net_forward.2} parent=1 // loop_footer_branch
      %13 = sbr.rel target = $region3
    $region8: #{net_forward.2} parent=1 // loop_exit
      _
    %7160 = vsyncpa [#allocation6], 1
    %s7161 = scalar_lea.sflag [#allocation6], 1
    %7162 = vsyncpa %s7161, 1
    %7163 = vsyncpa [#allocation8], 1
    %7164 = vsyncpa [#allocation11], 1

</llo_original>
